<compile_context>
chip_gen: v6e
topology: v6e:2x2x1
jax: 0.10.0
libtpu: 0.0.40
codegen_flags: <defaults>
</compile_context>

<pallas_src>
import jax
import jax.numpy as jnp
import numpy as np
from jax import lax
from jax.experimental import pallas as pl
from jax.experimental.pallas import tpu as pltpu


# ------------------------------ helpers --------------------------------------

def _round_up(x, m):
    return (x + m - 1) // m * m


def _shift_lanes(x, k):
    # y[:, l] = x[:, l + k]   (wrap-around lanes are never consumed: the following
    # A-matrix has all-zero rows for every non-anchor lane).
    return jnp.concatenate([x[:, k:], x[:, :k]], axis=-1)


def _pool2x2_lanes(x, w_stride, h_stride):
    # 2x2 / stride-2 max pool for activations laid out as lane = h*h_stride + w*w_stride + c.
    # Result is "uncompacted": only lanes with even h and even w hold pooled values.
    wmax = jnp.maximum(x, _shift_lanes(x, w_stride))
    return jnp.maximum(wmax, _shift_lanes(wmax, h_stride))


# ------------------------------ fused kernel ---------------------------------

def _cnn_kernel(x_ref, a1_ref, b1_ref, a2_ref, b2_ref, a3_ref, b3_ref, o_ref):
    """Whole network for one batch tile; 3 lane-dense matmuls + 2 lane-shift pools.

    x_ref : (TB, 144)    flattened 12x12 input image
    a1_ref: (144, 2304)  bf16 conv1 matrix   (lane = h*192 + w*16 + oc)
    a2_ref: (2304, 1152) bf16 conv2 matrix   (lane = h2*192 + w2*32 + oc2)
    a3_ref: (1152, 128)  bf16 linear matrix  (logits in lanes 0..2)
    o_ref : (TB, 128)    f32 lane-dense output
    """
    bf16 = jnp.bfloat16
    f32 = jnp.float32

    # conv1 + bias + ReLU
    x = x_ref[...].astype(bf16)                                              # (TB, 144)
    h1 = jnp.dot(x, a1_ref[...], preferred_element_type=f32)                 # (TB, 2304)
    h1 = jnp.maximum(h1 + b1_ref[...], 0.0)

    # maxpool 2x2 (uncompacted; valid at even h/w anchor lanes)
    m1 = _pool2x2_lanes(h1, w_stride=16, h_stride=192)                        # (TB, 2304)

    # conv2 + bias + ReLU (pool selection + SAME padding folded into a2)
    h2 = jnp.dot(m1.astype(bf16), a2_ref[...], preferred_element_type=f32)    # (TB, 1152)
    h2 = jnp.maximum(h2 + b2_ref[...], 0.0)

    # maxpool 2x2
    m2 = _pool2x2_lanes(h2, w_stride=32, h_stride=192)                         # (TB, 1152)

    # linear (torch (C,H,W) flatten order + pool2 selection folded into a3)
    out = jnp.dot(m2.astype(bf16), a3_ref[...], preferred_element_type=f32)
    o_ref[...] = (out + b3_ref[...]).astype(o_ref.dtype)                       # (TB, 128)


# --------------------------- host-side weight packing -------------------------

def _pack_params(params):
    """Expand conv/pool/flatten into lane-dense structured-matmul matrices."""
    bf16 = jnp.bfloat16
    f32 = jnp.float32
    w1 = params["w1"].astype(f32)        # (16, 1, 5, 5)  OIHW
    w2 = params["w2"].astype(f32)        # (32, 16, 5, 5)
    w3 = params["w_out"].astype(f32)     # (3, 288)

    # conv1: (144 -> 2304); row = hi*12 + wi, col = h*192 + w*16 + oc.
    # SAME padding handled by dropping out-of-range taps.
    sel1 = (np.arange(12)[:, None, None] ==
            np.arange(12)[None, :, None] + np.arange(5)[None, None, :] - 2
            ).astype(np.float32)                                               # (12, 12, 5)
    a1 = jnp.einsum("hpk,wql,okl->hwpqo", sel1, sel1, w1[:, 0])
    a1 = a1.reshape(144, 2304).astype(bf16)
    b1r = jnp.tile(params["b1"].astype(f32), 144).reshape(1, 2304)

    # conv2: consumes the UNCOMPACTED pooled map (row = h*192 + w*16 + cin, nonzero only at
    # even h/w anchors), emits col = h2*192 + w2*32 + oc2.
    sel2 = (np.arange(12)[:, None, None] ==
            2 * (np.arange(6)[None, :, None] + np.arange(5)[None, None, :] - 2)
            ).astype(np.float32)                                               # (12, 6, 5)
    a2 = jnp.einsum("hak,wbl,ockl->hwcabo", sel2, sel2, w2)
    a2 = a2.reshape(2304, 1152).astype(bf16)
    b2r = jnp.tile(params["b2"].astype(f32), 36).reshape(1, 1152)

    # linear: consumes uncompacted pool2 map (row = h2*192 + w2*32 + oc2, even h2/w2 anchors),
    # emits a lane-dense 128-wide output (logits in lanes 0..2).  Torch's (C,H,W) flatten
    # order is folded into the matrix.
    sel3 = (np.arange(6)[:, None] == 2 * np.arange(3)[None, :]).astype(np.float32)  # (6, 3)
    w3r = w3.reshape(3, 32, 3, 3)                                              # (j, oc2, hp, wp)
    a3 = jnp.einsum("hp,wq,jopq->hwoj", sel3, sel3, w3r).reshape(1152, 3)
    a3 = jnp.pad(a3, ((0, 0), (0, 125))).astype(bf16)                          # (1152, 128)
    b3r = jnp.pad(params["b_out"].astype(f32), (0, 125)).reshape(1, 128)

    return a1, b1r, a2, b2r, a3, b3r


# ------------------------------ host wrapper ----------------------------------

def cnn_forward(x, params, block_b=32):
    """x: (B, 1, 12, 12) NCHW float32 -> logits (B, 3) float32."""
    B = x.shape[0]
    assert x.shape[1:] == (1, 12, 12)
    a1, b1r, a2, b2r, a3, b3r = _pack_params(params)

    # Batch tiling: pad the batch to a multiple of the tile (no "whole batch" fallback);
    # keep grid >= 2 when the batch allows so the parallel axis can shard across v7x's 2 TCs.
    tb = min(block_b, _round_up(B, 8))
    if B > 8 and _round_up(B, tb) // tb < 2:
        tb = max(8, _round_up(tb // 2, 8))
    bp = _round_up(B, tb)
    xf = x.reshape(B, 144).astype(jnp.float32)
    xf = jnp.pad(xf, ((0, bp - B), (0, 0)))

    out = pl.pallas_call(
        _cnn_kernel,
        out_shape=jax.ShapeDtypeStruct((bp, 128), jnp.float32),
        grid=(bp // tb,),
        in_specs=[
            pl.BlockSpec((tb, 144), lambda i: (i, 0)),        # input tile (dense DMA)
            pl.BlockSpec((144, 2304), lambda i: (0, 0)),      # conv1 matrix (resident)
            pl.BlockSpec((1, 2304), lambda i: (0, 0)),
            pl.BlockSpec((2304, 1152), lambda i: (0, 0)),     # conv2 matrix (resident)
            pl.BlockSpec((1, 1152), lambda i: (0, 0)),
            pl.BlockSpec((1152, 128), lambda i: (0, 0)),      # linear matrix (resident)
            pl.BlockSpec((1, 128), lambda i: (0, 0)),
        ],
        out_specs=pl.BlockSpec((tb, 128), lambda i: (i, 0)),  # lane-dense output
        compiler_params=pltpu.CompilerParams(
            dimension_semantics=("parallel",),
            vmem_limit_bytes=40 * 1024 * 1024,
        ),
    )(xf, a1, b1r, a2, b2r, a3, b3r)
    return out[:B, :3]


# --------------------------- pure-JAX reference -------------------------------

def _reference_forward(x, params):
    dn = ("NCHW", "OIHW", "NCHW")
    y = lax.conv_general_dilated(x, params["w1"], (1, 1), [(2, 2), (2, 2)],
                                 dimension_numbers=dn)
    y = jax.nn.relu(y + params["b1"][None, :, None, None])
    y = lax.reduce_window(y, -jnp.inf, lax.max, (1, 1, 2, 2), (1, 1, 2, 2), "VALID")
    y = lax.conv_general_dilated(y, params["w2"], (1, 1), [(2, 2), (2, 2)],
                                 dimension_numbers=dn)
    y = jax.nn.relu(y + params["b2"][None, :, None, None])
    y = lax.reduce_window(y, -jnp.inf, lax.max, (1, 1, 2, 2), (1, 1, 2, 2), "VALID")
    f = y.reshape(y.shape[0], -1)
    return f @ params["w_out"].T + params["b_out"]


# ----------------------------------- demo ------------------------------------

def _init_params(key):
    k1, k2, k3, k4, k5, k6 = jax.random.split(key, 6)
    return {
        "w1": 0.10 * jax.random.normal(k1, (16, 1, 5, 5), jnp.float32),
        "b1": 0.10 * jax.random.normal(k2, (16,), jnp.float32),
        "w2": 0.05 * jax.random.normal(k3, (32, 16, 5, 5), jnp.float32),
        "b2": 0.05 * jax.random.normal(k4, (32,), jnp.float32),
        "w_out": 0.05 * jax.random.normal(k5, (3, 288), jnp.float32),
        "b_out": 0.05 * jax.random.normal(k6, (3,), jnp.float32),
    }


if __name__ == "__main__":
    key = jax.random.PRNGKey(0)
    kp, kx = jax.random.split(key)
    params = _init_params(kp)
    x = jax.random.normal(kx, (2, 1, 12, 12), jnp.float32)

    out = jax.jit(cnn_forward)(x, params)
    out = jax.block_until_ready(out)
    assert out.shape == (2, 3) and out.dtype == jnp.float32
    assert bool(jnp.all(jnp.isfinite(out)))

    ref = _reference_forward(x, params)
    # bf16 MXU operands with f32 accumulation -> observed error ~1e-3, tolerance well above.
    err = float(jnp.max(jnp.abs(out - ref)))
    assert err < 5e-2, f"max abs err {err}"

    print("KERNEL_OK")
</pallas_src>

<mosaic_0001>
module attributes {stable_mosaic.version = 11 : i64} {
  func.func @_cnn_kernel(%arg0: i32, %arg1: memref<8x144xf32, #tpu.memory_space<vmem>>, %arg2: memref<144x2304xbf16, #tpu.memory_space<vmem>>, %arg3: memref<1x2304xf32, #tpu.memory_space<vmem>>, %arg4: memref<2304x1152xbf16, #tpu.memory_space<vmem>>, %arg5: memref<1x1152xf32, #tpu.memory_space<vmem>>, %arg6: memref<1152x128xbf16, #tpu.memory_space<vmem>>, %arg7: memref<1x128xf32, #tpu.memory_space<vmem>>, %arg8: memref<8x128xf32, #tpu.memory_space<vmem>>) attributes {dimension_semantics = [#tpu.dimension_semantics<parallel>], iteration_bounds = array<i64: 1>, scalar_prefetch = 0 : i64, scratch_operands = 0 : i64, tpu.core_type = #tpu.core_type<tc>, window_params = [{transform_indices = @transform_0, window_bounds = array<i64: 8, 144>}, {pipeline_mode = #tpu.pipeline_mode<synchronous>, transform_indices = @transform_1, window_bounds = array<i64: 144, 2304>}, {pipeline_mode = #tpu.pipeline_mode<synchronous>, transform_indices = @transform_2, window_bounds = array<i64: 1, 2304>}, {pipeline_mode = #tpu.pipeline_mode<synchronous>, transform_indices = @transform_3, window_bounds = array<i64: 2304, 1152>}, {pipeline_mode = #tpu.pipeline_mode<synchronous>, transform_indices = @transform_4, window_bounds = array<i64: 1, 1152>}, {pipeline_mode = #tpu.pipeline_mode<synchronous>, transform_indices = @transform_5, window_bounds = array<i64: 1152, 128>}, {pipeline_mode = #tpu.pipeline_mode<synchronous>, transform_indices = @transform_6, window_bounds = array<i64: 1, 128>}, {transform_indices = @transform_7, window_bounds = array<i64: 8, 128>}]} {
    %c0 = arith.constant 0 : index
    %c0_0 = arith.constant 0 : index
    %0 = vector.load %arg1[%c0, %c0_0] : memref<8x144xf32, #tpu.memory_space<vmem>>, vector<8x144xf32>
    %1 = arith.truncf %0 : vector<8x144xf32> to vector<8x144xbf16>
    %c0_1 = arith.constant 0 : index
    %c0_2 = arith.constant 0 : index
    %2 = vector.load %arg2[%c0_1, %c0_2] : memref<144x2304xbf16, #tpu.memory_space<vmem>>, vector<144x2304xbf16>
    %cst = arith.constant dense<0.000000e+00> : vector<8x2304xf32>
    %3 = tpu.matmul %1, %2, %cst {dimension_numbers = #tpu.dot_dimension_numbers<[1], [0], [0], [1], [0, 0, 1, 1], [], []>} : vector<8x144xbf16>, vector<144x2304xbf16>, vector<8x2304xf32> -> vector<8x2304xf32>
    %c0_3 = arith.constant 0 : index
    %c0_4 = arith.constant 0 : index
    %4 = vector.load %arg3[%c0_3, %c0_4] : memref<1x2304xf32, #tpu.memory_space<vmem>>, vector<1x2304xf32>
    %5 = vector.broadcast %4 : vector<1x2304xf32> to vector<8x2304xf32>
    %6 = arith.addf %3, %5 : vector<8x2304xf32>
    %cst_5 = arith.constant 0.000000e+00 : f32
    %7 = vector.broadcast %cst_5 : f32 to vector<8x2304xf32>
    %8 = arith.maximumf %6, %7 : vector<8x2304xf32>
    %9 = vector.extract_strided_slice %8 {offsets = [0, 16], sizes = [8, 2288], strides = [1, 1]} : vector<8x2304xf32> to vector<8x2288xf32>
    %10 = vector.extract_strided_slice %8 {offsets = [0, 0], sizes = [8, 16], strides = [1, 1]} : vector<8x2304xf32> to vector<8x16xf32>
    %11 = tpu.concatenate %9, %10 in 1 : vector<8x2288xf32>, vector<8x16xf32> -> vector<8x2304xf32>
    %12 = arith.maximumf %8, %11 : vector<8x2304xf32>
    %13 = vector.extract_strided_slice %12 {offsets = [0, 192], sizes = [8, 2112], strides = [1, 1]} : vector<8x2304xf32> to vector<8x2112xf32>
    %14 = vector.extract_strided_slice %12 {offsets = [0, 0], sizes = [8, 192], strides = [1, 1]} : vector<8x2304xf32> to vector<8x192xf32>
    %15 = tpu.concatenate %13, %14 in 1 : vector<8x2112xf32>, vector<8x192xf32> -> vector<8x2304xf32>
    %16 = arith.maximumf %12, %15 : vector<8x2304xf32>
    %17 = arith.truncf %16 : vector<8x2304xf32> to vector<8x2304xbf16>
    %c0_6 = arith.constant 0 : index
    %c0_7 = arith.constant 0 : index
    %18 = vector.load %arg4[%c0_6, %c0_7] : memref<2304x1152xbf16, #tpu.memory_space<vmem>>, vector<2304x1152xbf16>
    %cst_8 = arith.constant dense<0.000000e+00> : vector<8x1152xf32>
    %19 = tpu.matmul %17, %18, %cst_8 {dimension_numbers = #tpu.dot_dimension_numbers<[1], [0], [0], [1], [0, 0, 1, 1], [], []>} : vector<8x2304xbf16>, vector<2304x1152xbf16>, vector<8x1152xf32> -> vector<8x1152xf32>
    %c0_9 = arith.constant 0 : index
    %c0_10 = arith.constant 0 : index
    %20 = vector.load %arg5[%c0_9, %c0_10] : memref<1x1152xf32, #tpu.memory_space<vmem>>, vector<1x1152xf32>
    %21 = vector.broadcast %20 : vector<1x1152xf32> to vector<8x1152xf32>
    %22 = arith.addf %19, %21 : vector<8x1152xf32>
    %cst_11 = arith.constant 0.000000e+00 : f32
    %23 = vector.broadcast %cst_11 : f32 to vector<8x1152xf32>
    %24 = arith.maximumf %22, %23 : vector<8x1152xf32>
    %25 = vector.extract_strided_slice %24 {offsets = [0, 32], sizes = [8, 1120], strides = [1, 1]} : vector<8x1152xf32> to vector<8x1120xf32>
    %26 = vector.extract_strided_slice %24 {offsets = [0, 0], sizes = [8, 32], strides = [1, 1]} : vector<8x1152xf32> to vector<8x32xf32>
    %27 = tpu.concatenate %25, %26 in 1 : vector<8x1120xf32>, vector<8x32xf32> -> vector<8x1152xf32>
    %28 = arith.maximumf %24, %27 : vector<8x1152xf32>
    %29 = vector.extract_strided_slice %28 {offsets = [0, 192], sizes = [8, 960], strides = [1, 1]} : vector<8x1152xf32> to vector<8x960xf32>
    %30 = vector.extract_strided_slice %28 {offsets = [0, 0], sizes = [8, 192], strides = [1, 1]} : vector<8x1152xf32> to vector<8x192xf32>
    %31 = tpu.concatenate %29, %30 in 1 : vector<8x960xf32>, vector<8x192xf32> -> vector<8x1152xf32>
    %32 = arith.maximumf %28, %31 : vector<8x1152xf32>
    %33 = arith.truncf %32 : vector<8x1152xf32> to vector<8x1152xbf16>
    %c0_12 = arith.constant 0 : index
    %c0_13 = arith.constant 0 : index
    %34 = vector.load %arg6[%c0_12, %c0_13] : memref<1152x128xbf16, #tpu.memory_space<vmem>>, vector<1152x128xbf16>
    %cst_14 = arith.constant dense<0.000000e+00> : vector<8x128xf32>
    %35 = tpu.matmul %33, %34, %cst_14 {dimension_numbers = #tpu.dot_dimension_numbers<[1], [0], [0], [1], [0, 0, 1, 1], [], []>} : vector<8x1152xbf16>, vector<1152x128xbf16>, vector<8x128xf32> -> vector<8x128xf32>
    %c0_15 = arith.constant 0 : index
    %c0_16 = arith.constant 0 : index
    %36 = vector.load %arg7[%c0_15, %c0_16] : memref<1x128xf32, #tpu.memory_space<vmem>>, vector<1x128xf32>
    %37 = vector.broadcast %36 : vector<1x128xf32> to vector<8x128xf32>
    %38 = arith.addf %35, %37 : vector<8x128xf32>
    %c0_17 = arith.constant 0 : index
    %c0_18 = arith.constant 0 : index
    %39 = vector.load %arg8[%c0_17, %c0_18] : memref<8x128xf32, #tpu.memory_space<vmem>>, vector<8x128xf32>
    tpu.vector_store %arg8[%c0_17, %c0_18], %38 {strides = array<i32>} : memref<8x128xf32, #tpu.memory_space<vmem>>, vector<8x128xf32>,
    return
  }
  func.func @transform_0(%arg0: i32) -> (i32, i32) {
    %c0_i32 = arith.constant 0 : i32
    %c0_i32_0 = arith.constant 0 : i32
    return %arg0, %c0_i32 : i32, i32
  }
  func.func @transform_1(%arg0: i32) -> (i32, i32) {
    %c0_i32 = arith.constant 0 : i32
    %c0_i32_0 = arith.constant 0 : i32
    %c0_i32_1 = arith.constant 0 : i32
    return %c0_i32, %c0_i32_0 : i32, i32
  }
  func.func @transform_2(%arg0: i32) -> (i32, i32) {
    %c0_i32 = arith.constant 0 : i32
    %c0_i32_0 = arith.constant 0 : i32
    %c0_i32_1 = arith.constant 0 : i32
    return %c0_i32, %c0_i32_0 : i32, i32
  }
  func.func @transform_3(%arg0: i32) -> (i32, i32) {
    %c0_i32 = arith.constant 0 : i32
    %c0_i32_0 = arith.constant 0 : i32
    %c0_i32_1 = arith.constant 0 : i32
    return %c0_i32, %c0_i32_0 : i32, i32
  }
  func.func @transform_4(%arg0: i32) -> (i32, i32) {
    %c0_i32 = arith.constant 0 : i32
    %c0_i32_0 = arith.constant 0 : i32
    %c0_i32_1 = arith.constant 0 : i32
    return %c0_i32, %c0_i32_0 : i32, i32
  }
  func.func @transform_5(%arg0: i32) -> (i32, i32) {
    %c0_i32 = arith.constant 0 : i32
    %c0_i32_0 = arith.constant 0 : i32
    %c0_i32_1 = arith.constant 0 : i32
    return %c0_i32, %c0_i32_0 : i32, i32
  }
  func.func @transform_6(%arg0: i32) -> (i32, i32) {
    %c0_i32 = arith.constant 0 : i32
    %c0_i32_0 = arith.constant 0 : i32
    %c0_i32_1 = arith.constant 0 : i32
    return %c0_i32, %c0_i32_0 : i32, i32
  }
  func.func @transform_7(%arg0: i32) -> (i32, i32) {
    %c0_i32 = arith.constant 0 : i32
    %c0_i32_0 = arith.constant 0 : i32
    return %arg0, %c0_i32 : i32, i32
  }
}

</mosaic_0001>

<llo_original>
// kernel: tile.13
$region0: #{tile.13}
  #allocation0 [shape = 's32[1]{0}', space=sflag, size = 0x4, scoped, tag = 'scoped memory for tile.13']
  %s0 = inlined_call_operand.vmem [shape: f32[16], index: 0, kind: input, shape index: {}]
  %s1 = inlined_call_operand.vmem [shape: f32[144,16], index: 1, kind: output, shape index: {}]
  // Predicated region
  $region2: #{tile.13} parent=0 // pred_check
    _
  $region3: #{tile.13} parent=0 // pred_check_branch
    %3 = sbr.rel (0) target = $region5
  $region4: #{tile.13} parent=0 // pred_region
    _
  $region5: #{tile.13} parent=0 // pred_fallthru
    _
  %v4 = vld [vmem:[%s0] ss:$0 sm:$0xff]
  %5 = vst [vmem:[%s1] sm:$0xff] %v4
  %s6 = scalar_lea.vmem %s1, 8
  %7 = vst [vmem:[%s6] sm:$0xff] %v4
  %s8 = scalar_lea.vmem %s1, 16
  %9 = vst [vmem:[%s8] sm:$0xff] %v4
  %s10 = scalar_lea.vmem %s1, 24
  %11 = vst [vmem:[%s10] sm:$0xff] %v4
  %s12 = scalar_lea.vmem %s1, 32
  %13 = vst [vmem:[%s12] sm:$0xff] %v4
  %s14 = scalar_lea.vmem %s1, 40
  %15 = vst [vmem:[%s14] sm:$0xff] %v4
  %s16 = scalar_lea.vmem %s1, 48
  %17 = vst [vmem:[%s16] sm:$0xff] %v4
  %s18 = scalar_lea.vmem %s1, 56
  %19 = vst [vmem:[%s18] sm:$0xff] %v4
  %s20 = scalar_lea.vmem %s1, 64
  %21 = vst [vmem:[%s20] sm:$0xff] %v4
  %s22 = scalar_lea.vmem %s1, 72
  %23 = vst [vmem:[%s22] sm:$0xff] %v4
  %s24 = scalar_lea.vmem %s1, 80
  %25 = vst [vmem:[%s24] sm:$0xff] %v4
  %s26 = scalar_lea.vmem %s1, 88
  %27 = vst [vmem:[%s26] sm:$0xff] %v4
  %s28 = scalar_lea.vmem %s1, 96
  %29 = vst [vmem:[%s28] sm:$0xff] %v4
  %s30 = scalar_lea.vmem %s1, 104
  %31 = vst [vmem:[%s30] sm:$0xff] %v4
  %s32 = scalar_lea.vmem %s1, 112
  %33 = vst [vmem:[%s32] sm:$0xff] %v4
  %s34 = scalar_lea.vmem %s1, 120
  %35 = vst [vmem:[%s34] sm:$0xff] %v4
  %s36 = scalar_lea.vmem %s1, 128
  %37 = vst [vmem:[%s36] sm:$0xff] %v4
  %s38 = scalar_lea.vmem %s1, 136
  %39 = vst [vmem:[%s38] sm:$0xff] %v4

// kernel: tile.14
$region0: #{tile.14}
  %s0 = inlined_call_operand.vmem [shape: f32[144,16], index: 0, kind: input, shape index: {}]
  %s1 = inlined_call_operand.vmem [shape: f32[1,2304], index: 1, kind: output, shape index: {}]
  $region1: #{tile.14} parent=0
    #allocation0 [shape = 'u8[73728]{0}', space=vmem, size = 0x12000, scoped, tag = 'scoped mem for output reshape']
    %v2 = vld [vmem:[%s0] ss:$8 sm:$0xf]
    %v3 = vld [vmem:[%s0] ss:$8 sm:$0xf0]
    %vm4 = vcmask 1047556
    %v5 = vsel %vm4, %v3, %v2
    %vm6 = vcmask 130048
    %7 = vst.msk [vmem:[#allocation0] ss:$8 sm:$0xf] %vm6, %v5
    %8 = vst.msk [vmem:[#allocation0] ss:$8 sm:$0xf0] %vm6, %v5
    %s9 = scalar_lea.vmem %s0, 64
    %v10 = vld [vmem:[%s9] ss:$8 sm:$0xf]
    %s11 = scalar_lea.vmem %s0, 64
    %v12 = vld [vmem:[%s11] ss:$8 sm:$0xf0]
    %vm13 = vcmask 1047556
    %v14 = vsel %vm13, %v12, %v10
    %vm15 = vcmask 130048
    %s16 = scalar_lea.vmem [#allocation0], 64
    %17 = vst.msk [vmem:[%s16] ss:$8 sm:$0xf] %vm15, %v14
    %s18 = scalar_lea.vmem [#allocation0], 64
    %19 = vst.msk [vmem:[%s18] ss:$8 sm:$0xf0] %vm15, %v14
    %s20 = scalar_lea.vmem %s0, 128
    %s21 = smov 3
    %v22 = vld [vmem:[%s20] ss:$8 sm:%s21]
    %vm23 = vcmask 130048
    %s24 = scalar_lea.vmem [#allocation0], 128
    %25 = vst.msk [vmem:[%s24] ss:$8 sm:$0x3] %vm23, %v22
    %s26 = scalar_lea.vmem %s0, 7
    %v27 = vld [vmem:[%s26] ss:$8 sm:$0xf]
    %s28 = scalar_lea.vmem %s0, 7
    %v29 = vld [vmem:[%s28] ss:$8 sm:$0xf0]
    %vm30 = vcmask 1047556
    %v31 = vsel %vm30, %v29, %v27
    %32 = vrot.lane.b32.xlu0 %v31, 112
    %v33 = vpop.permute.xlu0 %32
    %vm34 = vcmask 1048448
    %35 = vst.msk [vmem:[#allocation0] ss:$8 sm:$0xf] %vm34, %v33
    %36 = vst.msk [vmem:[#allocation0] ss:$8 sm:$0xf0] %vm34, %v33
    %s37 = scalar_lea.vmem %s0, 71
    %v38 = vld [vmem:[%s37] ss:$8 sm:$0xf]
    %s39 = scalar_lea.vmem %s0, 71
    %v40 = vld [vmem:[%s39] ss:$8 sm:$0xf0]
    %vm41 = vcmask 1047556
    %v42 = vsel %vm41, %v40, %v38
    %43 = vrot.lane.b32.xlu0 %v42, 112
    %v44 = vpop.permute.xlu0 %43
    %vm45 = vcmask 1048448
    %s46 = scalar_lea.vmem [#allocation0], 64
    %47 = vst.msk [vmem:[%s46] ss:$8 sm:$0xf] %vm45, %v44
    %s48 = scalar_lea.vmem [#allocation0], 64
    %49 = vst.msk [vmem:[%s48] ss:$8 sm:$0xf0] %vm45, %v44
    %s50 = scalar_lea.vmem %s0, 135
    %s51 = smov 3
    %v52 = vld [vmem:[%s50] ss:$8 sm:%s51]
    %53 = vrot.lane.b32.xlu0 %v52, 112
    %v54 = vpop.permute.xlu0 %53
    %vm55 = vcmask 1048448
    %s56 = scalar_lea.vmem [#allocation0], 128
    %57 = vst.msk [vmem:[%s56] ss:$8 sm:$0x3] %vm55, %v54
    %s58 = scalar_lea.vmem %s0, 6
    %v59 = vld [vmem:[%s58] ss:$8 sm:$0xf]
    %s60 = scalar_lea.vmem %s0, 6
    %v61 = vld [vmem:[%s60] ss:$8 sm:$0xf0]
    %vm62 = vcmask 1047556
    %v63 = vsel %vm62, %v61, %v59
    %64 = vrot.lane.b32.xlu0 %v63, 96
    %v65 = vpop.permute.xlu0 %64
    %vm66 = vcmask 917248
    %67 = vst.msk [vmem:[#allocation0] ss:$8 sm:$0xf] %vm66, %v65
    %68 = vst.msk [vmem:[#allocation0] ss:$8 sm:$0xf0] %vm66, %v65
    %s69 = scalar_lea.vmem %s0, 70
    %v70 = vld [vmem:[%s69] ss:$8 sm:$0xf]
    %s71 = scalar_lea.vmem %s0, 70
    %v72 = vld [vmem:[%s71] ss:$8 sm:$0xf0]
    %vm73 = vcmask 1047556
    %v74 = vsel %vm73, %v72, %v70
    %75 = vrot.lane.b32.xlu0 %v74, 96
    %v76 = vpop.permute.xlu0 %75
    %vm77 = vcmask 917248
    %s78 = scalar_lea.vmem [#allocation0], 64
    %79 = vst.msk [vmem:[%s78] ss:$8 sm:$0xf] %vm77, %v76
    %s80 = scalar_lea.vmem [#allocation0], 64
    %81 = vst.msk [vmem:[%s80] ss:$8 sm:$0xf0] %vm77, %v76
    %s82 = scalar_lea.vmem %s0, 134
    %s83 = smov 3
    %v84 = vld [vmem:[%s82] ss:$8 sm:%s83]
    %85 = vrot.lane.b32.xlu0 %v84, 96
    %v86 = vpop.permute.xlu0 %85
    %vm87 = vcmask 917248
    %s88 = scalar_lea.vmem [#allocation0], 128
    %89 = vst.msk [vmem:[%s88] ss:$8 sm:$0x3] %vm87, %v86
    %s90 = scalar_lea.vmem %s0, 5
    %v91 = vld [vmem:[%s90] ss:$8 sm:$0xf]
    %s92 = scalar_lea.vmem %s0, 5
    %v93 = vld [vmem:[%s92] ss:$8 sm:$0xf0]
    %vm94 = vcmask 1047556
    %v95 = vsel %vm94, %v93, %v91
    %96 = vrot.lane.b32.xlu0 %v95, 80
    %v97 = vpop.permute.xlu0 %96
    %vm98 = vcmask 786048
    %99 = vst.msk [vmem:[#allocation0] ss:$8 sm:$0xf] %vm98, %v97
    %100 = vst.msk [vmem:[#allocation0] ss:$8 sm:$0xf0] %vm98, %v97
    %s101 = scalar_lea.vmem %s0, 69
    %v102 = vld [vmem:[%s101] ss:$8 sm:$0xf]
    %s103 = scalar_lea.vmem %s0, 69
    %v104 = vld [vmem:[%s103] ss:$8 sm:$0xf0]
    %vm105 = vcmask 1047556
    %v106 = vsel %vm105, %v104, %v102
    %107 = vrot.lane.b32.xlu0 %v106, 80
    %v108 = vpop.permute.xlu0 %107
    %vm109 = vcmask 786048
    %s110 = scalar_lea.vmem [#allocation0], 64
    %111 = vst.msk [vmem:[%s110] ss:$8 sm:$0xf] %vm109, %v108
    %s112 = scalar_lea.vmem [#allocation0], 64
    %113 = vst.msk [vmem:[%s112] ss:$8 sm:$0xf0] %vm109, %v108
    %s114 = scalar_lea.vmem %s0, 133
    %s115 = smov 3
    %v116 = vld [vmem:[%s114] ss:$8 sm:%s115]
    %117 = vrot.lane.b32.xlu0 %v116, 80
    %v118 = vpop.permute.xlu0 %117
    %vm119 = vcmask 786048
    %s120 = scalar_lea.vmem [#allocation0], 128
    %121 = vst.msk [vmem:[%s120] ss:$8 sm:$0x3] %vm119, %v118
    %s122 = scalar_lea.vmem %s0, 4
    %v123 = vld [vmem:[%s122] ss:$8 sm:$0xf]
    %s124 = scalar_lea.vmem %s0, 4
    %v125 = vld [vmem:[%s124] ss:$8 sm:$0xf0]
    %vm126 = vcmask 1047556
    %v127 = vsel %vm126, %v125, %v123
    %128 = vrot.lane.b32.xlu0 %v127, 64
    %v129 = vpop.permute.xlu0 %128
    %vm130 = vcmask 654848
    %131 = vst.msk [vmem:[#allocation0] ss:$8 sm:$0xf] %vm130, %v129
    %132 = vst.msk [vmem:[#allocation0] ss:$8 sm:$0xf0] %vm130, %v129
    %s133 = scalar_lea.vmem %s0, 68
    %v134 = vld [vmem:[%s133] ss:$8 sm:$0xf]
    %s135 = scalar_lea.vmem %s0, 68
    %v136 = vld [vmem:[%s135] ss:$8 sm:$0xf0]
    %vm137 = vcmask 1047556
    %v138 = vsel %vm137, %v136, %v134
    %139 = vrot.lane.b32.xlu0 %v138, 64
    %v140 = vpop.permute.xlu0 %139
    %vm141 = vcmask 654848
    %s142 = scalar_lea.vmem [#allocation0], 64
    %143 = vst.msk [vmem:[%s142] ss:$8 sm:$0xf] %vm141, %v140
    %s144 = scalar_lea.vmem [#allocation0], 64
    %145 = vst.msk [vmem:[%s144] ss:$8 sm:$0xf0] %vm141, %v140
    %s146 = scalar_lea.vmem %s0, 132
    %s147 = smov 3
    %v148 = vld [vmem:[%s146] ss:$8 sm:%s147]
    %149 = vrot.lane.b32.xlu0 %v148, 64
    %v150 = vpop.permute.xlu0 %149
    %vm151 = vcmask 654848
    %s152 = scalar_lea.vmem [#allocation0], 128
    %153 = vst.msk [vmem:[%s152] ss:$8 sm:$0x3] %vm151, %v150
    %s154 = scalar_lea.vmem %s0, 3
    %v155 = vld [vmem:[%s154] ss:$8 sm:$0xf]
    %s156 = scalar_lea.vmem %s0, 3
    %v157 = vld [vmem:[%s156] ss:$8 sm:$0xf0]
    %vm158 = vcmask 1047556
    %v159 = vsel %vm158, %v157, %v155
    %160 = vrot.lane.b32.xlu0 %v159, 48
    %v161 = vpop.permute.xlu0 %160
    %vm162 = vcmask 523648
    %163 = vst.msk [vmem:[#allocation0] ss:$8 sm:$0xf] %vm162, %v161
    %164 = vst.msk [vmem:[#allocation0] ss:$8 sm:$0xf0] %vm162, %v161
    %s165 = scalar_lea.vmem %s0, 67
    %v166 = vld [vmem:[%s165] ss:$8 sm:$0xf]
    %s167 = scalar_lea.vmem %s0, 67
    %v168 = vld [vmem:[%s167] ss:$8 sm:$0xf0]
    %vm169 = vcmask 1047556
    %v170 = vsel %vm169, %v168, %v166
    %171 = vrot.lane.b32.xlu0 %v170, 48
    %v172 = vpop.permute.xlu0 %171
    %vm173 = vcmask 523648
    %s174 = scalar_lea.vmem [#allocation0], 64
    %175 = vst.msk [vmem:[%s174] ss:$8 sm:$0xf] %vm173, %v172
    %s176 = scalar_lea.vmem [#allocation0], 64
    %177 = vst.msk [vmem:[%s176] ss:$8 sm:$0xf0] %vm173, %v172
    %s178 = scalar_lea.vmem %s0, 131
    %s179 = smov 3
    %v180 = vld [vmem:[%s178] ss:$8 sm:%s179]
    %181 = vrot.lane.b32.xlu0 %v180, 48
    %v182 = vpop.permute.xlu0 %181
    %vm183 = vcmask 523648
    %s184 = scalar_lea.vmem [#allocation0], 128
    %185 = vst.msk [vmem:[%s184] ss:$8 sm:$0x3] %vm183, %v182
    %s186 = scalar_lea.vmem %s0, 2
    %v187 = vld [vmem:[%s186] ss:$8 sm:$0xf]
    %s188 = scalar_lea.vmem %s0, 2
    %v189 = vld [vmem:[%s188] ss:$8 sm:$0xf0]
    %vm190 = vcmask 1047556
    %v191 = vsel %vm190, %v189, %v187
    %192 = vrot.lane.b32.xlu0 %v191, 32
    %v193 = vpop.permute.xlu0 %192
    %vm194 = vcmask 392448
    %195 = vst.msk [vmem:[#allocation0] ss:$8 sm:$0xf] %vm194, %v193
    %196 = vst.msk [vmem:[#allocation0] ss:$8 sm:$0xf0] %vm194, %v193
    %s197 = scalar_lea.vmem %s0, 66
    %v198 = vld [vmem:[%s197] ss:$8 sm:$0xf]
    %s199 = scalar_lea.vmem %s0, 66
    %v200 = vld [vmem:[%s199] ss:$8 sm:$0xf0]
    %vm201 = vcmask 1047556
    %v202 = vsel %vm201, %v200, %v198
    %203 = vrot.lane.b32.xlu0 %v202, 32
    %v204 = vpop.permute.xlu0 %203
    %vm205 = vcmask 392448
    %s206 = scalar_lea.vmem [#allocation0], 64
    %207 = vst.msk [vmem:[%s206] ss:$8 sm:$0xf] %vm205, %v204
    %s208 = scalar_lea.vmem [#allocation0], 64
    %209 = vst.msk [vmem:[%s208] ss:$8 sm:$0xf0] %vm205, %v204
    %s210 = scalar_lea.vmem %s0, 130
    %s211 = smov 3
    %v212 = vld [vmem:[%s210] ss:$8 sm:%s211]
    %213 = vrot.lane.b32.xlu0 %v212, 32
    %v214 = vpop.permute.xlu0 %213
    %vm215 = vcmask 392448
    %s216 = scalar_lea.vmem [#allocation0], 128
    %217 = vst.msk [vmem:[%s216] ss:$8 sm:$0x3] %vm215, %v214
    %s218 = scalar_lea.vmem %s0, 1
    %v219 = vld [vmem:[%s218] ss:$8 sm:$0xf]
    %s220 = scalar_lea.vmem %s0, 1
    %v221 = vld [vmem:[%s220] ss:$8 sm:$0xf0]
    %vm222 = vcmask 1047556
    %v223 = vsel %vm222, %v221, %v219
    %224 = vrot.lane.b32.xlu0 %v223, 16
    %v225 = vpop.permute.xlu0 %224
    %vm226 = vcmask 261248
    %227 = vst.msk [vmem:[#allocation0] ss:$8 sm:$0xf] %vm226, %v225
    %228 = vst.msk [vmem:[#allocation0] ss:$8 sm:$0xf0] %vm226, %v225
    %s229 = scalar_lea.vmem %s0, 65
    %v230 = vld [vmem:[%s229] ss:$8 sm:$0xf]
    %s231 = scalar_lea.vmem %s0, 65
    %v232 = vld [vmem:[%s231] ss:$8 sm:$0xf0]
    %vm233 = vcmask 1047556
    %v234 = vsel %vm233, %v232, %v230
    %235 = vrot.lane.b32.xlu0 %v234, 16
    %v236 = vpop.permute.xlu0 %235
    %vm237 = vcmask 261248
    %s238 = scalar_lea.vmem [#allocation0], 64
    %239 = vst.msk [vmem:[%s238] ss:$8 sm:$0xf] %vm237, %v236
    %s240 = scalar_lea.vmem [#allocation0], 64
    %241 = vst.msk [vmem:[%s240] ss:$8 sm:$0xf0] %vm237, %v236
    %s242 = scalar_lea.vmem %s0, 129
    %s243 = smov 3
    %v244 = vld [vmem:[%s242] ss:$8 sm:%s243]
    %245 = vrot.lane.b32.xlu0 %v244, 16
    %v246 = vpop.permute.xlu0 %245
    %vm247 = vcmask 261248
    %s248 = scalar_lea.vmem [#allocation0], 128
    %249 = vst.msk [vmem:[%s248] ss:$8 sm:$0x3] %vm247, %v246
    %s251 = sshll.u32 1, 1
    %s252 = ssub.s32 %s251, 1
    %v254 = vld [vmem:[#allocation0] sm:%s252]
    %s255 = sshll.u32 1, 1
    %s256 = ssub.s32 %s255, 1
    %257 = vst [vmem:[%s1] sm:%s256] %v254
    %s258 = scalar_lea.vmem [#allocation0], 8
    %v259 = vld [vmem:[%s258] sm:%s252]
    %s260 = sshll.u32 1, 1
    %s261 = ssub.s32 %s260, 1
    %s262 = scalar_lea.vmem %s1, 1
    %263 = vst [vmem:[%s262] sm:%s261] %v259
    %s264 = scalar_lea.vmem [#allocation0], 16
    %v265 = vld [vmem:[%s264] sm:%s252]
    %s266 = sshll.u32 1, 1
    %s267 = ssub.s32 %s266, 1
    %s268 = smul.addr 1, 2
    %s269 = scalar_lea.vmem %s1, %s268
    %270 = vst [vmem:[%s269] sm:%s267] %v265
    %s271 = scalar_lea.vmem [#allocation0], 24
    %v272 = vld [vmem:[%s271] sm:%s252]
    %s273 = sshll.u32 1, 1
    %s274 = ssub.s32 %s273, 1
    %s275 = smul.addr 1, 3
    %s276 = scalar_lea.vmem %s1, %s275
    %277 = vst [vmem:[%s276] sm:%s274] %v272
    %s278 = scalar_lea.vmem [#allocation0], 32
    %v279 = vld [vmem:[%s278] sm:%s252]
    %s280 = sshll.u32 1, 1
    %s281 = ssub.s32 %s280, 1
    %s282 = smul.addr 1, 4
    %s283 = scalar_lea.vmem %s1, %s282
    %284 = vst [vmem:[%s283] sm:%s281] %v279
    %s285 = scalar_lea.vmem [#allocation0], 40
    %v286 = vld [vmem:[%s285] sm:%s252]
    %s287 = sshll.u32 1, 1
    %s288 = ssub.s32 %s287, 1
    %s289 = smul.addr 1, 5
    %s290 = scalar_lea.vmem %s1, %s289
    %291 = vst [vmem:[%s290] sm:%s288] %v286
    %s292 = scalar_lea.vmem [#allocation0], 48
    %v293 = vld [vmem:[%s292] sm:%s252]
    %s294 = sshll.u32 1, 1
    %s295 = ssub.s32 %s294, 1
    %s296 = smul.addr 1, 6
    %s297 = scalar_lea.vmem %s1, %s296
    %298 = vst [vmem:[%s297] sm:%s295] %v293
    %s299 = scalar_lea.vmem [#allocation0], 56
    %v300 = vld [vmem:[%s299] sm:%s252]
    %s301 = sshll.u32 1, 1
    %s302 = ssub.s32 %s301, 1
    %s303 = smul.addr 1, 7
    %s304 = scalar_lea.vmem %s1, %s303
    %305 = vst [vmem:[%s304] sm:%s302] %v300
    %s306 = scalar_lea.vmem [#allocation0], 64
    %v307 = vld [vmem:[%s306] sm:%s252]
    %s308 = sshll.u32 1, 1
    %s309 = ssub.s32 %s308, 1
    %s310 = smul.addr 1, 8
    %s311 = scalar_lea.vmem %s1, %s310
    %312 = vst [vmem:[%s311] sm:%s309] %v307
    %s313 = scalar_lea.vmem [#allocation0], 72
    %v314 = vld [vmem:[%s313] sm:%s252]
    %s315 = sshll.u32 1, 1
    %s316 = ssub.s32 %s315, 1
    %s317 = smul.addr 1, 9
    %s318 = scalar_lea.vmem %s1, %s317
    %319 = vst [vmem:[%s318] sm:%s316] %v314
    %s320 = scalar_lea.vmem [#allocation0], 80
    %v321 = vld [vmem:[%s320] sm:%s252]
    %s322 = sshll.u32 1, 1
    %s323 = ssub.s32 %s322, 1
    %s324 = smul.addr 1, 10
    %s325 = scalar_lea.vmem %s1, %s324
    %326 = vst [vmem:[%s325] sm:%s323] %v321
    %s327 = scalar_lea.vmem [#allocation0], 88
    %v328 = vld [vmem:[%s327] sm:%s252]
    %s329 = sshll.u32 1, 1
    %s330 = ssub.s32 %s329, 1
    %s331 = smul.addr 1, 11
    %s332 = scalar_lea.vmem %s1, %s331
    %333 = vst [vmem:[%s332] sm:%s330] %v328
    %s334 = scalar_lea.vmem [#allocation0], 96
    %v335 = vld [vmem:[%s334] sm:%s252]
    %s336 = sshll.u32 1, 1
    %s337 = ssub.s32 %s336, 1
    %s338 = smul.addr 1, 12
    %s339 = scalar_lea.vmem %s1, %s338
    %340 = vst [vmem:[%s339] sm:%s337] %v335
    %s341 = scalar_lea.vmem [#allocation0], 104
    %v342 = vld [vmem:[%s341] sm:%s252]
    %s343 = sshll.u32 1, 1
    %s344 = ssub.s32 %s343, 1
    %s345 = smul.addr 1, 13
    %s346 = scalar_lea.vmem %s1, %s345
    %347 = vst [vmem:[%s346] sm:%s344] %v342
    %s348 = scalar_lea.vmem [#allocation0], 112
    %v349 = vld [vmem:[%s348] sm:%s252]
    %s350 = sshll.u32 1, 1
    %s351 = ssub.s32 %s350, 1
    %s352 = smul.addr 1, 14
    %s353 = scalar_lea.vmem %s1, %s352
    %354 = vst [vmem:[%s353] sm:%s351] %v349
    %s355 = scalar_lea.vmem [#allocation0], 120
    %v356 = vld [vmem:[%s355] sm:%s252]
    %s357 = sshll.u32 1, 1
    %s358 = ssub.s32 %s357, 1
    %s359 = smul.addr 1, 15
    %s360 = scalar_lea.vmem %s1, %s359
    %361 = vst [vmem:[%s360] sm:%s358] %v356
    %s362 = scalar_lea.vmem [#allocation0], 128
    %v363 = vld [vmem:[%s362] sm:%s252]
    %s364 = sshll.u32 1, 1
    %s365 = ssub.s32 %s364, 1
    %s366 = smul.addr 1, 16
    %s367 = scalar_lea.vmem %s1, %s366
    %368 = vst [vmem:[%s367] sm:%s365] %v363
    %s369 = scalar_lea.vmem [#allocation0], 136
    %v370 = vld [vmem:[%s369] sm:%s252]
    %s371 = sshll.u32 1, 1
    %s372 = ssub.s32 %s371, 1
    %s373 = smul.addr 1, 17
    %s374 = scalar_lea.vmem %s1, %s373
    %375 = vst [vmem:[%s374] sm:%s372] %v370

// kernel: tile.18
$region0: #{tile.18}
  #allocation0 [shape = 's32[1]{0}', space=sflag, size = 0x4, scoped, tag = 'scoped memory for tile.18']
  %s0 = inlined_call_operand.vmem [shape: f32[32], index: 0, kind: input, shape index: {}]
  %s1 = inlined_call_operand.vmem [shape: f32[36,32], index: 1, kind: output, shape index: {}]
  // Predicated region
  $region2: #{tile.18} parent=0 // pred_check
    _
  $region3: #{tile.18} parent=0 // pred_check_branch
    %3 = sbr.rel (0) target = $region5
  $region4: #{tile.18} parent=0 // pred_region
    _
  $region5: #{tile.18} parent=0 // pred_fallthru
    _
  %v4 = vld [vmem:[%s0] ss:$0 sm:$0xff]
  %5 = vst [vmem:[%s1] sm:$0xff] %v4
  %s6 = scalar_lea.vmem %s1, 8
  %7 = vst [vmem:[%s6] sm:$0xff] %v4
  %s8 = scalar_lea.vmem %s1, 16
  %9 = vst [vmem:[%s8] sm:$0xff] %v4
  %s10 = scalar_lea.vmem %s1, 24
  %11 = vst [vmem:[%s10] sm:$0xff] %v4
  %s12 = scalar_lea.vmem %s1, 32
  %13 = vst [vmem:[%s12] sm:$0xff] %v4

// kernel: tile.19
$region0: #{tile.19}
  %s0 = inlined_call_operand.vmem [shape: f32[36,32], index: 0, kind: input, shape index: {}]
  %s1 = inlined_call_operand.vmem [shape: f32[1,1152], index: 1, kind: output, shape index: {}]
  $region1: #{tile.19} parent=0
    #allocation0 [shape = 'u8[36864]{0}', space=vmem, size = 0x9000, scoped, tag = 'scoped mem for output reshape']
    %v2 = vld [vmem:[%s0] ss:$4 sm:$0xff]
    %vm3 = vcmask 261120
    %4 = vst.msk [vmem:[#allocation0] ss:$8 sm:$0xf] %vm3, %v2
    %5 = vst.msk [vmem:[#allocation0] ss:$8 sm:$0xf0] %vm3, %v2
    %s6 = scalar_lea.vmem %s0, 32
    %v7 = vld [vmem:[%s6] sm:$0x1]
    %vm8 = vcmask 261120
    %s9 = scalar_lea.vmem [#allocation0], 64
    %10 = vst.msk [vmem:[%s9] sm:$0x1] %vm8, %v7
    %s11 = scalar_lea.vmem %s0, 3
    %v12 = vld [vmem:[%s11] ss:$4 sm:$0xff]
    %13 = vrot.lane.b32.xlu0 %v12, 96
    %v14 = vpop.permute.xlu0 %13
    %vm15 = vcmask 1048320
    %16 = vst.msk [vmem:[#allocation0] ss:$8 sm:$0xf] %vm15, %v14
    %17 = vst.msk [vmem:[#allocation0] ss:$8 sm:$0xf0] %vm15, %v14
    %s18 = scalar_lea.vmem %s0, 35
    %v19 = vld [vmem:[%s18] sm:$0x1]
    %20 = vrot.lane.b32.xlu0 %v19, 96
    %v21 = vpop.permute.xlu0 %20
    %vm22 = vcmask 1048320
    %s23 = scalar_lea.vmem [#allocation0], 64
    %24 = vst.msk [vmem:[%s23] sm:$0x1] %vm22, %v21
    %s25 = scalar_lea.vmem %s0, 2
    %v26 = vld [vmem:[%s25] ss:$4 sm:$0xff]
    %27 = vrot.lane.b32.xlu0 %v26, 64
    %v28 = vpop.permute.xlu0 %27
    %vm29 = vcmask 785920
    %30 = vst.msk [vmem:[#allocation0] ss:$8 sm:$0xf] %vm29, %v28
    %31 = vst.msk [vmem:[#allocation0] ss:$8 sm:$0xf0] %vm29, %v28
    %s32 = scalar_lea.vmem %s0, 34
    %v33 = vld [vmem:[%s32] sm:$0x1]
    %34 = vrot.lane.b32.xlu0 %v33, 64
    %v35 = vpop.permute.xlu0 %34
    %vm36 = vcmask 785920
    %s37 = scalar_lea.vmem [#allocation0], 64
    %38 = vst.msk [vmem:[%s37] sm:$0x1] %vm36, %v35
    %s39 = scalar_lea.vmem %s0, 1
    %v40 = vld [vmem:[%s39] ss:$4 sm:$0xff]
    %41 = vrot.lane.b32.xlu0 %v40, 32
    %v42 = vpop.permute.xlu0 %41
    %vm43 = vcmask 523520
    %44 = vst.msk [vmem:[#allocation0] ss:$8 sm:$0xf] %vm43, %v42
    %45 = vst.msk [vmem:[#allocation0] ss:$8 sm:$0xf0] %vm43, %v42
    %s46 = scalar_lea.vmem %s0, 33
    %v47 = vld [vmem:[%s46] sm:$0x1]
    %48 = vrot.lane.b32.xlu0 %v47, 32
    %v49 = vpop.permute.xlu0 %48
    %vm50 = vcmask 523520
    %s51 = scalar_lea.vmem [#allocation0], 64
    %52 = vst.msk [vmem:[%s51] sm:$0x1] %vm50, %v49
    %s54 = sshll.u32 1, 1
    %s55 = ssub.s32 %s54, 1
    %v57 = vld [vmem:[#allocation0] sm:%s55]
    %s58 = sshll.u32 1, 1
    %s59 = ssub.s32 %s58, 1
    %60 = vst [vmem:[%s1] sm:%s59] %v57
    %s61 = scalar_lea.vmem [#allocation0], 8
    %v62 = vld [vmem:[%s61] sm:%s55]
    %s63 = sshll.u32 1, 1
    %s64 = ssub.s32 %s63, 1
    %s65 = scalar_lea.vmem %s1, 1
    %66 = vst [vmem:[%s65] sm:%s64] %v62
    %s67 = scalar_lea.vmem [#allocation0], 16
    %v68 = vld [vmem:[%s67] sm:%s55]
    %s69 = sshll.u32 1, 1
    %s70 = ssub.s32 %s69, 1
    %s71 = smul.addr 1, 2
    %s72 = scalar_lea.vmem %s1, %s71
    %73 = vst [vmem:[%s72] sm:%s70] %v68
    %s74 = scalar_lea.vmem [#allocation0], 24
    %v75 = vld [vmem:[%s74] sm:%s55]
    %s76 = sshll.u32 1, 1
    %s77 = ssub.s32 %s76, 1
    %s78 = smul.addr 1, 3
    %s79 = scalar_lea.vmem %s1, %s78
    %80 = vst [vmem:[%s79] sm:%s77] %v75
    %s81 = scalar_lea.vmem [#allocation0], 32
    %v82 = vld [vmem:[%s81] sm:%s55]
    %s83 = sshll.u32 1, 1
    %s84 = ssub.s32 %s83, 1
    %s85 = smul.addr 1, 4
    %s86 = scalar_lea.vmem %s1, %s85
    %87 = vst [vmem:[%s86] sm:%s84] %v82
    %s88 = scalar_lea.vmem [#allocation0], 40
    %v89 = vld [vmem:[%s88] sm:%s55]
    %s90 = sshll.u32 1, 1
    %s91 = ssub.s32 %s90, 1
    %s92 = smul.addr 1, 5
    %s93 = scalar_lea.vmem %s1, %s92
    %94 = vst [vmem:[%s93] sm:%s91] %v89
    %s95 = scalar_lea.vmem [#allocation0], 48
    %v96 = vld [vmem:[%s95] sm:%s55]
    %s97 = sshll.u32 1, 1
    %s98 = ssub.s32 %s97, 1
    %s99 = smul.addr 1, 6
    %s100 = scalar_lea.vmem %s1, %s99
    %101 = vst [vmem:[%s100] sm:%s98] %v96
    %s102 = scalar_lea.vmem [#allocation0], 56
    %v103 = vld [vmem:[%s102] sm:%s55]
    %s104 = sshll.u32 1, 1
    %s105 = ssub.s32 %s104, 1
    %s106 = smul.addr 1, 7
    %s107 = scalar_lea.vmem %s1, %s106
    %108 = vst [vmem:[%s107] sm:%s105] %v103
    %s109 = scalar_lea.vmem [#allocation0], 64
    %v110 = vld [vmem:[%s109] sm:%s55]
    %s111 = sshll.u32 1, 1
    %s112 = ssub.s32 %s111, 1
    %s113 = smul.addr 1, 8
    %s114 = scalar_lea.vmem %s1, %s113
    %115 = vst [vmem:[%s114] sm:%s112] %v110

// kernel: cnn_forward.1
$region0: #{cnn_forward.1}
  #allocation0 [shape = 'u32[]', space=smem, size = 0x4, offset = 0x4, fixed_abs, tag = 'smem constant byte address 0x4 - core index']
  #allocation1 [shape = 'u32[144,128]{1,0:T(1,128)}', space=vmem, size = 0x12000, scoped, tag = 'internal scratch']
  %s0 = inlined_call_operand.vmem [shape: f32[8,144], index: 0, kind: input, shape index: {}]
  %s1 = inlined_call_operand.vmem [shape: bf16[144,2304], index: 1, kind: input, shape index: {}]
  %s2 = inlined_call_operand.vmem [shape: f32[1,2304], index: 2, kind: input, shape index: {}]
  %s3 = inlined_call_operand.vmem [shape: bf16[2304,1152], index: 3, kind: input, shape index: {}]
  %s4 = inlined_call_operand.vmem [shape: f32[1,1152], index: 4, kind: input, shape index: {}]
  %s5 = inlined_call_operand.vmem [shape: bf16[1152,128], index: 5, kind: input, shape index: {}]
  %s6 = inlined_call_operand.vmem [shape: f32[1,128], index: 6, kind: input, shape index: {}]
  %s7 = inlined_call_operand.vmem [shape: f32[8,128], index: 7, kind: output, shape index: {}]
  %s8 = sld [smem:[#allocation0]]
  $region38: #{cnn_forward.1} parent=0
    _
  %s10 = ssub.s32 1, %s8
  %s11 = scalar_select 0, %s10, %s8
  // Predicated region
  $region2: #{cnn_forward.1} parent=0 // pred_check
    _
  $region3: #{cnn_forward.1} parent=0 // pred_check_branch
    %13 = sbr.rel (0) target = $region5
  $region4: #{cnn_forward.1} parent=0 // pred_region
    _
  $region5: #{cnn_forward.1} parent=0 // pred_fallthru
    _
  // Predicated region
  $region6: #{cnn_forward.1} parent=0 // pred_check
    _
  $region7: #{cnn_forward.1} parent=0 // pred_check_branch
    %15 = sbr.rel (0) target = $region9
  $region8: #{cnn_forward.1} parent=0 // pred_region
    _
  $region9: #{cnn_forward.1} parent=0 // pred_fallthru
    _
  // Predicated region
  $region10: #{cnn_forward.1} parent=0 // pred_check
    _
  $region11: #{cnn_forward.1} parent=0 // pred_check_branch
    %17 = sbr.rel (0) target = $region13
  $region12: #{cnn_forward.1} parent=0 // pred_region
    _
  $region13: #{cnn_forward.1} parent=0 // pred_fallthru
    _
  // Predicated region
  $region14: #{cnn_forward.1} parent=0 // pred_check
    _
  $region15: #{cnn_forward.1} parent=0 // pred_check_branch
    %19 = sbr.rel (0) target = $region17
  $region16: #{cnn_forward.1} parent=0 // pred_region
    _
  $region17: #{cnn_forward.1} parent=0 // pred_fallthru
    _
  // Predicated region
  $region18: #{cnn_forward.1} parent=0 // pred_check
    _
  $region19: #{cnn_forward.1} parent=0 // pred_check_branch
    %21 = sbr.rel (0) target = $region21
  $region20: #{cnn_forward.1} parent=0 // pred_region
    _
  $region21: #{cnn_forward.1} parent=0 // pred_fallthru
    _
  // Predicated region
  $region22: #{cnn_forward.1} parent=0 // pred_check
    _
  $region23: #{cnn_forward.1} parent=0 // pred_check_branch
    %23 = sbr.rel (0) target = $region25
  $region24: #{cnn_forward.1} parent=0 // pred_region
    _
  $region25: #{cnn_forward.1} parent=0 // pred_fallthru
    _
  // Predicated region
  $region26: #{cnn_forward.1} parent=0 // pred_check
    _
  $region27: #{cnn_forward.1} parent=0 // pred_check_branch
    %25 = sbr.rel (0) target = $region29
  $region28: #{cnn_forward.1} parent=0 // pred_region
    _
  $region29: #{cnn_forward.1} parent=0 // pred_fallthru
    _
  %v27 = vld [vmem:[%s0] sm:$0xff]
  %v28 = vld [vmem:[%s0 + $0x8] sm:$0xff]
  %v29 = vpack.c.bf16 %v27, %v27
  %v30 = vpack.c.bf16 %v28, %v28
  %v31 = vld [vmem:[%s1] sm:$0xff]
  %v32 = vld [vmem:[%s1 + $0x8] sm:$0xff]
  %v33 = vld [vmem:[%s1 + $0x10] sm:$0xff]
  %v34 = vld [vmem:[%s1 + $0x18] sm:$0xff]
  %v35 = vld [vmem:[%s1 + $0x20] sm:$0xff]
  %v36 = vld [vmem:[%s1 + $0x28] sm:$0xff]
  %v37 = vld [vmem:[%s1 + $0x30] sm:$0xff]
  %v38 = vld [vmem:[%s1 + $0x38] sm:$0xff]
  %v39 = vld [vmem:[%s1 + $0x40] sm:$0xff]
  %v40 = vld [vmem:[%s1 + $0x48] sm:$0xff]
  %v41 = vld [vmem:[%s1 + $0x50] sm:$0xff]
  %v42 = vld [vmem:[%s1 + $0x58] sm:$0xff]
  %v43 = vld [vmem:[%s1 + $0x60] sm:$0xff]
  %v44 = vld [vmem:[%s1 + $0x68] sm:$0xff]
  %v45 = vld [vmem:[%s1 + $0x70] sm:$0xff]
  %v46 = vld [vmem:[%s1 + $0x78] sm:$0xff]
  %v47 = vld [vmem:[%s1 + $0x80] sm:$0xff]
  %v48 = vld [vmem:[%s1 + $0x88] sm:$0xff]
  %v49 = vld [vmem:[%s1 + $0x90] sm:$0xff]
  %v50 = vld [vmem:[%s1 + $0x98] sm:$0xff]
  %v51 = vld [vmem:[%s1 + $0xa0] sm:$0xff]
  %v52 = vld [vmem:[%s1 + $0xa8] sm:$0xff]
  %v53 = vld [vmem:[%s1 + $0xb0] sm:$0xff]
  %v54 = vld [vmem:[%s1 + $0xb8] sm:$0xff]
  %v55 = vld [vmem:[%s1 + $0xc0] sm:$0xff]
  %v56 = vld [vmem:[%s1 + $0xc8] sm:$0xff]
  %v57 = vld [vmem:[%s1 + $0xd0] sm:$0xff]
  %v58 = vld [vmem:[%s1 + $0xd8] sm:$0xff]
  %v59 = vld [vmem:[%s1 + $0xe0] sm:$0xff]
  %v60 = vld [vmem:[%s1 + $0xe8] sm:$0xff]
  %v61 = vld [vmem:[%s1 + $0xf0] sm:$0xff]
  %v62 = vld [vmem:[%s1 + $0xf8] sm:$0xff]
  %v63 = vld [vmem:[%s1 + $0x100] sm:$0xff]
  %v64 = vld [vmem:[%s1 + $0x108] sm:$0xff]
  %v65 = vld [vmem:[%s1 + $0x110] sm:$0xff]
  %v66 = vld [vmem:[%s1 + $0x118] sm:$0xff]
  %v67 = vld [vmem:[%s1 + $0x120] sm:$0xff]
  %v68 = vld [vmem:[%s1 + $0x128] sm:$0xff]
  %v69 = vld [vmem:[%s1 + $0x130] sm:$0xff]
  %v70 = vld [vmem:[%s1 + $0x138] sm:$0xff]
  %v71 = vld [vmem:[%s1 + $0x140] sm:$0xff]
  %v72 = vld [vmem:[%s1 + $0x148] sm:$0xff]
  %v73 = vld [vmem:[%s1 + $0x150] sm:$0xff]
  %v74 = vld [vmem:[%s1 + $0x158] sm:$0xff]
  %v75 = vld [vmem:[%s1 + $0x160] sm:$0xff]
  %v76 = vld [vmem:[%s1 + $0x168] sm:$0xff]
  %v77 = vld [vmem:[%s1 + $0x170] sm:$0xff]
  %v78 = vld [vmem:[%s1 + $0x178] sm:$0xff]
  %v79 = vld [vmem:[%s1 + $0x180] sm:$0xff]
  %v80 = vld [vmem:[%s1 + $0x188] sm:$0xff]
  %v81 = vld [vmem:[%s1 + $0x190] sm:$0xff]
  %v82 = vld [vmem:[%s1 + $0x198] sm:$0xff]
  %v83 = vld [vmem:[%s1 + $0x1a0] sm:$0xff]
  %v84 = vld [vmem:[%s1 + $0x1a8] sm:$0xff]
  %v85 = vld [vmem:[%s1 + $0x1b0] sm:$0xff]
  %v86 = vld [vmem:[%s1 + $0x1b8] sm:$0xff]
  %v87 = vld [vmem:[%s1 + $0x1c0] sm:$0xff]
  %v88 = vld [vmem:[%s1 + $0x1c8] sm:$0xff]
  %v89 = vld [vmem:[%s1 + $0x1d0] sm:$0xff]
  %v90 = vld [vmem:[%s1 + $0x1d8] sm:$0xff]
  %v91 = vld [vmem:[%s1 + $0x1e0] sm:$0xff]
  %v92 = vld [vmem:[%s1 + $0x1e8] sm:$0xff]
  %v93 = vld [vmem:[%s1 + $0x1f0] sm:$0xff]
  %v94 = vld [vmem:[%s1 + $0x1f8] sm:$0xff]
  %v95 = vld [vmem:[%s1 + $0x200] sm:$0xff]
  %v96 = vld [vmem:[%s1 + $0x208] sm:$0xff]
  %v97 = vld [vmem:[%s1 + $0x210] sm:$0xff]
  %v98 = vld [vmem:[%s1 + $0x218] sm:$0xff]
  %v99 = vld [vmem:[%s1 + $0x220] sm:$0xff]
  %v100 = vld [vmem:[%s1 + $0x228] sm:$0xff]
  %v101 = vld [vmem:[%s1 + $0x230] sm:$0xff]
  %v102 = vld [vmem:[%s1 + $0x238] sm:$0xff]
  %v103 = vld [vmem:[%s1 + $0x240] sm:$0xff]
  %v104 = vld [vmem:[%s1 + $0x248] sm:$0xff]
  %v105 = vld [vmem:[%s1 + $0x250] sm:$0xff]
  %v106 = vld [vmem:[%s1 + $0x258] sm:$0xff]
  %v107 = vld [vmem:[%s1 + $0x260] sm:$0xff]
  %v108 = vld [vmem:[%s1 + $0x268] sm:$0xff]
  %v109 = vld [vmem:[%s1 + $0x270] sm:$0xff]
  %v110 = vld [vmem:[%s1 + $0x278] sm:$0xff]
  %v111 = vld [vmem:[%s1 + $0x280] sm:$0xff]
  %v112 = vld [vmem:[%s1 + $0x288] sm:$0xff]
  %v113 = vld [vmem:[%s1 + $0x290] sm:$0xff]
  %v114 = vld [vmem:[%s1 + $0x298] sm:$0xff]
  %v115 = vld [vmem:[%s1 + $0x2a0] sm:$0xff]
  %v116 = vld [vmem:[%s1 + $0x2a8] sm:$0xff]
  %v117 = vld [vmem:[%s1 + $0x2b0] sm:$0xff]
  %v118 = vld [vmem:[%s1 + $0x2b8] sm:$0xff]
  %v119 = vld [vmem:[%s1 + $0x2c0] sm:$0xff]
  %v120 = vld [vmem:[%s1 + $0x2c8] sm:$0xff]
  %v121 = vld [vmem:[%s1 + $0x2d0] sm:$0xff]
  %v122 = vld [vmem:[%s1 + $0x2d8] sm:$0xff]
  %v123 = vld [vmem:[%s1 + $0x2e0] sm:$0xff]
  %v124 = vld [vmem:[%s1 + $0x2e8] sm:$0xff]
  %v125 = vld [vmem:[%s1 + $0x2f0] sm:$0xff]
  %v126 = vld [vmem:[%s1 + $0x2f8] sm:$0xff]
  %v127 = vld [vmem:[%s1 + $0x300] sm:$0xff]
  %v128 = vld [vmem:[%s1 + $0x308] sm:$0xff]
  %v129 = vld [vmem:[%s1 + $0x310] sm:$0xff]
  %v130 = vld [vmem:[%s1 + $0x318] sm:$0xff]
  %v131 = vld [vmem:[%s1 + $0x320] sm:$0xff]
  %v132 = vld [vmem:[%s1 + $0x328] sm:$0xff]
  %v133 = vld [vmem:[%s1 + $0x330] sm:$0xff]
  %v134 = vld [vmem:[%s1 + $0x338] sm:$0xff]
  %v135 = vld [vmem:[%s1 + $0x340] sm:$0xff]
  %v136 = vld [vmem:[%s1 + $0x348] sm:$0xff]
  %v137 = vld [vmem:[%s1 + $0x350] sm:$0xff]
  %v138 = vld [vmem:[%s1 + $0x358] sm:$0xff]
  %v139 = vld [vmem:[%s1 + $0x360] sm:$0xff]
  %v140 = vld [vmem:[%s1 + $0x368] sm:$0xff]
  %v141 = vld [vmem:[%s1 + $0x370] sm:$0xff]
  %v142 = vld [vmem:[%s1 + $0x378] sm:$0xff]
  %v143 = vld [vmem:[%s1 + $0x380] sm:$0xff]
  %v144 = vld [vmem:[%s1 + $0x388] sm:$0xff]
  %v145 = vld [vmem:[%s1 + $0x390] sm:$0xff]
  %v146 = vld [vmem:[%s1 + $0x398] sm:$0xff]
  %v147 = vld [vmem:[%s1 + $0x3a0] sm:$0xff]
  %v148 = vld [vmem:[%s1 + $0x3a8] sm:$0xff]
  %v149 = vld [vmem:[%s1 + $0x3b0] sm:$0xff]
  %v150 = vld [vmem:[%s1 + $0x3b8] sm:$0xff]
  %v151 = vld [vmem:[%s1 + $0x3c0] sm:$0xff]
  %v152 = vld [vmem:[%s1 + $0x3c8] sm:$0xff]
  %v153 = vld [vmem:[%s1 + $0x3d0] sm:$0xff]
  %v154 = vld [vmem:[%s1 + $0x3d8] sm:$0xff]
  %v155 = vld [vmem:[%s1 + $0x3e0] sm:$0xff]
  %v156 = vld [vmem:[%s1 + $0x3e8] sm:$0xff]
  %v157 = vld [vmem:[%s1 + $0x3f0] sm:$0xff]
  %v158 = vld [vmem:[%s1 + $0x3f8] sm:$0xff]
  %v159 = vld [vmem:[%s1 + $0x400] sm:$0xff]
  %v160 = vld [vmem:[%s1 + $0x408] sm:$0xff]
  %v161 = vld [vmem:[%s1 + $0x410] sm:$0xff]
  %v162 = vld [vmem:[%s1 + $0x418] sm:$0xff]
  %v163 = vld [vmem:[%s1 + $0x420] sm:$0xff]
  %v164 = vld [vmem:[%s1 + $0x428] sm:$0xff]
  %v165 = vld [vmem:[%s1 + $0x430] sm:$0xff]
  %v166 = vld [vmem:[%s1 + $0x438] sm:$0xff]
  %v167 = vld [vmem:[%s1 + $0x440] sm:$0xff]
  %v168 = vld [vmem:[%s1 + $0x448] sm:$0xff]
  %v169 = vld [vmem:[%s1 + $0x450] sm:$0xff]
  %v170 = vld [vmem:[%s1 + $0x458] sm:$0xff]
  %v171 = vld [vmem:[%s1 + $0x460] sm:$0xff]
  %v172 = vld [vmem:[%s1 + $0x468] sm:$0xff]
  %v173 = vld [vmem:[%s1 + $0x470] sm:$0xff]
  %v174 = vld [vmem:[%s1 + $0x478] sm:$0xff]
  %v175 = vld [vmem:[%s1 + $0x480] sm:$0xff]
  %v176 = vld [vmem:[%s1 + $0x488] sm:$0xff]
  %v177 = vld [vmem:[%s1 + $0x490] sm:$0xff]
  %v178 = vld [vmem:[%s1 + $0x498] sm:$0xff]
  %v179 = vld [vmem:[%s1 + $0x4a0] sm:$0xff]
  %v180 = vld [vmem:[%s1 + $0x4a8] sm:$0xff]
  %v181 = vld [vmem:[%s1 + $0x4b0] sm:$0xff]
  %v182 = vld [vmem:[%s1 + $0x4b8] sm:$0xff]
  %v183 = vld [vmem:[%s1 + $0x4c0] sm:$0xff]
  %v184 = vld [vmem:[%s1 + $0x4c8] sm:$0xff]
  %v185 = vld [vmem:[%s1 + $0x4d0] sm:$0xff]
  %v186 = vld [vmem:[%s1 + $0x4d8] sm:$0xff]
  %v187 = vld [vmem:[%s1 + $0x4e0] sm:$0xff]
  %v188 = vld [vmem:[%s1 + $0x4e8] sm:$0xff]
  %v189 = vld [vmem:[%s1 + $0x4f0] sm:$0xff]
  %v190 = vld [vmem:[%s1 + $0x4f8] sm:$0xff]
  %v191 = vld [vmem:[%s1 + $0x500] sm:$0xff]
  %v192 = vld [vmem:[%s1 + $0x508] sm:$0xff]
  %v193 = vld [vmem:[%s2] sm:$0xff]
  %v194 = vld [vmem:[%s2 + $0x8] sm:$0xff]
  %v195 = vld [vmem:[%s2 + $0x10] sm:$0x3]
  %v199 = vlaneseq
  %v200 = vshrl.u32 %v199, 7
  %v201 = vsub.s32 0, %v200
  %v202 = vrot.slane %v193, %v201
  %v203 = vlaneseq
  %v204 = vshrl.u32 %v203, 7
  %v205 = vsub.s32 1, %v204
  %v206 = vrot.slane %v193, %v205
  %v207 = vlaneseq
  %v208 = vshrl.u32 %v207, 7
  %v209 = vsub.s32 2, %v208
  %v210 = vrot.slane %v193, %v209
  %v211 = vlaneseq
  %v212 = vshrl.u32 %v211, 7
  %v213 = vsub.s32 3, %v212
  %v214 = vrot.slane %v193, %v213
  %v215 = vlaneseq
  %v216 = vshrl.u32 %v215, 7
  %v217 = vsub.s32 4, %v216
  %v218 = vrot.slane %v193, %v217
  %v219 = vlaneseq
  %v220 = vshrl.u32 %v219, 7
  %v221 = vsub.s32 5, %v220
  %v222 = vrot.slane %v193, %v221
  %v223 = vlaneseq
  %v224 = vshrl.u32 %v223, 7
  %v225 = vsub.s32 6, %v224
  %v226 = vrot.slane %v193, %v225
  %v227 = vlaneseq
  %v228 = vshrl.u32 %v227, 7
  %v229 = vsub.s32 7, %v228
  %v230 = vrot.slane %v193, %v229
  %v231 = vlaneseq
  %v232 = vshrl.u32 %v231, 7
  %v233 = vsub.s32 0, %v232
  %v234 = vrot.slane %v194, %v233
  %v235 = vlaneseq
  %v236 = vshrl.u32 %v235, 7
  %v237 = vsub.s32 1, %v236
  %v238 = vrot.slane %v194, %v237
  %v239 = vlaneseq
  %v240 = vshrl.u32 %v239, 7
  %v241 = vsub.s32 2, %v240
  %v242 = vrot.slane %v194, %v241
  %v243 = vlaneseq
  %v244 = vshrl.u32 %v243, 7
  %v245 = vsub.s32 3, %v244
  %v246 = vrot.slane %v194, %v245
  %v247 = vlaneseq
  %v248 = vshrl.u32 %v247, 7
  %v249 = vsub.s32 4, %v248
  %v250 = vrot.slane %v194, %v249
  %v251 = vlaneseq
  %v252 = vshrl.u32 %v251, 7
  %v253 = vsub.s32 5, %v252
  %v254 = vrot.slane %v194, %v253
  %v255 = vlaneseq
  %v256 = vshrl.u32 %v255, 7
  %v257 = vsub.s32 6, %v256
  %v258 = vrot.slane %v194, %v257
  %v259 = vlaneseq
  %v260 = vshrl.u32 %v259, 7
  %v261 = vsub.s32 7, %v260
  %v262 = vrot.slane %v194, %v261
  %v263 = vlaneseq
  %v264 = vshrl.u32 %v263, 7
  %v265 = vsub.s32 0, %v264
  %v266 = vrot.slane %v195, %v265
  %v267 = vlaneseq
  %v268 = vshrl.u32 %v267, 7
  %v269 = vsub.s32 1, %v268
  %v270 = vrot.slane %v195, %v269
  %v451 = vunpack.c.l.b16 %v31
  %v452 = vunpack.c.h.b16 %v31
  %v453 = vunpack.c.l.b16 %v32
  %v454 = vunpack.c.h.b16 %v32
  %v455 = vunpack.c.l.b16 %v33
  %v456 = vunpack.c.h.b16 %v33
  %v457 = vunpack.c.l.b16 %v34
  %v458 = vunpack.c.h.b16 %v34
  %v459 = vunpack.c.l.b16 %v35
  %v460 = vunpack.c.h.b16 %v35
  %v461 = vunpack.c.l.b16 %v36
  %v462 = vunpack.c.h.b16 %v36
  %v463 = vunpack.c.l.b16 %v37
  %v464 = vunpack.c.h.b16 %v37
  %v465 = vunpack.c.l.b16 %v38
  %v466 = vunpack.c.h.b16 %v38
  %v467 = vunpack.c.l.b16 %v39
  %v468 = vunpack.c.h.b16 %v39
  %v469 = vunpack.c.l.b16 %v40
  %v470 = vunpack.c.h.b16 %v40
  %v471 = vunpack.c.l.b16 %v41
  %v472 = vunpack.c.h.b16 %v41
  %v473 = vunpack.c.l.b16 %v42
  %v474 = vunpack.c.h.b16 %v42
  %v475 = vunpack.c.l.b16 %v43
  %v476 = vunpack.c.h.b16 %v43
  %v477 = vunpack.c.l.b16 %v44
  %v478 = vunpack.c.h.b16 %v44
  %v479 = vunpack.c.l.b16 %v45
  %v480 = vunpack.c.h.b16 %v45
  %v481 = vunpack.c.l.b16 %v46
  %v482 = vunpack.c.h.b16 %v46
  %v483 = vunpack.c.l.b16 %v47
  %v484 = vunpack.c.h.b16 %v47
  %v485 = vunpack.c.l.b16 %v48
  %v486 = vunpack.c.h.b16 %v48
  %v487 = vunpack.c.l.b16 %v49
  %v488 = vunpack.c.h.b16 %v49
  %v489 = vunpack.c.l.b16 %v50
  %v490 = vunpack.c.h.b16 %v50
  %v491 = vunpack.c.l.b16 %v51
  %v492 = vunpack.c.h.b16 %v51
  %v493 = vunpack.c.l.b16 %v52
  %v494 = vunpack.c.h.b16 %v52
  %v495 = vunpack.c.l.b16 %v53
  %v496 = vunpack.c.h.b16 %v53
  %v497 = vunpack.c.l.b16 %v54
  %v498 = vunpack.c.h.b16 %v54
  %v499 = vunpack.c.l.b16 %v55
  %v500 = vunpack.c.h.b16 %v55
  %v501 = vunpack.c.l.b16 %v56
  %v502 = vunpack.c.h.b16 %v56
  %v503 = vunpack.c.l.b16 %v57
  %v504 = vunpack.c.h.b16 %v57
  %v505 = vunpack.c.l.b16 %v58
  %v506 = vunpack.c.h.b16 %v58
  %v507 = vunpack.c.l.b16 %v59
  %v508 = vunpack.c.h.b16 %v59
  %v509 = vunpack.c.l.b16 %v60
  %v510 = vunpack.c.h.b16 %v60
  %v511 = vunpack.c.l.b16 %v61
  %v512 = vunpack.c.h.b16 %v61
  %v513 = vunpack.c.l.b16 %v62
  %v514 = vunpack.c.h.b16 %v62
  %v515 = vunpack.c.l.b16 %v63
  %v516 = vunpack.c.h.b16 %v63
  %v517 = vunpack.c.l.b16 %v64
  %v518 = vunpack.c.h.b16 %v64
  %v519 = vunpack.c.l.b16 %v65
  %v520 = vunpack.c.h.b16 %v65
  %v521 = vunpack.c.l.b16 %v66
  %v522 = vunpack.c.h.b16 %v66
  %v523 = vunpack.c.l.b16 %v67
  %v524 = vunpack.c.h.b16 %v67
  %v525 = vunpack.c.l.b16 %v68
  %v526 = vunpack.c.h.b16 %v68
  %v527 = vunpack.c.l.b16 %v69
  %v528 = vunpack.c.h.b16 %v69
  %v529 = vunpack.c.l.b16 %v70
  %v530 = vunpack.c.h.b16 %v70
  %v531 = vunpack.c.l.b16 %v71
  %v532 = vunpack.c.h.b16 %v71
  %v533 = vunpack.c.l.b16 %v72
  %v534 = vunpack.c.h.b16 %v72
  %v535 = vunpack.c.l.b16 %v73
  %v536 = vunpack.c.h.b16 %v73
  %v537 = vunpack.c.l.b16 %v74
  %v538 = vunpack.c.h.b16 %v74
  %v539 = vunpack.c.l.b16 %v75
  %v540 = vunpack.c.h.b16 %v75
  %v541 = vunpack.c.l.b16 %v76
  %v542 = vunpack.c.h.b16 %v76
  %v543 = vunpack.c.l.b16 %v77
  %v544 = vunpack.c.h.b16 %v77
  %v545 = vunpack.c.l.b16 %v78
  %v546 = vunpack.c.h.b16 %v78
  %v547 = vunpack.c.l.b16 %v79
  %v548 = vunpack.c.h.b16 %v79
  %v549 = vunpack.c.l.b16 %v80
  %v550 = vunpack.c.h.b16 %v80
  %v551 = vunpack.c.l.b16 %v81
  %v552 = vunpack.c.h.b16 %v81
  %v553 = vunpack.c.l.b16 %v82
  %v554 = vunpack.c.h.b16 %v82
  %v555 = vunpack.c.l.b16 %v83
  %v556 = vunpack.c.h.b16 %v83
  %v557 = vunpack.c.l.b16 %v84
  %v558 = vunpack.c.h.b16 %v84
  %v559 = vunpack.c.l.b16 %v85
  %v560 = vunpack.c.h.b16 %v85
  %v561 = vunpack.c.l.b16 %v86
  %v562 = vunpack.c.h.b16 %v86
  %v563 = vunpack.c.l.b16 %v87
  %v564 = vunpack.c.h.b16 %v87
  %v565 = vunpack.c.l.b16 %v88
  %v566 = vunpack.c.h.b16 %v88
  %v567 = vunpack.c.l.b16 %v89
  %v568 = vunpack.c.h.b16 %v89
  %v569 = vunpack.c.l.b16 %v90
  %v570 = vunpack.c.h.b16 %v90
  %v571 = vunpack.c.l.b16 %v91
  %v572 = vunpack.c.h.b16 %v91
  %v573 = vunpack.c.l.b16 %v92
  %v574 = vunpack.c.h.b16 %v92
  %v575 = vunpack.c.l.b16 %v93
  %v576 = vunpack.c.h.b16 %v93
  %v577 = vunpack.c.l.b16 %v94
  %v578 = vunpack.c.h.b16 %v94
  %v579 = vunpack.c.l.b16 %v95
  %v580 = vunpack.c.h.b16 %v95
  %v581 = vunpack.c.l.b16 %v96
  %v582 = vunpack.c.h.b16 %v96
  %v583 = vunpack.c.l.b16 %v97
  %v584 = vunpack.c.h.b16 %v97
  %v585 = vunpack.c.l.b16 %v98
  %v586 = vunpack.c.h.b16 %v98
  %v587 = vunpack.c.l.b16 %v99
  %v588 = vunpack.c.h.b16 %v99
  %v589 = vunpack.c.l.b16 %v100
  %v590 = vunpack.c.h.b16 %v100
  %v591 = vunpack.c.l.b16 %v101
  %v592 = vunpack.c.h.b16 %v101
  %v593 = vunpack.c.l.b16 %v102
  %v594 = vunpack.c.h.b16 %v102
  %v595 = vunpack.c.l.b16 %v103
  %v596 = vunpack.c.h.b16 %v103
  %v597 = vunpack.c.l.b16 %v104
  %v598 = vunpack.c.h.b16 %v104
  %v599 = vunpack.c.l.b16 %v105
  %v600 = vunpack.c.h.b16 %v105
  %v601 = vunpack.c.l.b16 %v106
  %v602 = vunpack.c.h.b16 %v106
  %v603 = vunpack.c.l.b16 %v107
  %v604 = vunpack.c.h.b16 %v107
  %v605 = vunpack.c.l.b16 %v108
  %v606 = vunpack.c.h.b16 %v108
  %v607 = vunpack.c.l.b16 %v109
  %v608 = vunpack.c.h.b16 %v109
  %v609 = vunpack.c.l.b16 %v110
  %v610 = vunpack.c.h.b16 %v110
  %v611 = vunpack.c.l.b16 %v111
  %v612 = vunpack.c.h.b16 %v111
  %v613 = vunpack.c.l.b16 %v112
  %v614 = vunpack.c.h.b16 %v112
  %v615 = vunpack.c.l.b16 %v113
  %v616 = vunpack.c.h.b16 %v113
  %v617 = vunpack.c.l.b16 %v114
  %v618 = vunpack.c.h.b16 %v114
  %v619 = vunpack.c.l.b16 %v115
  %v620 = vunpack.c.h.b16 %v115
  %v621 = vunpack.c.l.b16 %v116
  %v622 = vunpack.c.h.b16 %v116
  %v623 = vunpack.c.l.b16 %v117
  %v624 = vunpack.c.h.b16 %v117
  %v625 = vunpack.c.l.b16 %v118
  %v626 = vunpack.c.h.b16 %v118
  %v627 = vunpack.c.l.b16 %v119
  %v628 = vunpack.c.h.b16 %v119
  %v629 = vunpack.c.l.b16 %v120
  %v630 = vunpack.c.h.b16 %v120
  %v631 = vunpack.c.l.b16 %v121
  %v632 = vunpack.c.h.b16 %v121
  %v633 = vunpack.c.l.b16 %v122
  %v634 = vunpack.c.h.b16 %v122
  %v635 = vunpack.c.l.b16 %v123
  %v636 = vunpack.c.h.b16 %v123
  %v637 = vunpack.c.l.b16 %v124
  %v638 = vunpack.c.h.b16 %v124
  %v639 = vunpack.c.l.b16 %v125
  %v640 = vunpack.c.h.b16 %v125
  %v641 = vunpack.c.l.b16 %v126
  %v642 = vunpack.c.h.b16 %v126
  %v643 = vunpack.c.l.b16 %v127
  %v644 = vunpack.c.h.b16 %v127
  %v645 = vunpack.c.l.b16 %v128
  %v646 = vunpack.c.h.b16 %v128
  %v647 = vunpack.c.l.b16 %v129
  %v648 = vunpack.c.h.b16 %v129
  %v649 = vunpack.c.l.b16 %v130
  %v650 = vunpack.c.h.b16 %v130
  %v651 = vunpack.c.l.b16 %v131
  %v652 = vunpack.c.h.b16 %v131
  %v653 = vunpack.c.l.b16 %v132
  %v654 = vunpack.c.h.b16 %v132
  %v655 = vunpack.c.l.b16 %v133
  %v656 = vunpack.c.h.b16 %v133
  %v657 = vunpack.c.l.b16 %v134
  %v658 = vunpack.c.h.b16 %v134
  %v659 = vunpack.c.l.b16 %v135
  %v660 = vunpack.c.h.b16 %v135
  %v661 = vunpack.c.l.b16 %v136
  %v662 = vunpack.c.h.b16 %v136
  %v663 = vunpack.c.l.b16 %v137
  %v664 = vunpack.c.h.b16 %v137
  %v665 = vunpack.c.l.b16 %v138
  %v666 = vunpack.c.h.b16 %v138
  %v667 = vunpack.c.l.b16 %v139
  %v668 = vunpack.c.h.b16 %v139
  %v669 = vunpack.c.l.b16 %v140
  %v670 = vunpack.c.h.b16 %v140
  %v671 = vunpack.c.l.b16 %v141
  %v672 = vunpack.c.h.b16 %v141
  %v673 = vunpack.c.l.b16 %v142
  %v674 = vunpack.c.h.b16 %v142
  %v675 = vunpack.c.l.b16 %v143
  %v676 = vunpack.c.h.b16 %v143
  %v677 = vunpack.c.l.b16 %v144
  %v678 = vunpack.c.h.b16 %v144
  %v679 = vunpack.c.l.b16 %v145
  %v680 = vunpack.c.h.b16 %v145
  %v681 = vunpack.c.l.b16 %v146
  %v682 = vunpack.c.h.b16 %v146
  %v683 = vunpack.c.l.b16 %v147
  %v684 = vunpack.c.h.b16 %v147
  %v685 = vunpack.c.l.b16 %v148
  %v686 = vunpack.c.h.b16 %v148
  %v687 = vunpack.c.l.b16 %v149
  %v688 = vunpack.c.h.b16 %v149
  %v689 = vunpack.c.l.b16 %v150
  %v690 = vunpack.c.h.b16 %v150
  %v691 = vunpack.c.l.b16 %v151
  %v692 = vunpack.c.h.b16 %v151
  %v693 = vunpack.c.l.b16 %v152
  %v694 = vunpack.c.h.b16 %v152
  %v695 = vunpack.c.l.b16 %v153
  %v696 = vunpack.c.h.b16 %v153
  %v697 = vunpack.c.l.b16 %v154
  %v698 = vunpack.c.h.b16 %v154
  %v699 = vunpack.c.l.b16 %v155
  %v700 = vunpack.c.h.b16 %v155
  %v701 = vunpack.c.l.b16 %v156
  %v702 = vunpack.c.h.b16 %v156
  %v703 = vunpack.c.l.b16 %v157
  %v704 = vunpack.c.h.b16 %v157
  %v705 = vunpack.c.l.b16 %v158
  %v706 = vunpack.c.h.b16 %v158
  %v707 = vunpack.c.l.b16 %v159
  %v708 = vunpack.c.h.b16 %v159
  %v709 = vunpack.c.l.b16 %v160
  %v710 = vunpack.c.h.b16 %v160
  %v711 = vunpack.c.l.b16 %v161
  %v712 = vunpack.c.h.b16 %v161
  %v713 = vunpack.c.l.b16 %v162
  %v714 = vunpack.c.h.b16 %v162
  %v715 = vunpack.c.l.b16 %v163
  %v716 = vunpack.c.h.b16 %v163
  %v717 = vunpack.c.l.b16 %v164
  %v718 = vunpack.c.h.b16 %v164
  %v719 = vunpack.c.l.b16 %v165
  %v720 = vunpack.c.h.b16 %v165
  %v721 = vunpack.c.l.b16 %v166
  %v722 = vunpack.c.h.b16 %v166
  %v723 = vunpack.c.l.b16 %v167
  %v724 = vunpack.c.h.b16 %v167
  %v725 = vunpack.c.l.b16 %v168
  %v726 = vunpack.c.h.b16 %v168
  %v727 = vunpack.c.l.b16 %v169
  %v728 = vunpack.c.h.b16 %v169
  %v729 = vunpack.c.l.b16 %v170
  %v730 = vunpack.c.h.b16 %v170
  %v731 = vunpack.c.l.b16 %v171
  %v732 = vunpack.c.h.b16 %v171
  %v733 = vunpack.c.l.b16 %v172
  %v734 = vunpack.c.h.b16 %v172
  %v735 = vunpack.c.l.b16 %v173
  %v736 = vunpack.c.h.b16 %v173
  %v737 = vunpack.c.l.b16 %v174
  %v738 = vunpack.c.h.b16 %v174
  %v739 = vunpack.c.l.b16 %v175
  %v740 = vunpack.c.h.b16 %v175
  %v741 = vunpack.c.l.b16 %v176
  %v742 = vunpack.c.h.b16 %v176
  %v743 = vunpack.c.l.b16 %v177
  %v744 = vunpack.c.h.b16 %v177
  %v745 = vunpack.c.l.b16 %v178
  %v746 = vunpack.c.h.b16 %v178
  %v747 = vunpack.c.l.b16 %v179
  %v748 = vunpack.c.h.b16 %v179
  %v749 = vunpack.c.l.b16 %v180
  %v750 = vunpack.c.h.b16 %v180
  %v751 = vunpack.c.l.b16 %v181
  %v752 = vunpack.c.h.b16 %v181
  %v753 = vunpack.c.l.b16 %v182
  %v754 = vunpack.c.h.b16 %v182
  %v755 = vunpack.c.l.b16 %v183
  %v756 = vunpack.c.h.b16 %v183
  %v757 = vunpack.c.l.b16 %v184
  %v758 = vunpack.c.h.b16 %v184
  %v759 = vunpack.c.l.b16 %v185
  %v760 = vunpack.c.h.b16 %v185
  %v761 = vunpack.c.l.b16 %v186
  %v762 = vunpack.c.h.b16 %v186
  %v763 = vunpack.c.l.b16 %v187
  %v764 = vunpack.c.h.b16 %v187
  %v765 = vunpack.c.l.b16 %v188
  %v766 = vunpack.c.h.b16 %v188
  %v767 = vunpack.c.l.b16 %v189
  %v768 = vunpack.c.h.b16 %v189
  %v769 = vunpack.c.l.b16 %v190
  %v770 = vunpack.c.h.b16 %v190
  %v771 = vunpack.c.l.b16 %v191
  %v772 = vunpack.c.h.b16 %v191
  %v773 = vunpack.c.l.b16 %v192
  %v774 = vunpack.c.h.b16 %v192
  %v775 = vpack.c.b16 %v469, %v451
  %v776 = vpack.c.b16 %v470, %v452
  %v777 = vpack.c.b16 %v471, %v453
  %v778 = vpack.c.b16 %v472, %v454
  %v779 = vpack.c.b16 %v473, %v455
  %v780 = vpack.c.b16 %v474, %v456
  %v781 = vpack.c.b16 %v475, %v457
  %v782 = vpack.c.b16 %v476, %v458
  %v783 = vpack.c.b16 %v477, %v459
  %v784 = vpack.c.b16 %v478, %v460
  %v785 = vpack.c.b16 %v479, %v461
  %v786 = vpack.c.b16 %v480, %v462
  %v787 = vpack.c.b16 %v481, %v463
  %v788 = vpack.c.b16 %v482, %v464
  %v789 = vpack.c.b16 %v483, %v465
  %v790 = vpack.c.b16 %v484, %v466
  %v791 = vpack.c.b16 %v485, %v467
  %v792 = vpack.c.b16 %v486, %v468
  %v793 = vpack.c.b16 %v505, %v487
  %v794 = vpack.c.b16 %v506, %v488
  %v795 = vpack.c.b16 %v507, %v489
  %v796 = vpack.c.b16 %v508, %v490
  %v797 = vpack.c.b16 %v509, %v491
  %v798 = vpack.c.b16 %v510, %v492
  %v799 = vpack.c.b16 %v511, %v493
  %v800 = vpack.c.b16 %v512, %v494
  %v801 = vpack.c.b16 %v513, %v495
  %v802 = vpack.c.b16 %v514, %v496
  %v803 = vpack.c.b16 %v515, %v497
  %v804 = vpack.c.b16 %v516, %v498
  %v805 = vpack.c.b16 %v517, %v499
  %v806 = vpack.c.b16 %v518, %v500
  %v807 = vpack.c.b16 %v519, %v501
  %v808 = vpack.c.b16 %v520, %v502
  %v809 = vpack.c.b16 %v521, %v503
  %v810 = vpack.c.b16 %v522, %v504
  %v811 = vpack.c.b16 %v541, %v523
  %v812 = vpack.c.b16 %v542, %v524
  %v813 = vpack.c.b16 %v543, %v525
  %v814 = vpack.c.b16 %v544, %v526
  %v815 = vpack.c.b16 %v545, %v527
  %v816 = vpack.c.b16 %v546, %v528
  %v817 = vpack.c.b16 %v547, %v529
  %v818 = vpack.c.b16 %v548, %v530
  %v819 = vpack.c.b16 %v549, %v531
  %v820 = vpack.c.b16 %v550, %v532
  %v821 = vpack.c.b16 %v551, %v533
  %v822 = vpack.c.b16 %v552, %v534
  %v823 = vpack.c.b16 %v553, %v535
  %v824 = vpack.c.b16 %v554, %v536
  %v825 = vpack.c.b16 %v555, %v537
  %v826 = vpack.c.b16 %v556, %v538
  %v827 = vpack.c.b16 %v557, %v539
  %v828 = vpack.c.b16 %v558, %v540
  %v829 = vpack.c.b16 %v577, %v559
  %v830 = vpack.c.b16 %v578, %v560
  %v831 = vpack.c.b16 %v579, %v561
  %v832 = vpack.c.b16 %v580, %v562
  %v833 = vpack.c.b16 %v581, %v563
  %v834 = vpack.c.b16 %v582, %v564
  %v835 = vpack.c.b16 %v583, %v565
  %v836 = vpack.c.b16 %v584, %v566
  %v837 = vpack.c.b16 %v585, %v567
  %v838 = vpack.c.b16 %v586, %v568
  %v839 = vpack.c.b16 %v587, %v569
  %v840 = vpack.c.b16 %v588, %v570
  %v841 = vpack.c.b16 %v589, %v571
  %v842 = vpack.c.b16 %v590, %v572
  %v843 = vpack.c.b16 %v591, %v573
  %v844 = vpack.c.b16 %v592, %v574
  %v845 = vpack.c.b16 %v593, %v575
  %v846 = vpack.c.b16 %v594, %v576
  %v847 = vpack.c.b16 %v613, %v595
  %v848 = vpack.c.b16 %v614, %v596
  %v849 = vpack.c.b16 %v615, %v597
  %v850 = vpack.c.b16 %v616, %v598
  %v851 = vpack.c.b16 %v617, %v599
  %v852 = vpack.c.b16 %v618, %v600
  %v853 = vpack.c.b16 %v619, %v601
  %v854 = vpack.c.b16 %v620, %v602
  %v855 = vpack.c.b16 %v621, %v603
  %v856 = vpack.c.b16 %v622, %v604
  %v857 = vpack.c.b16 %v623, %v605
  %v858 = vpack.c.b16 %v624, %v606
  %v859 = vpack.c.b16 %v625, %v607
  %v860 = vpack.c.b16 %v626, %v608
  %v861 = vpack.c.b16 %v627, %v609
  %v862 = vpack.c.b16 %v628, %v610
  %v863 = vpack.c.b16 %v629, %v611
  %v864 = vpack.c.b16 %v630, %v612
  %v865 = vpack.c.b16 %v649, %v631
  %v866 = vpack.c.b16 %v650, %v632
  %v867 = vpack.c.b16 %v651, %v633
  %v868 = vpack.c.b16 %v652, %v634
  %v869 = vpack.c.b16 %v653, %v635
  %v870 = vpack.c.b16 %v654, %v636
  %v871 = vpack.c.b16 %v655, %v637
  %v872 = vpack.c.b16 %v656, %v638
  %v873 = vpack.c.b16 %v657, %v639
  %v874 = vpack.c.b16 %v658, %v640
  %v875 = vpack.c.b16 %v659, %v641
  %v876 = vpack.c.b16 %v660, %v642
  %v877 = vpack.c.b16 %v661, %v643
  %v878 = vpack.c.b16 %v662, %v644
  %v879 = vpack.c.b16 %v663, %v645
  %v880 = vpack.c.b16 %v664, %v646
  %v881 = vpack.c.b16 %v665, %v647
  %v882 = vpack.c.b16 %v666, %v648
  %v883 = vpack.c.b16 %v685, %v667
  %v884 = vpack.c.b16 %v686, %v668
  %v885 = vpack.c.b16 %v687, %v669
  %v886 = vpack.c.b16 %v688, %v670
  %v887 = vpack.c.b16 %v689, %v671
  %v888 = vpack.c.b16 %v690, %v672
  %v889 = vpack.c.b16 %v691, %v673
  %v890 = vpack.c.b16 %v692, %v674
  %v891 = vpack.c.b16 %v693, %v675
  %v892 = vpack.c.b16 %v694, %v676
  %v893 = vpack.c.b16 %v695, %v677
  %v894 = vpack.c.b16 %v696, %v678
  %v895 = vpack.c.b16 %v697, %v679
  %v896 = vpack.c.b16 %v698, %v680
  %v897 = vpack.c.b16 %v699, %v681
  %v898 = vpack.c.b16 %v700, %v682
  %v899 = vpack.c.b16 %v701, %v683
  %v900 = vpack.c.b16 %v702, %v684
  %v901 = vpack.c.b16 %v721, %v703
  %v902 = vpack.c.b16 %v722, %v704
  %v903 = vpack.c.b16 %v723, %v705
  %v904 = vpack.c.b16 %v724, %v706
  %v905 = vpack.c.b16 %v725, %v707
  %v906 = vpack.c.b16 %v726, %v708
  %v907 = vpack.c.b16 %v727, %v709
  %v908 = vpack.c.b16 %v728, %v710
  %v909 = vpack.c.b16 %v729, %v711
  %v910 = vpack.c.b16 %v730, %v712
  %v911 = vpack.c.b16 %v731, %v713
  %v912 = vpack.c.b16 %v732, %v714
  %v913 = vpack.c.b16 %v733, %v715
  %v914 = vpack.c.b16 %v734, %v716
  %v915 = vpack.c.b16 %v735, %v717
  %v916 = vpack.c.b16 %v736, %v718
  %v917 = vpack.c.b16 %v737, %v719
  %v918 = vpack.c.b16 %v738, %v720
  %v919 = vpack.c.b16 %v757, %v739
  %v920 = vpack.c.b16 %v758, %v740
  %v921 = vpack.c.b16 %v759, %v741
  %v922 = vpack.c.b16 %v760, %v742
  %v923 = vpack.c.b16 %v761, %v743
  %v924 = vpack.c.b16 %v762, %v744
  %v925 = vpack.c.b16 %v763, %v745
  %v926 = vpack.c.b16 %v764, %v746
  %v927 = vpack.c.b16 %v765, %v747
  %v928 = vpack.c.b16 %v766, %v748
  %v929 = vpack.c.b16 %v767, %v749
  %v930 = vpack.c.b16 %v768, %v750
  %v931 = vpack.c.b16 %v769, %v751
  %v932 = vpack.c.b16 %v770, %v752
  %v933 = vpack.c.b16 %v771, %v753
  %v934 = vpack.c.b16 %v772, %v754
  %v935 = vpack.c.b16 %v773, %v755
  %v936 = vpack.c.b16 %v774, %v756
  %vm1099 = vcmask 130048
  %v1101 = vsel %vm1099, %v30, 0
  %1103 = vmatprep.subr.bf16.mxu0 %v902
  %1104 = vmatpush1.bf16.msra.mxu0 %v901
  %1105 = vmatprep.subr.bf16.mxu0 %v884
  %1106 = vmatpush1.bf16.msra.mxu0 %v883
  %1107 = vmatprep.subr.bf16.mxu0 %v866
  %1108 = vmatpush1.bf16.msra.mxu0 %v865
  %1109 = vmatprep.subr.bf16.mxu0 %v848
  %1110 = vmatpush1.bf16.msra.mxu0 %v847
  %1111 = vmatprep.subr.bf16.mxu0 %v830
  %1112 = vmatpush1.bf16.msra.mxu0 %v829
  %1113 = vmatprep.subr.bf16.mxu0 %v812
  %1114 = vmatpush1.bf16.msra.mxu0 %v811
  %1115 = vmatprep.subr.bf16.mxu0 %v794
  %1116 = vmatpush1.bf16.msra.mxu0 %v793
  %1117 = vmatprep.subr.bf16.mxu0 %v776
  %1118 = vmatpush1.bf16.msra.mxu0 %v775
  %1119 = vmatprep.subr.bf16.mxu0 0
  %1120 = vmatpush2.bf16.msra.mxu0 0
  %1121 = vmatprep.subr.bf16.mxu0 0
  %1122 = vmatpush2.bf16.msra.mxu0 0
  %1123 = vmatprep.subr.bf16.mxu0 0
  %1124 = vmatpush2.bf16.msra.mxu0 0
  %1125 = vmatprep.subr.bf16.mxu0 0
  %1126 = vmatpush2.bf16.msra.mxu0 0
  %1127 = vmatprep.subr.bf16.mxu0 0
  %1128 = vmatpush2.bf16.msra.mxu0 0
  %1129 = vmatprep.subr.bf16.mxu0 0
  %1130 = vmatpush2.bf16.msra.mxu0 0
  %1131 = vmatprep.subr.bf16.mxu0 0
  %1132 = vmatpush2.bf16.msra.mxu0 0
  %1133 = vmatprep.subr.bf16.mxu0 %v920
  %1134 = vmatpush2.bf16.msra.mxu0 %v919
  %1135 = vmatprep.mubr.bf16.mxu0 %v1101
  %1136 = vmatmul.mubr.bf16.gmra.mxu0 %v29
  %v1137 = vpop.f32.mrf.mxu0
  %v1138 = vadd.f32 %v202, %v1137
  %v1139 = vpop.f32.mrf.mxu0
  %v1140 = vadd.f32 %v206, %v1139
  %v1141 = vpop.f32.mrf.mxu0
  %v1142 = vpop.f32.mrf.mxu0
  %1143 = vdwg.mxu0
  %1144 = vmatprep.subr.bf16.mxu0 %v904
  %1145 = vmatpush1.bf16.msra.mxu0 %v903
  %1146 = vmatprep.subr.bf16.mxu0 %v886
  %1147 = vmatpush1.bf16.msra.mxu0 %v885
  %1148 = vmatprep.subr.bf16.mxu0 %v868
  %1149 = vmatpush1.bf16.msra.mxu0 %v867
  %1150 = vmatprep.subr.bf16.mxu0 %v850
  %1151 = vmatpush1.bf16.msra.mxu0 %v849
  %1152 = vmatprep.subr.bf16.mxu0 %v832
  %1153 = vmatpush1.bf16.msra.mxu0 %v831
  %1154 = vmatprep.subr.bf16.mxu0 %v814
  %1155 = vmatpush1.bf16.msra.mxu0 %v813
  %1156 = vmatprep.subr.bf16.mxu0 %v796
  %1157 = vmatpush1.bf16.msra.mxu0 %v795
  %1158 = vmatprep.subr.bf16.mxu0 %v778
  %1159 = vmatpush1.bf16.msra.mxu0 %v777
  %1160 = vmatprep.subr.bf16.mxu0 0
  %1161 = vmatpush2.bf16.msra.mxu0 0
  %1162 = vmatprep.subr.bf16.mxu0 0
  %1163 = vmatpush2.bf16.msra.mxu0 0
  %1164 = vmatprep.subr.bf16.mxu0 0
  %1165 = vmatpush2.bf16.msra.mxu0 0
  %1166 = vmatprep.subr.bf16.mxu0 0
  %1167 = vmatpush2.bf16.msra.mxu0 0
  %1168 = vmatprep.subr.bf16.mxu0 0
  %1169 = vmatpush2.bf16.msra.mxu0 0
  %1170 = vmatprep.subr.bf16.mxu0 0
  %1171 = vmatpush2.bf16.msra.mxu0 0
  %1172 = vmatprep.subr.bf16.mxu0 0
  %1173 = vmatpush2.bf16.msra.mxu0 0
  %1174 = vmatprep.subr.bf16.mxu0 %v922
  %1175 = vmatpush2.bf16.msra.mxu0 %v921
  %1176 = vmatprep.mubr.bf16.mxu0 %v1101
  %1177 = vmatmul.mubr.bf16.gmra.mxu0 %v29
  %v1178 = vpop.f32.mrf.mxu0
  %v1179 = vadd.f32 %v210, %v1178
  %v1180 = vpop.f32.mrf.mxu0
  %v1181 = vadd.f32 %v214, %v1180
  %v1182 = vpop.f32.mrf.mxu0
  %v1183 = vpop.f32.mrf.mxu0
  %1184 = vdwg.mxu0
  %1185 = vmatprep.subr.bf16.mxu0 %v906
  %1186 = vmatpush1.bf16.msra.mxu0 %v905
  %1187 = vmatprep.subr.bf16.mxu0 %v888
  %1188 = vmatpush1.bf16.msra.mxu0 %v887
  %1189 = vmatprep.subr.bf16.mxu0 %v870
  %1190 = vmatpush1.bf16.msra.mxu0 %v869
  %1191 = vmatprep.subr.bf16.mxu0 %v852
  %1192 = vmatpush1.bf16.msra.mxu0 %v851
  %1193 = vmatprep.subr.bf16.mxu0 %v834
  %1194 = vmatpush1.bf16.msra.mxu0 %v833
  %1195 = vmatprep.subr.bf16.mxu0 %v816
  %1196 = vmatpush1.bf16.msra.mxu0 %v815
  %1197 = vmatprep.subr.bf16.mxu0 %v798
  %1198 = vmatpush1.bf16.msra.mxu0 %v797
  %1199 = vmatprep.subr.bf16.mxu0 %v780
  %1200 = vmatpush1.bf16.msra.mxu0 %v779
  %1201 = vmatprep.subr.bf16.mxu0 0
  %1202 = vmatpush2.bf16.msra.mxu0 0
  %1203 = vmatprep.subr.bf16.mxu0 0
  %1204 = vmatpush2.bf16.msra.mxu0 0
  %1205 = vmatprep.subr.bf16.mxu0 0
  %1206 = vmatpush2.bf16.msra.mxu0 0
  %1207 = vmatprep.subr.bf16.mxu0 0
  %1208 = vmatpush2.bf16.msra.mxu0 0
  %1209 = vmatprep.subr.bf16.mxu0 0
  %1210 = vmatpush2.bf16.msra.mxu0 0
  %1211 = vmatprep.subr.bf16.mxu0 0
  %1212 = vmatpush2.bf16.msra.mxu0 0
  %1213 = vmatprep.subr.bf16.mxu0 0
  %1214 = vmatpush2.bf16.msra.mxu0 0
  %1215 = vmatprep.subr.bf16.mxu0 %v924
  %1216 = vmatpush2.bf16.msra.mxu0 %v923
  %1217 = vmatprep.mubr.bf16.mxu0 %v1101
  %1218 = vmatmul.mubr.bf16.gmra.mxu0 %v29
  %v1219 = vpop.f32.mrf.mxu0
  %v1220 = vadd.f32 %v218, %v1219
  %v1221 = vpop.f32.mrf.mxu0
  %v1222 = vadd.f32 %v222, %v1221
  %v1223 = vpop.f32.mrf.mxu0
  %v1224 = vpop.f32.mrf.mxu0
  %1225 = vdwg.mxu0
  %1226 = vmatprep.subr.bf16.mxu0 %v908
  %1227 = vmatpush1.bf16.msra.mxu0 %v907
  %1228 = vmatprep.subr.bf16.mxu0 %v890
  %1229 = vmatpush1.bf16.msra.mxu0 %v889
  %1230 = vmatprep.subr.bf16.mxu0 %v872
  %1231 = vmatpush1.bf16.msra.mxu0 %v871
  %1232 = vmatprep.subr.bf16.mxu0 %v854
  %1233 = vmatpush1.bf16.msra.mxu0 %v853
  %1234 = vmatprep.subr.bf16.mxu0 %v836
  %1235 = vmatpush1.bf16.msra.mxu0 %v835
  %1236 = vmatprep.subr.bf16.mxu0 %v818
  %1237 = vmatpush1.bf16.msra.mxu0 %v817
  %1238 = vmatprep.subr.bf16.mxu0 %v800
  %1239 = vmatpush1.bf16.msra.mxu0 %v799
  %1240 = vmatprep.subr.bf16.mxu0 %v782
  %1241 = vmatpush1.bf16.msra.mxu0 %v781
  %1242 = vmatprep.subr.bf16.mxu0 0
  %1243 = vmatpush2.bf16.msra.mxu0 0
  %1244 = vmatprep.subr.bf16.mxu0 0
  %1245 = vmatpush2.bf16.msra.mxu0 0
  %1246 = vmatprep.subr.bf16.mxu0 0
  %1247 = vmatpush2.bf16.msra.mxu0 0
  %1248 = vmatprep.subr.bf16.mxu0 0
  %1249 = vmatpush2.bf16.msra.mxu0 0
  %1250 = vmatprep.subr.bf16.mxu0 0
  %1251 = vmatpush2.bf16.msra.mxu0 0
  %1252 = vmatprep.subr.bf16.mxu0 0
  %1253 = vmatpush2.bf16.msra.mxu0 0
  %1254 = vmatprep.subr.bf16.mxu0 0
  %1255 = vmatpush2.bf16.msra.mxu0 0
  %1256 = vmatprep.subr.bf16.mxu0 %v926
  %1257 = vmatpush2.bf16.msra.mxu0 %v925
  %1258 = vmatprep.mubr.bf16.mxu0 %v1101
  %1259 = vmatmul.mubr.bf16.gmra.mxu0 %v29
  %v1260 = vpop.f32.mrf.mxu0
  %v1261 = vadd.f32 %v226, %v1260
  %v1262 = vpop.f32.mrf.mxu0
  %v1263 = vadd.f32 %v230, %v1262
  %v1264 = vpop.f32.mrf.mxu0
  %v1265 = vpop.f32.mrf.mxu0
  %1266 = vdwg.mxu0
  %1267 = vmatprep.subr.bf16.mxu0 %v910
  %1268 = vmatpush1.bf16.msra.mxu0 %v909
  %1269 = vmatprep.subr.bf16.mxu0 %v892
  %1270 = vmatpush1.bf16.msra.mxu0 %v891
  %1271 = vmatprep.subr.bf16.mxu0 %v874
  %1272 = vmatpush1.bf16.msra.mxu0 %v873
  %1273 = vmatprep.subr.bf16.mxu0 %v856
  %1274 = vmatpush1.bf16.msra.mxu0 %v855
  %1275 = vmatprep.subr.bf16.mxu0 %v838
  %1276 = vmatpush1.bf16.msra.mxu0 %v837
  %1277 = vmatprep.subr.bf16.mxu0 %v820
  %1278 = vmatpush1.bf16.msra.mxu0 %v819
  %1279 = vmatprep.subr.bf16.mxu0 %v802
  %1280 = vmatpush1.bf16.msra.mxu0 %v801
  %1281 = vmatprep.subr.bf16.mxu0 %v784
  %1282 = vmatpush1.bf16.msra.mxu0 %v783
  %1283 = vmatprep.subr.bf16.mxu0 0
  %1284 = vmatpush2.bf16.msra.mxu0 0
  %1285 = vmatprep.subr.bf16.mxu0 0
  %1286 = vmatpush2.bf16.msra.mxu0 0
  %1287 = vmatprep.subr.bf16.mxu0 0
  %1288 = vmatpush2.bf16.msra.mxu0 0
  %1289 = vmatprep.subr.bf16.mxu0 0
  %1290 = vmatpush2.bf16.msra.mxu0 0
  %1291 = vmatprep.subr.bf16.mxu0 0
  %1292 = vmatpush2.bf16.msra.mxu0 0
  %1293 = vmatprep.subr.bf16.mxu0 0
  %1294 = vmatpush2.bf16.msra.mxu0 0
  %1295 = vmatprep.subr.bf16.mxu0 0
  %1296 = vmatpush2.bf16.msra.mxu0 0
  %1297 = vmatprep.subr.bf16.mxu0 %v928
  %1298 = vmatpush2.bf16.msra.mxu0 %v927
  %1299 = vmatprep.mubr.bf16.mxu0 %v1101
  %1300 = vmatmul.mubr.bf16.gmra.mxu0 %v29
  %v1301 = vpop.f32.mrf.mxu0
  %v1302 = vadd.f32 %v234, %v1301
  %v1303 = vpop.f32.mrf.mxu0
  %v1304 = vadd.f32 %v238, %v1303
  %v1305 = vpop.f32.mrf.mxu0
  %v1306 = vpop.f32.mrf.mxu0
  %1307 = vdwg.mxu0
  %1308 = vmatprep.subr.bf16.mxu0 %v912
  %1309 = vmatpush1.bf16.msra.mxu0 %v911
  %1310 = vmatprep.subr.bf16.mxu0 %v894
  %1311 = vmatpush1.bf16.msra.mxu0 %v893
  %1312 = vmatprep.subr.bf16.mxu0 %v876
  %1313 = vmatpush1.bf16.msra.mxu0 %v875
  %1314 = vmatprep.subr.bf16.mxu0 %v858
  %1315 = vmatpush1.bf16.msra.mxu0 %v857
  %1316 = vmatprep.subr.bf16.mxu0 %v840
  %1317 = vmatpush1.bf16.msra.mxu0 %v839
  %1318 = vmatprep.subr.bf16.mxu0 %v822
  %1319 = vmatpush1.bf16.msra.mxu0 %v821
  %1320 = vmatprep.subr.bf16.mxu0 %v804
  %1321 = vmatpush1.bf16.msra.mxu0 %v803
  %1322 = vmatprep.subr.bf16.mxu0 %v786
  %1323 = vmatpush1.bf16.msra.mxu0 %v785
  %1324 = vmatprep.subr.bf16.mxu0 0
  %1325 = vmatpush2.bf16.msra.mxu0 0
  %1326 = vmatprep.subr.bf16.mxu0 0
  %1327 = vmatpush2.bf16.msra.mxu0 0
  %1328 = vmatprep.subr.bf16.mxu0 0
  %1329 = vmatpush2.bf16.msra.mxu0 0
  %1330 = vmatprep.subr.bf16.mxu0 0
  %1331 = vmatpush2.bf16.msra.mxu0 0
  %1332 = vmatprep.subr.bf16.mxu0 0
  %1333 = vmatpush2.bf16.msra.mxu0 0
  %1334 = vmatprep.subr.bf16.mxu0 0
  %1335 = vmatpush2.bf16.msra.mxu0 0
  %1336 = vmatprep.subr.bf16.mxu0 0
  %1337 = vmatpush2.bf16.msra.mxu0 0
  %1338 = vmatprep.subr.bf16.mxu0 %v930
  %1339 = vmatpush2.bf16.msra.mxu0 %v929
  %1340 = vmatprep.mubr.bf16.mxu0 %v1101
  %1341 = vmatmul.mubr.bf16.gmra.mxu0 %v29
  %v1342 = vpop.f32.mrf.mxu0
  %v1343 = vadd.f32 %v242, %v1342
  %v1344 = vpop.f32.mrf.mxu0
  %v1345 = vadd.f32 %v246, %v1344
  %v1346 = vpop.f32.mrf.mxu0
  %v1347 = vpop.f32.mrf.mxu0
  %1348 = vdwg.mxu0
  %1349 = vmatprep.subr.bf16.mxu0 %v914
  %1350 = vmatpush1.bf16.msra.mxu0 %v913
  %1351 = vmatprep.subr.bf16.mxu0 %v896
  %1352 = vmatpush1.bf16.msra.mxu0 %v895
  %1353 = vmatprep.subr.bf16.mxu0 %v878
  %1354 = vmatpush1.bf16.msra.mxu0 %v877
  %1355 = vmatprep.subr.bf16.mxu0 %v860
  %1356 = vmatpush1.bf16.msra.mxu0 %v859
  %1357 = vmatprep.subr.bf16.mxu0 %v842
  %1358 = vmatpush1.bf16.msra.mxu0 %v841
  %1359 = vmatprep.subr.bf16.mxu0 %v824
  %1360 = vmatpush1.bf16.msra.mxu0 %v823
  %1361 = vmatprep.subr.bf16.mxu0 %v806
  %1362 = vmatpush1.bf16.msra.mxu0 %v805
  %1363 = vmatprep.subr.bf16.mxu0 %v788
  %1364 = vmatpush1.bf16.msra.mxu0 %v787
  %1365 = vmatprep.subr.bf16.mxu0 0
  %1366 = vmatpush2.bf16.msra.mxu0 0
  %1367 = vmatprep.subr.bf16.mxu0 0
  %1368 = vmatpush2.bf16.msra.mxu0 0
  %1369 = vmatprep.subr.bf16.mxu0 0
  %1370 = vmatpush2.bf16.msra.mxu0 0
  %1371 = vmatprep.subr.bf16.mxu0 0
  %1372 = vmatpush2.bf16.msra.mxu0 0
  %1373 = vmatprep.subr.bf16.mxu0 0
  %1374 = vmatpush2.bf16.msra.mxu0 0
  %1375 = vmatprep.subr.bf16.mxu0 0
  %1376 = vmatpush2.bf16.msra.mxu0 0
  %1377 = vmatprep.subr.bf16.mxu0 0
  %1378 = vmatpush2.bf16.msra.mxu0 0
  %1379 = vmatprep.subr.bf16.mxu0 %v932
  %1380 = vmatpush2.bf16.msra.mxu0 %v931
  %1381 = vmatprep.mubr.bf16.mxu0 %v1101
  %1382 = vmatmul.mubr.bf16.gmra.mxu0 %v29
  %v1383 = vpop.f32.mrf.mxu0
  %v1384 = vadd.f32 %v250, %v1383
  %v1385 = vpop.f32.mrf.mxu0
  %v1386 = vadd.f32 %v254, %v1385
  %v1387 = vpop.f32.mrf.mxu0
  %v1388 = vpop.f32.mrf.mxu0
  %1389 = vdwg.mxu0
  %1390 = vmatprep.subr.bf16.mxu0 %v916
  %1391 = vmatpush1.bf16.msra.mxu0 %v915
  %1392 = vmatprep.subr.bf16.mxu0 %v898
  %1393 = vmatpush1.bf16.msra.mxu0 %v897
  %1394 = vmatprep.subr.bf16.mxu0 %v880
  %1395 = vmatpush1.bf16.msra.mxu0 %v879
  %1396 = vmatprep.subr.bf16.mxu0 %v862
  %1397 = vmatpush1.bf16.msra.mxu0 %v861
  %1398 = vmatprep.subr.bf16.mxu0 %v844
  %1399 = vmatpush1.bf16.msra.mxu0 %v843
  %1400 = vmatprep.subr.bf16.mxu0 %v826
  %1401 = vmatpush1.bf16.msra.mxu0 %v825
  %1402 = vmatprep.subr.bf16.mxu0 %v808
  %1403 = vmatpush1.bf16.msra.mxu0 %v807
  %1404 = vmatprep.subr.bf16.mxu0 %v790
  %1405 = vmatpush1.bf16.msra.mxu0 %v789
  %1406 = vmatprep.subr.bf16.mxu0 0
  %1407 = vmatpush2.bf16.msra.mxu0 0
  %1408 = vmatprep.subr.bf16.mxu0 0
  %1409 = vmatpush2.bf16.msra.mxu0 0
  %1410 = vmatprep.subr.bf16.mxu0 0
  %1411 = vmatpush2.bf16.msra.mxu0 0
  %1412 = vmatprep.subr.bf16.mxu0 0
  %1413 = vmatpush2.bf16.msra.mxu0 0
  %1414 = vmatprep.subr.bf16.mxu0 0
  %1415 = vmatpush2.bf16.msra.mxu0 0
  %1416 = vmatprep.subr.bf16.mxu0 0
  %1417 = vmatpush2.bf16.msra.mxu0 0
  %1418 = vmatprep.subr.bf16.mxu0 0
  %1419 = vmatpush2.bf16.msra.mxu0 0
  %1420 = vmatprep.subr.bf16.mxu0 %v934
  %1421 = vmatpush2.bf16.msra.mxu0 %v933
  %1422 = vmatprep.mubr.bf16.mxu0 %v1101
  %1423 = vmatmul.mubr.bf16.gmra.mxu0 %v29
  %v1424 = vpop.f32.mrf.mxu0
  %v1425 = vadd.f32 %v258, %v1424
  %v1426 = vpop.f32.mrf.mxu0
  %v1427 = vadd.f32 %v262, %v1426
  %v1428 = vpop.f32.mrf.mxu0
  %v1429 = vpop.f32.mrf.mxu0
  %1430 = vdwg.mxu0
  %1431 = vmatprep.subr.bf16.mxu0 %v918
  %1432 = vmatpush1.bf16.msra.mxu0 %v917
  %1433 = vmatprep.subr.bf16.mxu0 %v900
  %1434 = vmatpush1.bf16.msra.mxu0 %v899
  %1435 = vmatprep.subr.bf16.mxu0 %v882
  %1436 = vmatpush1.bf16.msra.mxu0 %v881
  %1437 = vmatprep.subr.bf16.mxu0 %v864
  %1438 = vmatpush1.bf16.msra.mxu0 %v863
  %1439 = vmatprep.subr.bf16.mxu0 %v846
  %1440 = vmatpush1.bf16.msra.mxu0 %v845
  %1441 = vmatprep.subr.bf16.mxu0 %v828
  %1442 = vmatpush1.bf16.msra.mxu0 %v827
  %1443 = vmatprep.subr.bf16.mxu0 %v810
  %1444 = vmatpush1.bf16.msra.mxu0 %v809
  %1445 = vmatprep.subr.bf16.mxu0 %v792
  %1446 = vmatpush1.bf16.msra.mxu0 %v791
  %1447 = vmatprep.subr.bf16.mxu0 0
  %1448 = vmatpush2.bf16.msra.mxu0 0
  %1449 = vmatprep.subr.bf16.mxu0 0
  %1450 = vmatpush2.bf16.msra.mxu0 0
  %1451 = vmatprep.subr.bf16.mxu0 0
  %1452 = vmatpush2.bf16.msra.mxu0 0
  %1453 = vmatprep.subr.bf16.mxu0 0
  %1454 = vmatpush2.bf16.msra.mxu0 0
  %1455 = vmatprep.subr.bf16.mxu0 0
  %1456 = vmatpush2.bf16.msra.mxu0 0
  %1457 = vmatprep.subr.bf16.mxu0 0
  %1458 = vmatpush2.bf16.msra.mxu0 0
  %1459 = vmatprep.subr.bf16.mxu0 0
  %1460 = vmatpush2.bf16.msra.mxu0 0
  %1461 = vmatprep.subr.bf16.mxu0 %v936
  %1462 = vmatpush2.bf16.msra.mxu0 %v935
  %1463 = vmatprep.mubr.bf16.mxu0 %v1101
  %1464 = vmatmul.mubr.bf16.gmra.mxu0 %v29
  %v1465 = vpop.f32.mrf.mxu0
  %v1466 = vadd.f32 %v266, %v1465
  %v1467 = vpop.f32.mrf.mxu0
  %v1468 = vadd.f32 %v270, %v1467
  %v1469 = vpop.f32.mrf.mxu0
  %v1470 = vpop.f32.mrf.mxu0
  %1471 = vdwg.mxu0
  %v1472 = vmax.f32 %v1138, 0.0
  %v1473 = vmax.f32 %v1140, 0.0
  %v1474 = vmax.f32 %v1179, 0.0
  %v1475 = vmax.f32 %v1181, 0.0
  %v1476 = vmax.f32 %v1220, 0.0
  %v1477 = vmax.f32 %v1222, 0.0
  %v1478 = vmax.f32 %v1261, 0.0
  %v1479 = vmax.f32 %v1263, 0.0
  %v1480 = vmax.f32 %v1302, 0.0
  %v1481 = vmax.f32 %v1304, 0.0
  %v1482 = vmax.f32 %v1343, 0.0
  %v1483 = vmax.f32 %v1345, 0.0
  %v1484 = vmax.f32 %v1384, 0.0
  %v1485 = vmax.f32 %v1386, 0.0
  %v1486 = vmax.f32 %v1425, 0.0
  %v1487 = vmax.f32 %v1427, 0.0
  %v1488 = vmax.f32 %v1466, 0.0
  %v1489 = vmax.f32 %v1468, 0.0
  %1508 = vrot.lane.b32.xlu0 %v1472, 112
  %v1509 = vpop.permute.xlu0 %1508
  %1510 = vrot.lane.b32.xlu0 %v1473, 112
  %v1511 = vpop.permute.xlu0 %1510
  %1512 = vrot.lane.b32.xlu0 %v1474, 112
  %v1513 = vpop.permute.xlu0 %1512
  %1514 = vrot.lane.b32.xlu0 %v1475, 112
  %v1515 = vpop.permute.xlu0 %1514
  %1516 = vrot.lane.b32.xlu0 %v1476, 112
  %v1517 = vpop.permute.xlu0 %1516
  %1518 = vrot.lane.b32.xlu0 %v1477, 112
  %v1519 = vpop.permute.xlu0 %1518
  %1520 = vrot.lane.b32.xlu0 %v1478, 112
  %v1521 = vpop.permute.xlu0 %1520
  %1522 = vrot.lane.b32.xlu0 %v1479, 112
  %v1523 = vpop.permute.xlu0 %1522
  %1524 = vrot.lane.b32.xlu0 %v1480, 112
  %v1525 = vpop.permute.xlu0 %1524
  %1526 = vrot.lane.b32.xlu0 %v1481, 112
  %v1527 = vpop.permute.xlu0 %1526
  %1528 = vrot.lane.b32.xlu0 %v1482, 112
  %v1529 = vpop.permute.xlu0 %1528
  %1530 = vrot.lane.b32.xlu0 %v1483, 112
  %v1531 = vpop.permute.xlu0 %1530
  %1532 = vrot.lane.b32.xlu0 %v1484, 112
  %v1533 = vpop.permute.xlu0 %1532
  %1534 = vrot.lane.b32.xlu0 %v1485, 112
  %v1535 = vpop.permute.xlu0 %1534
  %1536 = vrot.lane.b32.xlu0 %v1486, 112
  %v1537 = vpop.permute.xlu0 %1536
  %1538 = vrot.lane.b32.xlu0 %v1487, 112
  %v1539 = vpop.permute.xlu0 %1538
  %1540 = vrot.lane.b32.xlu0 %v1488, 112
  %v1541 = vpop.permute.xlu0 %1540
  %1542 = vrot.lane.b32.xlu0 %v1489, 112
  %v1543 = vpop.permute.xlu0 %1542
  %vm1544 = vcmask 916480
  %v1545 = vsel %vm1544, %v1509, %v1511
  %v1546 = vsel %vm1544, %v1511, %v1513
  %v1547 = vsel %vm1544, %v1513, %v1515
  %v1548 = vsel %vm1544, %v1515, %v1517
  %v1549 = vsel %vm1544, %v1517, %v1519
  %v1550 = vsel %vm1544, %v1519, %v1521
  %v1551 = vsel %vm1544, %v1521, %v1523
  %v1552 = vsel %vm1544, %v1523, %v1525
  %v1553 = vsel %vm1544, %v1525, %v1527
  %v1554 = vsel %vm1544, %v1527, %v1529
  %v1555 = vsel %vm1544, %v1529, %v1531
  %v1556 = vsel %vm1544, %v1531, %v1533
  %v1557 = vsel %vm1544, %v1533, %v1535
  %v1558 = vsel %vm1544, %v1535, %v1537
  %v1559 = vsel %vm1544, %v1537, %v1539
  %v1560 = vsel %vm1544, %v1539, %v1541
  %v1561 = vsel %vm1544, %v1541, %v1543
  %v1581 = vsel %vm1544, %v1543, %v1509
  %v1582 = vmax.f32 %v1472, %v1545
  %v1583 = vmax.f32 %v1473, %v1546
  %v1584 = vmax.f32 %v1474, %v1547
  %v1585 = vmax.f32 %v1475, %v1548
  %v1586 = vmax.f32 %v1476, %v1549
  %v1587 = vmax.f32 %v1477, %v1550
  %v1588 = vmax.f32 %v1478, %v1551
  %v1589 = vmax.f32 %v1479, %v1552
  %v1590 = vmax.f32 %v1480, %v1553
  %v1591 = vmax.f32 %v1481, %v1554
  %v1592 = vmax.f32 %v1482, %v1555
  %v1593 = vmax.f32 %v1483, %v1556
  %v1594 = vmax.f32 %v1484, %v1557
  %v1595 = vmax.f32 %v1485, %v1558
  %v1596 = vmax.f32 %v1486, %v1559
  %v1597 = vmax.f32 %v1487, %v1560
  %v1598 = vmax.f32 %v1488, %v1561
  %v1599 = vmax.f32 %v1489, %v1581
  %1617 = vrot.lane.b32.xlu0 %v1583, 64
  %v1618 = vpop.permute.xlu0 %1617
  %1619 = vrot.lane.b32.xlu0 %v1584, 64
  %v1620 = vpop.permute.xlu0 %1619
  %1621 = vrot.lane.b32.xlu0 %v1585, 64
  %v1622 = vpop.permute.xlu0 %1621
  %1623 = vrot.lane.b32.xlu0 %v1586, 64
  %v1624 = vpop.permute.xlu0 %1623
  %1625 = vrot.lane.b32.xlu0 %v1587, 64
  %v1626 = vpop.permute.xlu0 %1625
  %1627 = vrot.lane.b32.xlu0 %v1588, 64
  %v1628 = vpop.permute.xlu0 %1627
  %1629 = vrot.lane.b32.xlu0 %v1589, 64
  %v1630 = vpop.permute.xlu0 %1629
  %1631 = vrot.lane.b32.xlu0 %v1590, 64
  %v1632 = vpop.permute.xlu0 %1631
  %1633 = vrot.lane.b32.xlu0 %v1591, 64
  %v1634 = vpop.permute.xlu0 %1633
  %1635 = vrot.lane.b32.xlu0 %v1592, 64
  %v1636 = vpop.permute.xlu0 %1635
  %1637 = vrot.lane.b32.xlu0 %v1593, 64
  %v1638 = vpop.permute.xlu0 %1637
  %1639 = vrot.lane.b32.xlu0 %v1594, 64
  %v1640 = vpop.permute.xlu0 %1639
  %1641 = vrot.lane.b32.xlu0 %v1595, 64
  %v1642 = vpop.permute.xlu0 %1641
  %1643 = vrot.lane.b32.xlu0 %v1596, 64
  %v1644 = vpop.permute.xlu0 %1643
  %1645 = vrot.lane.b32.xlu0 %v1597, 64
  %v1646 = vpop.permute.xlu0 %1645
  %1647 = vrot.lane.b32.xlu0 %v1598, 64
  %v1648 = vpop.permute.xlu0 %1647
  %1649 = vrot.lane.b32.xlu0 %v1599, 64
  %v1650 = vpop.permute.xlu0 %1649
  %vm1651 = vcmask 523264
  %v1652 = vsel %vm1651, %v1618, %v1620
  %v1653 = vsel %vm1651, %v1620, %v1622
  %v1654 = vsel %vm1651, %v1622, %v1624
  %v1655 = vsel %vm1651, %v1624, %v1626
  %v1656 = vsel %vm1651, %v1626, %v1628
  %v1657 = vsel %vm1651, %v1628, %v1630
  %v1658 = vsel %vm1651, %v1630, %v1632
  %v1659 = vsel %vm1651, %v1632, %v1634
  %v1660 = vsel %vm1651, %v1634, %v1636
  %v1661 = vsel %vm1651, %v1636, %v1638
  %v1662 = vsel %vm1651, %v1638, %v1640
  %v1663 = vsel %vm1651, %v1640, %v1642
  %v1664 = vsel %vm1651, %v1642, %v1644
  %v1665 = vsel %vm1651, %v1644, %v1646
  %v1666 = vsel %vm1651, %v1646, %v1648
  %v1667 = vsel %vm1651, %v1648, %v1650
  %1686 = vrot.lane.b32.xlu0 %v1582, 64
  %v1687 = vpop.permute.xlu0 %1686
  %v1688 = vsel %vm1651, %v1687, %v1618
  %v1691 = vsel %vm1651, %v1650, %v1687
  %v1692 = vmax.f32 %v1582, %v1652
  %v1693 = vmax.f32 %v1583, %v1653
  %v1694 = vmax.f32 %v1584, %v1654
  %v1695 = vmax.f32 %v1585, %v1655
  %v1696 = vmax.f32 %v1586, %v1656
  %v1697 = vmax.f32 %v1587, %v1657
  %v1698 = vmax.f32 %v1588, %v1658
  %v1699 = vmax.f32 %v1589, %v1659
  %v1700 = vmax.f32 %v1590, %v1660
  %v1701 = vmax.f32 %v1591, %v1661
  %v1702 = vmax.f32 %v1592, %v1662
  %v1703 = vmax.f32 %v1593, %v1663
  %v1704 = vmax.f32 %v1594, %v1664
  %v1705 = vmax.f32 %v1595, %v1665
  %v1706 = vmax.f32 %v1596, %v1666
  %v1707 = vmax.f32 %v1597, %v1667
  %v1708 = vmax.f32 %v1598, %v1691
  %v1709 = vmax.f32 %v1599, %v1688
  %v1710 = vpack.c.bf16 %v1692, %v1692
  %v1711 = vpack.c.bf16 %v1693, %v1693
  %v1712 = vpack.c.bf16 %v1694, %v1694
  %v1713 = vpack.c.bf16 %v1695, %v1695
  %v1714 = vpack.c.bf16 %v1696, %v1696
  %v1715 = vpack.c.bf16 %v1697, %v1697
  %v1716 = vpack.c.bf16 %v1698, %v1698
  %v1717 = vpack.c.bf16 %v1699, %v1699
  %v1718 = vpack.c.bf16 %v1700, %v1700
  %v1719 = vpack.c.bf16 %v1701, %v1701
  %v1720 = vpack.c.bf16 %v1702, %v1702
  %v1721 = vpack.c.bf16 %v1703, %v1703
  %v1722 = vpack.c.bf16 %v1704, %v1704
  %v1723 = vpack.c.bf16 %v1705, %v1705
  %v1724 = vpack.c.bf16 %v1706, %v1706
  %v1725 = vpack.c.bf16 %v1707, %v1707
  %v1726 = vpack.c.bf16 %v1708, %v1708
  %v1727 = vpack.c.bf16 %v1709, %v1709
  %v1728 = vld [vmem:[%s3] sm:$0xff]
  %v1729 = vld [vmem:[%s3 + $0x8] sm:$0xff]
  %v1730 = vld [vmem:[%s3 + $0x10] sm:$0xff]
  %v1731 = vld [vmem:[%s3 + $0x18] sm:$0xff]
  %v1732 = vld [vmem:[%s3 + $0x20] sm:$0xf]
  %v1733 = vld [vmem:[%s3 + $0x24] sm:$0xff]
  %v1734 = vld [vmem:[%s3 + $0x2c] sm:$0xff]
  %v1735 = vld [vmem:[%s3 + $0x34] sm:$0xff]
  %v1736 = vld [vmem:[%s3 + $0x3c] sm:$0xff]
  %v1737 = vld [vmem:[%s3 + $0x44] sm:$0xf]
  %v1738 = vld [vmem:[%s3 + $0x48] sm:$0xff]
  %v1739 = vld [vmem:[%s3 + $0x50] sm:$0xff]
  %v1740 = vld [vmem:[%s3 + $0x58] sm:$0xff]
  %v1741 = vld [vmem:[%s3 + $0x60] sm:$0xff]
  %v1742 = vld [vmem:[%s3 + $0x68] sm:$0xf]
  %v1743 = vld [vmem:[%s3 + $0x6c] sm:$0xff]
  %v1744 = vld [vmem:[%s3 + $0x74] sm:$0xff]
  %v1745 = vld [vmem:[%s3 + $0x7c] sm:$0xff]
  %v1746 = vld [vmem:[%s3 + $0x84] sm:$0xff]
  %v1747 = vld [vmem:[%s3 + $0x8c] sm:$0xf]
  %v1748 = vld [vmem:[%s3 + $0x90] sm:$0xff]
  %v1749 = vld [vmem:[%s3 + $0x98] sm:$0xff]
  %v1750 = vld [vmem:[%s3 + $0xa0] sm:$0xff]
  %v1751 = vld [vmem:[%s3 + $0xa8] sm:$0xff]
  %v1752 = vld [vmem:[%s3 + $0xb0] sm:$0xf]
  %v1753 = vld [vmem:[%s3 + $0xb4] sm:$0xff]
  %v1754 = vld [vmem:[%s3 + $0xbc] sm:$0xff]
  %v1755 = vld [vmem:[%s3 + $0xc4] sm:$0xff]
  %v1756 = vld [vmem:[%s3 + $0xcc] sm:$0xff]
  %v1757 = vld [vmem:[%s3 + $0xd4] sm:$0xf]
  %v1758 = vld [vmem:[%s3 + $0xd8] sm:$0xff]
  %v1759 = vld [vmem:[%s3 + $0xe0] sm:$0xff]
  %v1760 = vld [vmem:[%s3 + $0xe8] sm:$0xff]
  %v1761 = vld [vmem:[%s3 + $0xf0] sm:$0xff]
  %v1762 = vld [vmem:[%s3 + $0xf8] sm:$0xf]
  %v1763 = vld [vmem:[%s3 + $0xfc] sm:$0xff]
  %v1764 = vld [vmem:[%s3 + $0x104] sm:$0xff]
  %v1765 = vld [vmem:[%s3 + $0x10c] sm:$0xff]
  %v1766 = vld [vmem:[%s3 + $0x114] sm:$0xff]
  %v1767 = vld [vmem:[%s3 + $0x11c] sm:$0xf]
  %v1768 = vld [vmem:[%s3 + $0x120] sm:$0xff]
  %v1769 = vld [vmem:[%s3 + $0x128] sm:$0xff]
  %v1770 = vld [vmem:[%s3 + $0x130] sm:$0xff]
  %v1771 = vld [vmem:[%s3 + $0x138] sm:$0xff]
  %v1772 = vld [vmem:[%s3 + $0x140] sm:$0xf]
  %v1773 = vld [vmem:[%s3 + $0x144] sm:$0xff]
  %v1774 = vld [vmem:[%s3 + $0x14c] sm:$0xff]
  %v1775 = vld [vmem:[%s3 + $0x154] sm:$0xff]
  %v1776 = vld [vmem:[%s3 + $0x15c] sm:$0xff]
  %v1777 = vld [vmem:[%s3 + $0x164] sm:$0xf]
  %v1778 = vld [vmem:[%s3 + $0x168] sm:$0xff]
  %v1779 = vld [vmem:[%s3 + $0x170] sm:$0xff]
  %v1780 = vld [vmem:[%s3 + $0x178] sm:$0xff]
  %v1781 = vld [vmem:[%s3 + $0x180] sm:$0xff]
  %v1782 = vld [vmem:[%s3 + $0x188] sm:$0xf]
  %v1783 = vld [vmem:[%s3 + $0x18c] sm:$0xff]
  %v1784 = vld [vmem:[%s3 + $0x194] sm:$0xff]
  %v1785 = vld [vmem:[%s3 + $0x19c] sm:$0xff]
  %v1786 = vld [vmem:[%s3 + $0x1a4] sm:$0xff]
  %v1787 = vld [vmem:[%s3 + $0x1ac] sm:$0xf]
  %v1788 = vld [vmem:[%s3 + $0x1b0] sm:$0xff]
  %v1789 = vld [vmem:[%s3 + $0x1b8] sm:$0xff]
  %v1790 = vld [vmem:[%s3 + $0x1c0] sm:$0xff]
  %v1791 = vld [vmem:[%s3 + $0x1c8] sm:$0xff]
  %v1792 = vld [vmem:[%s3 + $0x1d0] sm:$0xf]
  %v1793 = vld [vmem:[%s3 + $0x1d4] sm:$0xff]
  %v1794 = vld [vmem:[%s3 + $0x1dc] sm:$0xff]
  %v1795 = vld [vmem:[%s3 + $0x1e4] sm:$0xff]
  %v1796 = vld [vmem:[%s3 + $0x1ec] sm:$0xff]
  %v1797 = vld [vmem:[%s3 + $0x1f4] sm:$0xf]
  %v1798 = vld [vmem:[%s3 + $0x1f8] sm:$0xff]
  %v1799 = vld [vmem:[%s3 + $0x200] sm:$0xff]
  %v1800 = vld [vmem:[%s3 + $0x208] sm:$0xff]
  %v1801 = vld [vmem:[%s3 + $0x210] sm:$0xff]
  %v1802 = vld [vmem:[%s3 + $0x218] sm:$0xf]
  %v1803 = vld [vmem:[%s3 + $0x21c] sm:$0xff]
  %v1804 = vld [vmem:[%s3 + $0x224] sm:$0xff]
  %v1805 = vld [vmem:[%s3 + $0x22c] sm:$0xff]
  %v1806 = vld [vmem:[%s3 + $0x234] sm:$0xff]
  %v1807 = vld [vmem:[%s3 + $0x23c] sm:$0xf]
  %v1808 = vld [vmem:[%s3 + $0x240] sm:$0xff]
  %v1809 = vld [vmem:[%s3 + $0x248] sm:$0xff]
  %v1810 = vld [vmem:[%s3 + $0x250] sm:$0xff]
  %v1811 = vld [vmem:[%s3 + $0x258] sm:$0xff]
  %v1812 = vld [vmem:[%s3 + $0x260] sm:$0xf]
  %v1813 = vld [vmem:[%s3 + $0x264] sm:$0xff]
  %v1814 = vld [vmem:[%s3 + $0x26c] sm:$0xff]
  %v1815 = vld [vmem:[%s3 + $0x274] sm:$0xff]
  %v1816 = vld [vmem:[%s3 + $0x27c] sm:$0xff]
  %v1817 = vld [vmem:[%s3 + $0x284] sm:$0xf]
  %v1818 = vld [vmem:[%s3 + $0x288] sm:$0xff]
  %v1819 = vld [vmem:[%s3 + $0x290] sm:$0xff]
  %v1820 = vld [vmem:[%s3 + $0x298] sm:$0xff]
  %v1821 = vld [vmem:[%s3 + $0x2a0] sm:$0xff]
  %v1822 = vld [vmem:[%s3 + $0x2a8] sm:$0xf]
  %v1823 = vld [vmem:[%s3 + $0x2ac] sm:$0xff]
  %v1824 = vld [vmem:[%s3 + $0x2b4] sm:$0xff]
  %v1825 = vld [vmem:[%s3 + $0x2bc] sm:$0xff]
  %v1826 = vld [vmem:[%s3 + $0x2c4] sm:$0xff]
  %v1827 = vld [vmem:[%s3 + $0x2cc] sm:$0xf]
  %v1828 = vld [vmem:[%s3 + $0x2d0] sm:$0xff]
  %v1829 = vld [vmem:[%s3 + $0x2d8] sm:$0xff]
  %v1830 = vld [vmem:[%s3 + $0x2e0] sm:$0xff]
  %v1831 = vld [vmem:[%s3 + $0x2e8] sm:$0xff]
  %v1832 = vld [vmem:[%s3 + $0x2f0] sm:$0xf]
  %v1833 = vld [vmem:[%s3 + $0x2f4] sm:$0xff]
  %v1834 = vld [vmem:[%s3 + $0x2fc] sm:$0xff]
  %v1835 = vld [vmem:[%s3 + $0x304] sm:$0xff]
  %v1836 = vld [vmem:[%s3 + $0x30c] sm:$0xff]
  %v1837 = vld [vmem:[%s3 + $0x314] sm:$0xf]
  %v1838 = vld [vmem:[%s3 + $0x318] sm:$0xff]
  %v1839 = vld [vmem:[%s3 + $0x320] sm:$0xff]
  %v1840 = vld [vmem:[%s3 + $0x328] sm:$0xff]
  %v1841 = vld [vmem:[%s3 + $0x330] sm:$0xff]
  %v1842 = vld [vmem:[%s3 + $0x338] sm:$0xf]
  %v1843 = vld [vmem:[%s3 + $0x33c] sm:$0xff]
  %v1844 = vld [vmem:[%s3 + $0x344] sm:$0xff]
  %v1845 = vld [vmem:[%s3 + $0x34c] sm:$0xff]
  %v1846 = vld [vmem:[%s3 + $0x354] sm:$0xff]
  %v1847 = vld [vmem:[%s3 + $0x35c] sm:$0xf]
  %v1848 = vld [vmem:[%s3 + $0x360] sm:$0xff]
  %v1849 = vld [vmem:[%s3 + $0x368] sm:$0xff]
  %v1850 = vld [vmem:[%s3 + $0x370] sm:$0xff]
  %v1851 = vld [vmem:[%s3 + $0x378] sm:$0xff]
  %v1852 = vld [vmem:[%s3 + $0x380] sm:$0xf]
  %v1853 = vld [vmem:[%s3 + $0x384] sm:$0xff]
  %v1854 = vld [vmem:[%s3 + $0x38c] sm:$0xff]
  %v1855 = vld [vmem:[%s3 + $0x394] sm:$0xff]
  %v1856 = vld [vmem:[%s3 + $0x39c] sm:$0xff]
  %v1857 = vld [vmem:[%s3 + $0x3a4] sm:$0xf]
  %v1858 = vld [vmem:[%s3 + $0x3a8] sm:$0xff]
  %v1859 = vld [vmem:[%s3 + $0x3b0] sm:$0xff]
  %v1860 = vld [vmem:[%s3 + $0x3b8] sm:$0xff]
  %v1861 = vld [vmem:[%s3 + $0x3c0] sm:$0xff]
  %v1862 = vld [vmem:[%s3 + $0x3c8] sm:$0xf]
  %v1863 = vld [vmem:[%s3 + $0x3cc] sm:$0xff]
  %v1864 = vld [vmem:[%s3 + $0x3d4] sm:$0xff]
  %v1865 = vld [vmem:[%s3 + $0x3dc] sm:$0xff]
  %v1866 = vld [vmem:[%s3 + $0x3e4] sm:$0xff]
  %v1867 = vld [vmem:[%s3 + $0x3ec] sm:$0xf]
  %v1868 = vld [vmem:[%s3 + $0x3f0] sm:$0xff]
  %v1869 = vld [vmem:[%s3 + $0x3f8] sm:$0xff]
  %v1870 = vld [vmem:[%s3 + $0x400] sm:$0xff]
  %v1871 = vld [vmem:[%s3 + $0x408] sm:$0xff]
  %v1872 = vld [vmem:[%s3 + $0x410] sm:$0xf]
  %v1873 = vld [vmem:[%s3 + $0x414] sm:$0xff]
  %v1874 = vld [vmem:[%s3 + $0x41c] sm:$0xff]
  %v1875 = vld [vmem:[%s3 + $0x424] sm:$0xff]
  %v1876 = vld [vmem:[%s3 + $0x42c] sm:$0xff]
  %v1877 = vld [vmem:[%s3 + $0x434] sm:$0xf]
  %v1878 = vld [vmem:[%s3 + $0x438] sm:$0xff]
  %v1879 = vld [vmem:[%s3 + $0x440] sm:$0xff]
  %v1880 = vld [vmem:[%s3 + $0x448] sm:$0xff]
  %v1881 = vld [vmem:[%s3 + $0x450] sm:$0xff]
  %v1882 = vld [vmem:[%s3 + $0x458] sm:$0xf]
  %v1883 = vld [vmem:[%s3 + $0x45c] sm:$0xff]
  %v1884 = vld [vmem:[%s3 + $0x464] sm:$0xff]
  %v1885 = vld [vmem:[%s3 + $0x46c] sm:$0xff]
  %v1886 = vld [vmem:[%s3 + $0x474] sm:$0xff]
  %v1887 = vld [vmem:[%s3 + $0x47c] sm:$0xf]
  %v1888 = vld [vmem:[%s3 + $0x480] sm:$0xff]
  %v1889 = vld [vmem:[%s3 + $0x488] sm:$0xff]
  %v1890 = vld [vmem:[%s3 + $0x490] sm:$0xff]
  %v1891 = vld [vmem:[%s3 + $0x498] sm:$0xff]
  %v1892 = vld [vmem:[%s3 + $0x4a0] sm:$0xf]
  %v1893 = vld [vmem:[%s3 + $0x4a4] sm:$0xff]
  %v1894 = vld [vmem:[%s3 + $0x4ac] sm:$0xff]
  %v1895 = vld [vmem:[%s3 + $0x4b4] sm:$0xff]
  %v1896 = vld [vmem:[%s3 + $0x4bc] sm:$0xff]
  %v1897 = vld [vmem:[%s3 + $0x4c4] sm:$0xf]
  %v1898 = vld [vmem:[%s3 + $0x4c8] sm:$0xff]
  %v1899 = vld [vmem:[%s3 + $0x4d0] sm:$0xff]
  %v1900 = vld [vmem:[%s3 + $0x4d8] sm:$0xff]
  %v1901 = vld [vmem:[%s3 + $0x4e0] sm:$0xff]
  %v1902 = vld [vmem:[%s3 + $0x4e8] sm:$0xf]
  %v1903 = vld [vmem:[%s3 + $0x4ec] sm:$0xff]
  %v1904 = vld [vmem:[%s3 + $0x4f4] sm:$0xff]
  %v1905 = vld [vmem:[%s3 + $0x4fc] sm:$0xff]
  %v1906 = vld [vmem:[%s3 + $0x504] sm:$0xff]
  %v1907 = vld [vmem:[%s3 + $0x50c] sm:$0xf]
  %v1908 = vld [vmem:[%s3 + $0x510] sm:$0xff]
  %v1909 = vld [vmem:[%s3 + $0x518] sm:$0xff]
  %v1910 = vld [vmem:[%s3 + $0x520] sm:$0xff]
  %v1911 = vld [vmem:[%s3 + $0x528] sm:$0xff]
  %v1912 = vld [vmem:[%s3 + $0x530] sm:$0xf]
  %v1913 = vld [vmem:[%s3 + $0x534] sm:$0xff]
  %v1914 = vld [vmem:[%s3 + $0x53c] sm:$0xff]
  %v1915 = vld [vmem:[%s3 + $0x544] sm:$0xff]
  %v1916 = vld [vmem:[%s3 + $0x54c] sm:$0xff]
  %v1917 = vld [vmem:[%s3 + $0x554] sm:$0xf]
  %v1918 = vld [vmem:[%s3 + $0x558] sm:$0xff]
  %v1919 = vld [vmem:[%s3 + $0x560] sm:$0xff]
  %v1920 = vld [vmem:[%s3 + $0x568] sm:$0xff]
  %v1921 = vld [vmem:[%s3 + $0x570] sm:$0xff]
  %v1922 = vld [vmem:[%s3 + $0x578] sm:$0xf]
  %v1923 = vld [vmem:[%s3 + $0x57c] sm:$0xff]
  %v1924 = vld [vmem:[%s3 + $0x584] sm:$0xff]
  %v1925 = vld [vmem:[%s3 + $0x58c] sm:$0xff]
  %v1926 = vld [vmem:[%s3 + $0x594] sm:$0xff]
  %v1927 = vld [vmem:[%s3 + $0x59c] sm:$0xf]
  %v1928 = vld [vmem:[%s3 + $0x5a0] sm:$0xff]
  %v1929 = vld [vmem:[%s3 + $0x5a8] sm:$0xff]
  %v1930 = vld [vmem:[%s3 + $0x5b0] sm:$0xff]
  %v1931 = vld [vmem:[%s3 + $0x5b8] sm:$0xff]
  %v1932 = vld [vmem:[%s3 + $0x5c0] sm:$0xf]
  %v1933 = vld [vmem:[%s3 + $0x5c4] sm:$0xff]
  %v1934 = vld [vmem:[%s3 + $0x5cc] sm:$0xff]
  %v1935 = vld [vmem:[%s3 + $0x5d4] sm:$0xff]
  %v1936 = vld [vmem:[%s3 + $0x5dc] sm:$0xff]
  %v1937 = vld [vmem:[%s3 + $0x5e4] sm:$0xf]
  %v1938 = vld [vmem:[%s3 + $0x5e8] sm:$0xff]
  %v1939 = vld [vmem:[%s3 + $0x5f0] sm:$0xff]
  %v1940 = vld [vmem:[%s3 + $0x5f8] sm:$0xff]
  %v1941 = vld [vmem:[%s3 + $0x600] sm:$0xff]
  %v1942 = vld [vmem:[%s3 + $0x608] sm:$0xf]
  %v1943 = vld [vmem:[%s3 + $0x60c] sm:$0xff]
  %v1944 = vld [vmem:[%s3 + $0x614] sm:$0xff]
  %v1945 = vld [vmem:[%s3 + $0x61c] sm:$0xff]
  %v1946 = vld [vmem:[%s3 + $0x624] sm:$0xff]
  %v1947 = vld [vmem:[%s3 + $0x62c] sm:$0xf]
  %v1948 = vld [vmem:[%s3 + $0x630] sm:$0xff]
  %v1949 = vld [vmem:[%s3 + $0x638] sm:$0xff]
  %v1950 = vld [vmem:[%s3 + $0x640] sm:$0xff]
  %v1951 = vld [vmem:[%s3 + $0x648] sm:$0xff]
  %v1952 = vld [vmem:[%s3 + $0x650] sm:$0xf]
  %v1953 = vld [vmem:[%s3 + $0x654] sm:$0xff]
  %v1954 = vld [vmem:[%s3 + $0x65c] sm:$0xff]
  %v1955 = vld [vmem:[%s3 + $0x664] sm:$0xff]
  %v1956 = vld [vmem:[%s3 + $0x66c] sm:$0xff]
  %v1957 = vld [vmem:[%s3 + $0x674] sm:$0xf]
  %v1958 = vld [vmem:[%s3 + $0x678] sm:$0xff]
  %v1959 = vld [vmem:[%s3 + $0x680] sm:$0xff]
  %v1960 = vld [vmem:[%s3 + $0x688] sm:$0xff]
  %v1961 = vld [vmem:[%s3 + $0x690] sm:$0xff]
  %v1962 = vld [vmem:[%s3 + $0x698] sm:$0xf]
  %v1963 = vld [vmem:[%s3 + $0x69c] sm:$0xff]
  %v1964 = vld [vmem:[%s3 + $0x6a4] sm:$0xff]
  %v1965 = vld [vmem:[%s3 + $0x6ac] sm:$0xff]
  %v1966 = vld [vmem:[%s3 + $0x6b4] sm:$0xff]
  %v1967 = vld [vmem:[%s3 + $0x6bc] sm:$0xf]
  %v1968 = vld [vmem:[%s3 + $0x6c0] sm:$0xff]
  %v1969 = vld [vmem:[%s3 + $0x6c8] sm:$0xff]
  %v1970 = vld [vmem:[%s3 + $0x6d0] sm:$0xff]
  %v1971 = vld [vmem:[%s3 + $0x6d8] sm:$0xff]
  %v1972 = vld [vmem:[%s3 + $0x6e0] sm:$0xf]
  %v1973 = vld [vmem:[%s3 + $0x6e4] sm:$0xff]
  %v1974 = vld [vmem:[%s3 + $0x6ec] sm:$0xff]
  %v1975 = vld [vmem:[%s3 + $0x6f4] sm:$0xff]
  %v1976 = vld [vmem:[%s3 + $0x6fc] sm:$0xff]
  %v1977 = vld [vmem:[%s3 + $0x704] sm:$0xf]
  %v1978 = vld [vmem:[%s3 + $0x708] sm:$0xff]
  %v1979 = vld [vmem:[%s3 + $0x710] sm:$0xff]
  %v1980 = vld [vmem:[%s3 + $0x718] sm:$0xff]
  %v1981 = vld [vmem:[%s3 + $0x720] sm:$0xff]
  %v1982 = vld [vmem:[%s3 + $0x728] sm:$0xf]
  %v1983 = vld [vmem:[%s3 + $0x72c] sm:$0xff]
  %v1984 = vld [vmem:[%s3 + $0x734] sm:$0xff]
  %v1985 = vld [vmem:[%s3 + $0x73c] sm:$0xff]
  %v1986 = vld [vmem:[%s3 + $0x744] sm:$0xff]
  %v1987 = vld [vmem:[%s3 + $0x74c] sm:$0xf]
  %v1988 = vld [vmem:[%s3 + $0x750] sm:$0xff]
  %v1989 = vld [vmem:[%s3 + $0x758] sm:$0xff]
  %v1990 = vld [vmem:[%s3 + $0x760] sm:$0xff]
  %v1991 = vld [vmem:[%s3 + $0x768] sm:$0xff]
  %v1992 = vld [vmem:[%s3 + $0x770] sm:$0xf]
  %v1993 = vld [vmem:[%s3 + $0x774] sm:$0xff]
  %v1994 = vld [vmem:[%s3 + $0x77c] sm:$0xff]
  %v1995 = vld [vmem:[%s3 + $0x784] sm:$0xff]
  %v1996 = vld [vmem:[%s3 + $0x78c] sm:$0xff]
  %v1997 = vld [vmem:[%s3 + $0x794] sm:$0xf]
  %v1998 = vld [vmem:[%s3 + $0x798] sm:$0xff]
  %v1999 = vld [vmem:[%s3 + $0x7a0] sm:$0xff]
  %v2000 = vld [vmem:[%s3 + $0x7a8] sm:$0xff]
  %v2001 = vld [vmem:[%s3 + $0x7b0] sm:$0xff]
  %v2002 = vld [vmem:[%s3 + $0x7b8] sm:$0xf]
  %v2003 = vld [vmem:[%s3 + $0x7bc] sm:$0xff]
  %v2004 = vld [vmem:[%s3 + $0x7c4] sm:$0xff]
  %v2005 = vld [vmem:[%s3 + $0x7cc] sm:$0xff]
  %v2006 = vld [vmem:[%s3 + $0x7d4] sm:$0xff]
  %v2007 = vld [vmem:[%s3 + $0x7dc] sm:$0xf]
  %v2008 = vld [vmem:[%s3 + $0x7e0] sm:$0xff]
  %v2009 = vld [vmem:[%s3 + $0x7e8] sm:$0xff]
  %v2010 = vld [vmem:[%s3 + $0x7f0] sm:$0xff]
  %v2011 = vld [vmem:[%s3 + $0x7f8] sm:$0xff]
  %v2012 = vld [vmem:[%s3 + $0x800] sm:$0xf]
  %v2013 = vld [vmem:[%s3 + $0x804] sm:$0xff]
  %v2014 = vld [vmem:[%s3 + $0x80c] sm:$0xff]
  %v2015 = vld [vmem:[%s3 + $0x814] sm:$0xff]
  %v2016 = vld [vmem:[%s3 + $0x81c] sm:$0xff]
  %v2017 = vld [vmem:[%s3 + $0x824] sm:$0xf]
  %v2018 = vld [vmem:[%s3 + $0x828] sm:$0xff]
  %v2019 = vld [vmem:[%s3 + $0x830] sm:$0xff]
  %v2020 = vld [vmem:[%s3 + $0x838] sm:$0xff]
  %v2021 = vld [vmem:[%s3 + $0x840] sm:$0xff]
  %v2022 = vld [vmem:[%s3 + $0x848] sm:$0xf]
  %v2023 = vld [vmem:[%s3 + $0x84c] sm:$0xff]
  %v2024 = vld [vmem:[%s3 + $0x854] sm:$0xff]
  %v2025 = vld [vmem:[%s3 + $0x85c] sm:$0xff]
  %v2026 = vld [vmem:[%s3 + $0x864] sm:$0xff]
  %v2027 = vld [vmem:[%s3 + $0x86c] sm:$0xf]
  %v2028 = vld [vmem:[%s3 + $0x870] sm:$0xff]
  %v2029 = vld [vmem:[%s3 + $0x878] sm:$0xff]
  %v2030 = vld [vmem:[%s3 + $0x880] sm:$0xff]
  %v2031 = vld [vmem:[%s3 + $0x888] sm:$0xff]
  %v2032 = vld [vmem:[%s3 + $0x890] sm:$0xf]
  %v2033 = vld [vmem:[%s3 + $0x894] sm:$0xff]
  %v2034 = vld [vmem:[%s3 + $0x89c] sm:$0xff]
  %v2035 = vld [vmem:[%s3 + $0x8a4] sm:$0xff]
  %v2036 = vld [vmem:[%s3 + $0x8ac] sm:$0xff]
  %v2037 = vld [vmem:[%s3 + $0x8b4] sm:$0xf]
  %v2038 = vld [vmem:[%s3 + $0x8b8] sm:$0xff]
  %v2039 = vld [vmem:[%s3 + $0x8c0] sm:$0xff]
  %v2040 = vld [vmem:[%s3 + $0x8c8] sm:$0xff]
  %v2041 = vld [vmem:[%s3 + $0x8d0] sm:$0xff]
  %v2042 = vld [vmem:[%s3 + $0x8d8] sm:$0xf]
  %v2043 = vld [vmem:[%s3 + $0x8dc] sm:$0xff]
  %v2044 = vld [vmem:[%s3 + $0x8e4] sm:$0xff]
  %v2045 = vld [vmem:[%s3 + $0x8ec] sm:$0xff]
  %v2046 = vld [vmem:[%s3 + $0x8f4] sm:$0xff]
  %v2047 = vld [vmem:[%s3 + $0x8fc] sm:$0xf]
  %v2048 = vld [vmem:[%s3 + $0x900] sm:$0xff]
  %v2049 = vld [vmem:[%s3 + $0x908] sm:$0xff]
  %v2050 = vld [vmem:[%s3 + $0x910] sm:$0xff]
  %v2051 = vld [vmem:[%s3 + $0x918] sm:$0xff]
  %v2052 = vld [vmem:[%s3 + $0x920] sm:$0xf]
  %v2053 = vld [vmem:[%s3 + $0x924] sm:$0xff]
  %v2054 = vld [vmem:[%s3 + $0x92c] sm:$0xff]
  %v2055 = vld [vmem:[%s3 + $0x934] sm:$0xff]
  %v2056 = vld [vmem:[%s3 + $0x93c] sm:$0xff]
  %v2057 = vld [vmem:[%s3 + $0x944] sm:$0xf]
  %v2058 = vld [vmem:[%s3 + $0x948] sm:$0xff]
  %v2059 = vld [vmem:[%s3 + $0x950] sm:$0xff]
  %v2060 = vld [vmem:[%s3 + $0x958] sm:$0xff]
  %v2061 = vld [vmem:[%s3 + $0x960] sm:$0xff]
  %v2062 = vld [vmem:[%s3 + $0x968] sm:$0xf]
  %v2063 = vld [vmem:[%s3 + $0x96c] sm:$0xff]
  %v2064 = vld [vmem:[%s3 + $0x974] sm:$0xff]
  %v2065 = vld [vmem:[%s3 + $0x97c] sm:$0xff]
  %v2066 = vld [vmem:[%s3 + $0x984] sm:$0xff]
  %v2067 = vld [vmem:[%s3 + $0x98c] sm:$0xf]
  %v2068 = vld [vmem:[%s3 + $0x990] sm:$0xff]
  %v2069 = vld [vmem:[%s3 + $0x998] sm:$0xff]
  %v2070 = vld [vmem:[%s3 + $0x9a0] sm:$0xff]
  %v2071 = vld [vmem:[%s3 + $0x9a8] sm:$0xff]
  %v2072 = vld [vmem:[%s3 + $0x9b0] sm:$0xf]
  %v2073 = vld [vmem:[%s3 + $0x9b4] sm:$0xff]
  %v2074 = vld [vmem:[%s3 + $0x9bc] sm:$0xff]
  %v2075 = vld [vmem:[%s3 + $0x9c4] sm:$0xff]
  %v2076 = vld [vmem:[%s3 + $0x9cc] sm:$0xff]
  %v2077 = vld [vmem:[%s3 + $0x9d4] sm:$0xf]
  %v2078 = vld [vmem:[%s3 + $0x9d8] sm:$0xff]
  %v2079 = vld [vmem:[%s3 + $0x9e0] sm:$0xff]
  %v2080 = vld [vmem:[%s3 + $0x9e8] sm:$0xff]
  %v2081 = vld [vmem:[%s3 + $0x9f0] sm:$0xff]
  %v2082 = vld [vmem:[%s3 + $0x9f8] sm:$0xf]
  %v2083 = vld [vmem:[%s3 + $0x9fc] sm:$0xff]
  %v2084 = vld [vmem:[%s3 + $0xa04] sm:$0xff]
  %v2085 = vld [vmem:[%s3 + $0xa0c] sm:$0xff]
  %v2086 = vld [vmem:[%s3 + $0xa14] sm:$0xff]
  %v2087 = vld [vmem:[%s3 + $0xa1c] sm:$0xf]
  %v2088 = vld [vmem:[%s3 + $0xa20] sm:$0xff]
  %v2089 = vld [vmem:[%s3 + $0xa28] sm:$0xff]
  %v2090 = vld [vmem:[%s3 + $0xa30] sm:$0xff]
  %v2091 = vld [vmem:[%s3 + $0xa38] sm:$0xff]
  %v2092 = vld [vmem:[%s3 + $0xa40] sm:$0xf]
  %v2093 = vld [vmem:[%s3 + $0xa44] sm:$0xff]
  %v2094 = vld [vmem:[%s3 + $0xa4c] sm:$0xff]
  %v2095 = vld [vmem:[%s3 + $0xa54] sm:$0xff]
  %v2096 = vld [vmem:[%s3 + $0xa5c] sm:$0xff]
  %v2097 = vld [vmem:[%s3 + $0xa64] sm:$0xf]
  %v2098 = vld [vmem:[%s3 + $0xa68] sm:$0xff]
  %v2099 = vld [vmem:[%s3 + $0xa70] sm:$0xff]
  %v2100 = vld [vmem:[%s3 + $0xa78] sm:$0xff]
  %v2101 = vld [vmem:[%s3 + $0xa80] sm:$0xff]
  %v2102 = vld [vmem:[%s3 + $0xa88] sm:$0xf]
  %v2103 = vld [vmem:[%s3 + $0xa8c] sm:$0xff]
  %v2104 = vld [vmem:[%s3 + $0xa94] sm:$0xff]
  %v2105 = vld [vmem:[%s3 + $0xa9c] sm:$0xff]
  %v2106 = vld [vmem:[%s3 + $0xaa4] sm:$0xff]
  %v2107 = vld [vmem:[%s3 + $0xaac] sm:$0xf]
  %v2108 = vld [vmem:[%s3 + $0xab0] sm:$0xff]
  %v2109 = vld [vmem:[%s3 + $0xab8] sm:$0xff]
  %v2110 = vld [vmem:[%s3 + $0xac0] sm:$0xff]
  %v2111 = vld [vmem:[%s3 + $0xac8] sm:$0xff]
  %v2112 = vld [vmem:[%s3 + $0xad0] sm:$0xf]
  %v2113 = vld [vmem:[%s3 + $0xad4] sm:$0xff]
  %v2114 = vld [vmem:[%s3 + $0xadc] sm:$0xff]
  %v2115 = vld [vmem:[%s3 + $0xae4] sm:$0xff]
  %v2116 = vld [vmem:[%s3 + $0xaec] sm:$0xff]
  %v2117 = vld [vmem:[%s3 + $0xaf4] sm:$0xf]
  %v2118 = vld [vmem:[%s3 + $0xaf8] sm:$0xff]
  %v2119 = vld [vmem:[%s3 + $0xb00] sm:$0xff]
  %v2120 = vld [vmem:[%s3 + $0xb08] sm:$0xff]
  %v2121 = vld [vmem:[%s3 + $0xb10] sm:$0xff]
  %v2122 = vld [vmem:[%s3 + $0xb18] sm:$0xf]
  %v2123 = vld [vmem:[%s3 + $0xb1c] sm:$0xff]
  %v2124 = vld [vmem:[%s3 + $0xb24] sm:$0xff]
  %v2125 = vld [vmem:[%s3 + $0xb2c] sm:$0xff]
  %v2126 = vld [vmem:[%s3 + $0xb34] sm:$0xff]
  %v2127 = vld [vmem:[%s3 + $0xb3c] sm:$0xf]
  %v2128 = vld [vmem:[%s3 + $0xb40] sm:$0xff]
  %v2129 = vld [vmem:[%s3 + $0xb48] sm:$0xff]
  %v2130 = vld [vmem:[%s3 + $0xb50] sm:$0xff]
  %v2131 = vld [vmem:[%s3 + $0xb58] sm:$0xff]
  %v2132 = vld [vmem:[%s3 + $0xb60] sm:$0xf]
  %v2133 = vld [vmem:[%s3 + $0xb64] sm:$0xff]
  %v2134 = vld [vmem:[%s3 + $0xb6c] sm:$0xff]
  %v2135 = vld [vmem:[%s3 + $0xb74] sm:$0xff]
  %v2136 = vld [vmem:[%s3 + $0xb7c] sm:$0xff]
  %v2137 = vld [vmem:[%s3 + $0xb84] sm:$0xf]
  %v2138 = vld [vmem:[%s3 + $0xb88] sm:$0xff]
  %v2139 = vld [vmem:[%s3 + $0xb90] sm:$0xff]
  %v2140 = vld [vmem:[%s3 + $0xb98] sm:$0xff]
  %v2141 = vld [vmem:[%s3 + $0xba0] sm:$0xff]
  %v2142 = vld [vmem:[%s3 + $0xba8] sm:$0xf]
  %v2143 = vld [vmem:[%s3 + $0xbac] sm:$0xff]
  %v2144 = vld [vmem:[%s3 + $0xbb4] sm:$0xff]
  %v2145 = vld [vmem:[%s3 + $0xbbc] sm:$0xff]
  %v2146 = vld [vmem:[%s3 + $0xbc4] sm:$0xff]
  %v2147 = vld [vmem:[%s3 + $0xbcc] sm:$0xf]
  %v2148 = vld [vmem:[%s3 + $0xbd0] sm:$0xff]
  %v2149 = vld [vmem:[%s3 + $0xbd8] sm:$0xff]
  %v2150 = vld [vmem:[%s3 + $0xbe0] sm:$0xff]
  %v2151 = vld [vmem:[%s3 + $0xbe8] sm:$0xff]
  %v2152 = vld [vmem:[%s3 + $0xbf0] sm:$0xf]
  %v2153 = vld [vmem:[%s3 + $0xbf4] sm:$0xff]
  %v2154 = vld [vmem:[%s3 + $0xbfc] sm:$0xff]
  %v2155 = vld [vmem:[%s3 + $0xc04] sm:$0xff]
  %v2156 = vld [vmem:[%s3 + $0xc0c] sm:$0xff]
  %v2157 = vld [vmem:[%s3 + $0xc14] sm:$0xf]
  %v2158 = vld [vmem:[%s3 + $0xc18] sm:$0xff]
  %v2159 = vld [vmem:[%s3 + $0xc20] sm:$0xff]
  %v2160 = vld [vmem:[%s3 + $0xc28] sm:$0xff]
  %v2161 = vld [vmem:[%s3 + $0xc30] sm:$0xff]
  %v2162 = vld [vmem:[%s3 + $0xc38] sm:$0xf]
  %v2163 = vld [vmem:[%s3 + $0xc3c] sm:$0xff]
  %v2164 = vld [vmem:[%s3 + $0xc44] sm:$0xff]
  %v2165 = vld [vmem:[%s3 + $0xc4c] sm:$0xff]
  %v2166 = vld [vmem:[%s3 + $0xc54] sm:$0xff]
  %v2167 = vld [vmem:[%s3 + $0xc5c] sm:$0xf]
  %v2168 = vld [vmem:[%s3 + $0xc60] sm:$0xff]
  %v2169 = vld [vmem:[%s3 + $0xc68] sm:$0xff]
  %v2170 = vld [vmem:[%s3 + $0xc70] sm:$0xff]
  %v2171 = vld [vmem:[%s3 + $0xc78] sm:$0xff]
  %v2172 = vld [vmem:[%s3 + $0xc80] sm:$0xf]
  %v2173 = vld [vmem:[%s3 + $0xc84] sm:$0xff]
  %v2174 = vld [vmem:[%s3 + $0xc8c] sm:$0xff]
  %v2175 = vld [vmem:[%s3 + $0xc94] sm:$0xff]
  %v2176 = vld [vmem:[%s3 + $0xc9c] sm:$0xff]
  %v2177 = vld [vmem:[%s3 + $0xca4] sm:$0xf]
  %v2178 = vld [vmem:[%s3 + $0xca8] sm:$0xff]
  %v2179 = vld [vmem:[%s3 + $0xcb0] sm:$0xff]
  %v2180 = vld [vmem:[%s3 + $0xcb8] sm:$0xff]
  %v2181 = vld [vmem:[%s3 + $0xcc0] sm:$0xff]
  %v2182 = vld [vmem:[%s3 + $0xcc8] sm:$0xf]
  %v2183 = vld [vmem:[%s3 + $0xccc] sm:$0xff]
  %v2184 = vld [vmem:[%s3 + $0xcd4] sm:$0xff]
  %v2185 = vld [vmem:[%s3 + $0xcdc] sm:$0xff]
  %v2186 = vld [vmem:[%s3 + $0xce4] sm:$0xff]
  %v2187 = vld [vmem:[%s3 + $0xcec] sm:$0xf]
  %v2188 = vld [vmem:[%s3 + $0xcf0] sm:$0xff]
  %v2189 = vld [vmem:[%s3 + $0xcf8] sm:$0xff]
  %v2190 = vld [vmem:[%s3 + $0xd00] sm:$0xff]
  %v2191 = vld [vmem:[%s3 + $0xd08] sm:$0xff]
  %v2192 = vld [vmem:[%s3 + $0xd10] sm:$0xf]
  %v2193 = vld [vmem:[%s3 + $0xd14] sm:$0xff]
  %v2194 = vld [vmem:[%s3 + $0xd1c] sm:$0xff]
  %v2195 = vld [vmem:[%s3 + $0xd24] sm:$0xff]
  %v2196 = vld [vmem:[%s3 + $0xd2c] sm:$0xff]
  %v2197 = vld [vmem:[%s3 + $0xd34] sm:$0xf]
  %v2198 = vld [vmem:[%s3 + $0xd38] sm:$0xff]
  %v2199 = vld [vmem:[%s3 + $0xd40] sm:$0xff]
  %v2200 = vld [vmem:[%s3 + $0xd48] sm:$0xff]
  %v2201 = vld [vmem:[%s3 + $0xd50] sm:$0xff]
  %v2202 = vld [vmem:[%s3 + $0xd58] sm:$0xf]
  %v2203 = vld [vmem:[%s3 + $0xd5c] sm:$0xff]
  %v2204 = vld [vmem:[%s3 + $0xd64] sm:$0xff]
  %v2205 = vld [vmem:[%s3 + $0xd6c] sm:$0xff]
  %v2206 = vld [vmem:[%s3 + $0xd74] sm:$0xff]
  %v2207 = vld [vmem:[%s3 + $0xd7c] sm:$0xf]
  %v2208 = vld [vmem:[%s3 + $0xd80] sm:$0xff]
  %v2209 = vld [vmem:[%s3 + $0xd88] sm:$0xff]
  %v2210 = vld [vmem:[%s3 + $0xd90] sm:$0xff]
  %v2211 = vld [vmem:[%s3 + $0xd98] sm:$0xff]
  %v2212 = vld [vmem:[%s3 + $0xda0] sm:$0xf]
  %v2213 = vld [vmem:[%s3 + $0xda4] sm:$0xff]
  %v2214 = vld [vmem:[%s3 + $0xdac] sm:$0xff]
  %v2215 = vld [vmem:[%s3 + $0xdb4] sm:$0xff]
  %v2216 = vld [vmem:[%s3 + $0xdbc] sm:$0xff]
  %v2217 = vld [vmem:[%s3 + $0xdc4] sm:$0xf]
  %v2218 = vld [vmem:[%s3 + $0xdc8] sm:$0xff]
  %v2219 = vld [vmem:[%s3 + $0xdd0] sm:$0xff]
  %v2220 = vld [vmem:[%s3 + $0xdd8] sm:$0xff]
  %v2221 = vld [vmem:[%s3 + $0xde0] sm:$0xff]
  %v2222 = vld [vmem:[%s3 + $0xde8] sm:$0xf]
  %v2223 = vld [vmem:[%s3 + $0xdec] sm:$0xff]
  %v2224 = vld [vmem:[%s3 + $0xdf4] sm:$0xff]
  %v2225 = vld [vmem:[%s3 + $0xdfc] sm:$0xff]
  %v2226 = vld [vmem:[%s3 + $0xe04] sm:$0xff]
  %v2227 = vld [vmem:[%s3 + $0xe0c] sm:$0xf]
  %v2228 = vld [vmem:[%s3 + $0xe10] sm:$0xff]
  %v2229 = vld [vmem:[%s3 + $0xe18] sm:$0xff]
  %v2230 = vld [vmem:[%s3 + $0xe20] sm:$0xff]
  %v2231 = vld [vmem:[%s3 + $0xe28] sm:$0xff]
  %v2232 = vld [vmem:[%s3 + $0xe30] sm:$0xf]
  %v2233 = vld [vmem:[%s3 + $0xe34] sm:$0xff]
  %v2234 = vld [vmem:[%s3 + $0xe3c] sm:$0xff]
  %v2235 = vld [vmem:[%s3 + $0xe44] sm:$0xff]
  %v2236 = vld [vmem:[%s3 + $0xe4c] sm:$0xff]
  %v2237 = vld [vmem:[%s3 + $0xe54] sm:$0xf]
  %v2238 = vld [vmem:[%s3 + $0xe58] sm:$0xff]
  %v2239 = vld [vmem:[%s3 + $0xe60] sm:$0xff]
  %v2240 = vld [vmem:[%s3 + $0xe68] sm:$0xff]
  %v2241 = vld [vmem:[%s3 + $0xe70] sm:$0xff]
  %v2242 = vld [vmem:[%s3 + $0xe78] sm:$0xf]
  %v2243 = vld [vmem:[%s3 + $0xe7c] sm:$0xff]
  %v2244 = vld [vmem:[%s3 + $0xe84] sm:$0xff]
  %v2245 = vld [vmem:[%s3 + $0xe8c] sm:$0xff]
  %v2246 = vld [vmem:[%s3 + $0xe94] sm:$0xff]
  %v2247 = vld [vmem:[%s3 + $0xe9c] sm:$0xf]
  %v2248 = vld [vmem:[%s3 + $0xea0] sm:$0xff]
  %v2249 = vld [vmem:[%s3 + $0xea8] sm:$0xff]
  %v2250 = vld [vmem:[%s3 + $0xeb0] sm:$0xff]
  %v2251 = vld [vmem:[%s3 + $0xeb8] sm:$0xff]
  %v2252 = vld [vmem:[%s3 + $0xec0] sm:$0xf]
  %v2253 = vld [vmem:[%s3 + $0xec4] sm:$0xff]
  %v2254 = vld [vmem:[%s3 + $0xecc] sm:$0xff]
  %v2255 = vld [vmem:[%s3 + $0xed4] sm:$0xff]
  %v2256 = vld [vmem:[%s3 + $0xedc] sm:$0xff]
  %v2257 = vld [vmem:[%s3 + $0xee4] sm:$0xf]
  %v2258 = vld [vmem:[%s3 + $0xee8] sm:$0xff]
  %v2259 = vld [vmem:[%s3 + $0xef0] sm:$0xff]
  %v2260 = vld [vmem:[%s3 + $0xef8] sm:$0xff]
  %v2261 = vld [vmem:[%s3 + $0xf00] sm:$0xff]
  %v2262 = vld [vmem:[%s3 + $0xf08] sm:$0xf]
  %v2263 = vld [vmem:[%s3 + $0xf0c] sm:$0xff]
  %v2264 = vld [vmem:[%s3 + $0xf14] sm:$0xff]
  %v2265 = vld [vmem:[%s3 + $0xf1c] sm:$0xff]
  %v2266 = vld [vmem:[%s3 + $0xf24] sm:$0xff]
  %v2267 = vld [vmem:[%s3 + $0xf2c] sm:$0xf]
  %v2268 = vld [vmem:[%s3 + $0xf30] sm:$0xff]
  %v2269 = vld [vmem:[%s3 + $0xf38] sm:$0xff]
  %v2270 = vld [vmem:[%s3 + $0xf40] sm:$0xff]
  %v2271 = vld [vmem:[%s3 + $0xf48] sm:$0xff]
  %v2272 = vld [vmem:[%s3 + $0xf50] sm:$0xf]
  %v2273 = vld [vmem:[%s3 + $0xf54] sm:$0xff]
  %v2274 = vld [vmem:[%s3 + $0xf5c] sm:$0xff]
  %v2275 = vld [vmem:[%s3 + $0xf64] sm:$0xff]
  %v2276 = vld [vmem:[%s3 + $0xf6c] sm:$0xff]
  %v2277 = vld [vmem:[%s3 + $0xf74] sm:$0xf]
  %v2278 = vld [vmem:[%s3 + $0xf78] sm:$0xff]
  %v2279 = vld [vmem:[%s3 + $0xf80] sm:$0xff]
  %v2280 = vld [vmem:[%s3 + $0xf88] sm:$0xff]
  %v2281 = vld [vmem:[%s3 + $0xf90] sm:$0xff]
  %v2282 = vld [vmem:[%s3 + $0xf98] sm:$0xf]
  %v2283 = vld [vmem:[%s3 + $0xf9c] sm:$0xff]
  %v2284 = vld [vmem:[%s3 + $0xfa4] sm:$0xff]
  %v2285 = vld [vmem:[%s3 + $0xfac] sm:$0xff]
  %v2286 = vld [vmem:[%s3 + $0xfb4] sm:$0xff]
  %v2287 = vld [vmem:[%s3 + $0xfbc] sm:$0xf]
  %v2288 = vld [vmem:[%s3 + $0xfc0] sm:$0xff]
  %v2289 = vld [vmem:[%s3 + $0xfc8] sm:$0xff]
  %v2290 = vld [vmem:[%s3 + $0xfd0] sm:$0xff]
  %v2291 = vld [vmem:[%s3 + $0xfd8] sm:$0xff]
  %v2292 = vld [vmem:[%s3 + $0xfe0] sm:$0xf]
  %v2293 = vld [vmem:[%s3 + $0xfe4] sm:$0xff]
  %v2294 = vld [vmem:[%s3 + $0xfec] sm:$0xff]
  %v2295 = vld [vmem:[%s3 + $0xff4] sm:$0xff]
  %v2296 = vld [vmem:[%s3 + $0xffc] sm:$0xff]
  %v2297 = vld [vmem:[%s3 + $0x1004] sm:$0xf]
  %v2298 = vld [vmem:[%s3 + $0x1008] sm:$0xff]
  %v2299 = vld [vmem:[%s3 + $0x1010] sm:$0xff]
  %v2300 = vld [vmem:[%s3 + $0x1018] sm:$0xff]
  %v2301 = vld [vmem:[%s3 + $0x1020] sm:$0xff]
  %v2302 = vld [vmem:[%s3 + $0x1028] sm:$0xf]
  %v2303 = vld [vmem:[%s3 + $0x102c] sm:$0xff]
  %v2304 = vld [vmem:[%s3 + $0x1034] sm:$0xff]
  %v2305 = vld [vmem:[%s3 + $0x103c] sm:$0xff]
  %v2306 = vld [vmem:[%s3 + $0x1044] sm:$0xff]
  %v2307 = vld [vmem:[%s3 + $0x104c] sm:$0xf]
  %v2308 = vld [vmem:[%s3 + $0x1050] sm:$0xff]
  %v2309 = vld [vmem:[%s3 + $0x1058] sm:$0xff]
  %v2310 = vld [vmem:[%s3 + $0x1060] sm:$0xff]
  %v2311 = vld [vmem:[%s3 + $0x1068] sm:$0xff]
  %v2312 = vld [vmem:[%s3 + $0x1070] sm:$0xf]
  %v2313 = vld [vmem:[%s3 + $0x1074] sm:$0xff]
  %v2314 = vld [vmem:[%s3 + $0x107c] sm:$0xff]
  %v2315 = vld [vmem:[%s3 + $0x1084] sm:$0xff]
  %v2316 = vld [vmem:[%s3 + $0x108c] sm:$0xff]
  %v2317 = vld [vmem:[%s3 + $0x1094] sm:$0xf]
  %v2318 = vld [vmem:[%s3 + $0x1098] sm:$0xff]
  %v2319 = vld [vmem:[%s3 + $0x10a0] sm:$0xff]
  %v2320 = vld [vmem:[%s3 + $0x10a8] sm:$0xff]
  %v2321 = vld [vmem:[%s3 + $0x10b0] sm:$0xff]
  %v2322 = vld [vmem:[%s3 + $0x10b8] sm:$0xf]
  %v2323 = vld [vmem:[%s3 + $0x10bc] sm:$0xff]
  %v2324 = vld [vmem:[%s3 + $0x10c4] sm:$0xff]
  %v2325 = vld [vmem:[%s3 + $0x10cc] sm:$0xff]
  %v2326 = vld [vmem:[%s3 + $0x10d4] sm:$0xff]
  %v2327 = vld [vmem:[%s3 + $0x10dc] sm:$0xf]
  %v2328 = vld [vmem:[%s3 + $0x10e0] sm:$0xff]
  %v2329 = vld [vmem:[%s3 + $0x10e8] sm:$0xff]
  %v2330 = vld [vmem:[%s3 + $0x10f0] sm:$0xff]
  %v2331 = vld [vmem:[%s3 + $0x10f8] sm:$0xff]
  %v2332 = vld [vmem:[%s3 + $0x1100] sm:$0xf]
  %v2333 = vld [vmem:[%s3 + $0x1104] sm:$0xff]
  %v2334 = vld [vmem:[%s3 + $0x110c] sm:$0xff]
  %v2335 = vld [vmem:[%s3 + $0x1114] sm:$0xff]
  %v2336 = vld [vmem:[%s3 + $0x111c] sm:$0xff]
  %v2337 = vld [vmem:[%s3 + $0x1124] sm:$0xf]
  %v2338 = vld [vmem:[%s3 + $0x1128] sm:$0xff]
  %v2339 = vld [vmem:[%s3 + $0x1130] sm:$0xff]
  %v2340 = vld [vmem:[%s3 + $0x1138] sm:$0xff]
  %v2341 = vld [vmem:[%s3 + $0x1140] sm:$0xff]
  %v2342 = vld [vmem:[%s3 + $0x1148] sm:$0xf]
  %v2343 = vld [vmem:[%s3 + $0x114c] sm:$0xff]
  %v2344 = vld [vmem:[%s3 + $0x1154] sm:$0xff]
  %v2345 = vld [vmem:[%s3 + $0x115c] sm:$0xff]
  %v2346 = vld [vmem:[%s3 + $0x1164] sm:$0xff]
  %v2347 = vld [vmem:[%s3 + $0x116c] sm:$0xf]
  %v2348 = vld [vmem:[%s3 + $0x1170] sm:$0xff]
  %v2349 = vld [vmem:[%s3 + $0x1178] sm:$0xff]
  %v2350 = vld [vmem:[%s3 + $0x1180] sm:$0xff]
  %v2351 = vld [vmem:[%s3 + $0x1188] sm:$0xff]
  %v2352 = vld [vmem:[%s3 + $0x1190] sm:$0xf]
  %v2353 = vld [vmem:[%s3 + $0x1194] sm:$0xff]
  %v2354 = vld [vmem:[%s3 + $0x119c] sm:$0xff]
  %v2355 = vld [vmem:[%s3 + $0x11a4] sm:$0xff]
  %v2356 = vld [vmem:[%s3 + $0x11ac] sm:$0xff]
  %v2357 = vld [vmem:[%s3 + $0x11b4] sm:$0xf]
  %v2358 = vld [vmem:[%s3 + $0x11b8] sm:$0xff]
  %v2359 = vld [vmem:[%s3 + $0x11c0] sm:$0xff]
  %v2360 = vld [vmem:[%s3 + $0x11c8] sm:$0xff]
  %v2361 = vld [vmem:[%s3 + $0x11d0] sm:$0xff]
  %v2362 = vld [vmem:[%s3 + $0x11d8] sm:$0xf]
  %v2363 = vld [vmem:[%s3 + $0x11dc] sm:$0xff]
  %v2364 = vld [vmem:[%s3 + $0x11e4] sm:$0xff]
  %v2365 = vld [vmem:[%s3 + $0x11ec] sm:$0xff]
  %v2366 = vld [vmem:[%s3 + $0x11f4] sm:$0xff]
  %v2367 = vld [vmem:[%s3 + $0x11fc] sm:$0xf]
  %v2368 = vld [vmem:[%s3 + $0x1200] sm:$0xff]
  %v2369 = vld [vmem:[%s3 + $0x1208] sm:$0xff]
  %v2370 = vld [vmem:[%s3 + $0x1210] sm:$0xff]
  %v2371 = vld [vmem:[%s3 + $0x1218] sm:$0xff]
  %v2372 = vld [vmem:[%s3 + $0x1220] sm:$0xf]
  %v2373 = vld [vmem:[%s3 + $0x1224] sm:$0xff]
  %v2374 = vld [vmem:[%s3 + $0x122c] sm:$0xff]
  %v2375 = vld [vmem:[%s3 + $0x1234] sm:$0xff]
  %v2376 = vld [vmem:[%s3 + $0x123c] sm:$0xff]
  %v2377 = vld [vmem:[%s3 + $0x1244] sm:$0xf]
  %v2378 = vld [vmem:[%s3 + $0x1248] sm:$0xff]
  %v2379 = vld [vmem:[%s3 + $0x1250] sm:$0xff]
  %v2380 = vld [vmem:[%s3 + $0x1258] sm:$0xff]
  %v2381 = vld [vmem:[%s3 + $0x1260] sm:$0xff]
  %v2382 = vld [vmem:[%s3 + $0x1268] sm:$0xf]
  %v2383 = vld [vmem:[%s3 + $0x126c] sm:$0xff]
  %v2384 = vld [vmem:[%s3 + $0x1274] sm:$0xff]
  %v2385 = vld [vmem:[%s3 + $0x127c] sm:$0xff]
  %v2386 = vld [vmem:[%s3 + $0x1284] sm:$0xff]
  %v2387 = vld [vmem:[%s3 + $0x128c] sm:$0xf]
  %v2388 = vld [vmem:[%s3 + $0x1290] sm:$0xff]
  %v2389 = vld [vmem:[%s3 + $0x1298] sm:$0xff]
  %v2390 = vld [vmem:[%s3 + $0x12a0] sm:$0xff]
  %v2391 = vld [vmem:[%s3 + $0x12a8] sm:$0xff]
  %v2392 = vld [vmem:[%s3 + $0x12b0] sm:$0xf]
  %v2393 = vld [vmem:[%s3 + $0x12b4] sm:$0xff]
  %v2394 = vld [vmem:[%s3 + $0x12bc] sm:$0xff]
  %v2395 = vld [vmem:[%s3 + $0x12c4] sm:$0xff]
  %v2396 = vld [vmem:[%s3 + $0x12cc] sm:$0xff]
  %v2397 = vld [vmem:[%s3 + $0x12d4] sm:$0xf]
  %v2398 = vld [vmem:[%s3 + $0x12d8] sm:$0xff]
  %v2399 = vld [vmem:[%s3 + $0x12e0] sm:$0xff]
  %v2400 = vld [vmem:[%s3 + $0x12e8] sm:$0xff]
  %v2401 = vld [vmem:[%s3 + $0x12f0] sm:$0xff]
  %v2402 = vld [vmem:[%s3 + $0x12f8] sm:$0xf]
  %v2403 = vld [vmem:[%s3 + $0x12fc] sm:$0xff]
  %v2404 = vld [vmem:[%s3 + $0x1304] sm:$0xff]
  %v2405 = vld [vmem:[%s3 + $0x130c] sm:$0xff]
  %v2406 = vld [vmem:[%s3 + $0x1314] sm:$0xff]
  %v2407 = vld [vmem:[%s3 + $0x131c] sm:$0xf]
  %v2408 = vld [vmem:[%s3 + $0x1320] sm:$0xff]
  %v2409 = vld [vmem:[%s3 + $0x1328] sm:$0xff]
  %v2410 = vld [vmem:[%s3 + $0x1330] sm:$0xff]
  %v2411 = vld [vmem:[%s3 + $0x1338] sm:$0xff]
  %v2412 = vld [vmem:[%s3 + $0x1340] sm:$0xf]
  %v2413 = vld [vmem:[%s3 + $0x1344] sm:$0xff]
  %v2414 = vld [vmem:[%s3 + $0x134c] sm:$0xff]
  %v2415 = vld [vmem:[%s3 + $0x1354] sm:$0xff]
  %v2416 = vld [vmem:[%s3 + $0x135c] sm:$0xff]
  %v2417 = vld [vmem:[%s3 + $0x1364] sm:$0xf]
  %v2418 = vld [vmem:[%s3 + $0x1368] sm:$0xff]
  %v2419 = vld [vmem:[%s3 + $0x1370] sm:$0xff]
  %v2420 = vld [vmem:[%s3 + $0x1378] sm:$0xff]
  %v2421 = vld [vmem:[%s3 + $0x1380] sm:$0xff]
  %v2422 = vld [vmem:[%s3 + $0x1388] sm:$0xf]
  %v2423 = vld [vmem:[%s3 + $0x138c] sm:$0xff]
  %v2424 = vld [vmem:[%s3 + $0x1394] sm:$0xff]
  %v2425 = vld [vmem:[%s3 + $0x139c] sm:$0xff]
  %v2426 = vld [vmem:[%s3 + $0x13a4] sm:$0xff]
  %v2427 = vld [vmem:[%s3 + $0x13ac] sm:$0xf]
  %v2428 = vld [vmem:[%s3 + $0x13b0] sm:$0xff]
  %v2429 = vld [vmem:[%s3 + $0x13b8] sm:$0xff]
  %v2430 = vld [vmem:[%s3 + $0x13c0] sm:$0xff]
  %v2431 = vld [vmem:[%s3 + $0x13c8] sm:$0xff]
  %v2432 = vld [vmem:[%s3 + $0x13d0] sm:$0xf]
  %v2433 = vld [vmem:[%s3 + $0x13d4] sm:$0xff]
  %v2434 = vld [vmem:[%s3 + $0x13dc] sm:$0xff]
  %v2435 = vld [vmem:[%s3 + $0x13e4] sm:$0xff]
  %v2436 = vld [vmem:[%s3 + $0x13ec] sm:$0xff]
  %v2437 = vld [vmem:[%s3 + $0x13f4] sm:$0xf]
  %v2438 = vld [vmem:[%s3 + $0x13f8] sm:$0xff]
  %v2439 = vld [vmem:[%s3 + $0x1400] sm:$0xff]
  %v2440 = vld [vmem:[%s3 + $0x1408] sm:$0xff]
  %v2441 = vld [vmem:[%s3 + $0x1410] sm:$0xff]
  %v2442 = vld [vmem:[%s3 + $0x1418] sm:$0xf]
  %v2443 = vld [vmem:[%s3 + $0x141c] sm:$0xff]
  %v2444 = vld [vmem:[%s3 + $0x1424] sm:$0xff]
  %v2445 = vld [vmem:[%s3 + $0x142c] sm:$0xff]
  %v2446 = vld [vmem:[%s3 + $0x1434] sm:$0xff]
  %v2447 = vld [vmem:[%s3 + $0x143c] sm:$0xf]
  %v2448 = vld [vmem:[%s3 + $0x1440] sm:$0xff]
  %v2449 = vld [vmem:[%s3 + $0x1448] sm:$0xff]
  %v2450 = vld [vmem:[%s3 + $0x1450] sm:$0xff]
  %v2451 = vld [vmem:[%s3 + $0x1458] sm:$0xff]
  %v2452 = vld [vmem:[%s3 + $0x1460] sm:$0xf]
  %v2453 = vld [vmem:[%s3 + $0x1464] sm:$0xff]
  %v2454 = vld [vmem:[%s3 + $0x146c] sm:$0xff]
  %v2455 = vld [vmem:[%s3 + $0x1474] sm:$0xff]
  %v2456 = vld [vmem:[%s3 + $0x147c] sm:$0xff]
  %v2457 = vld [vmem:[%s3 + $0x1484] sm:$0xf]
  %v2458 = vld [vmem:[%s3 + $0x1488] sm:$0xff]
  %v2459 = vld [vmem:[%s3 + $0x1490] sm:$0xff]
  %v2460 = vld [vmem:[%s3 + $0x1498] sm:$0xff]
  %v2461 = vld [vmem:[%s3 + $0x14a0] sm:$0xff]
  %v2462 = vld [vmem:[%s3 + $0x14a8] sm:$0xf]
  %v2463 = vld [vmem:[%s3 + $0x14ac] sm:$0xff]
  %v2464 = vld [vmem:[%s3 + $0x14b4] sm:$0xff]
  %v2465 = vld [vmem:[%s3 + $0x14bc] sm:$0xff]
  %v2466 = vld [vmem:[%s3 + $0x14c4] sm:$0xff]
  %v2467 = vld [vmem:[%s3 + $0x14cc] sm:$0xf]
  %v2468 = vld [vmem:[%s3 + $0x14d0] sm:$0xff]
  %v2469 = vld [vmem:[%s3 + $0x14d8] sm:$0xff]
  %v2470 = vld [vmem:[%s3 + $0x14e0] sm:$0xff]
  %v2471 = vld [vmem:[%s3 + $0x14e8] sm:$0xff]
  %v2472 = vld [vmem:[%s3 + $0x14f0] sm:$0xf]
  %v2473 = vld [vmem:[%s3 + $0x14f4] sm:$0xff]
  %v2474 = vld [vmem:[%s3 + $0x14fc] sm:$0xff]
  %v2475 = vld [vmem:[%s3 + $0x1504] sm:$0xff]
  %v2476 = vld [vmem:[%s3 + $0x150c] sm:$0xff]
  %v2477 = vld [vmem:[%s3 + $0x1514] sm:$0xf]
  %v2478 = vld [vmem:[%s3 + $0x1518] sm:$0xff]
  %v2479 = vld [vmem:[%s3 + $0x1520] sm:$0xff]
  %v2480 = vld [vmem:[%s3 + $0x1528] sm:$0xff]
  %v2481 = vld [vmem:[%s3 + $0x1530] sm:$0xff]
  %v2482 = vld [vmem:[%s3 + $0x1538] sm:$0xf]
  %v2483 = vld [vmem:[%s3 + $0x153c] sm:$0xff]
  %v2484 = vld [vmem:[%s3 + $0x1544] sm:$0xff]
  %v2485 = vld [vmem:[%s3 + $0x154c] sm:$0xff]
  %v2486 = vld [vmem:[%s3 + $0x1554] sm:$0xff]
  %v2487 = vld [vmem:[%s3 + $0x155c] sm:$0xf]
  %v2488 = vld [vmem:[%s3 + $0x1560] sm:$0xff]
  %v2489 = vld [vmem:[%s3 + $0x1568] sm:$0xff]
  %v2490 = vld [vmem:[%s3 + $0x1570] sm:$0xff]
  %v2491 = vld [vmem:[%s3 + $0x1578] sm:$0xff]
  %v2492 = vld [vmem:[%s3 + $0x1580] sm:$0xf]
  %v2493 = vld [vmem:[%s3 + $0x1584] sm:$0xff]
  %v2494 = vld [vmem:[%s3 + $0x158c] sm:$0xff]
  %v2495 = vld [vmem:[%s3 + $0x1594] sm:$0xff]
  %v2496 = vld [vmem:[%s3 + $0x159c] sm:$0xff]
  %v2497 = vld [vmem:[%s3 + $0x15a4] sm:$0xf]
  %v2498 = vld [vmem:[%s3 + $0x15a8] sm:$0xff]
  %v2499 = vld [vmem:[%s3 + $0x15b0] sm:$0xff]
  %v2500 = vld [vmem:[%s3 + $0x15b8] sm:$0xff]
  %v2501 = vld [vmem:[%s3 + $0x15c0] sm:$0xff]
  %v2502 = vld [vmem:[%s3 + $0x15c8] sm:$0xf]
  %v2503 = vld [vmem:[%s3 + $0x15cc] sm:$0xff]
  %v2504 = vld [vmem:[%s3 + $0x15d4] sm:$0xff]
  %v2505 = vld [vmem:[%s3 + $0x15dc] sm:$0xff]
  %v2506 = vld [vmem:[%s3 + $0x15e4] sm:$0xff]
  %v2507 = vld [vmem:[%s3 + $0x15ec] sm:$0xf]
  %v2508 = vld [vmem:[%s3 + $0x15f0] sm:$0xff]
  %v2509 = vld [vmem:[%s3 + $0x15f8] sm:$0xff]
  %v2510 = vld [vmem:[%s3 + $0x1600] sm:$0xff]
  %v2511 = vld [vmem:[%s3 + $0x1608] sm:$0xff]
  %v2512 = vld [vmem:[%s3 + $0x1610] sm:$0xf]
  %v2513 = vld [vmem:[%s3 + $0x1614] sm:$0xff]
  %v2514 = vld [vmem:[%s3 + $0x161c] sm:$0xff]
  %v2515 = vld [vmem:[%s3 + $0x1624] sm:$0xff]
  %v2516 = vld [vmem:[%s3 + $0x162c] sm:$0xff]
  %v2517 = vld [vmem:[%s3 + $0x1634] sm:$0xf]
  %v2518 = vld [vmem:[%s3 + $0x1638] sm:$0xff]
  %v2519 = vld [vmem:[%s3 + $0x1640] sm:$0xff]
  %v2520 = vld [vmem:[%s3 + $0x1648] sm:$0xff]
  %v2521 = vld [vmem:[%s3 + $0x1650] sm:$0xff]
  %v2522 = vld [vmem:[%s3 + $0x1658] sm:$0xf]
  %v2523 = vld [vmem:[%s3 + $0x165c] sm:$0xff]
  %v2524 = vld [vmem:[%s3 + $0x1664] sm:$0xff]
  %v2525 = vld [vmem:[%s3 + $0x166c] sm:$0xff]
  %v2526 = vld [vmem:[%s3 + $0x1674] sm:$0xff]
  %v2527 = vld [vmem:[%s3 + $0x167c] sm:$0xf]
  %v2528 = vld [vmem:[%s3 + $0x1680] sm:$0xff]
  %v2529 = vld [vmem:[%s3 + $0x1688] sm:$0xff]
  %v2530 = vld [vmem:[%s3 + $0x1690] sm:$0xff]
  %v2531 = vld [vmem:[%s3 + $0x1698] sm:$0xff]
  %v2532 = vld [vmem:[%s3 + $0x16a0] sm:$0xf]
  %v2533 = vld [vmem:[%s3 + $0x16a4] sm:$0xff]
  %v2534 = vld [vmem:[%s3 + $0x16ac] sm:$0xff]
  %v2535 = vld [vmem:[%s3 + $0x16b4] sm:$0xff]
  %v2536 = vld [vmem:[%s3 + $0x16bc] sm:$0xff]
  %v2537 = vld [vmem:[%s3 + $0x16c4] sm:$0xf]
  %v2538 = vld [vmem:[%s3 + $0x16c8] sm:$0xff]
  %v2539 = vld [vmem:[%s3 + $0x16d0] sm:$0xff]
  %v2540 = vld [vmem:[%s3 + $0x16d8] sm:$0xff]
  %v2541 = vld [vmem:[%s3 + $0x16e0] sm:$0xff]
  %v2542 = vld [vmem:[%s3 + $0x16e8] sm:$0xf]
  %v2543 = vld [vmem:[%s3 + $0x16ec] sm:$0xff]
  %v2544 = vld [vmem:[%s3 + $0x16f4] sm:$0xff]
  %v2545 = vld [vmem:[%s3 + $0x16fc] sm:$0xff]
  %v2546 = vld [vmem:[%s3 + $0x1704] sm:$0xff]
  %v2547 = vld [vmem:[%s3 + $0x170c] sm:$0xf]
  %v2548 = vld [vmem:[%s3 + $0x1710] sm:$0xff]
  %v2549 = vld [vmem:[%s3 + $0x1718] sm:$0xff]
  %v2550 = vld [vmem:[%s3 + $0x1720] sm:$0xff]
  %v2551 = vld [vmem:[%s3 + $0x1728] sm:$0xff]
  %v2552 = vld [vmem:[%s3 + $0x1730] sm:$0xf]
  %v2553 = vld [vmem:[%s3 + $0x1734] sm:$0xff]
  %v2554 = vld [vmem:[%s3 + $0x173c] sm:$0xff]
  %v2555 = vld [vmem:[%s3 + $0x1744] sm:$0xff]
  %v2556 = vld [vmem:[%s3 + $0x174c] sm:$0xff]
  %v2557 = vld [vmem:[%s3 + $0x1754] sm:$0xf]
  %v2558 = vld [vmem:[%s3 + $0x1758] sm:$0xff]
  %v2559 = vld [vmem:[%s3 + $0x1760] sm:$0xff]
  %v2560 = vld [vmem:[%s3 + $0x1768] sm:$0xff]
  %v2561 = vld [vmem:[%s3 + $0x1770] sm:$0xff]
  %v2562 = vld [vmem:[%s3 + $0x1778] sm:$0xf]
  %v2563 = vld [vmem:[%s3 + $0x177c] sm:$0xff]
  %v2564 = vld [vmem:[%s3 + $0x1784] sm:$0xff]
  %v2565 = vld [vmem:[%s3 + $0x178c] sm:$0xff]
  %v2566 = vld [vmem:[%s3 + $0x1794] sm:$0xff]
  %v2567 = vld [vmem:[%s3 + $0x179c] sm:$0xf]
  %v2568 = vld [vmem:[%s3 + $0x17a0] sm:$0xff]
  %v2569 = vld [vmem:[%s3 + $0x17a8] sm:$0xff]
  %v2570 = vld [vmem:[%s3 + $0x17b0] sm:$0xff]
  %v2571 = vld [vmem:[%s3 + $0x17b8] sm:$0xff]
  %v2572 = vld [vmem:[%s3 + $0x17c0] sm:$0xf]
  %v2573 = vld [vmem:[%s3 + $0x17c4] sm:$0xff]
  %v2574 = vld [vmem:[%s3 + $0x17cc] sm:$0xff]
  %v2575 = vld [vmem:[%s3 + $0x17d4] sm:$0xff]
  %v2576 = vld [vmem:[%s3 + $0x17dc] sm:$0xff]
  %v2577 = vld [vmem:[%s3 + $0x17e4] sm:$0xf]
  %v2578 = vld [vmem:[%s3 + $0x17e8] sm:$0xff]
  %v2579 = vld [vmem:[%s3 + $0x17f0] sm:$0xff]
  %v2580 = vld [vmem:[%s3 + $0x17f8] sm:$0xff]
  %v2581 = vld [vmem:[%s3 + $0x1800] sm:$0xff]
  %v2582 = vld [vmem:[%s3 + $0x1808] sm:$0xf]
  %v2583 = vld [vmem:[%s3 + $0x180c] sm:$0xff]
  %v2584 = vld [vmem:[%s3 + $0x1814] sm:$0xff]
  %v2585 = vld [vmem:[%s3 + $0x181c] sm:$0xff]
  %v2586 = vld [vmem:[%s3 + $0x1824] sm:$0xff]
  %v2587 = vld [vmem:[%s3 + $0x182c] sm:$0xf]
  %v2588 = vld [vmem:[%s3 + $0x1830] sm:$0xff]
  %v2589 = vld [vmem:[%s3 + $0x1838] sm:$0xff]
  %v2590 = vld [vmem:[%s3 + $0x1840] sm:$0xff]
  %v2591 = vld [vmem:[%s3 + $0x1848] sm:$0xff]
  %v2592 = vld [vmem:[%s3 + $0x1850] sm:$0xf]
  %v2593 = vld [vmem:[%s3 + $0x1854] sm:$0xff]
  %v2594 = vld [vmem:[%s3 + $0x185c] sm:$0xff]
  %v2595 = vld [vmem:[%s3 + $0x1864] sm:$0xff]
  %v2596 = vld [vmem:[%s3 + $0x186c] sm:$0xff]
  %v2597 = vld [vmem:[%s3 + $0x1874] sm:$0xf]
  %v2598 = vld [vmem:[%s3 + $0x1878] sm:$0xff]
  %v2599 = vld [vmem:[%s3 + $0x1880] sm:$0xff]
  %v2600 = vld [vmem:[%s3 + $0x1888] sm:$0xff]
  %v2601 = vld [vmem:[%s3 + $0x1890] sm:$0xff]
  %v2602 = vld [vmem:[%s3 + $0x1898] sm:$0xf]
  %v2603 = vld [vmem:[%s3 + $0x189c] sm:$0xff]
  %v2604 = vld [vmem:[%s3 + $0x18a4] sm:$0xff]
  %v2605 = vld [vmem:[%s3 + $0x18ac] sm:$0xff]
  %v2606 = vld [vmem:[%s3 + $0x18b4] sm:$0xff]
  %v2607 = vld [vmem:[%s3 + $0x18bc] sm:$0xf]
  %v2608 = vld [vmem:[%s3 + $0x18c0] sm:$0xff]
  %v2609 = vld [vmem:[%s3 + $0x18c8] sm:$0xff]
  %v2610 = vld [vmem:[%s3 + $0x18d0] sm:$0xff]
  %v2611 = vld [vmem:[%s3 + $0x18d8] sm:$0xff]
  %v2612 = vld [vmem:[%s3 + $0x18e0] sm:$0xf]
  %v2613 = vld [vmem:[%s3 + $0x18e4] sm:$0xff]
  %v2614 = vld [vmem:[%s3 + $0x18ec] sm:$0xff]
  %v2615 = vld [vmem:[%s3 + $0x18f4] sm:$0xff]
  %v2616 = vld [vmem:[%s3 + $0x18fc] sm:$0xff]
  %v2617 = vld [vmem:[%s3 + $0x1904] sm:$0xf]
  %v2618 = vld [vmem:[%s3 + $0x1908] sm:$0xff]
  %v2619 = vld [vmem:[%s3 + $0x1910] sm:$0xff]
  %v2620 = vld [vmem:[%s3 + $0x1918] sm:$0xff]
  %v2621 = vld [vmem:[%s3 + $0x1920] sm:$0xff]
  %v2622 = vld [vmem:[%s3 + $0x1928] sm:$0xf]
  %v2623 = vld [vmem:[%s3 + $0x192c] sm:$0xff]
  %v2624 = vld [vmem:[%s3 + $0x1934] sm:$0xff]
  %v2625 = vld [vmem:[%s3 + $0x193c] sm:$0xff]
  %v2626 = vld [vmem:[%s3 + $0x1944] sm:$0xff]
  %v2627 = vld [vmem:[%s3 + $0x194c] sm:$0xf]
  %v2628 = vld [vmem:[%s3 + $0x1950] sm:$0xff]
  %v2629 = vld [vmem:[%s3 + $0x1958] sm:$0xff]
  %v2630 = vld [vmem:[%s3 + $0x1960] sm:$0xff]
  %v2631 = vld [vmem:[%s3 + $0x1968] sm:$0xff]
  %v2632 = vld [vmem:[%s3 + $0x1970] sm:$0xf]
  %v2633 = vld [vmem:[%s3 + $0x1974] sm:$0xff]
  %v2634 = vld [vmem:[%s3 + $0x197c] sm:$0xff]
  %v2635 = vld [vmem:[%s3 + $0x1984] sm:$0xff]
  %v2636 = vld [vmem:[%s3 + $0x198c] sm:$0xff]
  %v2637 = vld [vmem:[%s3 + $0x1994] sm:$0xf]
  %v2638 = vld [vmem:[%s3 + $0x1998] sm:$0xff]
  %v2639 = vld [vmem:[%s3 + $0x19a0] sm:$0xff]
  %v2640 = vld [vmem:[%s3 + $0x19a8] sm:$0xff]
  %v2641 = vld [vmem:[%s3 + $0x19b0] sm:$0xff]
  %v2642 = vld [vmem:[%s3 + $0x19b8] sm:$0xf]
  %v2643 = vld [vmem:[%s3 + $0x19bc] sm:$0xff]
  %v2644 = vld [vmem:[%s3 + $0x19c4] sm:$0xff]
  %v2645 = vld [vmem:[%s3 + $0x19cc] sm:$0xff]
  %v2646 = vld [vmem:[%s3 + $0x19d4] sm:$0xff]
  %v2647 = vld [vmem:[%s3 + $0x19dc] sm:$0xf]
  %v2648 = vld [vmem:[%s3 + $0x19e0] sm:$0xff]
  %v2649 = vld [vmem:[%s3 + $0x19e8] sm:$0xff]
  %v2650 = vld [vmem:[%s3 + $0x19f0] sm:$0xff]
  %v2651 = vld [vmem:[%s3 + $0x19f8] sm:$0xff]
  %v2652 = vld [vmem:[%s3 + $0x1a00] sm:$0xf]
  %v2653 = vld [vmem:[%s3 + $0x1a04] sm:$0xff]
  %v2654 = vld [vmem:[%s3 + $0x1a0c] sm:$0xff]
  %v2655 = vld [vmem:[%s3 + $0x1a14] sm:$0xff]
  %v2656 = vld [vmem:[%s3 + $0x1a1c] sm:$0xff]
  %v2657 = vld [vmem:[%s3 + $0x1a24] sm:$0xf]
  %v2658 = vld [vmem:[%s3 + $0x1a28] sm:$0xff]
  %v2659 = vld [vmem:[%s3 + $0x1a30] sm:$0xff]
  %v2660 = vld [vmem:[%s3 + $0x1a38] sm:$0xff]
  %v2661 = vld [vmem:[%s3 + $0x1a40] sm:$0xff]
  %v2662 = vld [vmem:[%s3 + $0x1a48] sm:$0xf]
  %v2663 = vld [vmem:[%s3 + $0x1a4c] sm:$0xff]
  %v2664 = vld [vmem:[%s3 + $0x1a54] sm:$0xff]
  %v2665 = vld [vmem:[%s3 + $0x1a5c] sm:$0xff]
  %v2666 = vld [vmem:[%s3 + $0x1a64] sm:$0xff]
  %v2667 = vld [vmem:[%s3 + $0x1a6c] sm:$0xf]
  %v2668 = vld [vmem:[%s3 + $0x1a70] sm:$0xff]
  %v2669 = vld [vmem:[%s3 + $0x1a78] sm:$0xff]
  %v2670 = vld [vmem:[%s3 + $0x1a80] sm:$0xff]
  %v2671 = vld [vmem:[%s3 + $0x1a88] sm:$0xff]
  %v2672 = vld [vmem:[%s3 + $0x1a90] sm:$0xf]
  %v2673 = vld [vmem:[%s3 + $0x1a94] sm:$0xff]
  %v2674 = vld [vmem:[%s3 + $0x1a9c] sm:$0xff]
  %v2675 = vld [vmem:[%s3 + $0x1aa4] sm:$0xff]
  %v2676 = vld [vmem:[%s3 + $0x1aac] sm:$0xff]
  %v2677 = vld [vmem:[%s3 + $0x1ab4] sm:$0xf]
  %v2678 = vld [vmem:[%s3 + $0x1ab8] sm:$0xff]
  %v2679 = vld [vmem:[%s3 + $0x1ac0] sm:$0xff]
  %v2680 = vld [vmem:[%s3 + $0x1ac8] sm:$0xff]
  %v2681 = vld [vmem:[%s3 + $0x1ad0] sm:$0xff]
  %v2682 = vld [vmem:[%s3 + $0x1ad8] sm:$0xf]
  %v2683 = vld [vmem:[%s3 + $0x1adc] sm:$0xff]
  %v2684 = vld [vmem:[%s3 + $0x1ae4] sm:$0xff]
  %v2685 = vld [vmem:[%s3 + $0x1aec] sm:$0xff]
  %v2686 = vld [vmem:[%s3 + $0x1af4] sm:$0xff]
  %v2687 = vld [vmem:[%s3 + $0x1afc] sm:$0xf]
  %v2688 = vld [vmem:[%s3 + $0x1b00] sm:$0xff]
  %v2689 = vld [vmem:[%s3 + $0x1b08] sm:$0xff]
  %v2690 = vld [vmem:[%s3 + $0x1b10] sm:$0xff]
  %v2691 = vld [vmem:[%s3 + $0x1b18] sm:$0xff]
  %v2692 = vld [vmem:[%s3 + $0x1b20] sm:$0xf]
  %v2693 = vld [vmem:[%s3 + $0x1b24] sm:$0xff]
  %v2694 = vld [vmem:[%s3 + $0x1b2c] sm:$0xff]
  %v2695 = vld [vmem:[%s3 + $0x1b34] sm:$0xff]
  %v2696 = vld [vmem:[%s3 + $0x1b3c] sm:$0xff]
  %v2697 = vld [vmem:[%s3 + $0x1b44] sm:$0xf]
  %v2698 = vld [vmem:[%s3 + $0x1b48] sm:$0xff]
  %v2699 = vld [vmem:[%s3 + $0x1b50] sm:$0xff]
  %v2700 = vld [vmem:[%s3 + $0x1b58] sm:$0xff]
  %v2701 = vld [vmem:[%s3 + $0x1b60] sm:$0xff]
  %v2702 = vld [vmem:[%s3 + $0x1b68] sm:$0xf]
  %v2703 = vld [vmem:[%s3 + $0x1b6c] sm:$0xff]
  %v2704 = vld [vmem:[%s3 + $0x1b74] sm:$0xff]
  %v2705 = vld [vmem:[%s3 + $0x1b7c] sm:$0xff]
  %v2706 = vld [vmem:[%s3 + $0x1b84] sm:$0xff]
  %v2707 = vld [vmem:[%s3 + $0x1b8c] sm:$0xf]
  %v2708 = vld [vmem:[%s3 + $0x1b90] sm:$0xff]
  %v2709 = vld [vmem:[%s3 + $0x1b98] sm:$0xff]
  %v2710 = vld [vmem:[%s3 + $0x1ba0] sm:$0xff]
  %v2711 = vld [vmem:[%s3 + $0x1ba8] sm:$0xff]
  %v2712 = vld [vmem:[%s3 + $0x1bb0] sm:$0xf]
  %v2713 = vld [vmem:[%s3 + $0x1bb4] sm:$0xff]
  %v2714 = vld [vmem:[%s3 + $0x1bbc] sm:$0xff]
  %v2715 = vld [vmem:[%s3 + $0x1bc4] sm:$0xff]
  %v2716 = vld [vmem:[%s3 + $0x1bcc] sm:$0xff]
  %v2717 = vld [vmem:[%s3 + $0x1bd4] sm:$0xf]
  %v2718 = vld [vmem:[%s3 + $0x1bd8] sm:$0xff]
  %v2719 = vld [vmem:[%s3 + $0x1be0] sm:$0xff]
  %v2720 = vld [vmem:[%s3 + $0x1be8] sm:$0xff]
  %v2721 = vld [vmem:[%s3 + $0x1bf0] sm:$0xff]
  %v2722 = vld [vmem:[%s3 + $0x1bf8] sm:$0xf]
  %v2723 = vld [vmem:[%s3 + $0x1bfc] sm:$0xff]
  %v2724 = vld [vmem:[%s3 + $0x1c04] sm:$0xff]
  %v2725 = vld [vmem:[%s3 + $0x1c0c] sm:$0xff]
  %v2726 = vld [vmem:[%s3 + $0x1c14] sm:$0xff]
  %v2727 = vld [vmem:[%s3 + $0x1c1c] sm:$0xf]
  %v2728 = vld [vmem:[%s3 + $0x1c20] sm:$0xff]
  %v2729 = vld [vmem:[%s3 + $0x1c28] sm:$0xff]
  %v2730 = vld [vmem:[%s3 + $0x1c30] sm:$0xff]
  %v2731 = vld [vmem:[%s3 + $0x1c38] sm:$0xff]
  %v2732 = vld [vmem:[%s3 + $0x1c40] sm:$0xf]
  %v2733 = vld [vmem:[%s3 + $0x1c44] sm:$0xff]
  %v2734 = vld [vmem:[%s3 + $0x1c4c] sm:$0xff]
  %v2735 = vld [vmem:[%s3 + $0x1c54] sm:$0xff]
  %v2736 = vld [vmem:[%s3 + $0x1c5c] sm:$0xff]
  %v2737 = vld [vmem:[%s3 + $0x1c64] sm:$0xf]
  %v2738 = vld [vmem:[%s3 + $0x1c68] sm:$0xff]
  %v2739 = vld [vmem:[%s3 + $0x1c70] sm:$0xff]
  %v2740 = vld [vmem:[%s3 + $0x1c78] sm:$0xff]
  %v2741 = vld [vmem:[%s3 + $0x1c80] sm:$0xff]
  %v2742 = vld [vmem:[%s3 + $0x1c88] sm:$0xf]
  %v2743 = vld [vmem:[%s3 + $0x1c8c] sm:$0xff]
  %v2744 = vld [vmem:[%s3 + $0x1c94] sm:$0xff]
  %v2745 = vld [vmem:[%s3 + $0x1c9c] sm:$0xff]
  %v2746 = vld [vmem:[%s3 + $0x1ca4] sm:$0xff]
  %v2747 = vld [vmem:[%s3 + $0x1cac] sm:$0xf]
  %v2748 = vld [vmem:[%s3 + $0x1cb0] sm:$0xff]
  %v2749 = vld [vmem:[%s3 + $0x1cb8] sm:$0xff]
  %v2750 = vld [vmem:[%s3 + $0x1cc0] sm:$0xff]
  %v2751 = vld [vmem:[%s3 + $0x1cc8] sm:$0xff]
  %v2752 = vld [vmem:[%s3 + $0x1cd0] sm:$0xf]
  %v2753 = vld [vmem:[%s3 + $0x1cd4] sm:$0xff]
  %v2754 = vld [vmem:[%s3 + $0x1cdc] sm:$0xff]
  %v2755 = vld [vmem:[%s3 + $0x1ce4] sm:$0xff]
  %v2756 = vld [vmem:[%s3 + $0x1cec] sm:$0xff]
  %v2757 = vld [vmem:[%s3 + $0x1cf4] sm:$0xf]
  %v2758 = vld [vmem:[%s3 + $0x1cf8] sm:$0xff]
  %v2759 = vld [vmem:[%s3 + $0x1d00] sm:$0xff]
  %v2760 = vld [vmem:[%s3 + $0x1d08] sm:$0xff]
  %v2761 = vld [vmem:[%s3 + $0x1d10] sm:$0xff]
  %v2762 = vld [vmem:[%s3 + $0x1d18] sm:$0xf]
  %v2763 = vld [vmem:[%s3 + $0x1d1c] sm:$0xff]
  %v2764 = vld [vmem:[%s3 + $0x1d24] sm:$0xff]
  %v2765 = vld [vmem:[%s3 + $0x1d2c] sm:$0xff]
  %v2766 = vld [vmem:[%s3 + $0x1d34] sm:$0xff]
  %v2767 = vld [vmem:[%s3 + $0x1d3c] sm:$0xf]
  %v2768 = vld [vmem:[%s3 + $0x1d40] sm:$0xff]
  %v2769 = vld [vmem:[%s3 + $0x1d48] sm:$0xff]
  %v2770 = vld [vmem:[%s3 + $0x1d50] sm:$0xff]
  %v2771 = vld [vmem:[%s3 + $0x1d58] sm:$0xff]
  %v2772 = vld [vmem:[%s3 + $0x1d60] sm:$0xf]
  %v2773 = vld [vmem:[%s3 + $0x1d64] sm:$0xff]
  %v2774 = vld [vmem:[%s3 + $0x1d6c] sm:$0xff]
  %v2775 = vld [vmem:[%s3 + $0x1d74] sm:$0xff]
  %v2776 = vld [vmem:[%s3 + $0x1d7c] sm:$0xff]
  %v2777 = vld [vmem:[%s3 + $0x1d84] sm:$0xf]
  %v2778 = vld [vmem:[%s3 + $0x1d88] sm:$0xff]
  %v2779 = vld [vmem:[%s3 + $0x1d90] sm:$0xff]
  %v2780 = vld [vmem:[%s3 + $0x1d98] sm:$0xff]
  %v2781 = vld [vmem:[%s3 + $0x1da0] sm:$0xff]
  %v2782 = vld [vmem:[%s3 + $0x1da8] sm:$0xf]
  %v2783 = vld [vmem:[%s3 + $0x1dac] sm:$0xff]
  %v2784 = vld [vmem:[%s3 + $0x1db4] sm:$0xff]
  %v2785 = vld [vmem:[%s3 + $0x1dbc] sm:$0xff]
  %v2786 = vld [vmem:[%s3 + $0x1dc4] sm:$0xff]
  %v2787 = vld [vmem:[%s3 + $0x1dcc] sm:$0xf]
  %v2788 = vld [vmem:[%s3 + $0x1dd0] sm:$0xff]
  %v2789 = vld [vmem:[%s3 + $0x1dd8] sm:$0xff]
  %v2790 = vld [vmem:[%s3 + $0x1de0] sm:$0xff]
  %v2791 = vld [vmem:[%s3 + $0x1de8] sm:$0xff]
  %v2792 = vld [vmem:[%s3 + $0x1df0] sm:$0xf]
  %v2793 = vld [vmem:[%s3 + $0x1df4] sm:$0xff]
  %v2794 = vld [vmem:[%s3 + $0x1dfc] sm:$0xff]
  %v2795 = vld [vmem:[%s3 + $0x1e04] sm:$0xff]
  %v2796 = vld [vmem:[%s3 + $0x1e0c] sm:$0xff]
  %v2797 = vld [vmem:[%s3 + $0x1e14] sm:$0xf]
  %v2798 = vld [vmem:[%s3 + $0x1e18] sm:$0xff]
  %v2799 = vld [vmem:[%s3 + $0x1e20] sm:$0xff]
  %v2800 = vld [vmem:[%s3 + $0x1e28] sm:$0xff]
  %v2801 = vld [vmem:[%s3 + $0x1e30] sm:$0xff]
  %v2802 = vld [vmem:[%s3 + $0x1e38] sm:$0xf]
  %v2803 = vld [vmem:[%s3 + $0x1e3c] sm:$0xff]
  %v2804 = vld [vmem:[%s3 + $0x1e44] sm:$0xff]
  %v2805 = vld [vmem:[%s3 + $0x1e4c] sm:$0xff]
  %v2806 = vld [vmem:[%s3 + $0x1e54] sm:$0xff]
  %v2807 = vld [vmem:[%s3 + $0x1e5c] sm:$0xf]
  %v2808 = vld [vmem:[%s3 + $0x1e60] sm:$0xff]
  %v2809 = vld [vmem:[%s3 + $0x1e68] sm:$0xff]
  %v2810 = vld [vmem:[%s3 + $0x1e70] sm:$0xff]
  %v2811 = vld [vmem:[%s3 + $0x1e78] sm:$0xff]
  %v2812 = vld [vmem:[%s3 + $0x1e80] sm:$0xf]
  %v2813 = vld [vmem:[%s3 + $0x1e84] sm:$0xff]
  %v2814 = vld [vmem:[%s3 + $0x1e8c] sm:$0xff]
  %v2815 = vld [vmem:[%s3 + $0x1e94] sm:$0xff]
  %v2816 = vld [vmem:[%s3 + $0x1e9c] sm:$0xff]
  %v2817 = vld [vmem:[%s3 + $0x1ea4] sm:$0xf]
  %v2818 = vld [vmem:[%s3 + $0x1ea8] sm:$0xff]
  %v2819 = vld [vmem:[%s3 + $0x1eb0] sm:$0xff]
  %v2820 = vld [vmem:[%s3 + $0x1eb8] sm:$0xff]
  %v2821 = vld [vmem:[%s3 + $0x1ec0] sm:$0xff]
  %v2822 = vld [vmem:[%s3 + $0x1ec8] sm:$0xf]
  %v2823 = vld [vmem:[%s3 + $0x1ecc] sm:$0xff]
  %v2824 = vld [vmem:[%s3 + $0x1ed4] sm:$0xff]
  %v2825 = vld [vmem:[%s3 + $0x1edc] sm:$0xff]
  %v2826 = vld [vmem:[%s3 + $0x1ee4] sm:$0xff]
  %v2827 = vld [vmem:[%s3 + $0x1eec] sm:$0xf]
  %v2828 = vld [vmem:[%s3 + $0x1ef0] sm:$0xff]
  %v2829 = vld [vmem:[%s3 + $0x1ef8] sm:$0xff]
  %v2830 = vld [vmem:[%s3 + $0x1f00] sm:$0xff]
  %v2831 = vld [vmem:[%s3 + $0x1f08] sm:$0xff]
  %v2832 = vld [vmem:[%s3 + $0x1f10] sm:$0xf]
  %v2833 = vld [vmem:[%s3 + $0x1f14] sm:$0xff]
  %v2834 = vld [vmem:[%s3 + $0x1f1c] sm:$0xff]
  %v2835 = vld [vmem:[%s3 + $0x1f24] sm:$0xff]
  %v2836 = vld [vmem:[%s3 + $0x1f2c] sm:$0xff]
  %v2837 = vld [vmem:[%s3 + $0x1f34] sm:$0xf]
  %v2838 = vld [vmem:[%s3 + $0x1f38] sm:$0xff]
  %v2839 = vld [vmem:[%s3 + $0x1f40] sm:$0xff]
  %v2840 = vld [vmem:[%s3 + $0x1f48] sm:$0xff]
  %v2841 = vld [vmem:[%s3 + $0x1f50] sm:$0xff]
  %v2842 = vld [vmem:[%s3 + $0x1f58] sm:$0xf]
  %v2843 = vld [vmem:[%s3 + $0x1f5c] sm:$0xff]
  %v2844 = vld [vmem:[%s3 + $0x1f64] sm:$0xff]
  %v2845 = vld [vmem:[%s3 + $0x1f6c] sm:$0xff]
  %v2846 = vld [vmem:[%s3 + $0x1f74] sm:$0xff]
  %v2847 = vld [vmem:[%s3 + $0x1f7c] sm:$0xf]
  %v2848 = vld [vmem:[%s3 + $0x1f80] sm:$0xff]
  %v2849 = vld [vmem:[%s3 + $0x1f88] sm:$0xff]
  %v2850 = vld [vmem:[%s3 + $0x1f90] sm:$0xff]
  %v2851 = vld [vmem:[%s3 + $0x1f98] sm:$0xff]
  %v2852 = vld [vmem:[%s3 + $0x1fa0] sm:$0xf]
  %v2853 = vld [vmem:[%s3 + $0x1fa4] sm:$0xff]
  %v2854 = vld [vmem:[%s3 + $0x1fac] sm:$0xff]
  %v2855 = vld [vmem:[%s3 + $0x1fb4] sm:$0xff]
  %v2856 = vld [vmem:[%s3 + $0x1fbc] sm:$0xff]
  %v2857 = vld [vmem:[%s3 + $0x1fc4] sm:$0xf]
  %v2858 = vld [vmem:[%s3 + $0x1fc8] sm:$0xff]
  %v2859 = vld [vmem:[%s3 + $0x1fd0] sm:$0xff]
  %v2860 = vld [vmem:[%s3 + $0x1fd8] sm:$0xff]
  %v2861 = vld [vmem:[%s3 + $0x1fe0] sm:$0xff]
  %v2862 = vld [vmem:[%s3 + $0x1fe8] sm:$0xf]
  %v2863 = vld [vmem:[%s3 + $0x1fec] sm:$0xff]
  %v2864 = vld [vmem:[%s3 + $0x1ff4] sm:$0xff]
  %v2865 = vld [vmem:[%s3 + $0x1ffc] sm:$0xff]
  %v2866 = vld [vmem:[%s3 + $0x2004] sm:$0xff]
  %v2867 = vld [vmem:[%s3 + $0x200c] sm:$0xf]
  %v2868 = vld [vmem:[%s3 + $0x2010] sm:$0xff]
  %v2869 = vld [vmem:[%s3 + $0x2018] sm:$0xff]
  %v2870 = vld [vmem:[%s3 + $0x2020] sm:$0xff]
  %v2871 = vld [vmem:[%s3 + $0x2028] sm:$0xff]
  %v2872 = vld [vmem:[%s3 + $0x2030] sm:$0xf]
  %v2873 = vld [vmem:[%s3 + $0x2034] sm:$0xff]
  %v2874 = vld [vmem:[%s3 + $0x203c] sm:$0xff]
  %v2875 = vld [vmem:[%s3 + $0x2044] sm:$0xff]
  %v2876 = vld [vmem:[%s3 + $0x204c] sm:$0xff]
  %v2877 = vld [vmem:[%s3 + $0x2054] sm:$0xf]
  %v2878 = vld [vmem:[%s3 + $0x2058] sm:$0xff]
  %v2879 = vld [vmem:[%s3 + $0x2060] sm:$0xff]
  %v2880 = vld [vmem:[%s3 + $0x2068] sm:$0xff]
  %v2881 = vld [vmem:[%s3 + $0x2070] sm:$0xff]
  %v2882 = vld [vmem:[%s3 + $0x2078] sm:$0xf]
  %v2883 = vld [vmem:[%s3 + $0x207c] sm:$0xff]
  %v2884 = vld [vmem:[%s3 + $0x2084] sm:$0xff]
  %v2885 = vld [vmem:[%s3 + $0x208c] sm:$0xff]
  %v2886 = vld [vmem:[%s3 + $0x2094] sm:$0xff]
  %v2887 = vld [vmem:[%s3 + $0x209c] sm:$0xf]
  %v2888 = vld [vmem:[%s3 + $0x20a0] sm:$0xff]
  %v2889 = vld [vmem:[%s3 + $0x20a8] sm:$0xff]
  %v2890 = vld [vmem:[%s3 + $0x20b0] sm:$0xff]
  %v2891 = vld [vmem:[%s3 + $0x20b8] sm:$0xff]
  %v2892 = vld [vmem:[%s3 + $0x20c0] sm:$0xf]
  %v2893 = vld [vmem:[%s3 + $0x20c4] sm:$0xff]
  %v2894 = vld [vmem:[%s3 + $0x20cc] sm:$0xff]
  %v2895 = vld [vmem:[%s3 + $0x20d4] sm:$0xff]
  %v2896 = vld [vmem:[%s3 + $0x20dc] sm:$0xff]
  %v2897 = vld [vmem:[%s3 + $0x20e4] sm:$0xf]
  %v2898 = vld [vmem:[%s3 + $0x20e8] sm:$0xff]
  %v2899 = vld [vmem:[%s3 + $0x20f0] sm:$0xff]
  %v2900 = vld [vmem:[%s3 + $0x20f8] sm:$0xff]
  %v2901 = vld [vmem:[%s3 + $0x2100] sm:$0xff]
  %v2902 = vld [vmem:[%s3 + $0x2108] sm:$0xf]
  %v2903 = vld [vmem:[%s3 + $0x210c] sm:$0xff]
  %v2904 = vld [vmem:[%s3 + $0x2114] sm:$0xff]
  %v2905 = vld [vmem:[%s3 + $0x211c] sm:$0xff]
  %v2906 = vld [vmem:[%s3 + $0x2124] sm:$0xff]
  %v2907 = vld [vmem:[%s3 + $0x212c] sm:$0xf]
  %v2908 = vld [vmem:[%s3 + $0x2130] sm:$0xff]
  %v2909 = vld [vmem:[%s3 + $0x2138] sm:$0xff]
  %v2910 = vld [vmem:[%s3 + $0x2140] sm:$0xff]
  %v2911 = vld [vmem:[%s3 + $0x2148] sm:$0xff]
  %v2912 = vld [vmem:[%s3 + $0x2150] sm:$0xf]
  %v2913 = vld [vmem:[%s3 + $0x2154] sm:$0xff]
  %v2914 = vld [vmem:[%s3 + $0x215c] sm:$0xff]
  %v2915 = vld [vmem:[%s3 + $0x2164] sm:$0xff]
  %v2916 = vld [vmem:[%s3 + $0x216c] sm:$0xff]
  %v2917 = vld [vmem:[%s3 + $0x2174] sm:$0xf]
  %v2918 = vld [vmem:[%s3 + $0x2178] sm:$0xff]
  %v2919 = vld [vmem:[%s3 + $0x2180] sm:$0xff]
  %v2920 = vld [vmem:[%s3 + $0x2188] sm:$0xff]
  %v2921 = vld [vmem:[%s3 + $0x2190] sm:$0xff]
  %v2922 = vld [vmem:[%s3 + $0x2198] sm:$0xf]
  %v2923 = vld [vmem:[%s3 + $0x219c] sm:$0xff]
  %v2924 = vld [vmem:[%s3 + $0x21a4] sm:$0xff]
  %v2925 = vld [vmem:[%s3 + $0x21ac] sm:$0xff]
  %v2926 = vld [vmem:[%s3 + $0x21b4] sm:$0xff]
  %v2927 = vld [vmem:[%s3 + $0x21bc] sm:$0xf]
  %v2928 = vld [vmem:[%s3 + $0x21c0] sm:$0xff]
  %v2929 = vld [vmem:[%s3 + $0x21c8] sm:$0xff]
  %v2930 = vld [vmem:[%s3 + $0x21d0] sm:$0xff]
  %v2931 = vld [vmem:[%s3 + $0x21d8] sm:$0xff]
  %v2932 = vld [vmem:[%s3 + $0x21e0] sm:$0xf]
  %v2933 = vld [vmem:[%s3 + $0x21e4] sm:$0xff]
  %v2934 = vld [vmem:[%s3 + $0x21ec] sm:$0xff]
  %v2935 = vld [vmem:[%s3 + $0x21f4] sm:$0xff]
  %v2936 = vld [vmem:[%s3 + $0x21fc] sm:$0xff]
  %v2937 = vld [vmem:[%s3 + $0x2204] sm:$0xf]
  %v2938 = vld [vmem:[%s3 + $0x2208] sm:$0xff]
  %v2939 = vld [vmem:[%s3 + $0x2210] sm:$0xff]
  %v2940 = vld [vmem:[%s3 + $0x2218] sm:$0xff]
  %v2941 = vld [vmem:[%s3 + $0x2220] sm:$0xff]
  %v2942 = vld [vmem:[%s3 + $0x2228] sm:$0xf]
  %v2943 = vld [vmem:[%s3 + $0x222c] sm:$0xff]
  %v2944 = vld [vmem:[%s3 + $0x2234] sm:$0xff]
  %v2945 = vld [vmem:[%s3 + $0x223c] sm:$0xff]
  %v2946 = vld [vmem:[%s3 + $0x2244] sm:$0xff]
  %v2947 = vld [vmem:[%s3 + $0x224c] sm:$0xf]
  %v2948 = vld [vmem:[%s3 + $0x2250] sm:$0xff]
  %v2949 = vld [vmem:[%s3 + $0x2258] sm:$0xff]
  %v2950 = vld [vmem:[%s3 + $0x2260] sm:$0xff]
  %v2951 = vld [vmem:[%s3 + $0x2268] sm:$0xff]
  %v2952 = vld [vmem:[%s3 + $0x2270] sm:$0xf]
  %v2953 = vld [vmem:[%s3 + $0x2274] sm:$0xff]
  %v2954 = vld [vmem:[%s3 + $0x227c] sm:$0xff]
  %v2955 = vld [vmem:[%s3 + $0x2284] sm:$0xff]
  %v2956 = vld [vmem:[%s3 + $0x228c] sm:$0xff]
  %v2957 = vld [vmem:[%s3 + $0x2294] sm:$0xf]
  %v2958 = vld [vmem:[%s3 + $0x2298] sm:$0xff]
  %v2959 = vld [vmem:[%s3 + $0x22a0] sm:$0xff]
  %v2960 = vld [vmem:[%s3 + $0x22a8] sm:$0xff]
  %v2961 = vld [vmem:[%s3 + $0x22b0] sm:$0xff]
  %v2962 = vld [vmem:[%s3 + $0x22b8] sm:$0xf]
  %v2963 = vld [vmem:[%s3 + $0x22bc] sm:$0xff]
  %v2964 = vld [vmem:[%s3 + $0x22c4] sm:$0xff]
  %v2965 = vld [vmem:[%s3 + $0x22cc] sm:$0xff]
  %v2966 = vld [vmem:[%s3 + $0x22d4] sm:$0xff]
  %v2967 = vld [vmem:[%s3 + $0x22dc] sm:$0xf]
  %v2968 = vld [vmem:[%s3 + $0x22e0] sm:$0xff]
  %v2969 = vld [vmem:[%s3 + $0x22e8] sm:$0xff]
  %v2970 = vld [vmem:[%s3 + $0x22f0] sm:$0xff]
  %v2971 = vld [vmem:[%s3 + $0x22f8] sm:$0xff]
  %v2972 = vld [vmem:[%s3 + $0x2300] sm:$0xf]
  %v2973 = vld [vmem:[%s3 + $0x2304] sm:$0xff]
  %v2974 = vld [vmem:[%s3 + $0x230c] sm:$0xff]
  %v2975 = vld [vmem:[%s3 + $0x2314] sm:$0xff]
  %v2976 = vld [vmem:[%s3 + $0x231c] sm:$0xff]
  %v2977 = vld [vmem:[%s3 + $0x2324] sm:$0xf]
  %v2978 = vld [vmem:[%s3 + $0x2328] sm:$0xff]
  %v2979 = vld [vmem:[%s3 + $0x2330] sm:$0xff]
  %v2980 = vld [vmem:[%s3 + $0x2338] sm:$0xff]
  %v2981 = vld [vmem:[%s3 + $0x2340] sm:$0xff]
  %v2982 = vld [vmem:[%s3 + $0x2348] sm:$0xf]
  %v2983 = vld [vmem:[%s3 + $0x234c] sm:$0xff]
  %v2984 = vld [vmem:[%s3 + $0x2354] sm:$0xff]
  %v2985 = vld [vmem:[%s3 + $0x235c] sm:$0xff]
  %v2986 = vld [vmem:[%s3 + $0x2364] sm:$0xff]
  %v2987 = vld [vmem:[%s3 + $0x236c] sm:$0xf]
  %v2988 = vld [vmem:[%s3 + $0x2370] sm:$0xff]
  %v2989 = vld [vmem:[%s3 + $0x2378] sm:$0xff]
  %v2990 = vld [vmem:[%s3 + $0x2380] sm:$0xff]
  %v2991 = vld [vmem:[%s3 + $0x2388] sm:$0xff]
  %v2992 = vld [vmem:[%s3 + $0x2390] sm:$0xf]
  %v2993 = vld [vmem:[%s3 + $0x2394] sm:$0xff]
  %v2994 = vld [vmem:[%s3 + $0x239c] sm:$0xff]
  %v2995 = vld [vmem:[%s3 + $0x23a4] sm:$0xff]
  %v2996 = vld [vmem:[%s3 + $0x23ac] sm:$0xff]
  %v2997 = vld [vmem:[%s3 + $0x23b4] sm:$0xf]
  %v2998 = vld [vmem:[%s3 + $0x23b8] sm:$0xff]
  %v2999 = vld [vmem:[%s3 + $0x23c0] sm:$0xff]
  %v3000 = vld [vmem:[%s3 + $0x23c8] sm:$0xff]
  %v3001 = vld [vmem:[%s3 + $0x23d0] sm:$0xff]
  %v3002 = vld [vmem:[%s3 + $0x23d8] sm:$0xf]
  %v3003 = vld [vmem:[%s3 + $0x23dc] sm:$0xff]
  %v3004 = vld [vmem:[%s3 + $0x23e4] sm:$0xff]
  %v3005 = vld [vmem:[%s3 + $0x23ec] sm:$0xff]
  %v3006 = vld [vmem:[%s3 + $0x23f4] sm:$0xff]
  %v3007 = vld [vmem:[%s3 + $0x23fc] sm:$0xf]
  %v3008 = vld [vmem:[%s3 + $0x2400] sm:$0xff]
  %v3009 = vld [vmem:[%s3 + $0x2408] sm:$0xff]
  %v3010 = vld [vmem:[%s3 + $0x2410] sm:$0xff]
  %v3011 = vld [vmem:[%s3 + $0x2418] sm:$0xff]
  %v3012 = vld [vmem:[%s3 + $0x2420] sm:$0xf]
  %v3013 = vld [vmem:[%s3 + $0x2424] sm:$0xff]
  %v3014 = vld [vmem:[%s3 + $0x242c] sm:$0xff]
  %v3015 = vld [vmem:[%s3 + $0x2434] sm:$0xff]
  %v3016 = vld [vmem:[%s3 + $0x243c] sm:$0xff]
  %v3017 = vld [vmem:[%s3 + $0x2444] sm:$0xf]
  %v3018 = vld [vmem:[%s3 + $0x2448] sm:$0xff]
  %v3019 = vld [vmem:[%s3 + $0x2450] sm:$0xff]
  %v3020 = vld [vmem:[%s3 + $0x2458] sm:$0xff]
  %v3021 = vld [vmem:[%s3 + $0x2460] sm:$0xff]
  %v3022 = vld [vmem:[%s3 + $0x2468] sm:$0xf]
  %v3023 = vld [vmem:[%s3 + $0x246c] sm:$0xff]
  %v3024 = vld [vmem:[%s3 + $0x2474] sm:$0xff]
  %v3025 = vld [vmem:[%s3 + $0x247c] sm:$0xff]
  %v3026 = vld [vmem:[%s3 + $0x2484] sm:$0xff]
  %v3027 = vld [vmem:[%s3 + $0x248c] sm:$0xf]
  %v3028 = vld [vmem:[%s3 + $0x2490] sm:$0xff]
  %v3029 = vld [vmem:[%s3 + $0x2498] sm:$0xff]
  %v3030 = vld [vmem:[%s3 + $0x24a0] sm:$0xff]
  %v3031 = vld [vmem:[%s3 + $0x24a8] sm:$0xff]
  %v3032 = vld [vmem:[%s3 + $0x24b0] sm:$0xf]
  %v3033 = vld [vmem:[%s3 + $0x24b4] sm:$0xff]
  %v3034 = vld [vmem:[%s3 + $0x24bc] sm:$0xff]
  %v3035 = vld [vmem:[%s3 + $0x24c4] sm:$0xff]
  %v3036 = vld [vmem:[%s3 + $0x24cc] sm:$0xff]
  %v3037 = vld [vmem:[%s3 + $0x24d4] sm:$0xf]
  %v3038 = vld [vmem:[%s3 + $0x24d8] sm:$0xff]
  %v3039 = vld [vmem:[%s3 + $0x24e0] sm:$0xff]
  %v3040 = vld [vmem:[%s3 + $0x24e8] sm:$0xff]
  %v3041 = vld [vmem:[%s3 + $0x24f0] sm:$0xff]
  %v3042 = vld [vmem:[%s3 + $0x24f8] sm:$0xf]
  %v3043 = vld [vmem:[%s3 + $0x24fc] sm:$0xff]
  %v3044 = vld [vmem:[%s3 + $0x2504] sm:$0xff]
  %v3045 = vld [vmem:[%s3 + $0x250c] sm:$0xff]
  %v3046 = vld [vmem:[%s3 + $0x2514] sm:$0xff]
  %v3047 = vld [vmem:[%s3 + $0x251c] sm:$0xf]
  %v3048 = vld [vmem:[%s3 + $0x2520] sm:$0xff]
  %v3049 = vld [vmem:[%s3 + $0x2528] sm:$0xff]
  %v3050 = vld [vmem:[%s3 + $0x2530] sm:$0xff]
  %v3051 = vld [vmem:[%s3 + $0x2538] sm:$0xff]
  %v3052 = vld [vmem:[%s3 + $0x2540] sm:$0xf]
  %v3053 = vld [vmem:[%s3 + $0x2544] sm:$0xff]
  %v3054 = vld [vmem:[%s3 + $0x254c] sm:$0xff]
  %v3055 = vld [vmem:[%s3 + $0x2554] sm:$0xff]
  %v3056 = vld [vmem:[%s3 + $0x255c] sm:$0xff]
  %v3057 = vld [vmem:[%s3 + $0x2564] sm:$0xf]
  %v3058 = vld [vmem:[%s3 + $0x2568] sm:$0xff]
  %v3059 = vld [vmem:[%s3 + $0x2570] sm:$0xff]
  %v3060 = vld [vmem:[%s3 + $0x2578] sm:$0xff]
  %v3061 = vld [vmem:[%s3 + $0x2580] sm:$0xff]
  %v3062 = vld [vmem:[%s3 + $0x2588] sm:$0xf]
  %v3063 = vld [vmem:[%s3 + $0x258c] sm:$0xff]
  %v3064 = vld [vmem:[%s3 + $0x2594] sm:$0xff]
  %v3065 = vld [vmem:[%s3 + $0x259c] sm:$0xff]
  %v3066 = vld [vmem:[%s3 + $0x25a4] sm:$0xff]
  %v3067 = vld [vmem:[%s3 + $0x25ac] sm:$0xf]
  %v3068 = vld [vmem:[%s3 + $0x25b0] sm:$0xff]
  %v3069 = vld [vmem:[%s3 + $0x25b8] sm:$0xff]
  %v3070 = vld [vmem:[%s3 + $0x25c0] sm:$0xff]
  %v3071 = vld [vmem:[%s3 + $0x25c8] sm:$0xff]
  %v3072 = vld [vmem:[%s3 + $0x25d0] sm:$0xf]
  %v3073 = vld [vmem:[%s3 + $0x25d4] sm:$0xff]
  %v3074 = vld [vmem:[%s3 + $0x25dc] sm:$0xff]
  %v3075 = vld [vmem:[%s3 + $0x25e4] sm:$0xff]
  %v3076 = vld [vmem:[%s3 + $0x25ec] sm:$0xff]
  %v3077 = vld [vmem:[%s3 + $0x25f4] sm:$0xf]
  %v3078 = vld [vmem:[%s3 + $0x25f8] sm:$0xff]
  %v3079 = vld [vmem:[%s3 + $0x2600] sm:$0xff]
  %v3080 = vld [vmem:[%s3 + $0x2608] sm:$0xff]
  %v3081 = vld [vmem:[%s3 + $0x2610] sm:$0xff]
  %v3082 = vld [vmem:[%s3 + $0x2618] sm:$0xf]
  %v3083 = vld [vmem:[%s3 + $0x261c] sm:$0xff]
  %v3084 = vld [vmem:[%s3 + $0x2624] sm:$0xff]
  %v3085 = vld [vmem:[%s3 + $0x262c] sm:$0xff]
  %v3086 = vld [vmem:[%s3 + $0x2634] sm:$0xff]
  %v3087 = vld [vmem:[%s3 + $0x263c] sm:$0xf]
  %v3088 = vld [vmem:[%s3 + $0x2640] sm:$0xff]
  %v3089 = vld [vmem:[%s3 + $0x2648] sm:$0xff]
  %v3090 = vld [vmem:[%s3 + $0x2650] sm:$0xff]
  %v3091 = vld [vmem:[%s3 + $0x2658] sm:$0xff]
  %v3092 = vld [vmem:[%s3 + $0x2660] sm:$0xf]
  %v3093 = vld [vmem:[%s3 + $0x2664] sm:$0xff]
  %v3094 = vld [vmem:[%s3 + $0x266c] sm:$0xff]
  %v3095 = vld [vmem:[%s3 + $0x2674] sm:$0xff]
  %v3096 = vld [vmem:[%s3 + $0x267c] sm:$0xff]
  %v3097 = vld [vmem:[%s3 + $0x2684] sm:$0xf]
  %v3098 = vld [vmem:[%s3 + $0x2688] sm:$0xff]
  %v3099 = vld [vmem:[%s3 + $0x2690] sm:$0xff]
  %v3100 = vld [vmem:[%s3 + $0x2698] sm:$0xff]
  %v3101 = vld [vmem:[%s3 + $0x26a0] sm:$0xff]
  %v3102 = vld [vmem:[%s3 + $0x26a8] sm:$0xf]
  %v3103 = vld [vmem:[%s3 + $0x26ac] sm:$0xff]
  %v3104 = vld [vmem:[%s3 + $0x26b4] sm:$0xff]
  %v3105 = vld [vmem:[%s3 + $0x26bc] sm:$0xff]
  %v3106 = vld [vmem:[%s3 + $0x26c4] sm:$0xff]
  %v3107 = vld [vmem:[%s3 + $0x26cc] sm:$0xf]
  %v3108 = vld [vmem:[%s3 + $0x26d0] sm:$0xff]
  %v3109 = vld [vmem:[%s3 + $0x26d8] sm:$0xff]
  %v3110 = vld [vmem:[%s3 + $0x26e0] sm:$0xff]
  %v3111 = vld [vmem:[%s3 + $0x26e8] sm:$0xff]
  %v3112 = vld [vmem:[%s3 + $0x26f0] sm:$0xf]
  %v3113 = vld [vmem:[%s3 + $0x26f4] sm:$0xff]
  %v3114 = vld [vmem:[%s3 + $0x26fc] sm:$0xff]
  %v3115 = vld [vmem:[%s3 + $0x2704] sm:$0xff]
  %v3116 = vld [vmem:[%s3 + $0x270c] sm:$0xff]
  %v3117 = vld [vmem:[%s3 + $0x2714] sm:$0xf]
  %v3118 = vld [vmem:[%s3 + $0x2718] sm:$0xff]
  %v3119 = vld [vmem:[%s3 + $0x2720] sm:$0xff]
  %v3120 = vld [vmem:[%s3 + $0x2728] sm:$0xff]
  %v3121 = vld [vmem:[%s3 + $0x2730] sm:$0xff]
  %v3122 = vld [vmem:[%s3 + $0x2738] sm:$0xf]
  %v3123 = vld [vmem:[%s3 + $0x273c] sm:$0xff]
  %v3124 = vld [vmem:[%s3 + $0x2744] sm:$0xff]
  %v3125 = vld [vmem:[%s3 + $0x274c] sm:$0xff]
  %v3126 = vld [vmem:[%s3 + $0x2754] sm:$0xff]
  %v3127 = vld [vmem:[%s3 + $0x275c] sm:$0xf]
  %v3128 = vld [vmem:[%s3 + $0x2760] sm:$0xff]
  %v3129 = vld [vmem:[%s3 + $0x2768] sm:$0xff]
  %v3130 = vld [vmem:[%s3 + $0x2770] sm:$0xff]
  %v3131 = vld [vmem:[%s3 + $0x2778] sm:$0xff]
  %v3132 = vld [vmem:[%s3 + $0x2780] sm:$0xf]
  %v3133 = vld [vmem:[%s3 + $0x2784] sm:$0xff]
  %v3134 = vld [vmem:[%s3 + $0x278c] sm:$0xff]
  %v3135 = vld [vmem:[%s3 + $0x2794] sm:$0xff]
  %v3136 = vld [vmem:[%s3 + $0x279c] sm:$0xff]
  %v3137 = vld [vmem:[%s3 + $0x27a4] sm:$0xf]
  %v3138 = vld [vmem:[%s3 + $0x27a8] sm:$0xff]
  %v3139 = vld [vmem:[%s3 + $0x27b0] sm:$0xff]
  %v3140 = vld [vmem:[%s3 + $0x27b8] sm:$0xff]
  %v3141 = vld [vmem:[%s3 + $0x27c0] sm:$0xff]
  %v3142 = vld [vmem:[%s3 + $0x27c8] sm:$0xf]
  %v3143 = vld [vmem:[%s3 + $0x27cc] sm:$0xff]
  %v3144 = vld [vmem:[%s3 + $0x27d4] sm:$0xff]
  %v3145 = vld [vmem:[%s3 + $0x27dc] sm:$0xff]
  %v3146 = vld [vmem:[%s3 + $0x27e4] sm:$0xff]
  %v3147 = vld [vmem:[%s3 + $0x27ec] sm:$0xf]
  %v3148 = vld [vmem:[%s3 + $0x27f0] sm:$0xff]
  %v3149 = vld [vmem:[%s3 + $0x27f8] sm:$0xff]
  %v3150 = vld [vmem:[%s3 + $0x2800] sm:$0xff]
  %v3151 = vld [vmem:[%s3 + $0x2808] sm:$0xff]
  %v3152 = vld [vmem:[%s3 + $0x2810] sm:$0xf]
  %v3153 = vld [vmem:[%s3 + $0x2814] sm:$0xff]
  %v3154 = vld [vmem:[%s3 + $0x281c] sm:$0xff]
  %v3155 = vld [vmem:[%s3 + $0x2824] sm:$0xff]
  %v3156 = vld [vmem:[%s3 + $0x282c] sm:$0xff]
  %v3157 = vld [vmem:[%s3 + $0x2834] sm:$0xf]
  %v3158 = vld [vmem:[%s3 + $0x2838] sm:$0xff]
  %v3159 = vld [vmem:[%s3 + $0x2840] sm:$0xff]
  %v3160 = vld [vmem:[%s3 + $0x2848] sm:$0xff]
  %v3161 = vld [vmem:[%s3 + $0x2850] sm:$0xff]
  %v3162 = vld [vmem:[%s3 + $0x2858] sm:$0xf]
  %v3163 = vld [vmem:[%s3 + $0x285c] sm:$0xff]
  %v3164 = vld [vmem:[%s3 + $0x2864] sm:$0xff]
  %v3165 = vld [vmem:[%s3 + $0x286c] sm:$0xff]
  %v3166 = vld [vmem:[%s3 + $0x2874] sm:$0xff]
  %v3167 = vld [vmem:[%s3 + $0x287c] sm:$0xf]
  %v3168 = vld [vmem:[%s4] sm:$0xff]
  %v3169 = vld [vmem:[%s4 + $0x8] sm:$0x1]
  %v3172 = vlaneseq
  %v3173 = vshrl.u32 %v3172, 7
  %v3174 = vsub.s32 0, %v3173
  %v3175 = vrot.slane %v3168, %v3174
  %v3176 = vlaneseq
  %v3177 = vshrl.u32 %v3176, 7
  %v3178 = vsub.s32 1, %v3177
  %v3179 = vrot.slane %v3168, %v3178
  %v3180 = vlaneseq
  %v3181 = vshrl.u32 %v3180, 7
  %v3182 = vsub.s32 2, %v3181
  %v3183 = vrot.slane %v3168, %v3182
  %v3184 = vlaneseq
  %v3185 = vshrl.u32 %v3184, 7
  %v3186 = vsub.s32 3, %v3185
  %v3187 = vrot.slane %v3168, %v3186
  %v3188 = vlaneseq
  %v3189 = vshrl.u32 %v3188, 7
  %v3190 = vsub.s32 4, %v3189
  %v3191 = vrot.slane %v3168, %v3190
  %v3192 = vlaneseq
  %v3193 = vshrl.u32 %v3192, 7
  %v3194 = vsub.s32 5, %v3193
  %v3195 = vrot.slane %v3168, %v3194
  %v3196 = vlaneseq
  %v3197 = vshrl.u32 %v3196, 7
  %v3198 = vsub.s32 6, %v3197
  %v3199 = vrot.slane %v3168, %v3198
  %v3200 = vlaneseq
  %v3201 = vshrl.u32 %v3200, 7
  %v3202 = vsub.s32 7, %v3201
  %v3203 = vrot.slane %v3168, %v3202
  %v3204 = vlaneseq
  %v3205 = vshrl.u32 %v3204, 7
  %v3206 = vsub.s32 0, %v3205
  %v3207 = vrot.slane %v3169, %v3206
  %v4657 = vunpack.c.l.b16 %v1728
  %v4658 = vunpack.c.h.b16 %v1728
  %v4659 = vunpack.c.l.b16 %v1729
  %v4660 = vunpack.c.h.b16 %v1729
  %v4661 = vunpack.c.l.b16 %v1730
  %v4662 = vunpack.c.h.b16 %v1730
  %v4663 = vunpack.c.l.b16 %v1731
  %v4664 = vunpack.c.h.b16 %v1731
  %v4665 = vunpack.c.l.b16 %v1732
  %v4666 = vunpack.c.l.b16 %v1733
  %v4667 = vunpack.c.h.b16 %v1733
  %v4668 = vunpack.c.l.b16 %v1734
  %v4669 = vunpack.c.h.b16 %v1734
  %v4670 = vunpack.c.l.b16 %v1735
  %v4671 = vunpack.c.h.b16 %v1735
  %v4672 = vunpack.c.l.b16 %v1736
  %v4673 = vunpack.c.h.b16 %v1736
  %v4674 = vunpack.c.l.b16 %v1737
  %v4675 = vunpack.c.l.b16 %v1738
  %v4676 = vunpack.c.h.b16 %v1738
  %v4677 = vunpack.c.l.b16 %v1739
  %v4678 = vunpack.c.h.b16 %v1739
  %v4679 = vunpack.c.l.b16 %v1740
  %v4680 = vunpack.c.h.b16 %v1740
  %v4681 = vunpack.c.l.b16 %v1741
  %v4682 = vunpack.c.h.b16 %v1741
  %v4683 = vunpack.c.l.b16 %v1742
  %v4684 = vunpack.c.l.b16 %v1743
  %v4685 = vunpack.c.h.b16 %v1743
  %v4686 = vunpack.c.l.b16 %v1744
  %v4687 = vunpack.c.h.b16 %v1744
  %v4688 = vunpack.c.l.b16 %v1745
  %v4689 = vunpack.c.h.b16 %v1745
  %v4690 = vunpack.c.l.b16 %v1746
  %v4691 = vunpack.c.h.b16 %v1746
  %v4692 = vunpack.c.l.b16 %v1747
  %v4693 = vunpack.c.l.b16 %v1748
  %v4694 = vunpack.c.h.b16 %v1748
  %v4695 = vunpack.c.l.b16 %v1749
  %v4696 = vunpack.c.h.b16 %v1749
  %v4697 = vunpack.c.l.b16 %v1750
  %v4698 = vunpack.c.h.b16 %v1750
  %v4699 = vunpack.c.l.b16 %v1751
  %v4700 = vunpack.c.h.b16 %v1751
  %v4701 = vunpack.c.l.b16 %v1752
  %v4702 = vunpack.c.l.b16 %v1753
  %v4703 = vunpack.c.h.b16 %v1753
  %v4704 = vunpack.c.l.b16 %v1754
  %v4705 = vunpack.c.h.b16 %v1754
  %v4706 = vunpack.c.l.b16 %v1755
  %v4707 = vunpack.c.h.b16 %v1755
  %v4708 = vunpack.c.l.b16 %v1756
  %v4709 = vunpack.c.h.b16 %v1756
  %v4710 = vunpack.c.l.b16 %v1757
  %v4711 = vunpack.c.l.b16 %v1758
  %v4712 = vunpack.c.h.b16 %v1758
  %v4713 = vunpack.c.l.b16 %v1759
  %v4714 = vunpack.c.h.b16 %v1759
  %v4715 = vunpack.c.l.b16 %v1760
  %v4716 = vunpack.c.h.b16 %v1760
  %v4717 = vunpack.c.l.b16 %v1761
  %v4718 = vunpack.c.h.b16 %v1761
  %v4719 = vunpack.c.l.b16 %v1762
  %v4720 = vunpack.c.l.b16 %v1763
  %v4721 = vunpack.c.h.b16 %v1763
  %v4722 = vunpack.c.l.b16 %v1764
  %v4723 = vunpack.c.h.b16 %v1764
  %v4724 = vunpack.c.l.b16 %v1765
  %v4725 = vunpack.c.h.b16 %v1765
  %v4726 = vunpack.c.l.b16 %v1766
  %v4727 = vunpack.c.h.b16 %v1766
  %v4728 = vunpack.c.l.b16 %v1767
  %v4729 = vunpack.c.l.b16 %v1768
  %v4730 = vunpack.c.h.b16 %v1768
  %v4731 = vunpack.c.l.b16 %v1769
  %v4732 = vunpack.c.h.b16 %v1769
  %v4733 = vunpack.c.l.b16 %v1770
  %v4734 = vunpack.c.h.b16 %v1770
  %v4735 = vunpack.c.l.b16 %v1771
  %v4736 = vunpack.c.h.b16 %v1771
  %v4737 = vunpack.c.l.b16 %v1772
  %v4738 = vunpack.c.l.b16 %v1773
  %v4739 = vunpack.c.h.b16 %v1773
  %v4740 = vunpack.c.l.b16 %v1774
  %v4741 = vunpack.c.h.b16 %v1774
  %v4742 = vunpack.c.l.b16 %v1775
  %v4743 = vunpack.c.h.b16 %v1775
  %v4744 = vunpack.c.l.b16 %v1776
  %v4745 = vunpack.c.h.b16 %v1776
  %v4746 = vunpack.c.l.b16 %v1777
  %v4747 = vunpack.c.l.b16 %v1778
  %v4748 = vunpack.c.h.b16 %v1778
  %v4749 = vunpack.c.l.b16 %v1779
  %v4750 = vunpack.c.h.b16 %v1779
  %v4751 = vunpack.c.l.b16 %v1780
  %v4752 = vunpack.c.h.b16 %v1780
  %v4753 = vunpack.c.l.b16 %v1781
  %v4754 = vunpack.c.h.b16 %v1781
  %v4755 = vunpack.c.l.b16 %v1782
  %v4756 = vunpack.c.l.b16 %v1783
  %v4757 = vunpack.c.h.b16 %v1783
  %v4758 = vunpack.c.l.b16 %v1784
  %v4759 = vunpack.c.h.b16 %v1784
  %v4760 = vunpack.c.l.b16 %v1785
  %v4761 = vunpack.c.h.b16 %v1785
  %v4762 = vunpack.c.l.b16 %v1786
  %v4763 = vunpack.c.h.b16 %v1786
  %v4764 = vunpack.c.l.b16 %v1787
  %v4765 = vunpack.c.l.b16 %v1788
  %v4766 = vunpack.c.h.b16 %v1788
  %v4767 = vunpack.c.l.b16 %v1789
  %v4768 = vunpack.c.h.b16 %v1789
  %v4769 = vunpack.c.l.b16 %v1790
  %v4770 = vunpack.c.h.b16 %v1790
  %v4771 = vunpack.c.l.b16 %v1791
  %v4772 = vunpack.c.h.b16 %v1791
  %v4773 = vunpack.c.l.b16 %v1792
  %v4774 = vunpack.c.l.b16 %v1793
  %v4775 = vunpack.c.h.b16 %v1793
  %v4776 = vunpack.c.l.b16 %v1794
  %v4777 = vunpack.c.h.b16 %v1794
  %v4778 = vunpack.c.l.b16 %v1795
  %v4779 = vunpack.c.h.b16 %v1795
  %v4780 = vunpack.c.l.b16 %v1796
  %v4781 = vunpack.c.h.b16 %v1796
  %v4782 = vunpack.c.l.b16 %v1797
  %v4783 = vunpack.c.l.b16 %v1798
  %v4784 = vunpack.c.h.b16 %v1798
  %v4785 = vunpack.c.l.b16 %v1799
  %v4786 = vunpack.c.h.b16 %v1799
  %v4787 = vunpack.c.l.b16 %v1800
  %v4788 = vunpack.c.h.b16 %v1800
  %v4789 = vunpack.c.l.b16 %v1801
  %v4790 = vunpack.c.h.b16 %v1801
  %v4791 = vunpack.c.l.b16 %v1802
  %v4792 = vunpack.c.l.b16 %v1803
  %v4793 = vunpack.c.h.b16 %v1803
  %v4794 = vunpack.c.l.b16 %v1804
  %v4795 = vunpack.c.h.b16 %v1804
  %v4796 = vunpack.c.l.b16 %v1805
  %v4797 = vunpack.c.h.b16 %v1805
  %v4798 = vunpack.c.l.b16 %v1806
  %v4799 = vunpack.c.h.b16 %v1806
  %v4800 = vunpack.c.l.b16 %v1807
  %v4801 = vunpack.c.l.b16 %v1808
  %v4802 = vunpack.c.h.b16 %v1808
  %v4803 = vunpack.c.l.b16 %v1809
  %v4804 = vunpack.c.h.b16 %v1809
  %v4805 = vunpack.c.l.b16 %v1810
  %v4806 = vunpack.c.h.b16 %v1810
  %v4807 = vunpack.c.l.b16 %v1811
  %v4808 = vunpack.c.h.b16 %v1811
  %v4809 = vunpack.c.l.b16 %v1812
  %v4810 = vunpack.c.l.b16 %v1813
  %v4811 = vunpack.c.h.b16 %v1813
  %v4812 = vunpack.c.l.b16 %v1814
  %v4813 = vunpack.c.h.b16 %v1814
  %v4814 = vunpack.c.l.b16 %v1815
  %v4815 = vunpack.c.h.b16 %v1815
  %v4816 = vunpack.c.l.b16 %v1816
  %v4817 = vunpack.c.h.b16 %v1816
  %v4818 = vunpack.c.l.b16 %v1817
  %v4819 = vunpack.c.l.b16 %v1818
  %v4820 = vunpack.c.h.b16 %v1818
  %v4821 = vunpack.c.l.b16 %v1819
  %v4822 = vunpack.c.h.b16 %v1819
  %v4823 = vunpack.c.l.b16 %v1820
  %v4824 = vunpack.c.h.b16 %v1820
  %v4825 = vunpack.c.l.b16 %v1821
  %v4826 = vunpack.c.h.b16 %v1821
  %v4827 = vunpack.c.l.b16 %v1822
  %v4828 = vunpack.c.l.b16 %v1823
  %v4829 = vunpack.c.h.b16 %v1823
  %v4830 = vunpack.c.l.b16 %v1824
  %v4831 = vunpack.c.h.b16 %v1824
  %v4832 = vunpack.c.l.b16 %v1825
  %v4833 = vunpack.c.h.b16 %v1825
  %v4834 = vunpack.c.l.b16 %v1826
  %v4835 = vunpack.c.h.b16 %v1826
  %v4836 = vunpack.c.l.b16 %v1827
  %v4837 = vunpack.c.l.b16 %v1828
  %v4838 = vunpack.c.h.b16 %v1828
  %v4839 = vunpack.c.l.b16 %v1829
  %v4840 = vunpack.c.h.b16 %v1829
  %v4841 = vunpack.c.l.b16 %v1830
  %v4842 = vunpack.c.h.b16 %v1830
  %v4843 = vunpack.c.l.b16 %v1831
  %v4844 = vunpack.c.h.b16 %v1831
  %v4845 = vunpack.c.l.b16 %v1832
  %v4846 = vunpack.c.l.b16 %v1833
  %v4847 = vunpack.c.h.b16 %v1833
  %v4848 = vunpack.c.l.b16 %v1834
  %v4849 = vunpack.c.h.b16 %v1834
  %v4850 = vunpack.c.l.b16 %v1835
  %v4851 = vunpack.c.h.b16 %v1835
  %v4852 = vunpack.c.l.b16 %v1836
  %v4853 = vunpack.c.h.b16 %v1836
  %v4854 = vunpack.c.l.b16 %v1837
  %v4855 = vunpack.c.l.b16 %v1838
  %v4856 = vunpack.c.h.b16 %v1838
  %v4857 = vunpack.c.l.b16 %v1839
  %v4858 = vunpack.c.h.b16 %v1839
  %v4859 = vunpack.c.l.b16 %v1840
  %v4860 = vunpack.c.h.b16 %v1840
  %v4861 = vunpack.c.l.b16 %v1841
  %v4862 = vunpack.c.h.b16 %v1841
  %v4863 = vunpack.c.l.b16 %v1842
  %v4864 = vunpack.c.l.b16 %v1843
  %v4865 = vunpack.c.h.b16 %v1843
  %v4866 = vunpack.c.l.b16 %v1844
  %v4867 = vunpack.c.h.b16 %v1844
  %v4868 = vunpack.c.l.b16 %v1845
  %v4869 = vunpack.c.h.b16 %v1845
  %v4870 = vunpack.c.l.b16 %v1846
  %v4871 = vunpack.c.h.b16 %v1846
  %v4872 = vunpack.c.l.b16 %v1847
  %v4873 = vunpack.c.l.b16 %v1848
  %v4874 = vunpack.c.h.b16 %v1848
  %v4875 = vunpack.c.l.b16 %v1849
  %v4876 = vunpack.c.h.b16 %v1849
  %v4877 = vunpack.c.l.b16 %v1850
  %v4878 = vunpack.c.h.b16 %v1850
  %v4879 = vunpack.c.l.b16 %v1851
  %v4880 = vunpack.c.h.b16 %v1851
  %v4881 = vunpack.c.l.b16 %v1852
  %v4882 = vunpack.c.l.b16 %v1853
  %v4883 = vunpack.c.h.b16 %v1853
  %v4884 = vunpack.c.l.b16 %v1854
  %v4885 = vunpack.c.h.b16 %v1854
  %v4886 = vunpack.c.l.b16 %v1855
  %v4887 = vunpack.c.h.b16 %v1855
  %v4888 = vunpack.c.l.b16 %v1856
  %v4889 = vunpack.c.h.b16 %v1856
  %v4890 = vunpack.c.l.b16 %v1857
  %v4891 = vunpack.c.l.b16 %v1858
  %v4892 = vunpack.c.h.b16 %v1858
  %v4893 = vunpack.c.l.b16 %v1859
  %v4894 = vunpack.c.h.b16 %v1859
  %v4895 = vunpack.c.l.b16 %v1860
  %v4896 = vunpack.c.h.b16 %v1860
  %v4897 = vunpack.c.l.b16 %v1861
  %v4898 = vunpack.c.h.b16 %v1861
  %v4899 = vunpack.c.l.b16 %v1862
  %v4900 = vunpack.c.l.b16 %v1863
  %v4901 = vunpack.c.h.b16 %v1863
  %v4902 = vunpack.c.l.b16 %v1864
  %v4903 = vunpack.c.h.b16 %v1864
  %v4904 = vunpack.c.l.b16 %v1865
  %v4905 = vunpack.c.h.b16 %v1865
  %v4906 = vunpack.c.l.b16 %v1866
  %v4907 = vunpack.c.h.b16 %v1866
  %v4908 = vunpack.c.l.b16 %v1867
  %v4909 = vunpack.c.l.b16 %v1868
  %v4910 = vunpack.c.h.b16 %v1868
  %v4911 = vunpack.c.l.b16 %v1869
  %v4912 = vunpack.c.h.b16 %v1869
  %v4913 = vunpack.c.l.b16 %v1870
  %v4914 = vunpack.c.h.b16 %v1870
  %v4915 = vunpack.c.l.b16 %v1871
  %v4916 = vunpack.c.h.b16 %v1871
  %v4917 = vunpack.c.l.b16 %v1872
  %v4918 = vunpack.c.l.b16 %v1873
  %v4919 = vunpack.c.h.b16 %v1873
  %v4920 = vunpack.c.l.b16 %v1874
  %v4921 = vunpack.c.h.b16 %v1874
  %v4922 = vunpack.c.l.b16 %v1875
  %v4923 = vunpack.c.h.b16 %v1875
  %v4924 = vunpack.c.l.b16 %v1876
  %v4925 = vunpack.c.h.b16 %v1876
  %v4926 = vunpack.c.l.b16 %v1877
  %v4927 = vunpack.c.l.b16 %v1878
  %v4928 = vunpack.c.h.b16 %v1878
  %v4929 = vunpack.c.l.b16 %v1879
  %v4930 = vunpack.c.h.b16 %v1879
  %v4931 = vunpack.c.l.b16 %v1880
  %v4932 = vunpack.c.h.b16 %v1880
  %v4933 = vunpack.c.l.b16 %v1881
  %v4934 = vunpack.c.h.b16 %v1881
  %v4935 = vunpack.c.l.b16 %v1882
  %v4936 = vunpack.c.l.b16 %v1883
  %v4937 = vunpack.c.h.b16 %v1883
  %v4938 = vunpack.c.l.b16 %v1884
  %v4939 = vunpack.c.h.b16 %v1884
  %v4940 = vunpack.c.l.b16 %v1885
  %v4941 = vunpack.c.h.b16 %v1885
  %v4942 = vunpack.c.l.b16 %v1886
  %v4943 = vunpack.c.h.b16 %v1886
  %v4944 = vunpack.c.l.b16 %v1887
  %v4945 = vunpack.c.l.b16 %v1888
  %v4946 = vunpack.c.h.b16 %v1888
  %v4947 = vunpack.c.l.b16 %v1889
  %v4948 = vunpack.c.h.b16 %v1889
  %v4949 = vunpack.c.l.b16 %v1890
  %v4950 = vunpack.c.h.b16 %v1890
  %v4951 = vunpack.c.l.b16 %v1891
  %v4952 = vunpack.c.h.b16 %v1891
  %v4953 = vunpack.c.l.b16 %v1892
  %v4954 = vunpack.c.l.b16 %v1893
  %v4955 = vunpack.c.h.b16 %v1893
  %v4956 = vunpack.c.l.b16 %v1894
  %v4957 = vunpack.c.h.b16 %v1894
  %v4958 = vunpack.c.l.b16 %v1895
  %v4959 = vunpack.c.h.b16 %v1895
  %v4960 = vunpack.c.l.b16 %v1896
  %v4961 = vunpack.c.h.b16 %v1896
  %v4962 = vunpack.c.l.b16 %v1897
  %v4963 = vunpack.c.l.b16 %v1898
  %v4964 = vunpack.c.h.b16 %v1898
  %v4965 = vunpack.c.l.b16 %v1899
  %v4966 = vunpack.c.h.b16 %v1899
  %v4967 = vunpack.c.l.b16 %v1900
  %v4968 = vunpack.c.h.b16 %v1900
  %v4969 = vunpack.c.l.b16 %v1901
  %v4970 = vunpack.c.h.b16 %v1901
  %v4971 = vunpack.c.l.b16 %v1902
  %v4972 = vunpack.c.l.b16 %v1903
  %v4973 = vunpack.c.h.b16 %v1903
  %v4974 = vunpack.c.l.b16 %v1904
  %v4975 = vunpack.c.h.b16 %v1904
  %v4976 = vunpack.c.l.b16 %v1905
  %v4977 = vunpack.c.h.b16 %v1905
  %v4978 = vunpack.c.l.b16 %v1906
  %v4979 = vunpack.c.h.b16 %v1906
  %v4980 = vunpack.c.l.b16 %v1907
  %v4981 = vunpack.c.l.b16 %v1908
  %v4982 = vunpack.c.h.b16 %v1908
  %v4983 = vunpack.c.l.b16 %v1909
  %v4984 = vunpack.c.h.b16 %v1909
  %v4985 = vunpack.c.l.b16 %v1910
  %v4986 = vunpack.c.h.b16 %v1910
  %v4987 = vunpack.c.l.b16 %v1911
  %v4988 = vunpack.c.h.b16 %v1911
  %v4989 = vunpack.c.l.b16 %v1912
  %v4990 = vunpack.c.l.b16 %v1913
  %v4991 = vunpack.c.h.b16 %v1913
  %v4992 = vunpack.c.l.b16 %v1914
  %v4993 = vunpack.c.h.b16 %v1914
  %v4994 = vunpack.c.l.b16 %v1915
  %v4995 = vunpack.c.h.b16 %v1915
  %v4996 = vunpack.c.l.b16 %v1916
  %v4997 = vunpack.c.h.b16 %v1916
  %v4998 = vunpack.c.l.b16 %v1917
  %v4999 = vunpack.c.l.b16 %v1918
  %v5000 = vunpack.c.h.b16 %v1918
  %v5001 = vunpack.c.l.b16 %v1919
  %v5002 = vunpack.c.h.b16 %v1919
  %v5003 = vunpack.c.l.b16 %v1920
  %v5004 = vunpack.c.h.b16 %v1920
  %v5005 = vunpack.c.l.b16 %v1921
  %v5006 = vunpack.c.h.b16 %v1921
  %v5007 = vunpack.c.l.b16 %v1922
  %v5008 = vunpack.c.l.b16 %v1923
  %v5009 = vunpack.c.h.b16 %v1923
  %v5010 = vunpack.c.l.b16 %v1924
  %v5011 = vunpack.c.h.b16 %v1924
  %v5012 = vunpack.c.l.b16 %v1925
  %v5013 = vunpack.c.h.b16 %v1925
  %v5014 = vunpack.c.l.b16 %v1926
  %v5015 = vunpack.c.h.b16 %v1926
  %v5016 = vunpack.c.l.b16 %v1927
  %v5017 = vunpack.c.l.b16 %v1928
  %v5018 = vunpack.c.h.b16 %v1928
  %v5019 = vunpack.c.l.b16 %v1929
  %v5020 = vunpack.c.h.b16 %v1929
  %v5021 = vunpack.c.l.b16 %v1930
  %v5022 = vunpack.c.h.b16 %v1930
  %v5023 = vunpack.c.l.b16 %v1931
  %v5024 = vunpack.c.h.b16 %v1931
  %v5025 = vunpack.c.l.b16 %v1932
  %v5026 = vunpack.c.l.b16 %v1933
  %v5027 = vunpack.c.h.b16 %v1933
  %v5028 = vunpack.c.l.b16 %v1934
  %v5029 = vunpack.c.h.b16 %v1934
  %v5030 = vunpack.c.l.b16 %v1935
  %v5031 = vunpack.c.h.b16 %v1935
  %v5032 = vunpack.c.l.b16 %v1936
  %v5033 = vunpack.c.h.b16 %v1936
  %v5034 = vunpack.c.l.b16 %v1937
  %v5035 = vunpack.c.l.b16 %v1938
  %v5036 = vunpack.c.h.b16 %v1938
  %v5037 = vunpack.c.l.b16 %v1939
  %v5038 = vunpack.c.h.b16 %v1939
  %v5039 = vunpack.c.l.b16 %v1940
  %v5040 = vunpack.c.h.b16 %v1940
  %v5041 = vunpack.c.l.b16 %v1941
  %v5042 = vunpack.c.h.b16 %v1941
  %v5043 = vunpack.c.l.b16 %v1942
  %v5044 = vunpack.c.l.b16 %v1943
  %v5045 = vunpack.c.h.b16 %v1943
  %v5046 = vunpack.c.l.b16 %v1944
  %v5047 = vunpack.c.h.b16 %v1944
  %v5048 = vunpack.c.l.b16 %v1945
  %v5049 = vunpack.c.h.b16 %v1945
  %v5050 = vunpack.c.l.b16 %v1946
  %v5051 = vunpack.c.h.b16 %v1946
  %v5052 = vunpack.c.l.b16 %v1947
  %v5053 = vunpack.c.l.b16 %v1948
  %v5054 = vunpack.c.h.b16 %v1948
  %v5055 = vunpack.c.l.b16 %v1949
  %v5056 = vunpack.c.h.b16 %v1949
  %v5057 = vunpack.c.l.b16 %v1950
  %v5058 = vunpack.c.h.b16 %v1950
  %v5059 = vunpack.c.l.b16 %v1951
  %v5060 = vunpack.c.h.b16 %v1951
  %v5061 = vunpack.c.l.b16 %v1952
  %v5062 = vunpack.c.l.b16 %v1953
  %v5063 = vunpack.c.h.b16 %v1953
  %v5064 = vunpack.c.l.b16 %v1954
  %v5065 = vunpack.c.h.b16 %v1954
  %v5066 = vunpack.c.l.b16 %v1955
  %v5067 = vunpack.c.h.b16 %v1955
  %v5068 = vunpack.c.l.b16 %v1956
  %v5069 = vunpack.c.h.b16 %v1956
  %v5070 = vunpack.c.l.b16 %v1957
  %v5071 = vunpack.c.l.b16 %v1958
  %v5072 = vunpack.c.h.b16 %v1958
  %v5073 = vunpack.c.l.b16 %v1959
  %v5074 = vunpack.c.h.b16 %v1959
  %v5075 = vunpack.c.l.b16 %v1960
  %v5076 = vunpack.c.h.b16 %v1960
  %v5077 = vunpack.c.l.b16 %v1961
  %v5078 = vunpack.c.h.b16 %v1961
  %v5079 = vunpack.c.l.b16 %v1962
  %v5080 = vunpack.c.l.b16 %v1963
  %v5081 = vunpack.c.h.b16 %v1963
  %v5082 = vunpack.c.l.b16 %v1964
  %v5083 = vunpack.c.h.b16 %v1964
  %v5084 = vunpack.c.l.b16 %v1965
  %v5085 = vunpack.c.h.b16 %v1965
  %v5086 = vunpack.c.l.b16 %v1966
  %v5087 = vunpack.c.h.b16 %v1966
  %v5088 = vunpack.c.l.b16 %v1967
  %v5089 = vunpack.c.l.b16 %v1968
  %v5090 = vunpack.c.h.b16 %v1968
  %v5091 = vunpack.c.l.b16 %v1969
  %v5092 = vunpack.c.h.b16 %v1969
  %v5093 = vunpack.c.l.b16 %v1970
  %v5094 = vunpack.c.h.b16 %v1970
  %v5095 = vunpack.c.l.b16 %v1971
  %v5096 = vunpack.c.h.b16 %v1971
  %v5097 = vunpack.c.l.b16 %v1972
  %v5098 = vunpack.c.l.b16 %v1973
  %v5099 = vunpack.c.h.b16 %v1973
  %v5100 = vunpack.c.l.b16 %v1974
  %v5101 = vunpack.c.h.b16 %v1974
  %v5102 = vunpack.c.l.b16 %v1975
  %v5103 = vunpack.c.h.b16 %v1975
  %v5104 = vunpack.c.l.b16 %v1976
  %v5105 = vunpack.c.h.b16 %v1976
  %v5106 = vunpack.c.l.b16 %v1977
  %v5107 = vunpack.c.l.b16 %v1978
  %v5108 = vunpack.c.h.b16 %v1978
  %v5109 = vunpack.c.l.b16 %v1979
  %v5110 = vunpack.c.h.b16 %v1979
  %v5111 = vunpack.c.l.b16 %v1980
  %v5112 = vunpack.c.h.b16 %v1980
  %v5113 = vunpack.c.l.b16 %v1981
  %v5114 = vunpack.c.h.b16 %v1981
  %v5115 = vunpack.c.l.b16 %v1982
  %v5116 = vunpack.c.l.b16 %v1983
  %v5117 = vunpack.c.h.b16 %v1983
  %v5118 = vunpack.c.l.b16 %v1984
  %v5119 = vunpack.c.h.b16 %v1984
  %v5120 = vunpack.c.l.b16 %v1985
  %v5121 = vunpack.c.h.b16 %v1985
  %v5122 = vunpack.c.l.b16 %v1986
  %v5123 = vunpack.c.h.b16 %v1986
  %v5124 = vunpack.c.l.b16 %v1987
  %v5125 = vunpack.c.l.b16 %v1988
  %v5126 = vunpack.c.h.b16 %v1988
  %v5127 = vunpack.c.l.b16 %v1989
  %v5128 = vunpack.c.h.b16 %v1989
  %v5129 = vunpack.c.l.b16 %v1990
  %v5130 = vunpack.c.h.b16 %v1990
  %v5131 = vunpack.c.l.b16 %v1991
  %v5132 = vunpack.c.h.b16 %v1991
  %v5133 = vunpack.c.l.b16 %v1992
  %v5134 = vunpack.c.l.b16 %v1993
  %v5135 = vunpack.c.h.b16 %v1993
  %v5136 = vunpack.c.l.b16 %v1994
  %v5137 = vunpack.c.h.b16 %v1994
  %v5138 = vunpack.c.l.b16 %v1995
  %v5139 = vunpack.c.h.b16 %v1995
  %v5140 = vunpack.c.l.b16 %v1996
  %v5141 = vunpack.c.h.b16 %v1996
  %v5142 = vunpack.c.l.b16 %v1997
  %v5143 = vunpack.c.l.b16 %v1998
  %v5144 = vunpack.c.h.b16 %v1998
  %v5145 = vunpack.c.l.b16 %v1999
  %v5146 = vunpack.c.h.b16 %v1999
  %v5147 = vunpack.c.l.b16 %v2000
  %v5148 = vunpack.c.h.b16 %v2000
  %v5149 = vunpack.c.l.b16 %v2001
  %v5150 = vunpack.c.h.b16 %v2001
  %v5151 = vunpack.c.l.b16 %v2002
  %v5152 = vunpack.c.l.b16 %v2003
  %v5153 = vunpack.c.h.b16 %v2003
  %v5154 = vunpack.c.l.b16 %v2004
  %v5155 = vunpack.c.h.b16 %v2004
  %v5156 = vunpack.c.l.b16 %v2005
  %v5157 = vunpack.c.h.b16 %v2005
  %v5158 = vunpack.c.l.b16 %v2006
  %v5159 = vunpack.c.h.b16 %v2006
  %v5160 = vunpack.c.l.b16 %v2007
  %v5161 = vunpack.c.l.b16 %v2008
  %v5162 = vunpack.c.h.b16 %v2008
  %v5163 = vunpack.c.l.b16 %v2009
  %v5164 = vunpack.c.h.b16 %v2009
  %v5165 = vunpack.c.l.b16 %v2010
  %v5166 = vunpack.c.h.b16 %v2010
  %v5167 = vunpack.c.l.b16 %v2011
  %v5168 = vunpack.c.h.b16 %v2011
  %v5169 = vunpack.c.l.b16 %v2012
  %v5170 = vunpack.c.l.b16 %v2013
  %v5171 = vunpack.c.h.b16 %v2013
  %v5172 = vunpack.c.l.b16 %v2014
  %v5173 = vunpack.c.h.b16 %v2014
  %v5174 = vunpack.c.l.b16 %v2015
  %v5175 = vunpack.c.h.b16 %v2015
  %v5176 = vunpack.c.l.b16 %v2016
  %v5177 = vunpack.c.h.b16 %v2016
  %v5178 = vunpack.c.l.b16 %v2017
  %v5179 = vunpack.c.l.b16 %v2018
  %v5180 = vunpack.c.h.b16 %v2018
  %v5181 = vunpack.c.l.b16 %v2019
  %v5182 = vunpack.c.h.b16 %v2019
  %v5183 = vunpack.c.l.b16 %v2020
  %v5184 = vunpack.c.h.b16 %v2020
  %v5185 = vunpack.c.l.b16 %v2021
  %v5186 = vunpack.c.h.b16 %v2021
  %v5187 = vunpack.c.l.b16 %v2022
  %v5188 = vunpack.c.l.b16 %v2023
  %v5189 = vunpack.c.h.b16 %v2023
  %v5190 = vunpack.c.l.b16 %v2024
  %v5191 = vunpack.c.h.b16 %v2024
  %v5192 = vunpack.c.l.b16 %v2025
  %v5193 = vunpack.c.h.b16 %v2025
  %v5194 = vunpack.c.l.b16 %v2026
  %v5195 = vunpack.c.h.b16 %v2026
  %v5196 = vunpack.c.l.b16 %v2027
  %v5197 = vunpack.c.l.b16 %v2028
  %v5198 = vunpack.c.h.b16 %v2028
  %v5199 = vunpack.c.l.b16 %v2029
  %v5200 = vunpack.c.h.b16 %v2029
  %v5201 = vunpack.c.l.b16 %v2030
  %v5202 = vunpack.c.h.b16 %v2030
  %v5203 = vunpack.c.l.b16 %v2031
  %v5204 = vunpack.c.h.b16 %v2031
  %v5205 = vunpack.c.l.b16 %v2032
  %v5206 = vunpack.c.l.b16 %v2033
  %v5207 = vunpack.c.h.b16 %v2033
  %v5208 = vunpack.c.l.b16 %v2034
  %v5209 = vunpack.c.h.b16 %v2034
  %v5210 = vunpack.c.l.b16 %v2035
  %v5211 = vunpack.c.h.b16 %v2035
  %v5212 = vunpack.c.l.b16 %v2036
  %v5213 = vunpack.c.h.b16 %v2036
  %v5214 = vunpack.c.l.b16 %v2037
  %v5215 = vunpack.c.l.b16 %v2038
  %v5216 = vunpack.c.h.b16 %v2038
  %v5217 = vunpack.c.l.b16 %v2039
  %v5218 = vunpack.c.h.b16 %v2039
  %v5219 = vunpack.c.l.b16 %v2040
  %v5220 = vunpack.c.h.b16 %v2040
  %v5221 = vunpack.c.l.b16 %v2041
  %v5222 = vunpack.c.h.b16 %v2041
  %v5223 = vunpack.c.l.b16 %v2042
  %v5224 = vunpack.c.l.b16 %v2043
  %v5225 = vunpack.c.h.b16 %v2043
  %v5226 = vunpack.c.l.b16 %v2044
  %v5227 = vunpack.c.h.b16 %v2044
  %v5228 = vunpack.c.l.b16 %v2045
  %v5229 = vunpack.c.h.b16 %v2045
  %v5230 = vunpack.c.l.b16 %v2046
  %v5231 = vunpack.c.h.b16 %v2046
  %v5232 = vunpack.c.l.b16 %v2047
  %v5233 = vunpack.c.l.b16 %v2048
  %v5234 = vunpack.c.h.b16 %v2048
  %v5235 = vunpack.c.l.b16 %v2049
  %v5236 = vunpack.c.h.b16 %v2049
  %v5237 = vunpack.c.l.b16 %v2050
  %v5238 = vunpack.c.h.b16 %v2050
  %v5239 = vunpack.c.l.b16 %v2051
  %v5240 = vunpack.c.h.b16 %v2051
  %v5241 = vunpack.c.l.b16 %v2052
  %v5242 = vunpack.c.l.b16 %v2053
  %v5243 = vunpack.c.h.b16 %v2053
  %v5244 = vunpack.c.l.b16 %v2054
  %v5245 = vunpack.c.h.b16 %v2054
  %v5246 = vunpack.c.l.b16 %v2055
  %v5247 = vunpack.c.h.b16 %v2055
  %v5248 = vunpack.c.l.b16 %v2056
  %v5249 = vunpack.c.h.b16 %v2056
  %v5250 = vunpack.c.l.b16 %v2057
  %v5251 = vunpack.c.l.b16 %v2058
  %v5252 = vunpack.c.h.b16 %v2058
  %v5253 = vunpack.c.l.b16 %v2059
  %v5254 = vunpack.c.h.b16 %v2059
  %v5255 = vunpack.c.l.b16 %v2060
  %v5256 = vunpack.c.h.b16 %v2060
  %v5257 = vunpack.c.l.b16 %v2061
  %v5258 = vunpack.c.h.b16 %v2061
  %v5259 = vunpack.c.l.b16 %v2062
  %v5260 = vunpack.c.l.b16 %v2063
  %v5261 = vunpack.c.h.b16 %v2063
  %v5262 = vunpack.c.l.b16 %v2064
  %v5263 = vunpack.c.h.b16 %v2064
  %v5264 = vunpack.c.l.b16 %v2065
  %v5265 = vunpack.c.h.b16 %v2065
  %v5266 = vunpack.c.l.b16 %v2066
  %v5267 = vunpack.c.h.b16 %v2066
  %v5268 = vunpack.c.l.b16 %v2067
  %v5269 = vunpack.c.l.b16 %v2068
  %v5270 = vunpack.c.h.b16 %v2068
  %v5271 = vunpack.c.l.b16 %v2069
  %v5272 = vunpack.c.h.b16 %v2069
  %v5273 = vunpack.c.l.b16 %v2070
  %v5274 = vunpack.c.h.b16 %v2070
  %v5275 = vunpack.c.l.b16 %v2071
  %v5276 = vunpack.c.h.b16 %v2071
  %v5277 = vunpack.c.l.b16 %v2072
  %v5278 = vunpack.c.l.b16 %v2073
  %v5279 = vunpack.c.h.b16 %v2073
  %v5280 = vunpack.c.l.b16 %v2074
  %v5281 = vunpack.c.h.b16 %v2074
  %v5282 = vunpack.c.l.b16 %v2075
  %v5283 = vunpack.c.h.b16 %v2075
  %v5284 = vunpack.c.l.b16 %v2076
  %v5285 = vunpack.c.h.b16 %v2076
  %v5286 = vunpack.c.l.b16 %v2077
  %v5287 = vunpack.c.l.b16 %v2078
  %v5288 = vunpack.c.h.b16 %v2078
  %v5289 = vunpack.c.l.b16 %v2079
  %v5290 = vunpack.c.h.b16 %v2079
  %v5291 = vunpack.c.l.b16 %v2080
  %v5292 = vunpack.c.h.b16 %v2080
  %v5293 = vunpack.c.l.b16 %v2081
  %v5294 = vunpack.c.h.b16 %v2081
  %v5295 = vunpack.c.l.b16 %v2082
  %v5296 = vunpack.c.l.b16 %v2083
  %v5297 = vunpack.c.h.b16 %v2083
  %v5298 = vunpack.c.l.b16 %v2084
  %v5299 = vunpack.c.h.b16 %v2084
  %v5300 = vunpack.c.l.b16 %v2085
  %v5301 = vunpack.c.h.b16 %v2085
  %v5302 = vunpack.c.l.b16 %v2086
  %v5303 = vunpack.c.h.b16 %v2086
  %v5304 = vunpack.c.l.b16 %v2087
  %v5305 = vunpack.c.l.b16 %v2088
  %v5306 = vunpack.c.h.b16 %v2088
  %v5307 = vunpack.c.l.b16 %v2089
  %v5308 = vunpack.c.h.b16 %v2089
  %v5309 = vunpack.c.l.b16 %v2090
  %v5310 = vunpack.c.h.b16 %v2090
  %v5311 = vunpack.c.l.b16 %v2091
  %v5312 = vunpack.c.h.b16 %v2091
  %v5313 = vunpack.c.l.b16 %v2092
  %v5314 = vunpack.c.l.b16 %v2093
  %v5315 = vunpack.c.h.b16 %v2093
  %v5316 = vunpack.c.l.b16 %v2094
  %v5317 = vunpack.c.h.b16 %v2094
  %v5318 = vunpack.c.l.b16 %v2095
  %v5319 = vunpack.c.h.b16 %v2095
  %v5320 = vunpack.c.l.b16 %v2096
  %v5321 = vunpack.c.h.b16 %v2096
  %v5322 = vunpack.c.l.b16 %v2097
  %v5323 = vunpack.c.l.b16 %v2098
  %v5324 = vunpack.c.h.b16 %v2098
  %v5325 = vunpack.c.l.b16 %v2099
  %v5326 = vunpack.c.h.b16 %v2099
  %v5327 = vunpack.c.l.b16 %v2100
  %v5328 = vunpack.c.h.b16 %v2100
  %v5329 = vunpack.c.l.b16 %v2101
  %v5330 = vunpack.c.h.b16 %v2101
  %v5331 = vunpack.c.l.b16 %v2102
  %v5332 = vunpack.c.l.b16 %v2103
  %v5333 = vunpack.c.h.b16 %v2103
  %v5334 = vunpack.c.l.b16 %v2104
  %v5335 = vunpack.c.h.b16 %v2104
  %v5336 = vunpack.c.l.b16 %v2105
  %v5337 = vunpack.c.h.b16 %v2105
  %v5338 = vunpack.c.l.b16 %v2106
  %v5339 = vunpack.c.h.b16 %v2106
  %v5340 = vunpack.c.l.b16 %v2107
  %v5341 = vunpack.c.l.b16 %v2108
  %v5342 = vunpack.c.h.b16 %v2108
  %v5343 = vunpack.c.l.b16 %v2109
  %v5344 = vunpack.c.h.b16 %v2109
  %v5345 = vunpack.c.l.b16 %v2110
  %v5346 = vunpack.c.h.b16 %v2110
  %v5347 = vunpack.c.l.b16 %v2111
  %v5348 = vunpack.c.h.b16 %v2111
  %v5349 = vunpack.c.l.b16 %v2112
  %v5350 = vunpack.c.l.b16 %v2113
  %v5351 = vunpack.c.h.b16 %v2113
  %v5352 = vunpack.c.l.b16 %v2114
  %v5353 = vunpack.c.h.b16 %v2114
  %v5354 = vunpack.c.l.b16 %v2115
  %v5355 = vunpack.c.h.b16 %v2115
  %v5356 = vunpack.c.l.b16 %v2116
  %v5357 = vunpack.c.h.b16 %v2116
  %v5358 = vunpack.c.l.b16 %v2117
  %v5359 = vunpack.c.l.b16 %v2118
  %v5360 = vunpack.c.h.b16 %v2118
  %v5361 = vunpack.c.l.b16 %v2119
  %v5362 = vunpack.c.h.b16 %v2119
  %v5363 = vunpack.c.l.b16 %v2120
  %v5364 = vunpack.c.h.b16 %v2120
  %v5365 = vunpack.c.l.b16 %v2121
  %v5366 = vunpack.c.h.b16 %v2121
  %v5367 = vunpack.c.l.b16 %v2122
  %v5368 = vunpack.c.l.b16 %v2123
  %v5369 = vunpack.c.h.b16 %v2123
  %v5370 = vunpack.c.l.b16 %v2124
  %v5371 = vunpack.c.h.b16 %v2124
  %v5372 = vunpack.c.l.b16 %v2125
  %v5373 = vunpack.c.h.b16 %v2125
  %v5374 = vunpack.c.l.b16 %v2126
  %v5375 = vunpack.c.h.b16 %v2126
  %v5376 = vunpack.c.l.b16 %v2127
  %v5377 = vunpack.c.l.b16 %v2128
  %v5378 = vunpack.c.h.b16 %v2128
  %v5379 = vunpack.c.l.b16 %v2129
  %v5380 = vunpack.c.h.b16 %v2129
  %v5381 = vunpack.c.l.b16 %v2130
  %v5382 = vunpack.c.h.b16 %v2130
  %v5383 = vunpack.c.l.b16 %v2131
  %v5384 = vunpack.c.h.b16 %v2131
  %v5385 = vunpack.c.l.b16 %v2132
  %v5386 = vunpack.c.l.b16 %v2133
  %v5387 = vunpack.c.h.b16 %v2133
  %v5388 = vunpack.c.l.b16 %v2134
  %v5389 = vunpack.c.h.b16 %v2134
  %v5390 = vunpack.c.l.b16 %v2135
  %v5391 = vunpack.c.h.b16 %v2135
  %v5392 = vunpack.c.l.b16 %v2136
  %v5393 = vunpack.c.h.b16 %v2136
  %v5394 = vunpack.c.l.b16 %v2137
  %v5395 = vunpack.c.l.b16 %v2138
  %v5396 = vunpack.c.h.b16 %v2138
  %v5397 = vunpack.c.l.b16 %v2139
  %v5398 = vunpack.c.h.b16 %v2139
  %v5399 = vunpack.c.l.b16 %v2140
  %v5400 = vunpack.c.h.b16 %v2140
  %v5401 = vunpack.c.l.b16 %v2141
  %v5402 = vunpack.c.h.b16 %v2141
  %v5403 = vunpack.c.l.b16 %v2142
  %v5404 = vunpack.c.l.b16 %v2143
  %v5405 = vunpack.c.h.b16 %v2143
  %v5406 = vunpack.c.l.b16 %v2144
  %v5407 = vunpack.c.h.b16 %v2144
  %v5408 = vunpack.c.l.b16 %v2145
  %v5409 = vunpack.c.h.b16 %v2145
  %v5410 = vunpack.c.l.b16 %v2146
  %v5411 = vunpack.c.h.b16 %v2146
  %v5412 = vunpack.c.l.b16 %v2147
  %v5413 = vunpack.c.l.b16 %v2148
  %v5414 = vunpack.c.h.b16 %v2148
  %v5415 = vunpack.c.l.b16 %v2149
  %v5416 = vunpack.c.h.b16 %v2149
  %v5417 = vunpack.c.l.b16 %v2150
  %v5418 = vunpack.c.h.b16 %v2150
  %v5419 = vunpack.c.l.b16 %v2151
  %v5420 = vunpack.c.h.b16 %v2151
  %v5421 = vunpack.c.l.b16 %v2152
  %v5422 = vunpack.c.l.b16 %v2153
  %v5423 = vunpack.c.h.b16 %v2153
  %v5424 = vunpack.c.l.b16 %v2154
  %v5425 = vunpack.c.h.b16 %v2154
  %v5426 = vunpack.c.l.b16 %v2155
  %v5427 = vunpack.c.h.b16 %v2155
  %v5428 = vunpack.c.l.b16 %v2156
  %v5429 = vunpack.c.h.b16 %v2156
  %v5430 = vunpack.c.l.b16 %v2157
  %v5431 = vunpack.c.l.b16 %v2158
  %v5432 = vunpack.c.h.b16 %v2158
  %v5433 = vunpack.c.l.b16 %v2159
  %v5434 = vunpack.c.h.b16 %v2159
  %v5435 = vunpack.c.l.b16 %v2160
  %v5436 = vunpack.c.h.b16 %v2160
  %v5437 = vunpack.c.l.b16 %v2161
  %v5438 = vunpack.c.h.b16 %v2161
  %v5439 = vunpack.c.l.b16 %v2162
  %v5440 = vunpack.c.l.b16 %v2163
  %v5441 = vunpack.c.h.b16 %v2163
  %v5442 = vunpack.c.l.b16 %v2164
  %v5443 = vunpack.c.h.b16 %v2164
  %v5444 = vunpack.c.l.b16 %v2165
  %v5445 = vunpack.c.h.b16 %v2165
  %v5446 = vunpack.c.l.b16 %v2166
  %v5447 = vunpack.c.h.b16 %v2166
  %v5448 = vunpack.c.l.b16 %v2167
  %v5449 = vunpack.c.l.b16 %v2168
  %v5450 = vunpack.c.h.b16 %v2168
  %v5451 = vunpack.c.l.b16 %v2169
  %v5452 = vunpack.c.h.b16 %v2169
  %v5453 = vunpack.c.l.b16 %v2170
  %v5454 = vunpack.c.h.b16 %v2170
  %v5455 = vunpack.c.l.b16 %v2171
  %v5456 = vunpack.c.h.b16 %v2171
  %v5457 = vunpack.c.l.b16 %v2172
  %v5458 = vunpack.c.l.b16 %v2173
  %v5459 = vunpack.c.h.b16 %v2173
  %v5460 = vunpack.c.l.b16 %v2174
  %v5461 = vunpack.c.h.b16 %v2174
  %v5462 = vunpack.c.l.b16 %v2175
  %v5463 = vunpack.c.h.b16 %v2175
  %v5464 = vunpack.c.l.b16 %v2176
  %v5465 = vunpack.c.h.b16 %v2176
  %v5466 = vunpack.c.l.b16 %v2177
  %v5467 = vunpack.c.l.b16 %v2178
  %v5468 = vunpack.c.h.b16 %v2178
  %v5469 = vunpack.c.l.b16 %v2179
  %v5470 = vunpack.c.h.b16 %v2179
  %v5471 = vunpack.c.l.b16 %v2180
  %v5472 = vunpack.c.h.b16 %v2180
  %v5473 = vunpack.c.l.b16 %v2181
  %v5474 = vunpack.c.h.b16 %v2181
  %v5475 = vunpack.c.l.b16 %v2182
  %v5476 = vunpack.c.l.b16 %v2183
  %v5477 = vunpack.c.h.b16 %v2183
  %v5478 = vunpack.c.l.b16 %v2184
  %v5479 = vunpack.c.h.b16 %v2184
  %v5480 = vunpack.c.l.b16 %v2185
  %v5481 = vunpack.c.h.b16 %v2185
  %v5482 = vunpack.c.l.b16 %v2186
  %v5483 = vunpack.c.h.b16 %v2186
  %v5484 = vunpack.c.l.b16 %v2187
  %v5485 = vunpack.c.l.b16 %v2188
  %v5486 = vunpack.c.h.b16 %v2188
  %v5487 = vunpack.c.l.b16 %v2189
  %v5488 = vunpack.c.h.b16 %v2189
  %v5489 = vunpack.c.l.b16 %v2190
  %v5490 = vunpack.c.h.b16 %v2190
  %v5491 = vunpack.c.l.b16 %v2191
  %v5492 = vunpack.c.h.b16 %v2191
  %v5493 = vunpack.c.l.b16 %v2192
  %v5494 = vunpack.c.l.b16 %v2193
  %v5495 = vunpack.c.h.b16 %v2193
  %v5496 = vunpack.c.l.b16 %v2194
  %v5497 = vunpack.c.h.b16 %v2194
  %v5498 = vunpack.c.l.b16 %v2195
  %v5499 = vunpack.c.h.b16 %v2195
  %v5500 = vunpack.c.l.b16 %v2196
  %v5501 = vunpack.c.h.b16 %v2196
  %v5502 = vunpack.c.l.b16 %v2197
  %v5503 = vunpack.c.l.b16 %v2198
  %v5504 = vunpack.c.h.b16 %v2198
  %v5505 = vunpack.c.l.b16 %v2199
  %v5506 = vunpack.c.h.b16 %v2199
  %v5507 = vunpack.c.l.b16 %v2200
  %v5508 = vunpack.c.h.b16 %v2200
  %v5509 = vunpack.c.l.b16 %v2201
  %v5510 = vunpack.c.h.b16 %v2201
  %v5511 = vunpack.c.l.b16 %v2202
  %v5512 = vunpack.c.l.b16 %v2203
  %v5513 = vunpack.c.h.b16 %v2203
  %v5514 = vunpack.c.l.b16 %v2204
  %v5515 = vunpack.c.h.b16 %v2204
  %v5516 = vunpack.c.l.b16 %v2205
  %v5517 = vunpack.c.h.b16 %v2205
  %v5518 = vunpack.c.l.b16 %v2206
  %v5519 = vunpack.c.h.b16 %v2206
  %v5520 = vunpack.c.l.b16 %v2207
  %v5521 = vunpack.c.l.b16 %v2208
  %v5522 = vunpack.c.h.b16 %v2208
  %v5523 = vunpack.c.l.b16 %v2209
  %v5524 = vunpack.c.h.b16 %v2209
  %v5525 = vunpack.c.l.b16 %v2210
  %v5526 = vunpack.c.h.b16 %v2210
  %v5527 = vunpack.c.l.b16 %v2211
  %v5528 = vunpack.c.h.b16 %v2211
  %v5529 = vunpack.c.l.b16 %v2212
  %v5530 = vunpack.c.l.b16 %v2213
  %v5531 = vunpack.c.h.b16 %v2213
  %v5532 = vunpack.c.l.b16 %v2214
  %v5533 = vunpack.c.h.b16 %v2214
  %v5534 = vunpack.c.l.b16 %v2215
  %v5535 = vunpack.c.h.b16 %v2215
  %v5536 = vunpack.c.l.b16 %v2216
  %v5537 = vunpack.c.h.b16 %v2216
  %v5538 = vunpack.c.l.b16 %v2217
  %v5539 = vunpack.c.l.b16 %v2218
  %v5540 = vunpack.c.h.b16 %v2218
  %v5541 = vunpack.c.l.b16 %v2219
  %v5542 = vunpack.c.h.b16 %v2219
  %v5543 = vunpack.c.l.b16 %v2220
  %v5544 = vunpack.c.h.b16 %v2220
  %v5545 = vunpack.c.l.b16 %v2221
  %v5546 = vunpack.c.h.b16 %v2221
  %v5547 = vunpack.c.l.b16 %v2222
  %v5548 = vunpack.c.l.b16 %v2223
  %v5549 = vunpack.c.h.b16 %v2223
  %v5550 = vunpack.c.l.b16 %v2224
  %v5551 = vunpack.c.h.b16 %v2224
  %v5552 = vunpack.c.l.b16 %v2225
  %v5553 = vunpack.c.h.b16 %v2225
  %v5554 = vunpack.c.l.b16 %v2226
  %v5555 = vunpack.c.h.b16 %v2226
  %v5556 = vunpack.c.l.b16 %v2227
  %v5557 = vunpack.c.l.b16 %v2228
  %v5558 = vunpack.c.h.b16 %v2228
  %v5559 = vunpack.c.l.b16 %v2229
  %v5560 = vunpack.c.h.b16 %v2229
  %v5561 = vunpack.c.l.b16 %v2230
  %v5562 = vunpack.c.h.b16 %v2230
  %v5563 = vunpack.c.l.b16 %v2231
  %v5564 = vunpack.c.h.b16 %v2231
  %v5565 = vunpack.c.l.b16 %v2232
  %v5566 = vunpack.c.l.b16 %v2233
  %v5567 = vunpack.c.h.b16 %v2233
  %v5568 = vunpack.c.l.b16 %v2234
  %v5569 = vunpack.c.h.b16 %v2234
  %v5570 = vunpack.c.l.b16 %v2235
  %v5571 = vunpack.c.h.b16 %v2235
  %v5572 = vunpack.c.l.b16 %v2236
  %v5573 = vunpack.c.h.b16 %v2236
  %v5574 = vunpack.c.l.b16 %v2237
  %v5575 = vunpack.c.l.b16 %v2238
  %v5576 = vunpack.c.h.b16 %v2238
  %v5577 = vunpack.c.l.b16 %v2239
  %v5578 = vunpack.c.h.b16 %v2239
  %v5579 = vunpack.c.l.b16 %v2240
  %v5580 = vunpack.c.h.b16 %v2240
  %v5581 = vunpack.c.l.b16 %v2241
  %v5582 = vunpack.c.h.b16 %v2241
  %v5583 = vunpack.c.l.b16 %v2242
  %v5584 = vunpack.c.l.b16 %v2243
  %v5585 = vunpack.c.h.b16 %v2243
  %v5586 = vunpack.c.l.b16 %v2244
  %v5587 = vunpack.c.h.b16 %v2244
  %v5588 = vunpack.c.l.b16 %v2245
  %v5589 = vunpack.c.h.b16 %v2245
  %v5590 = vunpack.c.l.b16 %v2246
  %v5591 = vunpack.c.h.b16 %v2246
  %v5592 = vunpack.c.l.b16 %v2247
  %v5593 = vunpack.c.l.b16 %v2248
  %v5594 = vunpack.c.h.b16 %v2248
  %v5595 = vunpack.c.l.b16 %v2249
  %v5596 = vunpack.c.h.b16 %v2249
  %v5597 = vunpack.c.l.b16 %v2250
  %v5598 = vunpack.c.h.b16 %v2250
  %v5599 = vunpack.c.l.b16 %v2251
  %v5600 = vunpack.c.h.b16 %v2251
  %v5601 = vunpack.c.l.b16 %v2252
  %v5602 = vunpack.c.l.b16 %v2253
  %v5603 = vunpack.c.h.b16 %v2253
  %v5604 = vunpack.c.l.b16 %v2254
  %v5605 = vunpack.c.h.b16 %v2254
  %v5606 = vunpack.c.l.b16 %v2255
  %v5607 = vunpack.c.h.b16 %v2255
  %v5608 = vunpack.c.l.b16 %v2256
  %v5609 = vunpack.c.h.b16 %v2256
  %v5610 = vunpack.c.l.b16 %v2257
  %v5611 = vunpack.c.l.b16 %v2258
  %v5612 = vunpack.c.h.b16 %v2258
  %v5613 = vunpack.c.l.b16 %v2259
  %v5614 = vunpack.c.h.b16 %v2259
  %v5615 = vunpack.c.l.b16 %v2260
  %v5616 = vunpack.c.h.b16 %v2260
  %v5617 = vunpack.c.l.b16 %v2261
  %v5618 = vunpack.c.h.b16 %v2261
  %v5619 = vunpack.c.l.b16 %v2262
  %v5620 = vunpack.c.l.b16 %v2263
  %v5621 = vunpack.c.h.b16 %v2263
  %v5622 = vunpack.c.l.b16 %v2264
  %v5623 = vunpack.c.h.b16 %v2264
  %v5624 = vunpack.c.l.b16 %v2265
  %v5625 = vunpack.c.h.b16 %v2265
  %v5626 = vunpack.c.l.b16 %v2266
  %v5627 = vunpack.c.h.b16 %v2266
  %v5628 = vunpack.c.l.b16 %v2267
  %v5629 = vunpack.c.l.b16 %v2268
  %v5630 = vunpack.c.h.b16 %v2268
  %v5631 = vunpack.c.l.b16 %v2269
  %v5632 = vunpack.c.h.b16 %v2269
  %v5633 = vunpack.c.l.b16 %v2270
  %v5634 = vunpack.c.h.b16 %v2270
  %v5635 = vunpack.c.l.b16 %v2271
  %v5636 = vunpack.c.h.b16 %v2271
  %v5637 = vunpack.c.l.b16 %v2272
  %v5638 = vunpack.c.l.b16 %v2273
  %v5639 = vunpack.c.h.b16 %v2273
  %v5640 = vunpack.c.l.b16 %v2274
  %v5641 = vunpack.c.h.b16 %v2274
  %v5642 = vunpack.c.l.b16 %v2275
  %v5643 = vunpack.c.h.b16 %v2275
  %v5644 = vunpack.c.l.b16 %v2276
  %v5645 = vunpack.c.h.b16 %v2276
  %v5646 = vunpack.c.l.b16 %v2277
  %v5647 = vunpack.c.l.b16 %v2278
  %v5648 = vunpack.c.h.b16 %v2278
  %v5649 = vunpack.c.l.b16 %v2279
  %v5650 = vunpack.c.h.b16 %v2279
  %v5651 = vunpack.c.l.b16 %v2280
  %v5652 = vunpack.c.h.b16 %v2280
  %v5653 = vunpack.c.l.b16 %v2281
  %v5654 = vunpack.c.h.b16 %v2281
  %v5655 = vunpack.c.l.b16 %v2282
  %v5656 = vunpack.c.l.b16 %v2283
  %v5657 = vunpack.c.h.b16 %v2283
  %v5658 = vunpack.c.l.b16 %v2284
  %v5659 = vunpack.c.h.b16 %v2284
  %v5660 = vunpack.c.l.b16 %v2285
  %v5661 = vunpack.c.h.b16 %v2285
  %v5662 = vunpack.c.l.b16 %v2286
  %v5663 = vunpack.c.h.b16 %v2286
  %v5664 = vunpack.c.l.b16 %v2287
  %v5665 = vunpack.c.l.b16 %v2288
  %v5666 = vunpack.c.h.b16 %v2288
  %v5667 = vunpack.c.l.b16 %v2289
  %v5668 = vunpack.c.h.b16 %v2289
  %v5669 = vunpack.c.l.b16 %v2290
  %v5670 = vunpack.c.h.b16 %v2290
  %v5671 = vunpack.c.l.b16 %v2291
  %v5672 = vunpack.c.h.b16 %v2291
  %v5673 = vunpack.c.l.b16 %v2292
  %v5674 = vunpack.c.l.b16 %v2293
  %v5675 = vunpack.c.h.b16 %v2293
  %v5676 = vunpack.c.l.b16 %v2294
  %v5677 = vunpack.c.h.b16 %v2294
  %v5678 = vunpack.c.l.b16 %v2295
  %v5679 = vunpack.c.h.b16 %v2295
  %v5680 = vunpack.c.l.b16 %v2296
  %v5681 = vunpack.c.h.b16 %v2296
  %v5682 = vunpack.c.l.b16 %v2297
  %v5683 = vunpack.c.l.b16 %v2298
  %v5684 = vunpack.c.h.b16 %v2298
  %v5685 = vunpack.c.l.b16 %v2299
  %v5686 = vunpack.c.h.b16 %v2299
  %v5687 = vunpack.c.l.b16 %v2300
  %v5688 = vunpack.c.h.b16 %v2300
  %v5689 = vunpack.c.l.b16 %v2301
  %v5690 = vunpack.c.h.b16 %v2301
  %v5691 = vunpack.c.l.b16 %v2302
  %v5692 = vunpack.c.l.b16 %v2303
  %v5693 = vunpack.c.h.b16 %v2303
  %v5694 = vunpack.c.l.b16 %v2304
  %v5695 = vunpack.c.h.b16 %v2304
  %v5696 = vunpack.c.l.b16 %v2305
  %v5697 = vunpack.c.h.b16 %v2305
  %v5698 = vunpack.c.l.b16 %v2306
  %v5699 = vunpack.c.h.b16 %v2306
  %v5700 = vunpack.c.l.b16 %v2307
  %v5701 = vunpack.c.l.b16 %v2308
  %v5702 = vunpack.c.h.b16 %v2308
  %v5703 = vunpack.c.l.b16 %v2309
  %v5704 = vunpack.c.h.b16 %v2309
  %v5705 = vunpack.c.l.b16 %v2310
  %v5706 = vunpack.c.h.b16 %v2310
  %v5707 = vunpack.c.l.b16 %v2311
  %v5708 = vunpack.c.h.b16 %v2311
  %v5709 = vunpack.c.l.b16 %v2312
  %v5710 = vunpack.c.l.b16 %v2313
  %v5711 = vunpack.c.h.b16 %v2313
  %v5712 = vunpack.c.l.b16 %v2314
  %v5713 = vunpack.c.h.b16 %v2314
  %v5714 = vunpack.c.l.b16 %v2315
  %v5715 = vunpack.c.h.b16 %v2315
  %v5716 = vunpack.c.l.b16 %v2316
  %v5717 = vunpack.c.h.b16 %v2316
  %v5718 = vunpack.c.l.b16 %v2317
  %v5719 = vunpack.c.l.b16 %v2318
  %v5720 = vunpack.c.h.b16 %v2318
  %v5721 = vunpack.c.l.b16 %v2319
  %v5722 = vunpack.c.h.b16 %v2319
  %v5723 = vunpack.c.l.b16 %v2320
  %v5724 = vunpack.c.h.b16 %v2320
  %v5725 = vunpack.c.l.b16 %v2321
  %v5726 = vunpack.c.h.b16 %v2321
  %v5727 = vunpack.c.l.b16 %v2322
  %v5728 = vunpack.c.l.b16 %v2323
  %v5729 = vunpack.c.h.b16 %v2323
  %v5730 = vunpack.c.l.b16 %v2324
  %v5731 = vunpack.c.h.b16 %v2324
  %v5732 = vunpack.c.l.b16 %v2325
  %v5733 = vunpack.c.h.b16 %v2325
  %v5734 = vunpack.c.l.b16 %v2326
  %v5735 = vunpack.c.h.b16 %v2326
  %v5736 = vunpack.c.l.b16 %v2327
  %v5737 = vunpack.c.l.b16 %v2328
  %v5738 = vunpack.c.h.b16 %v2328
  %v5739 = vunpack.c.l.b16 %v2329
  %v5740 = vunpack.c.h.b16 %v2329
  %v5741 = vunpack.c.l.b16 %v2330
  %v5742 = vunpack.c.h.b16 %v2330
  %v5743 = vunpack.c.l.b16 %v2331
  %v5744 = vunpack.c.h.b16 %v2331
  %v5745 = vunpack.c.l.b16 %v2332
  %v5746 = vunpack.c.l.b16 %v2333
  %v5747 = vunpack.c.h.b16 %v2333
  %v5748 = vunpack.c.l.b16 %v2334
  %v5749 = vunpack.c.h.b16 %v2334
  %v5750 = vunpack.c.l.b16 %v2335
  %v5751 = vunpack.c.h.b16 %v2335
  %v5752 = vunpack.c.l.b16 %v2336
  %v5753 = vunpack.c.h.b16 %v2336
  %v5754 = vunpack.c.l.b16 %v2337
  %v5755 = vunpack.c.l.b16 %v2338
  %v5756 = vunpack.c.h.b16 %v2338
  %v5757 = vunpack.c.l.b16 %v2339
  %v5758 = vunpack.c.h.b16 %v2339
  %v5759 = vunpack.c.l.b16 %v2340
  %v5760 = vunpack.c.h.b16 %v2340
  %v5761 = vunpack.c.l.b16 %v2341
  %v5762 = vunpack.c.h.b16 %v2341
  %v5763 = vunpack.c.l.b16 %v2342
  %v5764 = vunpack.c.l.b16 %v2343
  %v5765 = vunpack.c.h.b16 %v2343
  %v5766 = vunpack.c.l.b16 %v2344
  %v5767 = vunpack.c.h.b16 %v2344
  %v5768 = vunpack.c.l.b16 %v2345
  %v5769 = vunpack.c.h.b16 %v2345
  %v5770 = vunpack.c.l.b16 %v2346
  %v5771 = vunpack.c.h.b16 %v2346
  %v5772 = vunpack.c.l.b16 %v2347
  %v5773 = vunpack.c.l.b16 %v2348
  %v5774 = vunpack.c.h.b16 %v2348
  %v5775 = vunpack.c.l.b16 %v2349
  %v5776 = vunpack.c.h.b16 %v2349
  %v5777 = vunpack.c.l.b16 %v2350
  %v5778 = vunpack.c.h.b16 %v2350
  %v5779 = vunpack.c.l.b16 %v2351
  %v5780 = vunpack.c.h.b16 %v2351
  %v5781 = vunpack.c.l.b16 %v2352
  %v5782 = vunpack.c.l.b16 %v2353
  %v5783 = vunpack.c.h.b16 %v2353
  %v5784 = vunpack.c.l.b16 %v2354
  %v5785 = vunpack.c.h.b16 %v2354
  %v5786 = vunpack.c.l.b16 %v2355
  %v5787 = vunpack.c.h.b16 %v2355
  %v5788 = vunpack.c.l.b16 %v2356
  %v5789 = vunpack.c.h.b16 %v2356
  %v5790 = vunpack.c.l.b16 %v2357
  %v5791 = vunpack.c.l.b16 %v2358
  %v5792 = vunpack.c.h.b16 %v2358
  %v5793 = vunpack.c.l.b16 %v2359
  %v5794 = vunpack.c.h.b16 %v2359
  %v5795 = vunpack.c.l.b16 %v2360
  %v5796 = vunpack.c.h.b16 %v2360
  %v5797 = vunpack.c.l.b16 %v2361
  %v5798 = vunpack.c.h.b16 %v2361
  %v5799 = vunpack.c.l.b16 %v2362
  %v5800 = vunpack.c.l.b16 %v2363
  %v5801 = vunpack.c.h.b16 %v2363
  %v5802 = vunpack.c.l.b16 %v2364
  %v5803 = vunpack.c.h.b16 %v2364
  %v5804 = vunpack.c.l.b16 %v2365
  %v5805 = vunpack.c.h.b16 %v2365
  %v5806 = vunpack.c.l.b16 %v2366
  %v5807 = vunpack.c.h.b16 %v2366
  %v5808 = vunpack.c.l.b16 %v2367
  %v5809 = vunpack.c.l.b16 %v2368
  %v5810 = vunpack.c.h.b16 %v2368
  %v5811 = vunpack.c.l.b16 %v2369
  %v5812 = vunpack.c.h.b16 %v2369
  %v5813 = vunpack.c.l.b16 %v2370
  %v5814 = vunpack.c.h.b16 %v2370
  %v5815 = vunpack.c.l.b16 %v2371
  %v5816 = vunpack.c.h.b16 %v2371
  %v5817 = vunpack.c.l.b16 %v2372
  %v5818 = vunpack.c.l.b16 %v2373
  %v5819 = vunpack.c.h.b16 %v2373
  %v5820 = vunpack.c.l.b16 %v2374
  %v5821 = vunpack.c.h.b16 %v2374
  %v5822 = vunpack.c.l.b16 %v2375
  %v5823 = vunpack.c.h.b16 %v2375
  %v5824 = vunpack.c.l.b16 %v2376
  %v5825 = vunpack.c.h.b16 %v2376
  %v5826 = vunpack.c.l.b16 %v2377
  %v5827 = vunpack.c.l.b16 %v2378
  %v5828 = vunpack.c.h.b16 %v2378
  %v5829 = vunpack.c.l.b16 %v2379
  %v5830 = vunpack.c.h.b16 %v2379
  %v5831 = vunpack.c.l.b16 %v2380
  %v5832 = vunpack.c.h.b16 %v2380
  %v5833 = vunpack.c.l.b16 %v2381
  %v5834 = vunpack.c.h.b16 %v2381
  %v5835 = vunpack.c.l.b16 %v2382
  %v5836 = vunpack.c.l.b16 %v2383
  %v5837 = vunpack.c.h.b16 %v2383
  %v5838 = vunpack.c.l.b16 %v2384
  %v5839 = vunpack.c.h.b16 %v2384
  %v5840 = vunpack.c.l.b16 %v2385
  %v5841 = vunpack.c.h.b16 %v2385
  %v5842 = vunpack.c.l.b16 %v2386
  %v5843 = vunpack.c.h.b16 %v2386
  %v5844 = vunpack.c.l.b16 %v2387
  %v5845 = vunpack.c.l.b16 %v2388
  %v5846 = vunpack.c.h.b16 %v2388
  %v5847 = vunpack.c.l.b16 %v2389
  %v5848 = vunpack.c.h.b16 %v2389
  %v5849 = vunpack.c.l.b16 %v2390
  %v5850 = vunpack.c.h.b16 %v2390
  %v5851 = vunpack.c.l.b16 %v2391
  %v5852 = vunpack.c.h.b16 %v2391
  %v5853 = vunpack.c.l.b16 %v2392
  %v5854 = vunpack.c.l.b16 %v2393
  %v5855 = vunpack.c.h.b16 %v2393
  %v5856 = vunpack.c.l.b16 %v2394
  %v5857 = vunpack.c.h.b16 %v2394
  %v5858 = vunpack.c.l.b16 %v2395
  %v5859 = vunpack.c.h.b16 %v2395
  %v5860 = vunpack.c.l.b16 %v2396
  %v5861 = vunpack.c.h.b16 %v2396
  %v5862 = vunpack.c.l.b16 %v2397
  %v5863 = vunpack.c.l.b16 %v2398
  %v5864 = vunpack.c.h.b16 %v2398
  %v5865 = vunpack.c.l.b16 %v2399
  %v5866 = vunpack.c.h.b16 %v2399
  %v5867 = vunpack.c.l.b16 %v2400
  %v5868 = vunpack.c.h.b16 %v2400
  %v5869 = vunpack.c.l.b16 %v2401
  %v5870 = vunpack.c.h.b16 %v2401
  %v5871 = vunpack.c.l.b16 %v2402
  %v5872 = vunpack.c.l.b16 %v2403
  %v5873 = vunpack.c.h.b16 %v2403
  %v5874 = vunpack.c.l.b16 %v2404
  %v5875 = vunpack.c.h.b16 %v2404
  %v5876 = vunpack.c.l.b16 %v2405
  %v5877 = vunpack.c.h.b16 %v2405
  %v5878 = vunpack.c.l.b16 %v2406
  %v5879 = vunpack.c.h.b16 %v2406
  %v5880 = vunpack.c.l.b16 %v2407
  %v5881 = vunpack.c.l.b16 %v2408
  %v5882 = vunpack.c.h.b16 %v2408
  %v5883 = vunpack.c.l.b16 %v2409
  %v5884 = vunpack.c.h.b16 %v2409
  %v5885 = vunpack.c.l.b16 %v2410
  %v5886 = vunpack.c.h.b16 %v2410
  %v5887 = vunpack.c.l.b16 %v2411
  %v5888 = vunpack.c.h.b16 %v2411
  %v5889 = vunpack.c.l.b16 %v2412
  %v5890 = vunpack.c.l.b16 %v2413
  %v5891 = vunpack.c.h.b16 %v2413
  %v5892 = vunpack.c.l.b16 %v2414
  %v5893 = vunpack.c.h.b16 %v2414
  %v5894 = vunpack.c.l.b16 %v2415
  %v5895 = vunpack.c.h.b16 %v2415
  %v5896 = vunpack.c.l.b16 %v2416
  %v5897 = vunpack.c.h.b16 %v2416
  %v5898 = vunpack.c.l.b16 %v2417
  %v5899 = vunpack.c.l.b16 %v2418
  %v5900 = vunpack.c.h.b16 %v2418
  %v5901 = vunpack.c.l.b16 %v2419
  %v5902 = vunpack.c.h.b16 %v2419
  %v5903 = vunpack.c.l.b16 %v2420
  %v5904 = vunpack.c.h.b16 %v2420
  %v5905 = vunpack.c.l.b16 %v2421
  %v5906 = vunpack.c.h.b16 %v2421
  %v5907 = vunpack.c.l.b16 %v2422
  %v5908 = vunpack.c.l.b16 %v2423
  %v5909 = vunpack.c.h.b16 %v2423
  %v5910 = vunpack.c.l.b16 %v2424
  %v5911 = vunpack.c.h.b16 %v2424
  %v5912 = vunpack.c.l.b16 %v2425
  %v5913 = vunpack.c.h.b16 %v2425
  %v5914 = vunpack.c.l.b16 %v2426
  %v5915 = vunpack.c.h.b16 %v2426
  %v5916 = vunpack.c.l.b16 %v2427
  %v5917 = vunpack.c.l.b16 %v2428
  %v5918 = vunpack.c.h.b16 %v2428
  %v5919 = vunpack.c.l.b16 %v2429
  %v5920 = vunpack.c.h.b16 %v2429
  %v5921 = vunpack.c.l.b16 %v2430
  %v5922 = vunpack.c.h.b16 %v2430
  %v5923 = vunpack.c.l.b16 %v2431
  %v5924 = vunpack.c.h.b16 %v2431
  %v5925 = vunpack.c.l.b16 %v2432
  %v5926 = vunpack.c.l.b16 %v2433
  %v5927 = vunpack.c.h.b16 %v2433
  %v5928 = vunpack.c.l.b16 %v2434
  %v5929 = vunpack.c.h.b16 %v2434
  %v5930 = vunpack.c.l.b16 %v2435
  %v5931 = vunpack.c.h.b16 %v2435
  %v5932 = vunpack.c.l.b16 %v2436
  %v5933 = vunpack.c.h.b16 %v2436
  %v5934 = vunpack.c.l.b16 %v2437
  %v5935 = vunpack.c.l.b16 %v2438
  %v5936 = vunpack.c.h.b16 %v2438
  %v5937 = vunpack.c.l.b16 %v2439
  %v5938 = vunpack.c.h.b16 %v2439
  %v5939 = vunpack.c.l.b16 %v2440
  %v5940 = vunpack.c.h.b16 %v2440
  %v5941 = vunpack.c.l.b16 %v2441
  %v5942 = vunpack.c.h.b16 %v2441
  %v5943 = vunpack.c.l.b16 %v2442
  %v5944 = vunpack.c.l.b16 %v2443
  %v5945 = vunpack.c.h.b16 %v2443
  %v5946 = vunpack.c.l.b16 %v2444
  %v5947 = vunpack.c.h.b16 %v2444
  %v5948 = vunpack.c.l.b16 %v2445
  %v5949 = vunpack.c.h.b16 %v2445
  %v5950 = vunpack.c.l.b16 %v2446
  %v5951 = vunpack.c.h.b16 %v2446
  %v5952 = vunpack.c.l.b16 %v2447
  %v5953 = vunpack.c.l.b16 %v2448
  %v5954 = vunpack.c.h.b16 %v2448
  %v5955 = vunpack.c.l.b16 %v2449
  %v5956 = vunpack.c.h.b16 %v2449
  %v5957 = vunpack.c.l.b16 %v2450
  %v5958 = vunpack.c.h.b16 %v2450
  %v5959 = vunpack.c.l.b16 %v2451
  %v5960 = vunpack.c.h.b16 %v2451
  %v5961 = vunpack.c.l.b16 %v2452
  %v5962 = vunpack.c.l.b16 %v2453
  %v5963 = vunpack.c.h.b16 %v2453
  %v5964 = vunpack.c.l.b16 %v2454
  %v5965 = vunpack.c.h.b16 %v2454
  %v5966 = vunpack.c.l.b16 %v2455
  %v5967 = vunpack.c.h.b16 %v2455
  %v5968 = vunpack.c.l.b16 %v2456
  %v5969 = vunpack.c.h.b16 %v2456
  %v5970 = vunpack.c.l.b16 %v2457
  %v5971 = vunpack.c.l.b16 %v2458
  %v5972 = vunpack.c.h.b16 %v2458
  %v5973 = vunpack.c.l.b16 %v2459
  %v5974 = vunpack.c.h.b16 %v2459
  %v5975 = vunpack.c.l.b16 %v2460
  %v5976 = vunpack.c.h.b16 %v2460
  %v5977 = vunpack.c.l.b16 %v2461
  %v5978 = vunpack.c.h.b16 %v2461
  %v5979 = vunpack.c.l.b16 %v2462
  %v5980 = vunpack.c.l.b16 %v2463
  %v5981 = vunpack.c.h.b16 %v2463
  %v5982 = vunpack.c.l.b16 %v2464
  %v5983 = vunpack.c.h.b16 %v2464
  %v5984 = vunpack.c.l.b16 %v2465
  %v5985 = vunpack.c.h.b16 %v2465
  %v5986 = vunpack.c.l.b16 %v2466
  %v5987 = vunpack.c.h.b16 %v2466
  %v5988 = vunpack.c.l.b16 %v2467
  %v5989 = vunpack.c.l.b16 %v2468
  %v5990 = vunpack.c.h.b16 %v2468
  %v5991 = vunpack.c.l.b16 %v2469
  %v5992 = vunpack.c.h.b16 %v2469
  %v5993 = vunpack.c.l.b16 %v2470
  %v5994 = vunpack.c.h.b16 %v2470
  %v5995 = vunpack.c.l.b16 %v2471
  %v5996 = vunpack.c.h.b16 %v2471
  %v5997 = vunpack.c.l.b16 %v2472
  %v5998 = vunpack.c.l.b16 %v2473
  %v5999 = vunpack.c.h.b16 %v2473
  %v6000 = vunpack.c.l.b16 %v2474
  %v6001 = vunpack.c.h.b16 %v2474
  %v6002 = vunpack.c.l.b16 %v2475
  %v6003 = vunpack.c.h.b16 %v2475
  %v6004 = vunpack.c.l.b16 %v2476
  %v6005 = vunpack.c.h.b16 %v2476
  %v6006 = vunpack.c.l.b16 %v2477
  %v6007 = vunpack.c.l.b16 %v2478
  %v6008 = vunpack.c.h.b16 %v2478
  %v6009 = vunpack.c.l.b16 %v2479
  %v6010 = vunpack.c.h.b16 %v2479
  %v6011 = vunpack.c.l.b16 %v2480
  %v6012 = vunpack.c.h.b16 %v2480
  %v6013 = vunpack.c.l.b16 %v2481
  %v6014 = vunpack.c.h.b16 %v2481
  %v6015 = vunpack.c.l.b16 %v2482
  %v6016 = vunpack.c.l.b16 %v2483
  %v6017 = vunpack.c.h.b16 %v2483
  %v6018 = vunpack.c.l.b16 %v2484
  %v6019 = vunpack.c.h.b16 %v2484
  %v6020 = vunpack.c.l.b16 %v2485
  %v6021 = vunpack.c.h.b16 %v2485
  %v6022 = vunpack.c.l.b16 %v2486
  %v6023 = vunpack.c.h.b16 %v2486
  %v6024 = vunpack.c.l.b16 %v2487
  %v6025 = vunpack.c.l.b16 %v2488
  %v6026 = vunpack.c.h.b16 %v2488
  %v6027 = vunpack.c.l.b16 %v2489
  %v6028 = vunpack.c.h.b16 %v2489
  %v6029 = vunpack.c.l.b16 %v2490
  %v6030 = vunpack.c.h.b16 %v2490
  %v6031 = vunpack.c.l.b16 %v2491
  %v6032 = vunpack.c.h.b16 %v2491
  %v6033 = vunpack.c.l.b16 %v2492
  %v6034 = vunpack.c.l.b16 %v2493
  %v6035 = vunpack.c.h.b16 %v2493
  %v6036 = vunpack.c.l.b16 %v2494
  %v6037 = vunpack.c.h.b16 %v2494
  %v6038 = vunpack.c.l.b16 %v2495
  %v6039 = vunpack.c.h.b16 %v2495
  %v6040 = vunpack.c.l.b16 %v2496
  %v6041 = vunpack.c.h.b16 %v2496
  %v6042 = vunpack.c.l.b16 %v2497
  %v6043 = vunpack.c.l.b16 %v2498
  %v6044 = vunpack.c.h.b16 %v2498
  %v6045 = vunpack.c.l.b16 %v2499
  %v6046 = vunpack.c.h.b16 %v2499
  %v6047 = vunpack.c.l.b16 %v2500
  %v6048 = vunpack.c.h.b16 %v2500
  %v6049 = vunpack.c.l.b16 %v2501
  %v6050 = vunpack.c.h.b16 %v2501
  %v6051 = vunpack.c.l.b16 %v2502
  %v6052 = vunpack.c.l.b16 %v2503
  %v6053 = vunpack.c.h.b16 %v2503
  %v6054 = vunpack.c.l.b16 %v2504
  %v6055 = vunpack.c.h.b16 %v2504
  %v6056 = vunpack.c.l.b16 %v2505
  %v6057 = vunpack.c.h.b16 %v2505
  %v6058 = vunpack.c.l.b16 %v2506
  %v6059 = vunpack.c.h.b16 %v2506
  %v6060 = vunpack.c.l.b16 %v2507
  %v6061 = vunpack.c.l.b16 %v2508
  %v6062 = vunpack.c.h.b16 %v2508
  %v6063 = vunpack.c.l.b16 %v2509
  %v6064 = vunpack.c.h.b16 %v2509
  %v6065 = vunpack.c.l.b16 %v2510
  %v6066 = vunpack.c.h.b16 %v2510
  %v6067 = vunpack.c.l.b16 %v2511
  %v6068 = vunpack.c.h.b16 %v2511
  %v6069 = vunpack.c.l.b16 %v2512
  %v6070 = vunpack.c.l.b16 %v2513
  %v6071 = vunpack.c.h.b16 %v2513
  %v6072 = vunpack.c.l.b16 %v2514
  %v6073 = vunpack.c.h.b16 %v2514
  %v6074 = vunpack.c.l.b16 %v2515
  %v6075 = vunpack.c.h.b16 %v2515
  %v6076 = vunpack.c.l.b16 %v2516
  %v6077 = vunpack.c.h.b16 %v2516
  %v6078 = vunpack.c.l.b16 %v2517
  %v6079 = vunpack.c.l.b16 %v2518
  %v6080 = vunpack.c.h.b16 %v2518
  %v6081 = vunpack.c.l.b16 %v2519
  %v6082 = vunpack.c.h.b16 %v2519
  %v6083 = vunpack.c.l.b16 %v2520
  %v6084 = vunpack.c.h.b16 %v2520
  %v6085 = vunpack.c.l.b16 %v2521
  %v6086 = vunpack.c.h.b16 %v2521
  %v6087 = vunpack.c.l.b16 %v2522
  %v6088 = vunpack.c.l.b16 %v2523
  %v6089 = vunpack.c.h.b16 %v2523
  %v6090 = vunpack.c.l.b16 %v2524
  %v6091 = vunpack.c.h.b16 %v2524
  %v6092 = vunpack.c.l.b16 %v2525
  %v6093 = vunpack.c.h.b16 %v2525
  %v6094 = vunpack.c.l.b16 %v2526
  %v6095 = vunpack.c.h.b16 %v2526
  %v6096 = vunpack.c.l.b16 %v2527
  %v6097 = vunpack.c.l.b16 %v2528
  %v6098 = vunpack.c.h.b16 %v2528
  %v6099 = vunpack.c.l.b16 %v2529
  %v6100 = vunpack.c.h.b16 %v2529
  %v6101 = vunpack.c.l.b16 %v2530
  %v6102 = vunpack.c.h.b16 %v2530
  %v6103 = vunpack.c.l.b16 %v2531
  %v6104 = vunpack.c.h.b16 %v2531
  %v6105 = vunpack.c.l.b16 %v2532
  %v6106 = vunpack.c.l.b16 %v2533
  %v6107 = vunpack.c.h.b16 %v2533
  %v6108 = vunpack.c.l.b16 %v2534
  %v6109 = vunpack.c.h.b16 %v2534
  %v6110 = vunpack.c.l.b16 %v2535
  %v6111 = vunpack.c.h.b16 %v2535
  %v6112 = vunpack.c.l.b16 %v2536
  %v6113 = vunpack.c.h.b16 %v2536
  %v6114 = vunpack.c.l.b16 %v2537
  %v6115 = vunpack.c.l.b16 %v2538
  %v6116 = vunpack.c.h.b16 %v2538
  %v6117 = vunpack.c.l.b16 %v2539
  %v6118 = vunpack.c.h.b16 %v2539
  %v6119 = vunpack.c.l.b16 %v2540
  %v6120 = vunpack.c.h.b16 %v2540
  %v6121 = vunpack.c.l.b16 %v2541
  %v6122 = vunpack.c.h.b16 %v2541
  %v6123 = vunpack.c.l.b16 %v2542
  %v6124 = vunpack.c.l.b16 %v2543
  %v6125 = vunpack.c.h.b16 %v2543
  %v6126 = vunpack.c.l.b16 %v2544
  %v6127 = vunpack.c.h.b16 %v2544
  %v6128 = vunpack.c.l.b16 %v2545
  %v6129 = vunpack.c.h.b16 %v2545
  %v6130 = vunpack.c.l.b16 %v2546
  %v6131 = vunpack.c.h.b16 %v2546
  %v6132 = vunpack.c.l.b16 %v2547
  %v6133 = vunpack.c.l.b16 %v2548
  %v6134 = vunpack.c.h.b16 %v2548
  %v6135 = vunpack.c.l.b16 %v2549
  %v6136 = vunpack.c.h.b16 %v2549
  %v6137 = vunpack.c.l.b16 %v2550
  %v6138 = vunpack.c.h.b16 %v2550
  %v6139 = vunpack.c.l.b16 %v2551
  %v6140 = vunpack.c.h.b16 %v2551
  %v6141 = vunpack.c.l.b16 %v2552
  %v6142 = vunpack.c.l.b16 %v2553
  %v6143 = vunpack.c.h.b16 %v2553
  %v6144 = vunpack.c.l.b16 %v2554
  %v6145 = vunpack.c.h.b16 %v2554
  %v6146 = vunpack.c.l.b16 %v2555
  %v6147 = vunpack.c.h.b16 %v2555
  %v6148 = vunpack.c.l.b16 %v2556
  %v6149 = vunpack.c.h.b16 %v2556
  %v6150 = vunpack.c.l.b16 %v2557
  %v6151 = vunpack.c.l.b16 %v2558
  %v6152 = vunpack.c.h.b16 %v2558
  %v6153 = vunpack.c.l.b16 %v2559
  %v6154 = vunpack.c.h.b16 %v2559
  %v6155 = vunpack.c.l.b16 %v2560
  %v6156 = vunpack.c.h.b16 %v2560
  %v6157 = vunpack.c.l.b16 %v2561
  %v6158 = vunpack.c.h.b16 %v2561
  %v6159 = vunpack.c.l.b16 %v2562
  %v6160 = vunpack.c.l.b16 %v2563
  %v6161 = vunpack.c.h.b16 %v2563
  %v6162 = vunpack.c.l.b16 %v2564
  %v6163 = vunpack.c.h.b16 %v2564
  %v6164 = vunpack.c.l.b16 %v2565
  %v6165 = vunpack.c.h.b16 %v2565
  %v6166 = vunpack.c.l.b16 %v2566
  %v6167 = vunpack.c.h.b16 %v2566
  %v6168 = vunpack.c.l.b16 %v2567
  %v6169 = vunpack.c.l.b16 %v2568
  %v6170 = vunpack.c.h.b16 %v2568
  %v6171 = vunpack.c.l.b16 %v2569
  %v6172 = vunpack.c.h.b16 %v2569
  %v6173 = vunpack.c.l.b16 %v2570
  %v6174 = vunpack.c.h.b16 %v2570
  %v6175 = vunpack.c.l.b16 %v2571
  %v6176 = vunpack.c.h.b16 %v2571
  %v6177 = vunpack.c.l.b16 %v2572
  %v6178 = vunpack.c.l.b16 %v2573
  %v6179 = vunpack.c.h.b16 %v2573
  %v6180 = vunpack.c.l.b16 %v2574
  %v6181 = vunpack.c.h.b16 %v2574
  %v6182 = vunpack.c.l.b16 %v2575
  %v6183 = vunpack.c.h.b16 %v2575
  %v6184 = vunpack.c.l.b16 %v2576
  %v6185 = vunpack.c.h.b16 %v2576
  %v6186 = vunpack.c.l.b16 %v2577
  %v6187 = vunpack.c.l.b16 %v2578
  %v6188 = vunpack.c.h.b16 %v2578
  %v6189 = vunpack.c.l.b16 %v2579
  %v6190 = vunpack.c.h.b16 %v2579
  %v6191 = vunpack.c.l.b16 %v2580
  %v6192 = vunpack.c.h.b16 %v2580
  %v6193 = vunpack.c.l.b16 %v2581
  %v6194 = vunpack.c.h.b16 %v2581
  %v6195 = vunpack.c.l.b16 %v2582
  %v6196 = vunpack.c.l.b16 %v2583
  %v6197 = vunpack.c.h.b16 %v2583
  %v6198 = vunpack.c.l.b16 %v2584
  %v6199 = vunpack.c.h.b16 %v2584
  %v6200 = vunpack.c.l.b16 %v2585
  %v6201 = vunpack.c.h.b16 %v2585
  %v6202 = vunpack.c.l.b16 %v2586
  %v6203 = vunpack.c.h.b16 %v2586
  %v6204 = vunpack.c.l.b16 %v2587
  %v6205 = vunpack.c.l.b16 %v2588
  %v6206 = vunpack.c.h.b16 %v2588
  %v6207 = vunpack.c.l.b16 %v2589
  %v6208 = vunpack.c.h.b16 %v2589
  %v6209 = vunpack.c.l.b16 %v2590
  %v6210 = vunpack.c.h.b16 %v2590
  %v6211 = vunpack.c.l.b16 %v2591
  %v6212 = vunpack.c.h.b16 %v2591
  %v6213 = vunpack.c.l.b16 %v2592
  %v6214 = vunpack.c.l.b16 %v2593
  %v6215 = vunpack.c.h.b16 %v2593
  %v6216 = vunpack.c.l.b16 %v2594
  %v6217 = vunpack.c.h.b16 %v2594
  %v6218 = vunpack.c.l.b16 %v2595
  %v6219 = vunpack.c.h.b16 %v2595
  %v6220 = vunpack.c.l.b16 %v2596
  %v6221 = vunpack.c.h.b16 %v2596
  %v6222 = vunpack.c.l.b16 %v2597
  %v6223 = vunpack.c.l.b16 %v2598
  %v6224 = vunpack.c.h.b16 %v2598
  %v6225 = vunpack.c.l.b16 %v2599
  %v6226 = vunpack.c.h.b16 %v2599
  %v6227 = vunpack.c.l.b16 %v2600
  %v6228 = vunpack.c.h.b16 %v2600
  %v6229 = vunpack.c.l.b16 %v2601
  %v6230 = vunpack.c.h.b16 %v2601
  %v6231 = vunpack.c.l.b16 %v2602
  %v6232 = vunpack.c.l.b16 %v2603
  %v6233 = vunpack.c.h.b16 %v2603
  %v6234 = vunpack.c.l.b16 %v2604
  %v6235 = vunpack.c.h.b16 %v2604
  %v6236 = vunpack.c.l.b16 %v2605
  %v6237 = vunpack.c.h.b16 %v2605
  %v6238 = vunpack.c.l.b16 %v2606
  %v6239 = vunpack.c.h.b16 %v2606
  %v6240 = vunpack.c.l.b16 %v2607
  %v6241 = vunpack.c.l.b16 %v2608
  %v6242 = vunpack.c.h.b16 %v2608
  %v6243 = vunpack.c.l.b16 %v2609
  %v6244 = vunpack.c.h.b16 %v2609
  %v6245 = vunpack.c.l.b16 %v2610
  %v6246 = vunpack.c.h.b16 %v2610
  %v6247 = vunpack.c.l.b16 %v2611
  %v6248 = vunpack.c.h.b16 %v2611
  %v6249 = vunpack.c.l.b16 %v2612
  %v6250 = vunpack.c.l.b16 %v2613
  %v6251 = vunpack.c.h.b16 %v2613
  %v6252 = vunpack.c.l.b16 %v2614
  %v6253 = vunpack.c.h.b16 %v2614
  %v6254 = vunpack.c.l.b16 %v2615
  %v6255 = vunpack.c.h.b16 %v2615
  %v6256 = vunpack.c.l.b16 %v2616
  %v6257 = vunpack.c.h.b16 %v2616
  %v6258 = vunpack.c.l.b16 %v2617
  %v6259 = vunpack.c.l.b16 %v2618
  %v6260 = vunpack.c.h.b16 %v2618
  %v6261 = vunpack.c.l.b16 %v2619
  %v6262 = vunpack.c.h.b16 %v2619
  %v6263 = vunpack.c.l.b16 %v2620
  %v6264 = vunpack.c.h.b16 %v2620
  %v6265 = vunpack.c.l.b16 %v2621
  %v6266 = vunpack.c.h.b16 %v2621
  %v6267 = vunpack.c.l.b16 %v2622
  %v6268 = vunpack.c.l.b16 %v2623
  %v6269 = vunpack.c.h.b16 %v2623
  %v6270 = vunpack.c.l.b16 %v2624
  %v6271 = vunpack.c.h.b16 %v2624
  %v6272 = vunpack.c.l.b16 %v2625
  %v6273 = vunpack.c.h.b16 %v2625
  %v6274 = vunpack.c.l.b16 %v2626
  %v6275 = vunpack.c.h.b16 %v2626
  %v6276 = vunpack.c.l.b16 %v2627
  %v6277 = vunpack.c.l.b16 %v2628
  %v6278 = vunpack.c.h.b16 %v2628
  %v6279 = vunpack.c.l.b16 %v2629
  %v6280 = vunpack.c.h.b16 %v2629
  %v6281 = vunpack.c.l.b16 %v2630
  %v6282 = vunpack.c.h.b16 %v2630
  %v6283 = vunpack.c.l.b16 %v2631
  %v6284 = vunpack.c.h.b16 %v2631
  %v6285 = vunpack.c.l.b16 %v2632
  %v6286 = vunpack.c.l.b16 %v2633
  %v6287 = vunpack.c.h.b16 %v2633
  %v6288 = vunpack.c.l.b16 %v2634
  %v6289 = vunpack.c.h.b16 %v2634
  %v6290 = vunpack.c.l.b16 %v2635
  %v6291 = vunpack.c.h.b16 %v2635
  %v6292 = vunpack.c.l.b16 %v2636
  %v6293 = vunpack.c.h.b16 %v2636
  %v6294 = vunpack.c.l.b16 %v2637
  %v6295 = vunpack.c.l.b16 %v2638
  %v6296 = vunpack.c.h.b16 %v2638
  %v6297 = vunpack.c.l.b16 %v2639
  %v6298 = vunpack.c.h.b16 %v2639
  %v6299 = vunpack.c.l.b16 %v2640
  %v6300 = vunpack.c.h.b16 %v2640
  %v6301 = vunpack.c.l.b16 %v2641
  %v6302 = vunpack.c.h.b16 %v2641
  %v6303 = vunpack.c.l.b16 %v2642
  %v6304 = vunpack.c.l.b16 %v2643
  %v6305 = vunpack.c.h.b16 %v2643
  %v6306 = vunpack.c.l.b16 %v2644
  %v6307 = vunpack.c.h.b16 %v2644
  %v6308 = vunpack.c.l.b16 %v2645
  %v6309 = vunpack.c.h.b16 %v2645
  %v6310 = vunpack.c.l.b16 %v2646
  %v6311 = vunpack.c.h.b16 %v2646
  %v6312 = vunpack.c.l.b16 %v2647
  %v6313 = vunpack.c.l.b16 %v2648
  %v6314 = vunpack.c.h.b16 %v2648
  %v6315 = vunpack.c.l.b16 %v2649
  %v6316 = vunpack.c.h.b16 %v2649
  %v6317 = vunpack.c.l.b16 %v2650
  %v6318 = vunpack.c.h.b16 %v2650
  %v6319 = vunpack.c.l.b16 %v2651
  %v6320 = vunpack.c.h.b16 %v2651
  %v6321 = vunpack.c.l.b16 %v2652
  %v6322 = vunpack.c.l.b16 %v2653
  %v6323 = vunpack.c.h.b16 %v2653
  %v6324 = vunpack.c.l.b16 %v2654
  %v6325 = vunpack.c.h.b16 %v2654
  %v6326 = vunpack.c.l.b16 %v2655
  %v6327 = vunpack.c.h.b16 %v2655
  %v6328 = vunpack.c.l.b16 %v2656
  %v6329 = vunpack.c.h.b16 %v2656
  %v6330 = vunpack.c.l.b16 %v2657
  %v6331 = vunpack.c.l.b16 %v2658
  %v6332 = vunpack.c.h.b16 %v2658
  %v6333 = vunpack.c.l.b16 %v2659
  %v6334 = vunpack.c.h.b16 %v2659
  %v6335 = vunpack.c.l.b16 %v2660
  %v6336 = vunpack.c.h.b16 %v2660
  %v6337 = vunpack.c.l.b16 %v2661
  %v6338 = vunpack.c.h.b16 %v2661
  %v6339 = vunpack.c.l.b16 %v2662
  %v6340 = vunpack.c.l.b16 %v2663
  %v6341 = vunpack.c.h.b16 %v2663
  %v6342 = vunpack.c.l.b16 %v2664
  %v6343 = vunpack.c.h.b16 %v2664
  %v6344 = vunpack.c.l.b16 %v2665
  %v6345 = vunpack.c.h.b16 %v2665
  %v6346 = vunpack.c.l.b16 %v2666
  %v6347 = vunpack.c.h.b16 %v2666
  %v6348 = vunpack.c.l.b16 %v2667
  %v6349 = vunpack.c.l.b16 %v2668
  %v6350 = vunpack.c.h.b16 %v2668
  %v6351 = vunpack.c.l.b16 %v2669
  %v6352 = vunpack.c.h.b16 %v2669
  %v6353 = vunpack.c.l.b16 %v2670
  %v6354 = vunpack.c.h.b16 %v2670
  %v6355 = vunpack.c.l.b16 %v2671
  %v6356 = vunpack.c.h.b16 %v2671
  %v6357 = vunpack.c.l.b16 %v2672
  %v6358 = vunpack.c.l.b16 %v2673
  %v6359 = vunpack.c.h.b16 %v2673
  %v6360 = vunpack.c.l.b16 %v2674
  %v6361 = vunpack.c.h.b16 %v2674
  %v6362 = vunpack.c.l.b16 %v2675
  %v6363 = vunpack.c.h.b16 %v2675
  %v6364 = vunpack.c.l.b16 %v2676
  %v6365 = vunpack.c.h.b16 %v2676
  %v6366 = vunpack.c.l.b16 %v2677
  %v6367 = vunpack.c.l.b16 %v2678
  %v6368 = vunpack.c.h.b16 %v2678
  %v6369 = vunpack.c.l.b16 %v2679
  %v6370 = vunpack.c.h.b16 %v2679
  %v6371 = vunpack.c.l.b16 %v2680
  %v6372 = vunpack.c.h.b16 %v2680
  %v6373 = vunpack.c.l.b16 %v2681
  %v6374 = vunpack.c.h.b16 %v2681
  %v6375 = vunpack.c.l.b16 %v2682
  %v6376 = vunpack.c.l.b16 %v2683
  %v6377 = vunpack.c.h.b16 %v2683
  %v6378 = vunpack.c.l.b16 %v2684
  %v6379 = vunpack.c.h.b16 %v2684
  %v6380 = vunpack.c.l.b16 %v2685
  %v6381 = vunpack.c.h.b16 %v2685
  %v6382 = vunpack.c.l.b16 %v2686
  %v6383 = vunpack.c.h.b16 %v2686
  %v6384 = vunpack.c.l.b16 %v2687
  %v6385 = vunpack.c.l.b16 %v2688
  %v6386 = vunpack.c.h.b16 %v2688
  %v6387 = vunpack.c.l.b16 %v2689
  %v6388 = vunpack.c.h.b16 %v2689
  %v6389 = vunpack.c.l.b16 %v2690
  %v6390 = vunpack.c.h.b16 %v2690
  %v6391 = vunpack.c.l.b16 %v2691
  %v6392 = vunpack.c.h.b16 %v2691
  %v6393 = vunpack.c.l.b16 %v2692
  %v6394 = vunpack.c.l.b16 %v2693
  %v6395 = vunpack.c.h.b16 %v2693
  %v6396 = vunpack.c.l.b16 %v2694
  %v6397 = vunpack.c.h.b16 %v2694
  %v6398 = vunpack.c.l.b16 %v2695
  %v6399 = vunpack.c.h.b16 %v2695
  %v6400 = vunpack.c.l.b16 %v2696
  %v6401 = vunpack.c.h.b16 %v2696
  %v6402 = vunpack.c.l.b16 %v2697
  %v6403 = vunpack.c.l.b16 %v2698
  %v6404 = vunpack.c.h.b16 %v2698
  %v6405 = vunpack.c.l.b16 %v2699
  %v6406 = vunpack.c.h.b16 %v2699
  %v6407 = vunpack.c.l.b16 %v2700
  %v6408 = vunpack.c.h.b16 %v2700
  %v6409 = vunpack.c.l.b16 %v2701
  %v6410 = vunpack.c.h.b16 %v2701
  %v6411 = vunpack.c.l.b16 %v2702
  %v6412 = vunpack.c.l.b16 %v2703
  %v6413 = vunpack.c.h.b16 %v2703
  %v6414 = vunpack.c.l.b16 %v2704
  %v6415 = vunpack.c.h.b16 %v2704
  %v6416 = vunpack.c.l.b16 %v2705
  %v6417 = vunpack.c.h.b16 %v2705
  %v6418 = vunpack.c.l.b16 %v2706
  %v6419 = vunpack.c.h.b16 %v2706
  %v6420 = vunpack.c.l.b16 %v2707
  %v6421 = vunpack.c.l.b16 %v2708
  %v6422 = vunpack.c.h.b16 %v2708
  %v6423 = vunpack.c.l.b16 %v2709
  %v6424 = vunpack.c.h.b16 %v2709
  %v6425 = vunpack.c.l.b16 %v2710
  %v6426 = vunpack.c.h.b16 %v2710
  %v6427 = vunpack.c.l.b16 %v2711
  %v6428 = vunpack.c.h.b16 %v2711
  %v6429 = vunpack.c.l.b16 %v2712
  %v6430 = vunpack.c.l.b16 %v2713
  %v6431 = vunpack.c.h.b16 %v2713
  %v6432 = vunpack.c.l.b16 %v2714
  %v6433 = vunpack.c.h.b16 %v2714
  %v6434 = vunpack.c.l.b16 %v2715
  %v6435 = vunpack.c.h.b16 %v2715
  %v6436 = vunpack.c.l.b16 %v2716
  %v6437 = vunpack.c.h.b16 %v2716
  %v6438 = vunpack.c.l.b16 %v2717
  %v6439 = vunpack.c.l.b16 %v2718
  %v6440 = vunpack.c.h.b16 %v2718
  %v6441 = vunpack.c.l.b16 %v2719
  %v6442 = vunpack.c.h.b16 %v2719
  %v6443 = vunpack.c.l.b16 %v2720
  %v6444 = vunpack.c.h.b16 %v2720
  %v6445 = vunpack.c.l.b16 %v2721
  %v6446 = vunpack.c.h.b16 %v2721
  %v6447 = vunpack.c.l.b16 %v2722
  %v6448 = vunpack.c.l.b16 %v2723
  %v6449 = vunpack.c.h.b16 %v2723
  %v6450 = vunpack.c.l.b16 %v2724
  %v6451 = vunpack.c.h.b16 %v2724
  %v6452 = vunpack.c.l.b16 %v2725
  %v6453 = vunpack.c.h.b16 %v2725
  %v6454 = vunpack.c.l.b16 %v2726
  %v6455 = vunpack.c.h.b16 %v2726
  %v6456 = vunpack.c.l.b16 %v2727
  %v6457 = vunpack.c.l.b16 %v2728
  %v6458 = vunpack.c.h.b16 %v2728
  %v6459 = vunpack.c.l.b16 %v2729
  %v6460 = vunpack.c.h.b16 %v2729
  %v6461 = vunpack.c.l.b16 %v2730
  %v6462 = vunpack.c.h.b16 %v2730
  %v6463 = vunpack.c.l.b16 %v2731
  %v6464 = vunpack.c.h.b16 %v2731
  %v6465 = vunpack.c.l.b16 %v2732
  %v6466 = vunpack.c.l.b16 %v2733
  %v6467 = vunpack.c.h.b16 %v2733
  %v6468 = vunpack.c.l.b16 %v2734
  %v6469 = vunpack.c.h.b16 %v2734
  %v6470 = vunpack.c.l.b16 %v2735
  %v6471 = vunpack.c.h.b16 %v2735
  %v6472 = vunpack.c.l.b16 %v2736
  %v6473 = vunpack.c.h.b16 %v2736
  %v6474 = vunpack.c.l.b16 %v2737
  %v6475 = vunpack.c.l.b16 %v2738
  %v6476 = vunpack.c.h.b16 %v2738
  %v6477 = vunpack.c.l.b16 %v2739
  %v6478 = vunpack.c.h.b16 %v2739
  %v6479 = vunpack.c.l.b16 %v2740
  %v6480 = vunpack.c.h.b16 %v2740
  %v6481 = vunpack.c.l.b16 %v2741
  %v6482 = vunpack.c.h.b16 %v2741
  %v6483 = vunpack.c.l.b16 %v2742
  %v6484 = vunpack.c.l.b16 %v2743
  %v6485 = vunpack.c.h.b16 %v2743
  %v6486 = vunpack.c.l.b16 %v2744
  %v6487 = vunpack.c.h.b16 %v2744
  %v6488 = vunpack.c.l.b16 %v2745
  %v6489 = vunpack.c.h.b16 %v2745
  %v6490 = vunpack.c.l.b16 %v2746
  %v6491 = vunpack.c.h.b16 %v2746
  %v6492 = vunpack.c.l.b16 %v2747
  %v6493 = vunpack.c.l.b16 %v2748
  %v6494 = vunpack.c.h.b16 %v2748
  %v6495 = vunpack.c.l.b16 %v2749
  %v6496 = vunpack.c.h.b16 %v2749
  %v6497 = vunpack.c.l.b16 %v2750
  %v6498 = vunpack.c.h.b16 %v2750
  %v6499 = vunpack.c.l.b16 %v2751
  %v6500 = vunpack.c.h.b16 %v2751
  %v6501 = vunpack.c.l.b16 %v2752
  %v6502 = vunpack.c.l.b16 %v2753
  %v6503 = vunpack.c.h.b16 %v2753
  %v6504 = vunpack.c.l.b16 %v2754
  %v6505 = vunpack.c.h.b16 %v2754
  %v6506 = vunpack.c.l.b16 %v2755
  %v6507 = vunpack.c.h.b16 %v2755
  %v6508 = vunpack.c.l.b16 %v2756
  %v6509 = vunpack.c.h.b16 %v2756
  %v6510 = vunpack.c.l.b16 %v2757
  %v6511 = vunpack.c.l.b16 %v2758
  %v6512 = vunpack.c.h.b16 %v2758
  %v6513 = vunpack.c.l.b16 %v2759
  %v6514 = vunpack.c.h.b16 %v2759
  %v6515 = vunpack.c.l.b16 %v2760
  %v6516 = vunpack.c.h.b16 %v2760
  %v6517 = vunpack.c.l.b16 %v2761
  %v6518 = vunpack.c.h.b16 %v2761
  %v6519 = vunpack.c.l.b16 %v2762
  %v6520 = vunpack.c.l.b16 %v2763
  %v6521 = vunpack.c.h.b16 %v2763
  %v6522 = vunpack.c.l.b16 %v2764
  %v6523 = vunpack.c.h.b16 %v2764
  %v6524 = vunpack.c.l.b16 %v2765
  %v6525 = vunpack.c.h.b16 %v2765
  %v6526 = vunpack.c.l.b16 %v2766
  %v6527 = vunpack.c.h.b16 %v2766
  %v6528 = vunpack.c.l.b16 %v2767
  %v6529 = vunpack.c.l.b16 %v2768
  %v6530 = vunpack.c.h.b16 %v2768
  %v6531 = vunpack.c.l.b16 %v2769
  %v6532 = vunpack.c.h.b16 %v2769
  %v6533 = vunpack.c.l.b16 %v2770
  %v6534 = vunpack.c.h.b16 %v2770
  %v6535 = vunpack.c.l.b16 %v2771
  %v6536 = vunpack.c.h.b16 %v2771
  %v6537 = vunpack.c.l.b16 %v2772
  %v6538 = vunpack.c.l.b16 %v2773
  %v6539 = vunpack.c.h.b16 %v2773
  %v6540 = vunpack.c.l.b16 %v2774
  %v6541 = vunpack.c.h.b16 %v2774
  %v6542 = vunpack.c.l.b16 %v2775
  %v6543 = vunpack.c.h.b16 %v2775
  %v6544 = vunpack.c.l.b16 %v2776
  %v6545 = vunpack.c.h.b16 %v2776
  %v6546 = vunpack.c.l.b16 %v2777
  %v6547 = vunpack.c.l.b16 %v2778
  %v6548 = vunpack.c.h.b16 %v2778
  %v6549 = vunpack.c.l.b16 %v2779
  %v6550 = vunpack.c.h.b16 %v2779
  %v6551 = vunpack.c.l.b16 %v2780
  %v6552 = vunpack.c.h.b16 %v2780
  %v6553 = vunpack.c.l.b16 %v2781
  %v6554 = vunpack.c.h.b16 %v2781
  %v6555 = vunpack.c.l.b16 %v2782
  %v6556 = vunpack.c.l.b16 %v2783
  %v6557 = vunpack.c.h.b16 %v2783
  %v6558 = vunpack.c.l.b16 %v2784
  %v6559 = vunpack.c.h.b16 %v2784
  %v6560 = vunpack.c.l.b16 %v2785
  %v6561 = vunpack.c.h.b16 %v2785
  %v6562 = vunpack.c.l.b16 %v2786
  %v6563 = vunpack.c.h.b16 %v2786
  %v6564 = vunpack.c.l.b16 %v2787
  %v6565 = vunpack.c.l.b16 %v2788
  %v6566 = vunpack.c.h.b16 %v2788
  %v6567 = vunpack.c.l.b16 %v2789
  %v6568 = vunpack.c.h.b16 %v2789
  %v6569 = vunpack.c.l.b16 %v2790
  %v6570 = vunpack.c.h.b16 %v2790
  %v6571 = vunpack.c.l.b16 %v2791
  %v6572 = vunpack.c.h.b16 %v2791
  %v6573 = vunpack.c.l.b16 %v2792
  %v6574 = vunpack.c.l.b16 %v2793
  %v6575 = vunpack.c.h.b16 %v2793
  %v6576 = vunpack.c.l.b16 %v2794
  %v6577 = vunpack.c.h.b16 %v2794
  %v6578 = vunpack.c.l.b16 %v2795
  %v6579 = vunpack.c.h.b16 %v2795
  %v6580 = vunpack.c.l.b16 %v2796
  %v6581 = vunpack.c.h.b16 %v2796
  %v6582 = vunpack.c.l.b16 %v2797
  %v6583 = vunpack.c.l.b16 %v2798
  %v6584 = vunpack.c.h.b16 %v2798
  %v6585 = vunpack.c.l.b16 %v2799
  %v6586 = vunpack.c.h.b16 %v2799
  %v6587 = vunpack.c.l.b16 %v2800
  %v6588 = vunpack.c.h.b16 %v2800
  %v6589 = vunpack.c.l.b16 %v2801
  %v6590 = vunpack.c.h.b16 %v2801
  %v6591 = vunpack.c.l.b16 %v2802
  %v6592 = vunpack.c.l.b16 %v2803
  %v6593 = vunpack.c.h.b16 %v2803
  %v6594 = vunpack.c.l.b16 %v2804
  %v6595 = vunpack.c.h.b16 %v2804
  %v6596 = vunpack.c.l.b16 %v2805
  %v6597 = vunpack.c.h.b16 %v2805
  %v6598 = vunpack.c.l.b16 %v2806
  %v6599 = vunpack.c.h.b16 %v2806
  %v6600 = vunpack.c.l.b16 %v2807
  %v6601 = vunpack.c.l.b16 %v2808
  %v6602 = vunpack.c.h.b16 %v2808
  %v6603 = vunpack.c.l.b16 %v2809
  %v6604 = vunpack.c.h.b16 %v2809
  %v6605 = vunpack.c.l.b16 %v2810
  %v6606 = vunpack.c.h.b16 %v2810
  %v6607 = vunpack.c.l.b16 %v2811
  %v6608 = vunpack.c.h.b16 %v2811
  %v6609 = vunpack.c.l.b16 %v2812
  %v6610 = vunpack.c.l.b16 %v2813
  %v6611 = vunpack.c.h.b16 %v2813
  %v6612 = vunpack.c.l.b16 %v2814
  %v6613 = vunpack.c.h.b16 %v2814
  %v6614 = vunpack.c.l.b16 %v2815
  %v6615 = vunpack.c.h.b16 %v2815
  %v6616 = vunpack.c.l.b16 %v2816
  %v6617 = vunpack.c.h.b16 %v2816
  %v6618 = vunpack.c.l.b16 %v2817
  %v6619 = vunpack.c.l.b16 %v2818
  %v6620 = vunpack.c.h.b16 %v2818
  %v6621 = vunpack.c.l.b16 %v2819
  %v6622 = vunpack.c.h.b16 %v2819
  %v6623 = vunpack.c.l.b16 %v2820
  %v6624 = vunpack.c.h.b16 %v2820
  %v6625 = vunpack.c.l.b16 %v2821
  %v6626 = vunpack.c.h.b16 %v2821
  %v6627 = vunpack.c.l.b16 %v2822
  %v6628 = vunpack.c.l.b16 %v2823
  %v6629 = vunpack.c.h.b16 %v2823
  %v6630 = vunpack.c.l.b16 %v2824
  %v6631 = vunpack.c.h.b16 %v2824
  %v6632 = vunpack.c.l.b16 %v2825
  %v6633 = vunpack.c.h.b16 %v2825
  %v6634 = vunpack.c.l.b16 %v2826
  %v6635 = vunpack.c.h.b16 %v2826
  %v6636 = vunpack.c.l.b16 %v2827
  %v6637 = vunpack.c.l.b16 %v2828
  %v6638 = vunpack.c.h.b16 %v2828
  %v6639 = vunpack.c.l.b16 %v2829
  %v6640 = vunpack.c.h.b16 %v2829
  %v6641 = vunpack.c.l.b16 %v2830
  %v6642 = vunpack.c.h.b16 %v2830
  %v6643 = vunpack.c.l.b16 %v2831
  %v6644 = vunpack.c.h.b16 %v2831
  %v6645 = vunpack.c.l.b16 %v2832
  %v6646 = vunpack.c.l.b16 %v2833
  %v6647 = vunpack.c.h.b16 %v2833
  %v6648 = vunpack.c.l.b16 %v2834
  %v6649 = vunpack.c.h.b16 %v2834
  %v6650 = vunpack.c.l.b16 %v2835
  %v6651 = vunpack.c.h.b16 %v2835
  %v6652 = vunpack.c.l.b16 %v2836
  %v6653 = vunpack.c.h.b16 %v2836
  %v6654 = vunpack.c.l.b16 %v2837
  %v6655 = vunpack.c.l.b16 %v2838
  %v6656 = vunpack.c.h.b16 %v2838
  %v6657 = vunpack.c.l.b16 %v2839
  %v6658 = vunpack.c.h.b16 %v2839
  %v6659 = vunpack.c.l.b16 %v2840
  %v6660 = vunpack.c.h.b16 %v2840
  %v6661 = vunpack.c.l.b16 %v2841
  %v6662 = vunpack.c.h.b16 %v2841
  %v6663 = vunpack.c.l.b16 %v2842
  %v6664 = vunpack.c.l.b16 %v2843
  %v6665 = vunpack.c.h.b16 %v2843
  %v6666 = vunpack.c.l.b16 %v2844
  %v6667 = vunpack.c.h.b16 %v2844
  %v6668 = vunpack.c.l.b16 %v2845
  %v6669 = vunpack.c.h.b16 %v2845
  %v6670 = vunpack.c.l.b16 %v2846
  %v6671 = vunpack.c.h.b16 %v2846
  %v6672 = vunpack.c.l.b16 %v2847
  %v6673 = vunpack.c.l.b16 %v2848
  %v6674 = vunpack.c.h.b16 %v2848
  %v6675 = vunpack.c.l.b16 %v2849
  %v6676 = vunpack.c.h.b16 %v2849
  %v6677 = vunpack.c.l.b16 %v2850
  %v6678 = vunpack.c.h.b16 %v2850
  %v6679 = vunpack.c.l.b16 %v2851
  %v6680 = vunpack.c.h.b16 %v2851
  %v6681 = vunpack.c.l.b16 %v2852
  %v6682 = vunpack.c.l.b16 %v2853
  %v6683 = vunpack.c.h.b16 %v2853
  %v6684 = vunpack.c.l.b16 %v2854
  %v6685 = vunpack.c.h.b16 %v2854
  %v6686 = vunpack.c.l.b16 %v2855
  %v6687 = vunpack.c.h.b16 %v2855
  %v6688 = vunpack.c.l.b16 %v2856
  %v6689 = vunpack.c.h.b16 %v2856
  %v6690 = vunpack.c.l.b16 %v2857
  %v6691 = vunpack.c.l.b16 %v2858
  %v6692 = vunpack.c.h.b16 %v2858
  %v6693 = vunpack.c.l.b16 %v2859
  %v6694 = vunpack.c.h.b16 %v2859
  %v6695 = vunpack.c.l.b16 %v2860
  %v6696 = vunpack.c.h.b16 %v2860
  %v6697 = vunpack.c.l.b16 %v2861
  %v6698 = vunpack.c.h.b16 %v2861
  %v6699 = vunpack.c.l.b16 %v2862
  %v6700 = vunpack.c.l.b16 %v2863
  %v6701 = vunpack.c.h.b16 %v2863
  %v6702 = vunpack.c.l.b16 %v2864
  %v6703 = vunpack.c.h.b16 %v2864
  %v6704 = vunpack.c.l.b16 %v2865
  %v6705 = vunpack.c.h.b16 %v2865
  %v6706 = vunpack.c.l.b16 %v2866
  %v6707 = vunpack.c.h.b16 %v2866
  %v6708 = vunpack.c.l.b16 %v2867
  %v6709 = vunpack.c.l.b16 %v2868
  %v6710 = vunpack.c.h.b16 %v2868
  %v6711 = vunpack.c.l.b16 %v2869
  %v6712 = vunpack.c.h.b16 %v2869
  %v6713 = vunpack.c.l.b16 %v2870
  %v6714 = vunpack.c.h.b16 %v2870
  %v6715 = vunpack.c.l.b16 %v2871
  %v6716 = vunpack.c.h.b16 %v2871
  %v6717 = vunpack.c.l.b16 %v2872
  %v6718 = vunpack.c.l.b16 %v2873
  %v6719 = vunpack.c.h.b16 %v2873
  %v6720 = vunpack.c.l.b16 %v2874
  %v6721 = vunpack.c.h.b16 %v2874
  %v6722 = vunpack.c.l.b16 %v2875
  %v6723 = vunpack.c.h.b16 %v2875
  %v6724 = vunpack.c.l.b16 %v2876
  %v6725 = vunpack.c.h.b16 %v2876
  %v6726 = vunpack.c.l.b16 %v2877
  %v6727 = vunpack.c.l.b16 %v2878
  %v6728 = vunpack.c.h.b16 %v2878
  %v6729 = vunpack.c.l.b16 %v2879
  %v6730 = vunpack.c.h.b16 %v2879
  %v6731 = vunpack.c.l.b16 %v2880
  %v6732 = vunpack.c.h.b16 %v2880
  %v6733 = vunpack.c.l.b16 %v2881
  %v6734 = vunpack.c.h.b16 %v2881
  %v6735 = vunpack.c.l.b16 %v2882
  %v6736 = vunpack.c.l.b16 %v2883
  %v6737 = vunpack.c.h.b16 %v2883
  %v6738 = vunpack.c.l.b16 %v2884
  %v6739 = vunpack.c.h.b16 %v2884
  %v6740 = vunpack.c.l.b16 %v2885
  %v6741 = vunpack.c.h.b16 %v2885
  %v6742 = vunpack.c.l.b16 %v2886
  %v6743 = vunpack.c.h.b16 %v2886
  %v6744 = vunpack.c.l.b16 %v2887
  %v6745 = vunpack.c.l.b16 %v2888
  %v6746 = vunpack.c.h.b16 %v2888
  %v6747 = vunpack.c.l.b16 %v2889
  %v6748 = vunpack.c.h.b16 %v2889
  %v6749 = vunpack.c.l.b16 %v2890
  %v6750 = vunpack.c.h.b16 %v2890
  %v6751 = vunpack.c.l.b16 %v2891
  %v6752 = vunpack.c.h.b16 %v2891
  %v6753 = vunpack.c.l.b16 %v2892
  %v6754 = vunpack.c.l.b16 %v2893
  %v6755 = vunpack.c.h.b16 %v2893
  %v6756 = vunpack.c.l.b16 %v2894
  %v6757 = vunpack.c.h.b16 %v2894
  %v6758 = vunpack.c.l.b16 %v2895
  %v6759 = vunpack.c.h.b16 %v2895
  %v6760 = vunpack.c.l.b16 %v2896
  %v6761 = vunpack.c.h.b16 %v2896
  %v6762 = vunpack.c.l.b16 %v2897
  %v6763 = vunpack.c.l.b16 %v2898
  %v6764 = vunpack.c.h.b16 %v2898
  %v6765 = vunpack.c.l.b16 %v2899
  %v6766 = vunpack.c.h.b16 %v2899
  %v6767 = vunpack.c.l.b16 %v2900
  %v6768 = vunpack.c.h.b16 %v2900
  %v6769 = vunpack.c.l.b16 %v2901
  %v6770 = vunpack.c.h.b16 %v2901
  %v6771 = vunpack.c.l.b16 %v2902
  %v6772 = vunpack.c.l.b16 %v2903
  %v6773 = vunpack.c.h.b16 %v2903
  %v6774 = vunpack.c.l.b16 %v2904
  %v6775 = vunpack.c.h.b16 %v2904
  %v6776 = vunpack.c.l.b16 %v2905
  %v6777 = vunpack.c.h.b16 %v2905
  %v6778 = vunpack.c.l.b16 %v2906
  %v6779 = vunpack.c.h.b16 %v2906
  %v6780 = vunpack.c.l.b16 %v2907
  %v6781 = vunpack.c.l.b16 %v2908
  %v6782 = vunpack.c.h.b16 %v2908
  %v6783 = vunpack.c.l.b16 %v2909
  %v6784 = vunpack.c.h.b16 %v2909
  %v6785 = vunpack.c.l.b16 %v2910
  %v6786 = vunpack.c.h.b16 %v2910
  %v6787 = vunpack.c.l.b16 %v2911
  %v6788 = vunpack.c.h.b16 %v2911
  %v6789 = vunpack.c.l.b16 %v2912
  %v6790 = vunpack.c.l.b16 %v2913
  %v6791 = vunpack.c.h.b16 %v2913
  %v6792 = vunpack.c.l.b16 %v2914
  %v6793 = vunpack.c.h.b16 %v2914
  %v6794 = vunpack.c.l.b16 %v2915
  %v6795 = vunpack.c.h.b16 %v2915
  %v6796 = vunpack.c.l.b16 %v2916
  %v6797 = vunpack.c.h.b16 %v2916
  %v6798 = vunpack.c.l.b16 %v2917
  %v6799 = vunpack.c.l.b16 %v2918
  %v6800 = vunpack.c.h.b16 %v2918
  %v6801 = vunpack.c.l.b16 %v2919
  %v6802 = vunpack.c.h.b16 %v2919
  %v6803 = vunpack.c.l.b16 %v2920
  %v6804 = vunpack.c.h.b16 %v2920
  %v6805 = vunpack.c.l.b16 %v2921
  %v6806 = vunpack.c.h.b16 %v2921
  %v6807 = vunpack.c.l.b16 %v2922
  %v6808 = vunpack.c.l.b16 %v2923
  %v6809 = vunpack.c.h.b16 %v2923
  %v6810 = vunpack.c.l.b16 %v2924
  %v6811 = vunpack.c.h.b16 %v2924
  %v6812 = vunpack.c.l.b16 %v2925
  %v6813 = vunpack.c.h.b16 %v2925
  %v6814 = vunpack.c.l.b16 %v2926
  %v6815 = vunpack.c.h.b16 %v2926
  %v6816 = vunpack.c.l.b16 %v2927
  %v6817 = vunpack.c.l.b16 %v2928
  %v6818 = vunpack.c.h.b16 %v2928
  %v6819 = vunpack.c.l.b16 %v2929
  %v6820 = vunpack.c.h.b16 %v2929
  %v6821 = vunpack.c.l.b16 %v2930
  %v6822 = vunpack.c.h.b16 %v2930
  %v6823 = vunpack.c.l.b16 %v2931
  %v6824 = vunpack.c.h.b16 %v2931
  %v6825 = vunpack.c.l.b16 %v2932
  %v6826 = vunpack.c.l.b16 %v2933
  %v6827 = vunpack.c.h.b16 %v2933
  %v6828 = vunpack.c.l.b16 %v2934
  %v6829 = vunpack.c.h.b16 %v2934
  %v6830 = vunpack.c.l.b16 %v2935
  %v6831 = vunpack.c.h.b16 %v2935
  %v6832 = vunpack.c.l.b16 %v2936
  %v6833 = vunpack.c.h.b16 %v2936
  %v6834 = vunpack.c.l.b16 %v2937
  %v6835 = vunpack.c.l.b16 %v2938
  %v6836 = vunpack.c.h.b16 %v2938
  %v6837 = vunpack.c.l.b16 %v2939
  %v6838 = vunpack.c.h.b16 %v2939
  %v6839 = vunpack.c.l.b16 %v2940
  %v6840 = vunpack.c.h.b16 %v2940
  %v6841 = vunpack.c.l.b16 %v2941
  %v6842 = vunpack.c.h.b16 %v2941
  %v6843 = vunpack.c.l.b16 %v2942
  %v6844 = vunpack.c.l.b16 %v2943
  %v6845 = vunpack.c.h.b16 %v2943
  %v6846 = vunpack.c.l.b16 %v2944
  %v6847 = vunpack.c.h.b16 %v2944
  %v6848 = vunpack.c.l.b16 %v2945
  %v6849 = vunpack.c.h.b16 %v2945
  %v6850 = vunpack.c.l.b16 %v2946
  %v6851 = vunpack.c.h.b16 %v2946
  %v6852 = vunpack.c.l.b16 %v2947
  %v6853 = vunpack.c.l.b16 %v2948
  %v6854 = vunpack.c.h.b16 %v2948
  %v6855 = vunpack.c.l.b16 %v2949
  %v6856 = vunpack.c.h.b16 %v2949
  %v6857 = vunpack.c.l.b16 %v2950
  %v6858 = vunpack.c.h.b16 %v2950
  %v6859 = vunpack.c.l.b16 %v2951
  %v6860 = vunpack.c.h.b16 %v2951
  %v6861 = vunpack.c.l.b16 %v2952
  %v6862 = vunpack.c.l.b16 %v2953
  %v6863 = vunpack.c.h.b16 %v2953
  %v6864 = vunpack.c.l.b16 %v2954
  %v6865 = vunpack.c.h.b16 %v2954
  %v6866 = vunpack.c.l.b16 %v2955
  %v6867 = vunpack.c.h.b16 %v2955
  %v6868 = vunpack.c.l.b16 %v2956
  %v6869 = vunpack.c.h.b16 %v2956
  %v6870 = vunpack.c.l.b16 %v2957
  %v6871 = vunpack.c.l.b16 %v2958
  %v6872 = vunpack.c.h.b16 %v2958
  %v6873 = vunpack.c.l.b16 %v2959
  %v6874 = vunpack.c.h.b16 %v2959
  %v6875 = vunpack.c.l.b16 %v2960
  %v6876 = vunpack.c.h.b16 %v2960
  %v6877 = vunpack.c.l.b16 %v2961
  %v6878 = vunpack.c.h.b16 %v2961
  %v6879 = vunpack.c.l.b16 %v2962
  %v6880 = vunpack.c.l.b16 %v2963
  %v6881 = vunpack.c.h.b16 %v2963
  %v6882 = vunpack.c.l.b16 %v2964
  %v6883 = vunpack.c.h.b16 %v2964
  %v6884 = vunpack.c.l.b16 %v2965
  %v6885 = vunpack.c.h.b16 %v2965
  %v6886 = vunpack.c.l.b16 %v2966
  %v6887 = vunpack.c.h.b16 %v2966
  %v6888 = vunpack.c.l.b16 %v2967
  %v6889 = vunpack.c.l.b16 %v2968
  %v6890 = vunpack.c.h.b16 %v2968
  %v6891 = vunpack.c.l.b16 %v2969
  %v6892 = vunpack.c.h.b16 %v2969
  %v6893 = vunpack.c.l.b16 %v2970
  %v6894 = vunpack.c.h.b16 %v2970
  %v6895 = vunpack.c.l.b16 %v2971
  %v6896 = vunpack.c.h.b16 %v2971
  %v6897 = vunpack.c.l.b16 %v2972
  %v6898 = vunpack.c.l.b16 %v2973
  %v6899 = vunpack.c.h.b16 %v2973
  %v6900 = vunpack.c.l.b16 %v2974
  %v6901 = vunpack.c.h.b16 %v2974
  %v6902 = vunpack.c.l.b16 %v2975
  %v6903 = vunpack.c.h.b16 %v2975
  %v6904 = vunpack.c.l.b16 %v2976
  %v6905 = vunpack.c.h.b16 %v2976
  %v6906 = vunpack.c.l.b16 %v2977
  %v6907 = vunpack.c.l.b16 %v2978
  %v6908 = vunpack.c.h.b16 %v2978
  %v6909 = vunpack.c.l.b16 %v2979
  %v6910 = vunpack.c.h.b16 %v2979
  %v6911 = vunpack.c.l.b16 %v2980
  %v6912 = vunpack.c.h.b16 %v2980
  %v6913 = vunpack.c.l.b16 %v2981
  %v6914 = vunpack.c.h.b16 %v2981
  %v6915 = vunpack.c.l.b16 %v2982
  %v6916 = vunpack.c.l.b16 %v2983
  %v6917 = vunpack.c.h.b16 %v2983
  %v6918 = vunpack.c.l.b16 %v2984
  %v6919 = vunpack.c.h.b16 %v2984
  %v6920 = vunpack.c.l.b16 %v2985
  %v6921 = vunpack.c.h.b16 %v2985
  %v6922 = vunpack.c.l.b16 %v2986
  %v6923 = vunpack.c.h.b16 %v2986
  %v6924 = vunpack.c.l.b16 %v2987
  %v6925 = vunpack.c.l.b16 %v2988
  %v6926 = vunpack.c.h.b16 %v2988
  %v6927 = vunpack.c.l.b16 %v2989
  %v6928 = vunpack.c.h.b16 %v2989
  %v6929 = vunpack.c.l.b16 %v2990
  %v6930 = vunpack.c.h.b16 %v2990
  %v6931 = vunpack.c.l.b16 %v2991
  %v6932 = vunpack.c.h.b16 %v2991
  %v6933 = vunpack.c.l.b16 %v2992
  %v6934 = vunpack.c.l.b16 %v2993
  %v6935 = vunpack.c.h.b16 %v2993
  %v6936 = vunpack.c.l.b16 %v2994
  %v6937 = vunpack.c.h.b16 %v2994
  %v6938 = vunpack.c.l.b16 %v2995
  %v6939 = vunpack.c.h.b16 %v2995
  %v6940 = vunpack.c.l.b16 %v2996
  %v6941 = vunpack.c.h.b16 %v2996
  %v6942 = vunpack.c.l.b16 %v2997
  %v6943 = vunpack.c.l.b16 %v2998
  %v6944 = vunpack.c.h.b16 %v2998
  %v6945 = vunpack.c.l.b16 %v2999
  %v6946 = vunpack.c.h.b16 %v2999
  %v6947 = vunpack.c.l.b16 %v3000
  %v6948 = vunpack.c.h.b16 %v3000
  %v6949 = vunpack.c.l.b16 %v3001
  %v6950 = vunpack.c.h.b16 %v3001
  %v6951 = vunpack.c.l.b16 %v3002
  %v6952 = vunpack.c.l.b16 %v3003
  %v6953 = vunpack.c.h.b16 %v3003
  %v6954 = vunpack.c.l.b16 %v3004
  %v6955 = vunpack.c.h.b16 %v3004
  %v6956 = vunpack.c.l.b16 %v3005
  %v6957 = vunpack.c.h.b16 %v3005
  %v6958 = vunpack.c.l.b16 %v3006
  %v6959 = vunpack.c.h.b16 %v3006
  %v6960 = vunpack.c.l.b16 %v3007
  %v6961 = vunpack.c.l.b16 %v3008
  %v6962 = vunpack.c.h.b16 %v3008
  %v6963 = vunpack.c.l.b16 %v3009
  %v6964 = vunpack.c.h.b16 %v3009
  %v6965 = vunpack.c.l.b16 %v3010
  %v6966 = vunpack.c.h.b16 %v3010
  %v6967 = vunpack.c.l.b16 %v3011
  %v6968 = vunpack.c.h.b16 %v3011
  %v6969 = vunpack.c.l.b16 %v3012
  %v6970 = vunpack.c.l.b16 %v3013
  %v6971 = vunpack.c.h.b16 %v3013
  %v6972 = vunpack.c.l.b16 %v3014
  %v6973 = vunpack.c.h.b16 %v3014
  %v6974 = vunpack.c.l.b16 %v3015
  %v6975 = vunpack.c.h.b16 %v3015
  %v6976 = vunpack.c.l.b16 %v3016
  %v6977 = vunpack.c.h.b16 %v3016
  %v6978 = vunpack.c.l.b16 %v3017
  %v6979 = vunpack.c.l.b16 %v3018
  %v6980 = vunpack.c.h.b16 %v3018
  %v6981 = vunpack.c.l.b16 %v3019
  %v6982 = vunpack.c.h.b16 %v3019
  %v6983 = vunpack.c.l.b16 %v3020
  %v6984 = vunpack.c.h.b16 %v3020
  %v6985 = vunpack.c.l.b16 %v3021
  %v6986 = vunpack.c.h.b16 %v3021
  %v6987 = vunpack.c.l.b16 %v3022
  %v6988 = vunpack.c.l.b16 %v3023
  %v6989 = vunpack.c.h.b16 %v3023
  %v6990 = vunpack.c.l.b16 %v3024
  %v6991 = vunpack.c.h.b16 %v3024
  %v6992 = vunpack.c.l.b16 %v3025
  %v6993 = vunpack.c.h.b16 %v3025
  %v6994 = vunpack.c.l.b16 %v3026
  %v6995 = vunpack.c.h.b16 %v3026
  %v6996 = vunpack.c.l.b16 %v3027
  %v6997 = vunpack.c.l.b16 %v3028
  %v6998 = vunpack.c.h.b16 %v3028
  %v6999 = vunpack.c.l.b16 %v3029
  %v7000 = vunpack.c.h.b16 %v3029
  %v7001 = vunpack.c.l.b16 %v3030
  %v7002 = vunpack.c.h.b16 %v3030
  %v7003 = vunpack.c.l.b16 %v3031
  %v7004 = vunpack.c.h.b16 %v3031
  %v7005 = vunpack.c.l.b16 %v3032
  %v7006 = vunpack.c.l.b16 %v3033
  %v7007 = vunpack.c.h.b16 %v3033
  %v7008 = vunpack.c.l.b16 %v3034
  %v7009 = vunpack.c.h.b16 %v3034
  %v7010 = vunpack.c.l.b16 %v3035
  %v7011 = vunpack.c.h.b16 %v3035
  %v7012 = vunpack.c.l.b16 %v3036
  %v7013 = vunpack.c.h.b16 %v3036
  %v7014 = vunpack.c.l.b16 %v3037
  %v7015 = vunpack.c.l.b16 %v3038
  %v7016 = vunpack.c.h.b16 %v3038
  %v7017 = vunpack.c.l.b16 %v3039
  %v7018 = vunpack.c.h.b16 %v3039
  %v7019 = vunpack.c.l.b16 %v3040
  %v7020 = vunpack.c.h.b16 %v3040
  %v7021 = vunpack.c.l.b16 %v3041
  %v7022 = vunpack.c.h.b16 %v3041
  %v7023 = vunpack.c.l.b16 %v3042
  %v7024 = vunpack.c.l.b16 %v3043
  %v7025 = vunpack.c.h.b16 %v3043
  %v7026 = vunpack.c.l.b16 %v3044
  %v7027 = vunpack.c.h.b16 %v3044
  %v7028 = vunpack.c.l.b16 %v3045
  %v7029 = vunpack.c.h.b16 %v3045
  %v7030 = vunpack.c.l.b16 %v3046
  %v7031 = vunpack.c.h.b16 %v3046
  %v7032 = vunpack.c.l.b16 %v3047
  %v7033 = vunpack.c.l.b16 %v3048
  %v7034 = vunpack.c.h.b16 %v3048
  %v7035 = vunpack.c.l.b16 %v3049
  %v7036 = vunpack.c.h.b16 %v3049
  %v7037 = vunpack.c.l.b16 %v3050
  %v7038 = vunpack.c.h.b16 %v3050
  %v7039 = vunpack.c.l.b16 %v3051
  %v7040 = vunpack.c.h.b16 %v3051
  %v7041 = vunpack.c.l.b16 %v3052
  %v7042 = vunpack.c.l.b16 %v3053
  %v7043 = vunpack.c.h.b16 %v3053
  %v7044 = vunpack.c.l.b16 %v3054
  %v7045 = vunpack.c.h.b16 %v3054
  %v7046 = vunpack.c.l.b16 %v3055
  %v7047 = vunpack.c.h.b16 %v3055
  %v7048 = vunpack.c.l.b16 %v3056
  %v7049 = vunpack.c.h.b16 %v3056
  %v7050 = vunpack.c.l.b16 %v3057
  %v7051 = vunpack.c.l.b16 %v3058
  %v7052 = vunpack.c.h.b16 %v3058
  %v7053 = vunpack.c.l.b16 %v3059
  %v7054 = vunpack.c.h.b16 %v3059
  %v7055 = vunpack.c.l.b16 %v3060
  %v7056 = vunpack.c.h.b16 %v3060
  %v7057 = vunpack.c.l.b16 %v3061
  %v7058 = vunpack.c.h.b16 %v3061
  %v7059 = vunpack.c.l.b16 %v3062
  %v7060 = vunpack.c.l.b16 %v3063
  %v7061 = vunpack.c.h.b16 %v3063
  %v7062 = vunpack.c.l.b16 %v3064
  %v7063 = vunpack.c.h.b16 %v3064
  %v7064 = vunpack.c.l.b16 %v3065
  %v7065 = vunpack.c.h.b16 %v3065
  %v7066 = vunpack.c.l.b16 %v3066
  %v7067 = vunpack.c.h.b16 %v3066
  %v7068 = vunpack.c.l.b16 %v3067
  %v7069 = vunpack.c.l.b16 %v3068
  %v7070 = vunpack.c.h.b16 %v3068
  %v7071 = vunpack.c.l.b16 %v3069
  %v7072 = vunpack.c.h.b16 %v3069
  %v7073 = vunpack.c.l.b16 %v3070
  %v7074 = vunpack.c.h.b16 %v3070
  %v7075 = vunpack.c.l.b16 %v3071
  %v7076 = vunpack.c.h.b16 %v3071
  %v7077 = vunpack.c.l.b16 %v3072
  %v7078 = vunpack.c.l.b16 %v3073
  %v7079 = vunpack.c.h.b16 %v3073
  %v7080 = vunpack.c.l.b16 %v3074
  %v7081 = vunpack.c.h.b16 %v3074
  %v7082 = vunpack.c.l.b16 %v3075
  %v7083 = vunpack.c.h.b16 %v3075
  %v7084 = vunpack.c.l.b16 %v3076
  %v7085 = vunpack.c.h.b16 %v3076
  %v7086 = vunpack.c.l.b16 %v3077
  %v7087 = vunpack.c.l.b16 %v3078
  %v7088 = vunpack.c.h.b16 %v3078
  %v7089 = vunpack.c.l.b16 %v3079
  %v7090 = vunpack.c.h.b16 %v3079
  %v7091 = vunpack.c.l.b16 %v3080
  %v7092 = vunpack.c.h.b16 %v3080
  %v7093 = vunpack.c.l.b16 %v3081
  %v7094 = vunpack.c.h.b16 %v3081
  %v7095 = vunpack.c.l.b16 %v3082
  %v7096 = vunpack.c.l.b16 %v3083
  %v7097 = vunpack.c.h.b16 %v3083
  %v7098 = vunpack.c.l.b16 %v3084
  %v7099 = vunpack.c.h.b16 %v3084
  %v7100 = vunpack.c.l.b16 %v3085
  %v7101 = vunpack.c.h.b16 %v3085
  %v7102 = vunpack.c.l.b16 %v3086
  %v7103 = vunpack.c.h.b16 %v3086
  %v7104 = vunpack.c.l.b16 %v3087
  %v7105 = vunpack.c.l.b16 %v3088
  %v7106 = vunpack.c.h.b16 %v3088
  %v7107 = vunpack.c.l.b16 %v3089
  %v7108 = vunpack.c.h.b16 %v3089
  %v7109 = vunpack.c.l.b16 %v3090
  %v7110 = vunpack.c.h.b16 %v3090
  %v7111 = vunpack.c.l.b16 %v3091
  %v7112 = vunpack.c.h.b16 %v3091
  %v7113 = vunpack.c.l.b16 %v3092
  %v7114 = vunpack.c.l.b16 %v3093
  %v7115 = vunpack.c.h.b16 %v3093
  %v7116 = vunpack.c.l.b16 %v3094
  %v7117 = vunpack.c.h.b16 %v3094
  %v7118 = vunpack.c.l.b16 %v3095
  %v7119 = vunpack.c.h.b16 %v3095
  %v7120 = vunpack.c.l.b16 %v3096
  %v7121 = vunpack.c.h.b16 %v3096
  %v7122 = vunpack.c.l.b16 %v3097
  %v7123 = vunpack.c.l.b16 %v3098
  %v7124 = vunpack.c.h.b16 %v3098
  %v7125 = vunpack.c.l.b16 %v3099
  %v7126 = vunpack.c.h.b16 %v3099
  %v7127 = vunpack.c.l.b16 %v3100
  %v7128 = vunpack.c.h.b16 %v3100
  %v7129 = vunpack.c.l.b16 %v3101
  %v7130 = vunpack.c.h.b16 %v3101
  %v7131 = vunpack.c.l.b16 %v3102
  %v7132 = vunpack.c.l.b16 %v3103
  %v7133 = vunpack.c.h.b16 %v3103
  %v7134 = vunpack.c.l.b16 %v3104
  %v7135 = vunpack.c.h.b16 %v3104
  %v7136 = vunpack.c.l.b16 %v3105
  %v7137 = vunpack.c.h.b16 %v3105
  %v7138 = vunpack.c.l.b16 %v3106
  %v7139 = vunpack.c.h.b16 %v3106
  %v7140 = vunpack.c.l.b16 %v3107
  %v7141 = vunpack.c.l.b16 %v3108
  %v7142 = vunpack.c.h.b16 %v3108
  %v7143 = vunpack.c.l.b16 %v3109
  %v7144 = vunpack.c.h.b16 %v3109
  %v7145 = vunpack.c.l.b16 %v3110
  %v7146 = vunpack.c.h.b16 %v3110
  %v7147 = vunpack.c.l.b16 %v3111
  %v7148 = vunpack.c.h.b16 %v3111
  %v7149 = vunpack.c.l.b16 %v3112
  %v7150 = vunpack.c.l.b16 %v3113
  %v7151 = vunpack.c.h.b16 %v3113
  %v7152 = vunpack.c.l.b16 %v3114
  %v7153 = vunpack.c.h.b16 %v3114
  %v7154 = vunpack.c.l.b16 %v3115
  %v7155 = vunpack.c.h.b16 %v3115
  %v7156 = vunpack.c.l.b16 %v3116
  %v7157 = vunpack.c.h.b16 %v3116
  %v7158 = vunpack.c.l.b16 %v3117
  %v7159 = vunpack.c.l.b16 %v3118
  %v7160 = vunpack.c.h.b16 %v3118
  %v7161 = vunpack.c.l.b16 %v3119
  %v7162 = vunpack.c.h.b16 %v3119
  %v7163 = vunpack.c.l.b16 %v3120
  %v7164 = vunpack.c.h.b16 %v3120
  %v7165 = vunpack.c.l.b16 %v3121
  %v7166 = vunpack.c.h.b16 %v3121
  %v7167 = vunpack.c.l.b16 %v3122
  %v7168 = vunpack.c.l.b16 %v3123
  %v7169 = vunpack.c.h.b16 %v3123
  %v7170 = vunpack.c.l.b16 %v3124
  %v7171 = vunpack.c.h.b16 %v3124
  %v7172 = vunpack.c.l.b16 %v3125
  %v7173 = vunpack.c.h.b16 %v3125
  %v7174 = vunpack.c.l.b16 %v3126
  %v7175 = vunpack.c.h.b16 %v3126
  %v7176 = vunpack.c.l.b16 %v3127
  %v7177 = vunpack.c.l.b16 %v3128
  %v7178 = vunpack.c.h.b16 %v3128
  %v7179 = vunpack.c.l.b16 %v3129
  %v7180 = vunpack.c.h.b16 %v3129
  %v7181 = vunpack.c.l.b16 %v3130
  %v7182 = vunpack.c.h.b16 %v3130
  %v7183 = vunpack.c.l.b16 %v3131
  %v7184 = vunpack.c.h.b16 %v3131
  %v7185 = vunpack.c.l.b16 %v3132
  %v7186 = vunpack.c.l.b16 %v3133
  %v7187 = vunpack.c.h.b16 %v3133
  %v7188 = vunpack.c.l.b16 %v3134
  %v7189 = vunpack.c.h.b16 %v3134
  %v7190 = vunpack.c.l.b16 %v3135
  %v7191 = vunpack.c.h.b16 %v3135
  %v7192 = vunpack.c.l.b16 %v3136
  %v7193 = vunpack.c.h.b16 %v3136
  %v7194 = vunpack.c.l.b16 %v3137
  %v7195 = vunpack.c.l.b16 %v3138
  %v7196 = vunpack.c.h.b16 %v3138
  %v7197 = vunpack.c.l.b16 %v3139
  %v7198 = vunpack.c.h.b16 %v3139
  %v7199 = vunpack.c.l.b16 %v3140
  %v7200 = vunpack.c.h.b16 %v3140
  %v7201 = vunpack.c.l.b16 %v3141
  %v7202 = vunpack.c.h.b16 %v3141
  %v7203 = vunpack.c.l.b16 %v3142
  %v7204 = vunpack.c.l.b16 %v3143
  %v7205 = vunpack.c.h.b16 %v3143
  %v7206 = vunpack.c.l.b16 %v3144
  %v7207 = vunpack.c.h.b16 %v3144
  %v7208 = vunpack.c.l.b16 %v3145
  %v7209 = vunpack.c.h.b16 %v3145
  %v7210 = vunpack.c.l.b16 %v3146
  %v7211 = vunpack.c.h.b16 %v3146
  %v7212 = vunpack.c.l.b16 %v3147
  %v7213 = vunpack.c.l.b16 %v3148
  %v7214 = vunpack.c.h.b16 %v3148
  %v7215 = vunpack.c.l.b16 %v3149
  %v7216 = vunpack.c.h.b16 %v3149
  %v7217 = vunpack.c.l.b16 %v3150
  %v7218 = vunpack.c.h.b16 %v3150
  %v7219 = vunpack.c.l.b16 %v3151
  %v7220 = vunpack.c.h.b16 %v3151
  %v7221 = vunpack.c.l.b16 %v3152
  %v7222 = vunpack.c.l.b16 %v3153
  %v7223 = vunpack.c.h.b16 %v3153
  %v7224 = vunpack.c.l.b16 %v3154
  %v7225 = vunpack.c.h.b16 %v3154
  %v7226 = vunpack.c.l.b16 %v3155
  %v7227 = vunpack.c.h.b16 %v3155
  %v7228 = vunpack.c.l.b16 %v3156
  %v7229 = vunpack.c.h.b16 %v3156
  %v7230 = vunpack.c.l.b16 %v3157
  %v7231 = vunpack.c.l.b16 %v3158
  %v7232 = vunpack.c.h.b16 %v3158
  %v7233 = vunpack.c.l.b16 %v3159
  %v7234 = vunpack.c.h.b16 %v3159
  %v7235 = vunpack.c.l.b16 %v3160
  %v7236 = vunpack.c.h.b16 %v3160
  %v7237 = vunpack.c.l.b16 %v3161
  %v7238 = vunpack.c.h.b16 %v3161
  %v7239 = vunpack.c.l.b16 %v3162
  %v7240 = vunpack.c.l.b16 %v3163
  %v7241 = vunpack.c.h.b16 %v3163
  %v7242 = vunpack.c.l.b16 %v3164
  %v7243 = vunpack.c.h.b16 %v3164
  %v7244 = vunpack.c.l.b16 %v3165
  %v7245 = vunpack.c.h.b16 %v3165
  %v7246 = vunpack.c.l.b16 %v3166
  %v7247 = vunpack.c.h.b16 %v3166
  %v7248 = vunpack.c.l.b16 %v3167
  %v7249 = vpack.c.b16 %v4666, %v4657
  %v7250 = vpack.c.b16 %v4667, %v4658
  %v7251 = vpack.c.b16 %v4668, %v4659
  %v7252 = vpack.c.b16 %v4669, %v4660
  %v7253 = vpack.c.b16 %v4670, %v4661
  %v7254 = vpack.c.b16 %v4671, %v4662
  %v7255 = vpack.c.b16 %v4672, %v4663
  %v7256 = vpack.c.b16 %v4673, %v4664
  %v7257 = vpack.c.b16 %v4674, %v4665
  %v7258 = vpack.c.b16 %v4684, %v4675
  %v7259 = vpack.c.b16 %v4685, %v4676
  %v7260 = vpack.c.b16 %v4686, %v4677
  %v7261 = vpack.c.b16 %v4687, %v4678
  %v7262 = vpack.c.b16 %v4688, %v4679
  %v7263 = vpack.c.b16 %v4689, %v4680
  %v7264 = vpack.c.b16 %v4690, %v4681
  %v7265 = vpack.c.b16 %v4691, %v4682
  %v7266 = vpack.c.b16 %v4692, %v4683
  %v7267 = vpack.c.b16 %v4702, %v4693
  %v7268 = vpack.c.b16 %v4703, %v4694
  %v7269 = vpack.c.b16 %v4704, %v4695
  %v7270 = vpack.c.b16 %v4705, %v4696
  %v7271 = vpack.c.b16 %v4706, %v4697
  %v7272 = vpack.c.b16 %v4707, %v4698
  %v7273 = vpack.c.b16 %v4708, %v4699
  %v7274 = vpack.c.b16 %v4709, %v4700
  %v7275 = vpack.c.b16 %v4710, %v4701
  %v7276 = vpack.c.b16 %v4720, %v4711
  %v7277 = vpack.c.b16 %v4721, %v4712
  %v7278 = vpack.c.b16 %v4722, %v4713
  %v7279 = vpack.c.b16 %v4723, %v4714
  %v7280 = vpack.c.b16 %v4724, %v4715
  %v7281 = vpack.c.b16 %v4725, %v4716
  %v7282 = vpack.c.b16 %v4726, %v4717
  %v7283 = vpack.c.b16 %v4727, %v4718
  %v7284 = vpack.c.b16 %v4728, %v4719
  %v7285 = vpack.c.b16 %v4738, %v4729
  %v7286 = vpack.c.b16 %v4739, %v4730
  %v7287 = vpack.c.b16 %v4740, %v4731
  %v7288 = vpack.c.b16 %v4741, %v4732
  %v7289 = vpack.c.b16 %v4742, %v4733
  %v7290 = vpack.c.b16 %v4743, %v4734
  %v7291 = vpack.c.b16 %v4744, %v4735
  %v7292 = vpack.c.b16 %v4745, %v4736
  %v7293 = vpack.c.b16 %v4746, %v4737
  %v7294 = vpack.c.b16 %v4756, %v4747
  %v7295 = vpack.c.b16 %v4757, %v4748
  %v7296 = vpack.c.b16 %v4758, %v4749
  %v7297 = vpack.c.b16 %v4759, %v4750
  %v7298 = vpack.c.b16 %v4760, %v4751
  %v7299 = vpack.c.b16 %v4761, %v4752
  %v7300 = vpack.c.b16 %v4762, %v4753
  %v7301 = vpack.c.b16 %v4763, %v4754
  %v7302 = vpack.c.b16 %v4764, %v4755
  %v7303 = vpack.c.b16 %v4774, %v4765
  %v7304 = vpack.c.b16 %v4775, %v4766
  %v7305 = vpack.c.b16 %v4776, %v4767
  %v7306 = vpack.c.b16 %v4777, %v4768
  %v7307 = vpack.c.b16 %v4778, %v4769
  %v7308 = vpack.c.b16 %v4779, %v4770
  %v7309 = vpack.c.b16 %v4780, %v4771
  %v7310 = vpack.c.b16 %v4781, %v4772
  %v7311 = vpack.c.b16 %v4782, %v4773
  %v7312 = vpack.c.b16 %v4792, %v4783
  %v7313 = vpack.c.b16 %v4793, %v4784
  %v7314 = vpack.c.b16 %v4794, %v4785
  %v7315 = vpack.c.b16 %v4795, %v4786
  %v7316 = vpack.c.b16 %v4796, %v4787
  %v7317 = vpack.c.b16 %v4797, %v4788
  %v7318 = vpack.c.b16 %v4798, %v4789
  %v7319 = vpack.c.b16 %v4799, %v4790
  %v7320 = vpack.c.b16 %v4800, %v4791
  %v7321 = vpack.c.b16 %v4810, %v4801
  %v7322 = vpack.c.b16 %v4811, %v4802
  %v7323 = vpack.c.b16 %v4812, %v4803
  %v7324 = vpack.c.b16 %v4813, %v4804
  %v7325 = vpack.c.b16 %v4814, %v4805
  %v7326 = vpack.c.b16 %v4815, %v4806
  %v7327 = vpack.c.b16 %v4816, %v4807
  %v7328 = vpack.c.b16 %v4817, %v4808
  %v7329 = vpack.c.b16 %v4818, %v4809
  %v7330 = vpack.c.b16 %v4828, %v4819
  %v7331 = vpack.c.b16 %v4829, %v4820
  %v7332 = vpack.c.b16 %v4830, %v4821
  %v7333 = vpack.c.b16 %v4831, %v4822
  %v7334 = vpack.c.b16 %v4832, %v4823
  %v7335 = vpack.c.b16 %v4833, %v4824
  %v7336 = vpack.c.b16 %v4834, %v4825
  %v7337 = vpack.c.b16 %v4835, %v4826
  %v7338 = vpack.c.b16 %v4836, %v4827
  %v7339 = vpack.c.b16 %v4846, %v4837
  %v7340 = vpack.c.b16 %v4847, %v4838
  %v7341 = vpack.c.b16 %v4848, %v4839
  %v7342 = vpack.c.b16 %v4849, %v4840
  %v7343 = vpack.c.b16 %v4850, %v4841
  %v7344 = vpack.c.b16 %v4851, %v4842
  %v7345 = vpack.c.b16 %v4852, %v4843
  %v7346 = vpack.c.b16 %v4853, %v4844
  %v7347 = vpack.c.b16 %v4854, %v4845
  %v7348 = vpack.c.b16 %v4864, %v4855
  %v7349 = vpack.c.b16 %v4865, %v4856
  %v7350 = vpack.c.b16 %v4866, %v4857
  %v7351 = vpack.c.b16 %v4867, %v4858
  %v7352 = vpack.c.b16 %v4868, %v4859
  %v7353 = vpack.c.b16 %v4869, %v4860
  %v7354 = vpack.c.b16 %v4870, %v4861
  %v7355 = vpack.c.b16 %v4871, %v4862
  %v7356 = vpack.c.b16 %v4872, %v4863
  %v7357 = vpack.c.b16 %v4882, %v4873
  %v7358 = vpack.c.b16 %v4883, %v4874
  %v7359 = vpack.c.b16 %v4884, %v4875
  %v7360 = vpack.c.b16 %v4885, %v4876
  %v7361 = vpack.c.b16 %v4886, %v4877
  %v7362 = vpack.c.b16 %v4887, %v4878
  %v7363 = vpack.c.b16 %v4888, %v4879
  %v7364 = vpack.c.b16 %v4889, %v4880
  %v7365 = vpack.c.b16 %v4890, %v4881
  %v7366 = vpack.c.b16 %v4900, %v4891
  %v7367 = vpack.c.b16 %v4901, %v4892
  %v7368 = vpack.c.b16 %v4902, %v4893
  %v7369 = vpack.c.b16 %v4903, %v4894
  %v7370 = vpack.c.b16 %v4904, %v4895
  %v7371 = vpack.c.b16 %v4905, %v4896
  %v7372 = vpack.c.b16 %v4906, %v4897
  %v7373 = vpack.c.b16 %v4907, %v4898
  %v7374 = vpack.c.b16 %v4908, %v4899
  %v7375 = vpack.c.b16 %v4918, %v4909
  %v7376 = vpack.c.b16 %v4919, %v4910
  %v7377 = vpack.c.b16 %v4920, %v4911
  %v7378 = vpack.c.b16 %v4921, %v4912
  %v7379 = vpack.c.b16 %v4922, %v4913
  %v7380 = vpack.c.b16 %v4923, %v4914
  %v7381 = vpack.c.b16 %v4924, %v4915
  %v7382 = vpack.c.b16 %v4925, %v4916
  %v7383 = vpack.c.b16 %v4926, %v4917
  %v7384 = vpack.c.b16 %v4936, %v4927
  %v7385 = vpack.c.b16 %v4937, %v4928
  %v7386 = vpack.c.b16 %v4938, %v4929
  %v7387 = vpack.c.b16 %v4939, %v4930
  %v7388 = vpack.c.b16 %v4940, %v4931
  %v7389 = vpack.c.b16 %v4941, %v4932
  %v7390 = vpack.c.b16 %v4942, %v4933
  %v7391 = vpack.c.b16 %v4943, %v4934
  %v7392 = vpack.c.b16 %v4944, %v4935
  %v7393 = vpack.c.b16 %v4954, %v4945
  %v7394 = vpack.c.b16 %v4955, %v4946
  %v7395 = vpack.c.b16 %v4956, %v4947
  %v7396 = vpack.c.b16 %v4957, %v4948
  %v7397 = vpack.c.b16 %v4958, %v4949
  %v7398 = vpack.c.b16 %v4959, %v4950
  %v7399 = vpack.c.b16 %v4960, %v4951
  %v7400 = vpack.c.b16 %v4961, %v4952
  %v7401 = vpack.c.b16 %v4962, %v4953
  %v7402 = vpack.c.b16 %v4972, %v4963
  %v7403 = vpack.c.b16 %v4973, %v4964
  %v7404 = vpack.c.b16 %v4974, %v4965
  %v7405 = vpack.c.b16 %v4975, %v4966
  %v7406 = vpack.c.b16 %v4976, %v4967
  %v7407 = vpack.c.b16 %v4977, %v4968
  %v7408 = vpack.c.b16 %v4978, %v4969
  %v7409 = vpack.c.b16 %v4979, %v4970
  %v7410 = vpack.c.b16 %v4980, %v4971
  %v7411 = vpack.c.b16 %v4990, %v4981
  %v7412 = vpack.c.b16 %v4991, %v4982
  %v7413 = vpack.c.b16 %v4992, %v4983
  %v7414 = vpack.c.b16 %v4993, %v4984
  %v7415 = vpack.c.b16 %v4994, %v4985
  %v7416 = vpack.c.b16 %v4995, %v4986
  %v7417 = vpack.c.b16 %v4996, %v4987
  %v7418 = vpack.c.b16 %v4997, %v4988
  %v7419 = vpack.c.b16 %v4998, %v4989
  %v7420 = vpack.c.b16 %v5008, %v4999
  %v7421 = vpack.c.b16 %v5009, %v5000
  %v7422 = vpack.c.b16 %v5010, %v5001
  %v7423 = vpack.c.b16 %v5011, %v5002
  %v7424 = vpack.c.b16 %v5012, %v5003
  %v7425 = vpack.c.b16 %v5013, %v5004
  %v7426 = vpack.c.b16 %v5014, %v5005
  %v7427 = vpack.c.b16 %v5015, %v5006
  %v7428 = vpack.c.b16 %v5016, %v5007
  %v7429 = vpack.c.b16 %v5026, %v5017
  %v7430 = vpack.c.b16 %v5027, %v5018
  %v7431 = vpack.c.b16 %v5028, %v5019
  %v7432 = vpack.c.b16 %v5029, %v5020
  %v7433 = vpack.c.b16 %v5030, %v5021
  %v7434 = vpack.c.b16 %v5031, %v5022
  %v7435 = vpack.c.b16 %v5032, %v5023
  %v7436 = vpack.c.b16 %v5033, %v5024
  %v7437 = vpack.c.b16 %v5034, %v5025
  %v7438 = vpack.c.b16 %v5044, %v5035
  %v7439 = vpack.c.b16 %v5045, %v5036
  %v7440 = vpack.c.b16 %v5046, %v5037
  %v7441 = vpack.c.b16 %v5047, %v5038
  %v7442 = vpack.c.b16 %v5048, %v5039
  %v7443 = vpack.c.b16 %v5049, %v5040
  %v7444 = vpack.c.b16 %v5050, %v5041
  %v7445 = vpack.c.b16 %v5051, %v5042
  %v7446 = vpack.c.b16 %v5052, %v5043
  %v7447 = vpack.c.b16 %v5062, %v5053
  %v7448 = vpack.c.b16 %v5063, %v5054
  %v7449 = vpack.c.b16 %v5064, %v5055
  %v7450 = vpack.c.b16 %v5065, %v5056
  %v7451 = vpack.c.b16 %v5066, %v5057
  %v7452 = vpack.c.b16 %v5067, %v5058
  %v7453 = vpack.c.b16 %v5068, %v5059
  %v7454 = vpack.c.b16 %v5069, %v5060
  %v7455 = vpack.c.b16 %v5070, %v5061
  %v7456 = vpack.c.b16 %v5080, %v5071
  %v7457 = vpack.c.b16 %v5081, %v5072
  %v7458 = vpack.c.b16 %v5082, %v5073
  %v7459 = vpack.c.b16 %v5083, %v5074
  %v7460 = vpack.c.b16 %v5084, %v5075
  %v7461 = vpack.c.b16 %v5085, %v5076
  %v7462 = vpack.c.b16 %v5086, %v5077
  %v7463 = vpack.c.b16 %v5087, %v5078
  %v7464 = vpack.c.b16 %v5088, %v5079
  %v7465 = vpack.c.b16 %v5098, %v5089
  %v7466 = vpack.c.b16 %v5099, %v5090
  %v7467 = vpack.c.b16 %v5100, %v5091
  %v7468 = vpack.c.b16 %v5101, %v5092
  %v7469 = vpack.c.b16 %v5102, %v5093
  %v7470 = vpack.c.b16 %v5103, %v5094
  %v7471 = vpack.c.b16 %v5104, %v5095
  %v7472 = vpack.c.b16 %v5105, %v5096
  %v7473 = vpack.c.b16 %v5106, %v5097
  %v7474 = vpack.c.b16 %v5116, %v5107
  %v7475 = vpack.c.b16 %v5117, %v5108
  %v7476 = vpack.c.b16 %v5118, %v5109
  %v7477 = vpack.c.b16 %v5119, %v5110
  %v7478 = vpack.c.b16 %v5120, %v5111
  %v7479 = vpack.c.b16 %v5121, %v5112
  %v7480 = vpack.c.b16 %v5122, %v5113
  %v7481 = vpack.c.b16 %v5123, %v5114
  %v7482 = vpack.c.b16 %v5124, %v5115
  %v7483 = vpack.c.b16 %v5134, %v5125
  %v7484 = vpack.c.b16 %v5135, %v5126
  %v7485 = vpack.c.b16 %v5136, %v5127
  %v7486 = vpack.c.b16 %v5137, %v5128
  %v7487 = vpack.c.b16 %v5138, %v5129
  %v7488 = vpack.c.b16 %v5139, %v5130
  %v7489 = vpack.c.b16 %v5140, %v5131
  %v7490 = vpack.c.b16 %v5141, %v5132
  %v7491 = vpack.c.b16 %v5142, %v5133
  %v7492 = vpack.c.b16 %v5152, %v5143
  %v7493 = vpack.c.b16 %v5153, %v5144
  %v7494 = vpack.c.b16 %v5154, %v5145
  %v7495 = vpack.c.b16 %v5155, %v5146
  %v7496 = vpack.c.b16 %v5156, %v5147
  %v7497 = vpack.c.b16 %v5157, %v5148
  %v7498 = vpack.c.b16 %v5158, %v5149
  %v7499 = vpack.c.b16 %v5159, %v5150
  %v7500 = vpack.c.b16 %v5160, %v5151
  %v7501 = vpack.c.b16 %v5170, %v5161
  %v7502 = vpack.c.b16 %v5171, %v5162
  %v7503 = vpack.c.b16 %v5172, %v5163
  %v7504 = vpack.c.b16 %v5173, %v5164
  %v7505 = vpack.c.b16 %v5174, %v5165
  %v7506 = vpack.c.b16 %v5175, %v5166
  %v7507 = vpack.c.b16 %v5176, %v5167
  %v7508 = vpack.c.b16 %v5177, %v5168
  %v7509 = vpack.c.b16 %v5178, %v5169
  %v7510 = vpack.c.b16 %v5188, %v5179
  %v7511 = vpack.c.b16 %v5189, %v5180
  %v7512 = vpack.c.b16 %v5190, %v5181
  %v7513 = vpack.c.b16 %v5191, %v5182
  %v7514 = vpack.c.b16 %v5192, %v5183
  %v7515 = vpack.c.b16 %v5193, %v5184
  %v7516 = vpack.c.b16 %v5194, %v5185
  %v7517 = vpack.c.b16 %v5195, %v5186
  %v7518 = vpack.c.b16 %v5196, %v5187
  %v7519 = vpack.c.b16 %v5206, %v5197
  %v7520 = vpack.c.b16 %v5207, %v5198
  %v7521 = vpack.c.b16 %v5208, %v5199
  %v7522 = vpack.c.b16 %v5209, %v5200
  %v7523 = vpack.c.b16 %v5210, %v5201
  %v7524 = vpack.c.b16 %v5211, %v5202
  %v7525 = vpack.c.b16 %v5212, %v5203
  %v7526 = vpack.c.b16 %v5213, %v5204
  %v7527 = vpack.c.b16 %v5214, %v5205
  %v7528 = vpack.c.b16 %v5224, %v5215
  %v7529 = vpack.c.b16 %v5225, %v5216
  %v7530 = vpack.c.b16 %v5226, %v5217
  %v7531 = vpack.c.b16 %v5227, %v5218
  %v7532 = vpack.c.b16 %v5228, %v5219
  %v7533 = vpack.c.b16 %v5229, %v5220
  %v7534 = vpack.c.b16 %v5230, %v5221
  %v7535 = vpack.c.b16 %v5231, %v5222
  %v7536 = vpack.c.b16 %v5232, %v5223
  %v7537 = vpack.c.b16 %v5242, %v5233
  %v7538 = vpack.c.b16 %v5243, %v5234
  %v7539 = vpack.c.b16 %v5244, %v5235
  %v7540 = vpack.c.b16 %v5245, %v5236
  %v7541 = vpack.c.b16 %v5246, %v5237
  %v7542 = vpack.c.b16 %v5247, %v5238
  %v7543 = vpack.c.b16 %v5248, %v5239
  %v7544 = vpack.c.b16 %v5249, %v5240
  %v7545 = vpack.c.b16 %v5250, %v5241
  %v7546 = vpack.c.b16 %v5260, %v5251
  %v7547 = vpack.c.b16 %v5261, %v5252
  %v7548 = vpack.c.b16 %v5262, %v5253
  %v7549 = vpack.c.b16 %v5263, %v5254
  %v7550 = vpack.c.b16 %v5264, %v5255
  %v7551 = vpack.c.b16 %v5265, %v5256
  %v7552 = vpack.c.b16 %v5266, %v5257
  %v7553 = vpack.c.b16 %v5267, %v5258
  %v7554 = vpack.c.b16 %v5268, %v5259
  %v7555 = vpack.c.b16 %v5278, %v5269
  %v7556 = vpack.c.b16 %v5279, %v5270
  %v7557 = vpack.c.b16 %v5280, %v5271
  %v7558 = vpack.c.b16 %v5281, %v5272
  %v7559 = vpack.c.b16 %v5282, %v5273
  %v7560 = vpack.c.b16 %v5283, %v5274
  %v7561 = vpack.c.b16 %v5284, %v5275
  %v7562 = vpack.c.b16 %v5285, %v5276
  %v7563 = vpack.c.b16 %v5286, %v5277
  %v7564 = vpack.c.b16 %v5296, %v5287
  %v7565 = vpack.c.b16 %v5297, %v5288
  %v7566 = vpack.c.b16 %v5298, %v5289
  %v7567 = vpack.c.b16 %v5299, %v5290
  %v7568 = vpack.c.b16 %v5300, %v5291
  %v7569 = vpack.c.b16 %v5301, %v5292
  %v7570 = vpack.c.b16 %v5302, %v5293
  %v7571 = vpack.c.b16 %v5303, %v5294
  %v7572 = vpack.c.b16 %v5304, %v5295
  %v7573 = vpack.c.b16 %v5314, %v5305
  %v7574 = vpack.c.b16 %v5315, %v5306
  %v7575 = vpack.c.b16 %v5316, %v5307
  %v7576 = vpack.c.b16 %v5317, %v5308
  %v7577 = vpack.c.b16 %v5318, %v5309
  %v7578 = vpack.c.b16 %v5319, %v5310
  %v7579 = vpack.c.b16 %v5320, %v5311
  %v7580 = vpack.c.b16 %v5321, %v5312
  %v7581 = vpack.c.b16 %v5322, %v5313
  %v7582 = vpack.c.b16 %v5332, %v5323
  %v7583 = vpack.c.b16 %v5333, %v5324
  %v7584 = vpack.c.b16 %v5334, %v5325
  %v7585 = vpack.c.b16 %v5335, %v5326
  %v7586 = vpack.c.b16 %v5336, %v5327
  %v7587 = vpack.c.b16 %v5337, %v5328
  %v7588 = vpack.c.b16 %v5338, %v5329
  %v7589 = vpack.c.b16 %v5339, %v5330
  %v7590 = vpack.c.b16 %v5340, %v5331
  %v7591 = vpack.c.b16 %v5350, %v5341
  %v7592 = vpack.c.b16 %v5351, %v5342
  %v7593 = vpack.c.b16 %v5352, %v5343
  %v7594 = vpack.c.b16 %v5353, %v5344
  %v7595 = vpack.c.b16 %v5354, %v5345
  %v7596 = vpack.c.b16 %v5355, %v5346
  %v7597 = vpack.c.b16 %v5356, %v5347
  %v7598 = vpack.c.b16 %v5357, %v5348
  %v7599 = vpack.c.b16 %v5358, %v5349
  %v7600 = vpack.c.b16 %v5368, %v5359
  %v7601 = vpack.c.b16 %v5369, %v5360
  %v7602 = vpack.c.b16 %v5370, %v5361
  %v7603 = vpack.c.b16 %v5371, %v5362
  %v7604 = vpack.c.b16 %v5372, %v5363
  %v7605 = vpack.c.b16 %v5373, %v5364
  %v7606 = vpack.c.b16 %v5374, %v5365
  %v7607 = vpack.c.b16 %v5375, %v5366
  %v7608 = vpack.c.b16 %v5376, %v5367
  %v7609 = vpack.c.b16 %v5386, %v5377
  %v7610 = vpack.c.b16 %v5387, %v5378
  %v7611 = vpack.c.b16 %v5388, %v5379
  %v7612 = vpack.c.b16 %v5389, %v5380
  %v7613 = vpack.c.b16 %v5390, %v5381
  %v7614 = vpack.c.b16 %v5391, %v5382
  %v7615 = vpack.c.b16 %v5392, %v5383
  %v7616 = vpack.c.b16 %v5393, %v5384
  %v7617 = vpack.c.b16 %v5394, %v5385
  %v7618 = vpack.c.b16 %v5404, %v5395
  %v7619 = vpack.c.b16 %v5405, %v5396
  %v7620 = vpack.c.b16 %v5406, %v5397
  %v7621 = vpack.c.b16 %v5407, %v5398
  %v7622 = vpack.c.b16 %v5408, %v5399
  %v7623 = vpack.c.b16 %v5409, %v5400
  %v7624 = vpack.c.b16 %v5410, %v5401
  %v7625 = vpack.c.b16 %v5411, %v5402
  %v7626 = vpack.c.b16 %v5412, %v5403
  %v7627 = vpack.c.b16 %v5422, %v5413
  %v7628 = vpack.c.b16 %v5423, %v5414
  %v7629 = vpack.c.b16 %v5424, %v5415
  %v7630 = vpack.c.b16 %v5425, %v5416
  %v7631 = vpack.c.b16 %v5426, %v5417
  %v7632 = vpack.c.b16 %v5427, %v5418
  %v7633 = vpack.c.b16 %v5428, %v5419
  %v7634 = vpack.c.b16 %v5429, %v5420
  %v7635 = vpack.c.b16 %v5430, %v5421
  %v7636 = vpack.c.b16 %v5440, %v5431
  %v7637 = vpack.c.b16 %v5441, %v5432
  %v7638 = vpack.c.b16 %v5442, %v5433
  %v7639 = vpack.c.b16 %v5443, %v5434
  %v7640 = vpack.c.b16 %v5444, %v5435
  %v7641 = vpack.c.b16 %v5445, %v5436
  %v7642 = vpack.c.b16 %v5446, %v5437
  %v7643 = vpack.c.b16 %v5447, %v5438
  %v7644 = vpack.c.b16 %v5448, %v5439
  %v7645 = vpack.c.b16 %v5458, %v5449
  %v7646 = vpack.c.b16 %v5459, %v5450
  %v7647 = vpack.c.b16 %v5460, %v5451
  %v7648 = vpack.c.b16 %v5461, %v5452
  %v7649 = vpack.c.b16 %v5462, %v5453
  %v7650 = vpack.c.b16 %v5463, %v5454
  %v7651 = vpack.c.b16 %v5464, %v5455
  %v7652 = vpack.c.b16 %v5465, %v5456
  %v7653 = vpack.c.b16 %v5466, %v5457
  %v7654 = vpack.c.b16 %v5476, %v5467
  %v7655 = vpack.c.b16 %v5477, %v5468
  %v7656 = vpack.c.b16 %v5478, %v5469
  %v7657 = vpack.c.b16 %v5479, %v5470
  %v7658 = vpack.c.b16 %v5480, %v5471
  %v7659 = vpack.c.b16 %v5481, %v5472
  %v7660 = vpack.c.b16 %v5482, %v5473
  %v7661 = vpack.c.b16 %v5483, %v5474
  %v7662 = vpack.c.b16 %v5484, %v5475
  %v7663 = vpack.c.b16 %v5494, %v5485
  %v7664 = vpack.c.b16 %v5495, %v5486
  %v7665 = vpack.c.b16 %v5496, %v5487
  %v7666 = vpack.c.b16 %v5497, %v5488
  %v7667 = vpack.c.b16 %v5498, %v5489
  %v7668 = vpack.c.b16 %v5499, %v5490
  %v7669 = vpack.c.b16 %v5500, %v5491
  %v7670 = vpack.c.b16 %v5501, %v5492
  %v7671 = vpack.c.b16 %v5502, %v5493
  %v7672 = vpack.c.b16 %v5512, %v5503
  %v7673 = vpack.c.b16 %v5513, %v5504
  %v7674 = vpack.c.b16 %v5514, %v5505
  %v7675 = vpack.c.b16 %v5515, %v5506
  %v7676 = vpack.c.b16 %v5516, %v5507
  %v7677 = vpack.c.b16 %v5517, %v5508
  %v7678 = vpack.c.b16 %v5518, %v5509
  %v7679 = vpack.c.b16 %v5519, %v5510
  %v7680 = vpack.c.b16 %v5520, %v5511
  %v7681 = vpack.c.b16 %v5530, %v5521
  %v7682 = vpack.c.b16 %v5531, %v5522
  %v7683 = vpack.c.b16 %v5532, %v5523
  %v7684 = vpack.c.b16 %v5533, %v5524
  %v7685 = vpack.c.b16 %v5534, %v5525
  %v7686 = vpack.c.b16 %v5535, %v5526
  %v7687 = vpack.c.b16 %v5536, %v5527
  %v7688 = vpack.c.b16 %v5537, %v5528
  %v7689 = vpack.c.b16 %v5538, %v5529
  %v7690 = vpack.c.b16 %v5548, %v5539
  %v7691 = vpack.c.b16 %v5549, %v5540
  %v7692 = vpack.c.b16 %v5550, %v5541
  %v7693 = vpack.c.b16 %v5551, %v5542
  %v7694 = vpack.c.b16 %v5552, %v5543
  %v7695 = vpack.c.b16 %v5553, %v5544
  %v7696 = vpack.c.b16 %v5554, %v5545
  %v7697 = vpack.c.b16 %v5555, %v5546
  %v7698 = vpack.c.b16 %v5556, %v5547
  %v7699 = vpack.c.b16 %v5566, %v5557
  %v7700 = vpack.c.b16 %v5567, %v5558
  %v7701 = vpack.c.b16 %v5568, %v5559
  %v7702 = vpack.c.b16 %v5569, %v5560
  %v7703 = vpack.c.b16 %v5570, %v5561
  %v7704 = vpack.c.b16 %v5571, %v5562
  %v7705 = vpack.c.b16 %v5572, %v5563
  %v7706 = vpack.c.b16 %v5573, %v5564
  %v7707 = vpack.c.b16 %v5574, %v5565
  %v7708 = vpack.c.b16 %v5584, %v5575
  %v7709 = vpack.c.b16 %v5585, %v5576
  %v7710 = vpack.c.b16 %v5586, %v5577
  %v7711 = vpack.c.b16 %v5587, %v5578
  %v7712 = vpack.c.b16 %v5588, %v5579
  %v7713 = vpack.c.b16 %v5589, %v5580
  %v7714 = vpack.c.b16 %v5590, %v5581
  %v7715 = vpack.c.b16 %v5591, %v5582
  %v7716 = vpack.c.b16 %v5592, %v5583
  %v7717 = vpack.c.b16 %v5602, %v5593
  %v7718 = vpack.c.b16 %v5603, %v5594
  %v7719 = vpack.c.b16 %v5604, %v5595
  %v7720 = vpack.c.b16 %v5605, %v5596
  %v7721 = vpack.c.b16 %v5606, %v5597
  %v7722 = vpack.c.b16 %v5607, %v5598
  %v7723 = vpack.c.b16 %v5608, %v5599
  %v7724 = vpack.c.b16 %v5609, %v5600
  %v7725 = vpack.c.b16 %v5610, %v5601
  %v7726 = vpack.c.b16 %v5620, %v5611
  %v7727 = vpack.c.b16 %v5621, %v5612
  %v7728 = vpack.c.b16 %v5622, %v5613
  %v7729 = vpack.c.b16 %v5623, %v5614
  %v7730 = vpack.c.b16 %v5624, %v5615
  %v7731 = vpack.c.b16 %v5625, %v5616
  %v7732 = vpack.c.b16 %v5626, %v5617
  %v7733 = vpack.c.b16 %v5627, %v5618
  %v7734 = vpack.c.b16 %v5628, %v5619
  %v7735 = vpack.c.b16 %v5638, %v5629
  %v7736 = vpack.c.b16 %v5639, %v5630
  %v7737 = vpack.c.b16 %v5640, %v5631
  %v7738 = vpack.c.b16 %v5641, %v5632
  %v7739 = vpack.c.b16 %v5642, %v5633
  %v7740 = vpack.c.b16 %v5643, %v5634
  %v7741 = vpack.c.b16 %v5644, %v5635
  %v7742 = vpack.c.b16 %v5645, %v5636
  %v7743 = vpack.c.b16 %v5646, %v5637
  %v7744 = vpack.c.b16 %v5656, %v5647
  %v7745 = vpack.c.b16 %v5657, %v5648
  %v7746 = vpack.c.b16 %v5658, %v5649
  %v7747 = vpack.c.b16 %v5659, %v5650
  %v7748 = vpack.c.b16 %v5660, %v5651
  %v7749 = vpack.c.b16 %v5661, %v5652
  %v7750 = vpack.c.b16 %v5662, %v5653
  %v7751 = vpack.c.b16 %v5663, %v5654
  %v7752 = vpack.c.b16 %v5664, %v5655
  %v7753 = vpack.c.b16 %v5674, %v5665
  %v7754 = vpack.c.b16 %v5675, %v5666
  %v7755 = vpack.c.b16 %v5676, %v5667
  %v7756 = vpack.c.b16 %v5677, %v5668
  %v7757 = vpack.c.b16 %v5678, %v5669
  %v7758 = vpack.c.b16 %v5679, %v5670
  %v7759 = vpack.c.b16 %v5680, %v5671
  %v7760 = vpack.c.b16 %v5681, %v5672
  %v7761 = vpack.c.b16 %v5682, %v5673
  %v7762 = vpack.c.b16 %v5692, %v5683
  %v7763 = vpack.c.b16 %v5693, %v5684
  %v7764 = vpack.c.b16 %v5694, %v5685
  %v7765 = vpack.c.b16 %v5695, %v5686
  %v7766 = vpack.c.b16 %v5696, %v5687
  %v7767 = vpack.c.b16 %v5697, %v5688
  %v7768 = vpack.c.b16 %v5698, %v5689
  %v7769 = vpack.c.b16 %v5699, %v5690
  %v7770 = vpack.c.b16 %v5700, %v5691
  %v7771 = vpack.c.b16 %v5710, %v5701
  %v7772 = vpack.c.b16 %v5711, %v5702
  %v7773 = vpack.c.b16 %v5712, %v5703
  %v7774 = vpack.c.b16 %v5713, %v5704
  %v7775 = vpack.c.b16 %v5714, %v5705
  %v7776 = vpack.c.b16 %v5715, %v5706
  %v7777 = vpack.c.b16 %v5716, %v5707
  %v7778 = vpack.c.b16 %v5717, %v5708
  %v7779 = vpack.c.b16 %v5718, %v5709
  %v7780 = vpack.c.b16 %v5728, %v5719
  %v7781 = vpack.c.b16 %v5729, %v5720
  %v7782 = vpack.c.b16 %v5730, %v5721
  %v7783 = vpack.c.b16 %v5731, %v5722
  %v7784 = vpack.c.b16 %v5732, %v5723
  %v7785 = vpack.c.b16 %v5733, %v5724
  %v7786 = vpack.c.b16 %v5734, %v5725
  %v7787 = vpack.c.b16 %v5735, %v5726
  %v7788 = vpack.c.b16 %v5736, %v5727
  %v7789 = vpack.c.b16 %v5746, %v5737
  %v7790 = vpack.c.b16 %v5747, %v5738
  %v7791 = vpack.c.b16 %v5748, %v5739
  %v7792 = vpack.c.b16 %v5749, %v5740
  %v7793 = vpack.c.b16 %v5750, %v5741
  %v7794 = vpack.c.b16 %v5751, %v5742
  %v7795 = vpack.c.b16 %v5752, %v5743
  %v7796 = vpack.c.b16 %v5753, %v5744
  %v7797 = vpack.c.b16 %v5754, %v5745
  %v7798 = vpack.c.b16 %v5764, %v5755
  %v7799 = vpack.c.b16 %v5765, %v5756
  %v7800 = vpack.c.b16 %v5766, %v5757
  %v7801 = vpack.c.b16 %v5767, %v5758
  %v7802 = vpack.c.b16 %v5768, %v5759
  %v7803 = vpack.c.b16 %v5769, %v5760
  %v7804 = vpack.c.b16 %v5770, %v5761
  %v7805 = vpack.c.b16 %v5771, %v5762
  %v7806 = vpack.c.b16 %v5772, %v5763
  %v7807 = vpack.c.b16 %v5782, %v5773
  %v7808 = vpack.c.b16 %v5783, %v5774
  %v7809 = vpack.c.b16 %v5784, %v5775
  %v7810 = vpack.c.b16 %v5785, %v5776
  %v7811 = vpack.c.b16 %v5786, %v5777
  %v7812 = vpack.c.b16 %v5787, %v5778
  %v7813 = vpack.c.b16 %v5788, %v5779
  %v7814 = vpack.c.b16 %v5789, %v5780
  %v7815 = vpack.c.b16 %v5790, %v5781
  %v7816 = vpack.c.b16 %v5800, %v5791
  %v7817 = vpack.c.b16 %v5801, %v5792
  %v7818 = vpack.c.b16 %v5802, %v5793
  %v7819 = vpack.c.b16 %v5803, %v5794
  %v7820 = vpack.c.b16 %v5804, %v5795
  %v7821 = vpack.c.b16 %v5805, %v5796
  %v7822 = vpack.c.b16 %v5806, %v5797
  %v7823 = vpack.c.b16 %v5807, %v5798
  %v7824 = vpack.c.b16 %v5808, %v5799
  %v7825 = vpack.c.b16 %v5818, %v5809
  %v7826 = vpack.c.b16 %v5819, %v5810
  %v7827 = vpack.c.b16 %v5820, %v5811
  %v7828 = vpack.c.b16 %v5821, %v5812
  %v7829 = vpack.c.b16 %v5822, %v5813
  %v7830 = vpack.c.b16 %v5823, %v5814
  %v7831 = vpack.c.b16 %v5824, %v5815
  %v7832 = vpack.c.b16 %v5825, %v5816
  %v7833 = vpack.c.b16 %v5826, %v5817
  %v7834 = vpack.c.b16 %v5836, %v5827
  %v7835 = vpack.c.b16 %v5837, %v5828
  %v7836 = vpack.c.b16 %v5838, %v5829
  %v7837 = vpack.c.b16 %v5839, %v5830
  %v7838 = vpack.c.b16 %v5840, %v5831
  %v7839 = vpack.c.b16 %v5841, %v5832
  %v7840 = vpack.c.b16 %v5842, %v5833
  %v7841 = vpack.c.b16 %v5843, %v5834
  %v7842 = vpack.c.b16 %v5844, %v5835
  %v7843 = vpack.c.b16 %v5854, %v5845
  %v7844 = vpack.c.b16 %v5855, %v5846
  %v7845 = vpack.c.b16 %v5856, %v5847
  %v7846 = vpack.c.b16 %v5857, %v5848
  %v7847 = vpack.c.b16 %v5858, %v5849
  %v7848 = vpack.c.b16 %v5859, %v5850
  %v7849 = vpack.c.b16 %v5860, %v5851
  %v7850 = vpack.c.b16 %v5861, %v5852
  %v7851 = vpack.c.b16 %v5862, %v5853
  %v7852 = vpack.c.b16 %v5872, %v5863
  %v7853 = vpack.c.b16 %v5873, %v5864
  %v7854 = vpack.c.b16 %v5874, %v5865
  %v7855 = vpack.c.b16 %v5875, %v5866
  %v7856 = vpack.c.b16 %v5876, %v5867
  %v7857 = vpack.c.b16 %v5877, %v5868
  %v7858 = vpack.c.b16 %v5878, %v5869
  %v7859 = vpack.c.b16 %v5879, %v5870
  %v7860 = vpack.c.b16 %v5880, %v5871
  %v7861 = vpack.c.b16 %v5890, %v5881
  %v7862 = vpack.c.b16 %v5891, %v5882
  %v7863 = vpack.c.b16 %v5892, %v5883
  %v7864 = vpack.c.b16 %v5893, %v5884
  %v7865 = vpack.c.b16 %v5894, %v5885
  %v7866 = vpack.c.b16 %v5895, %v5886
  %v7867 = vpack.c.b16 %v5896, %v5887
  %v7868 = vpack.c.b16 %v5897, %v5888
  %v7869 = vpack.c.b16 %v5898, %v5889
  %v7870 = vpack.c.b16 %v5908, %v5899
  %v7871 = vpack.c.b16 %v5909, %v5900
  %v7872 = vpack.c.b16 %v5910, %v5901
  %v7873 = vpack.c.b16 %v5911, %v5902
  %v7874 = vpack.c.b16 %v5912, %v5903
  %v7875 = vpack.c.b16 %v5913, %v5904
  %v7876 = vpack.c.b16 %v5914, %v5905
  %v7877 = vpack.c.b16 %v5915, %v5906
  %v7878 = vpack.c.b16 %v5916, %v5907
  %v7879 = vpack.c.b16 %v5926, %v5917
  %v7880 = vpack.c.b16 %v5927, %v5918
  %v7881 = vpack.c.b16 %v5928, %v5919
  %v7882 = vpack.c.b16 %v5929, %v5920
  %v7883 = vpack.c.b16 %v5930, %v5921
  %v7884 = vpack.c.b16 %v5931, %v5922
  %v7885 = vpack.c.b16 %v5932, %v5923
  %v7886 = vpack.c.b16 %v5933, %v5924
  %v7887 = vpack.c.b16 %v5934, %v5925
  %v7888 = vpack.c.b16 %v5944, %v5935
  %v7889 = vpack.c.b16 %v5945, %v5936
  %v7890 = vpack.c.b16 %v5946, %v5937
  %v7891 = vpack.c.b16 %v5947, %v5938
  %v7892 = vpack.c.b16 %v5948, %v5939
  %v7893 = vpack.c.b16 %v5949, %v5940
  %v7894 = vpack.c.b16 %v5950, %v5941
  %v7895 = vpack.c.b16 %v5951, %v5942
  %v7896 = vpack.c.b16 %v5952, %v5943
  %v7897 = vpack.c.b16 %v5962, %v5953
  %v7898 = vpack.c.b16 %v5963, %v5954
  %v7899 = vpack.c.b16 %v5964, %v5955
  %v7900 = vpack.c.b16 %v5965, %v5956
  %v7901 = vpack.c.b16 %v5966, %v5957
  %v7902 = vpack.c.b16 %v5967, %v5958
  %v7903 = vpack.c.b16 %v5968, %v5959
  %v7904 = vpack.c.b16 %v5969, %v5960
  %v7905 = vpack.c.b16 %v5970, %v5961
  %v7906 = vpack.c.b16 %v5980, %v5971
  %v7907 = vpack.c.b16 %v5981, %v5972
  %v7908 = vpack.c.b16 %v5982, %v5973
  %v7909 = vpack.c.b16 %v5983, %v5974
  %v7910 = vpack.c.b16 %v5984, %v5975
  %v7911 = vpack.c.b16 %v5985, %v5976
  %v7912 = vpack.c.b16 %v5986, %v5977
  %v7913 = vpack.c.b16 %v5987, %v5978
  %v7914 = vpack.c.b16 %v5988, %v5979
  %v7915 = vpack.c.b16 %v5998, %v5989
  %v7916 = vpack.c.b16 %v5999, %v5990
  %v7917 = vpack.c.b16 %v6000, %v5991
  %v7918 = vpack.c.b16 %v6001, %v5992
  %v7919 = vpack.c.b16 %v6002, %v5993
  %v7920 = vpack.c.b16 %v6003, %v5994
  %v7921 = vpack.c.b16 %v6004, %v5995
  %v7922 = vpack.c.b16 %v6005, %v5996
  %v7923 = vpack.c.b16 %v6006, %v5997
  %v7924 = vpack.c.b16 %v6016, %v6007
  %v7925 = vpack.c.b16 %v6017, %v6008
  %v7926 = vpack.c.b16 %v6018, %v6009
  %v7927 = vpack.c.b16 %v6019, %v6010
  %v7928 = vpack.c.b16 %v6020, %v6011
  %v7929 = vpack.c.b16 %v6021, %v6012
  %v7930 = vpack.c.b16 %v6022, %v6013
  %v7931 = vpack.c.b16 %v6023, %v6014
  %v7932 = vpack.c.b16 %v6024, %v6015
  %v7933 = vpack.c.b16 %v6034, %v6025
  %v7934 = vpack.c.b16 %v6035, %v6026
  %v7935 = vpack.c.b16 %v6036, %v6027
  %v7936 = vpack.c.b16 %v6037, %v6028
  %v7937 = vpack.c.b16 %v6038, %v6029
  %v7938 = vpack.c.b16 %v6039, %v6030
  %v7939 = vpack.c.b16 %v6040, %v6031
  %v7940 = vpack.c.b16 %v6041, %v6032
  %v7941 = vpack.c.b16 %v6042, %v6033
  %v7942 = vpack.c.b16 %v6052, %v6043
  %v7943 = vpack.c.b16 %v6053, %v6044
  %v7944 = vpack.c.b16 %v6054, %v6045
  %v7945 = vpack.c.b16 %v6055, %v6046
  %v7946 = vpack.c.b16 %v6056, %v6047
  %v7947 = vpack.c.b16 %v6057, %v6048
  %v7948 = vpack.c.b16 %v6058, %v6049
  %v7949 = vpack.c.b16 %v6059, %v6050
  %v7950 = vpack.c.b16 %v6060, %v6051
  %v7951 = vpack.c.b16 %v6070, %v6061
  %v7952 = vpack.c.b16 %v6071, %v6062
  %v7953 = vpack.c.b16 %v6072, %v6063
  %v7954 = vpack.c.b16 %v6073, %v6064
  %v7955 = vpack.c.b16 %v6074, %v6065
  %v7956 = vpack.c.b16 %v6075, %v6066
  %v7957 = vpack.c.b16 %v6076, %v6067
  %v7958 = vpack.c.b16 %v6077, %v6068
  %v7959 = vpack.c.b16 %v6078, %v6069
  %v7960 = vpack.c.b16 %v6088, %v6079
  %v7961 = vpack.c.b16 %v6089, %v6080
  %v7962 = vpack.c.b16 %v6090, %v6081
  %v7963 = vpack.c.b16 %v6091, %v6082
  %v7964 = vpack.c.b16 %v6092, %v6083
  %v7965 = vpack.c.b16 %v6093, %v6084
  %v7966 = vpack.c.b16 %v6094, %v6085
  %v7967 = vpack.c.b16 %v6095, %v6086
  %v7968 = vpack.c.b16 %v6096, %v6087
  %v7969 = vpack.c.b16 %v6106, %v6097
  %v7970 = vpack.c.b16 %v6107, %v6098
  %v7971 = vpack.c.b16 %v6108, %v6099
  %v7972 = vpack.c.b16 %v6109, %v6100
  %v7973 = vpack.c.b16 %v6110, %v6101
  %v7974 = vpack.c.b16 %v6111, %v6102
  %v7975 = vpack.c.b16 %v6112, %v6103
  %v7976 = vpack.c.b16 %v6113, %v6104
  %v7977 = vpack.c.b16 %v6114, %v6105
  %v7978 = vpack.c.b16 %v6124, %v6115
  %v7979 = vpack.c.b16 %v6125, %v6116
  %v7980 = vpack.c.b16 %v6126, %v6117
  %v7981 = vpack.c.b16 %v6127, %v6118
  %v7982 = vpack.c.b16 %v6128, %v6119
  %v7983 = vpack.c.b16 %v6129, %v6120
  %v7984 = vpack.c.b16 %v6130, %v6121
  %v7985 = vpack.c.b16 %v6131, %v6122
  %v7986 = vpack.c.b16 %v6132, %v6123
  %v7987 = vpack.c.b16 %v6142, %v6133
  %v7988 = vpack.c.b16 %v6143, %v6134
  %v7989 = vpack.c.b16 %v6144, %v6135
  %v7990 = vpack.c.b16 %v6145, %v6136
  %v7991 = vpack.c.b16 %v6146, %v6137
  %v7992 = vpack.c.b16 %v6147, %v6138
  %v7993 = vpack.c.b16 %v6148, %v6139
  %v7994 = vpack.c.b16 %v6149, %v6140
  %v7995 = vpack.c.b16 %v6150, %v6141
  %v7996 = vpack.c.b16 %v6160, %v6151
  %v7997 = vpack.c.b16 %v6161, %v6152
  %v7998 = vpack.c.b16 %v6162, %v6153
  %v7999 = vpack.c.b16 %v6163, %v6154
  %v8000 = vpack.c.b16 %v6164, %v6155
  %v8001 = vpack.c.b16 %v6165, %v6156
  %v8002 = vpack.c.b16 %v6166, %v6157
  %v8003 = vpack.c.b16 %v6167, %v6158
  %v8004 = vpack.c.b16 %v6168, %v6159
  %v8005 = vpack.c.b16 %v6178, %v6169
  %v8006 = vpack.c.b16 %v6179, %v6170
  %v8007 = vpack.c.b16 %v6180, %v6171
  %v8008 = vpack.c.b16 %v6181, %v6172
  %v8009 = vpack.c.b16 %v6182, %v6173
  %v8010 = vpack.c.b16 %v6183, %v6174
  %v8011 = vpack.c.b16 %v6184, %v6175
  %v8012 = vpack.c.b16 %v6185, %v6176
  %v8013 = vpack.c.b16 %v6186, %v6177
  %v8014 = vpack.c.b16 %v6196, %v6187
  %v8015 = vpack.c.b16 %v6197, %v6188
  %v8016 = vpack.c.b16 %v6198, %v6189
  %v8017 = vpack.c.b16 %v6199, %v6190
  %v8018 = vpack.c.b16 %v6200, %v6191
  %v8019 = vpack.c.b16 %v6201, %v6192
  %v8020 = vpack.c.b16 %v6202, %v6193
  %v8021 = vpack.c.b16 %v6203, %v6194
  %v8022 = vpack.c.b16 %v6204, %v6195
  %v8023 = vpack.c.b16 %v6214, %v6205
  %v8024 = vpack.c.b16 %v6215, %v6206
  %v8025 = vpack.c.b16 %v6216, %v6207
  %v8026 = vpack.c.b16 %v6217, %v6208
  %v8027 = vpack.c.b16 %v6218, %v6209
  %v8028 = vpack.c.b16 %v6219, %v6210
  %v8029 = vpack.c.b16 %v6220, %v6211
  %v8030 = vpack.c.b16 %v6221, %v6212
  %v8031 = vpack.c.b16 %v6222, %v6213
  %v8032 = vpack.c.b16 %v6232, %v6223
  %v8033 = vpack.c.b16 %v6233, %v6224
  %v8034 = vpack.c.b16 %v6234, %v6225
  %v8035 = vpack.c.b16 %v6235, %v6226
  %v8036 = vpack.c.b16 %v6236, %v6227
  %v8037 = vpack.c.b16 %v6237, %v6228
  %v8038 = vpack.c.b16 %v6238, %v6229
  %v8039 = vpack.c.b16 %v6239, %v6230
  %v8040 = vpack.c.b16 %v6240, %v6231
  %v8041 = vpack.c.b16 %v6250, %v6241
  %v8042 = vpack.c.b16 %v6251, %v6242
  %v8043 = vpack.c.b16 %v6252, %v6243
  %v8044 = vpack.c.b16 %v6253, %v6244
  %v8045 = vpack.c.b16 %v6254, %v6245
  %v8046 = vpack.c.b16 %v6255, %v6246
  %v8047 = vpack.c.b16 %v6256, %v6247
  %v8048 = vpack.c.b16 %v6257, %v6248
  %v8049 = vpack.c.b16 %v6258, %v6249
  %v8050 = vpack.c.b16 %v6268, %v6259
  %v8051 = vpack.c.b16 %v6269, %v6260
  %v8052 = vpack.c.b16 %v6270, %v6261
  %v8053 = vpack.c.b16 %v6271, %v6262
  %v8054 = vpack.c.b16 %v6272, %v6263
  %v8055 = vpack.c.b16 %v6273, %v6264
  %v8056 = vpack.c.b16 %v6274, %v6265
  %v8057 = vpack.c.b16 %v6275, %v6266
  %v8058 = vpack.c.b16 %v6276, %v6267
  %v8059 = vpack.c.b16 %v6286, %v6277
  %v8060 = vpack.c.b16 %v6287, %v6278
  %v8061 = vpack.c.b16 %v6288, %v6279
  %v8062 = vpack.c.b16 %v6289, %v6280
  %v8063 = vpack.c.b16 %v6290, %v6281
  %v8064 = vpack.c.b16 %v6291, %v6282
  %v8065 = vpack.c.b16 %v6292, %v6283
  %v8066 = vpack.c.b16 %v6293, %v6284
  %v8067 = vpack.c.b16 %v6294, %v6285
  %v8068 = vpack.c.b16 %v6304, %v6295
  %v8069 = vpack.c.b16 %v6305, %v6296
  %v8070 = vpack.c.b16 %v6306, %v6297
  %v8071 = vpack.c.b16 %v6307, %v6298
  %v8072 = vpack.c.b16 %v6308, %v6299
  %v8073 = vpack.c.b16 %v6309, %v6300
  %v8074 = vpack.c.b16 %v6310, %v6301
  %v8075 = vpack.c.b16 %v6311, %v6302
  %v8076 = vpack.c.b16 %v6312, %v6303
  %v8077 = vpack.c.b16 %v6322, %v6313
  %v8078 = vpack.c.b16 %v6323, %v6314
  %v8079 = vpack.c.b16 %v6324, %v6315
  %v8080 = vpack.c.b16 %v6325, %v6316
  %v8081 = vpack.c.b16 %v6326, %v6317
  %v8082 = vpack.c.b16 %v6327, %v6318
  %v8083 = vpack.c.b16 %v6328, %v6319
  %v8084 = vpack.c.b16 %v6329, %v6320
  %v8085 = vpack.c.b16 %v6330, %v6321
  %v8086 = vpack.c.b16 %v6340, %v6331
  %v8087 = vpack.c.b16 %v6341, %v6332
  %v8088 = vpack.c.b16 %v6342, %v6333
  %v8089 = vpack.c.b16 %v6343, %v6334
  %v8090 = vpack.c.b16 %v6344, %v6335
  %v8091 = vpack.c.b16 %v6345, %v6336
  %v8092 = vpack.c.b16 %v6346, %v6337
  %v8093 = vpack.c.b16 %v6347, %v6338
  %v8094 = vpack.c.b16 %v6348, %v6339
  %v8095 = vpack.c.b16 %v6358, %v6349
  %v8096 = vpack.c.b16 %v6359, %v6350
  %v8097 = vpack.c.b16 %v6360, %v6351
  %v8098 = vpack.c.b16 %v6361, %v6352
  %v8099 = vpack.c.b16 %v6362, %v6353
  %v8100 = vpack.c.b16 %v6363, %v6354
  %v8101 = vpack.c.b16 %v6364, %v6355
  %v8102 = vpack.c.b16 %v6365, %v6356
  %v8103 = vpack.c.b16 %v6366, %v6357
  %v8104 = vpack.c.b16 %v6376, %v6367
  %v8105 = vpack.c.b16 %v6377, %v6368
  %v8106 = vpack.c.b16 %v6378, %v6369
  %v8107 = vpack.c.b16 %v6379, %v6370
  %v8108 = vpack.c.b16 %v6380, %v6371
  %v8109 = vpack.c.b16 %v6381, %v6372
  %v8110 = vpack.c.b16 %v6382, %v6373
  %v8111 = vpack.c.b16 %v6383, %v6374
  %v8112 = vpack.c.b16 %v6384, %v6375
  %v8113 = vpack.c.b16 %v6394, %v6385
  %v8114 = vpack.c.b16 %v6395, %v6386
  %v8115 = vpack.c.b16 %v6396, %v6387
  %v8116 = vpack.c.b16 %v6397, %v6388
  %v8117 = vpack.c.b16 %v6398, %v6389
  %v8118 = vpack.c.b16 %v6399, %v6390
  %v8119 = vpack.c.b16 %v6400, %v6391
  %v8120 = vpack.c.b16 %v6401, %v6392
  %v8121 = vpack.c.b16 %v6402, %v6393
  %v8122 = vpack.c.b16 %v6412, %v6403
  %v8123 = vpack.c.b16 %v6413, %v6404
  %v8124 = vpack.c.b16 %v6414, %v6405
  %v8125 = vpack.c.b16 %v6415, %v6406
  %v8126 = vpack.c.b16 %v6416, %v6407
  %v8127 = vpack.c.b16 %v6417, %v6408
  %v8128 = vpack.c.b16 %v6418, %v6409
  %v8129 = vpack.c.b16 %v6419, %v6410
  %v8130 = vpack.c.b16 %v6420, %v6411
  %v8131 = vpack.c.b16 %v6430, %v6421
  %v8132 = vpack.c.b16 %v6431, %v6422
  %v8133 = vpack.c.b16 %v6432, %v6423
  %v8134 = vpack.c.b16 %v6433, %v6424
  %v8135 = vpack.c.b16 %v6434, %v6425
  %v8136 = vpack.c.b16 %v6435, %v6426
  %v8137 = vpack.c.b16 %v6436, %v6427
  %v8138 = vpack.c.b16 %v6437, %v6428
  %v8139 = vpack.c.b16 %v6438, %v6429
  %v8140 = vpack.c.b16 %v6448, %v6439
  %v8141 = vpack.c.b16 %v6449, %v6440
  %v8142 = vpack.c.b16 %v6450, %v6441
  %v8143 = vpack.c.b16 %v6451, %v6442
  %v8144 = vpack.c.b16 %v6452, %v6443
  %v8145 = vpack.c.b16 %v6453, %v6444
  %v8146 = vpack.c.b16 %v6454, %v6445
  %v8147 = vpack.c.b16 %v6455, %v6446
  %v8148 = vpack.c.b16 %v6456, %v6447
  %v8149 = vpack.c.b16 %v6466, %v6457
  %v8150 = vpack.c.b16 %v6467, %v6458
  %v8151 = vpack.c.b16 %v6468, %v6459
  %v8152 = vpack.c.b16 %v6469, %v6460
  %v8153 = vpack.c.b16 %v6470, %v6461
  %v8154 = vpack.c.b16 %v6471, %v6462
  %v8155 = vpack.c.b16 %v6472, %v6463
  %v8156 = vpack.c.b16 %v6473, %v6464
  %v8157 = vpack.c.b16 %v6474, %v6465
  %v8158 = vpack.c.b16 %v6484, %v6475
  %v8159 = vpack.c.b16 %v6485, %v6476
  %v8160 = vpack.c.b16 %v6486, %v6477
  %v8161 = vpack.c.b16 %v6487, %v6478
  %v8162 = vpack.c.b16 %v6488, %v6479
  %v8163 = vpack.c.b16 %v6489, %v6480
  %v8164 = vpack.c.b16 %v6490, %v6481
  %v8165 = vpack.c.b16 %v6491, %v6482
  %v8166 = vpack.c.b16 %v6492, %v6483
  %v8167 = vpack.c.b16 %v6502, %v6493
  %v8168 = vpack.c.b16 %v6503, %v6494
  %v8169 = vpack.c.b16 %v6504, %v6495
  %v8170 = vpack.c.b16 %v6505, %v6496
  %v8171 = vpack.c.b16 %v6506, %v6497
  %v8172 = vpack.c.b16 %v6507, %v6498
  %v8173 = vpack.c.b16 %v6508, %v6499
  %v8174 = vpack.c.b16 %v6509, %v6500
  %v8175 = vpack.c.b16 %v6510, %v6501
  %v8176 = vpack.c.b16 %v6520, %v6511
  %v8177 = vpack.c.b16 %v6521, %v6512
  %v8178 = vpack.c.b16 %v6522, %v6513
  %v8179 = vpack.c.b16 %v6523, %v6514
  %v8180 = vpack.c.b16 %v6524, %v6515
  %v8181 = vpack.c.b16 %v6525, %v6516
  %v8182 = vpack.c.b16 %v6526, %v6517
  %v8183 = vpack.c.b16 %v6527, %v6518
  %v8184 = vpack.c.b16 %v6528, %v6519
  %v8185 = vpack.c.b16 %v6538, %v6529
  %v8186 = vpack.c.b16 %v6539, %v6530
  %v8187 = vpack.c.b16 %v6540, %v6531
  %v8188 = vpack.c.b16 %v6541, %v6532
  %v8189 = vpack.c.b16 %v6542, %v6533
  %v8190 = vpack.c.b16 %v6543, %v6534
  %v8191 = vpack.c.b16 %v6544, %v6535
  %v8192 = vpack.c.b16 %v6545, %v6536
  %v8193 = vpack.c.b16 %v6546, %v6537
  %v8194 = vpack.c.b16 %v6556, %v6547
  %v8195 = vpack.c.b16 %v6557, %v6548
  %v8196 = vpack.c.b16 %v6558, %v6549
  %v8197 = vpack.c.b16 %v6559, %v6550
  %v8198 = vpack.c.b16 %v6560, %v6551
  %v8199 = vpack.c.b16 %v6561, %v6552
  %v8200 = vpack.c.b16 %v6562, %v6553
  %v8201 = vpack.c.b16 %v6563, %v6554
  %v8202 = vpack.c.b16 %v6564, %v6555
  %v8203 = vpack.c.b16 %v6574, %v6565
  %v8204 = vpack.c.b16 %v6575, %v6566
  %v8205 = vpack.c.b16 %v6576, %v6567
  %v8206 = vpack.c.b16 %v6577, %v6568
  %v8207 = vpack.c.b16 %v6578, %v6569
  %v8208 = vpack.c.b16 %v6579, %v6570
  %v8209 = vpack.c.b16 %v6580, %v6571
  %v8210 = vpack.c.b16 %v6581, %v6572
  %v8211 = vpack.c.b16 %v6582, %v6573
  %v8212 = vpack.c.b16 %v6592, %v6583
  %v8213 = vpack.c.b16 %v6593, %v6584
  %v8214 = vpack.c.b16 %v6594, %v6585
  %v8215 = vpack.c.b16 %v6595, %v6586
  %v8216 = vpack.c.b16 %v6596, %v6587
  %v8217 = vpack.c.b16 %v6597, %v6588
  %v8218 = vpack.c.b16 %v6598, %v6589
  %v8219 = vpack.c.b16 %v6599, %v6590
  %v8220 = vpack.c.b16 %v6600, %v6591
  %v8221 = vpack.c.b16 %v6610, %v6601
  %v8222 = vpack.c.b16 %v6611, %v6602
  %v8223 = vpack.c.b16 %v6612, %v6603
  %v8224 = vpack.c.b16 %v6613, %v6604
  %v8225 = vpack.c.b16 %v6614, %v6605
  %v8226 = vpack.c.b16 %v6615, %v6606
  %v8227 = vpack.c.b16 %v6616, %v6607
  %v8228 = vpack.c.b16 %v6617, %v6608
  %v8229 = vpack.c.b16 %v6618, %v6609
  %v8230 = vpack.c.b16 %v6628, %v6619
  %v8231 = vpack.c.b16 %v6629, %v6620
  %v8232 = vpack.c.b16 %v6630, %v6621
  %v8233 = vpack.c.b16 %v6631, %v6622
  %v8234 = vpack.c.b16 %v6632, %v6623
  %v8235 = vpack.c.b16 %v6633, %v6624
  %v8236 = vpack.c.b16 %v6634, %v6625
  %v8237 = vpack.c.b16 %v6635, %v6626
  %v8238 = vpack.c.b16 %v6636, %v6627
  %v8239 = vpack.c.b16 %v6646, %v6637
  %v8240 = vpack.c.b16 %v6647, %v6638
  %v8241 = vpack.c.b16 %v6648, %v6639
  %v8242 = vpack.c.b16 %v6649, %v6640
  %v8243 = vpack.c.b16 %v6650, %v6641
  %v8244 = vpack.c.b16 %v6651, %v6642
  %v8245 = vpack.c.b16 %v6652, %v6643
  %v8246 = vpack.c.b16 %v6653, %v6644
  %v8247 = vpack.c.b16 %v6654, %v6645
  %v8248 = vpack.c.b16 %v6664, %v6655
  %v8249 = vpack.c.b16 %v6665, %v6656
  %v8250 = vpack.c.b16 %v6666, %v6657
  %v8251 = vpack.c.b16 %v6667, %v6658
  %v8252 = vpack.c.b16 %v6668, %v6659
  %v8253 = vpack.c.b16 %v6669, %v6660
  %v8254 = vpack.c.b16 %v6670, %v6661
  %v8255 = vpack.c.b16 %v6671, %v6662
  %v8256 = vpack.c.b16 %v6672, %v6663
  %v8257 = vpack.c.b16 %v6682, %v6673
  %v8258 = vpack.c.b16 %v6683, %v6674
  %v8259 = vpack.c.b16 %v6684, %v6675
  %v8260 = vpack.c.b16 %v6685, %v6676
  %v8261 = vpack.c.b16 %v6686, %v6677
  %v8262 = vpack.c.b16 %v6687, %v6678
  %v8263 = vpack.c.b16 %v6688, %v6679
  %v8264 = vpack.c.b16 %v6689, %v6680
  %v8265 = vpack.c.b16 %v6690, %v6681
  %v8266 = vpack.c.b16 %v6700, %v6691
  %v8267 = vpack.c.b16 %v6701, %v6692
  %v8268 = vpack.c.b16 %v6702, %v6693
  %v8269 = vpack.c.b16 %v6703, %v6694
  %v8270 = vpack.c.b16 %v6704, %v6695
  %v8271 = vpack.c.b16 %v6705, %v6696
  %v8272 = vpack.c.b16 %v6706, %v6697
  %v8273 = vpack.c.b16 %v6707, %v6698
  %v8274 = vpack.c.b16 %v6708, %v6699
  %v8275 = vpack.c.b16 %v6718, %v6709
  %v8276 = vpack.c.b16 %v6719, %v6710
  %v8277 = vpack.c.b16 %v6720, %v6711
  %v8278 = vpack.c.b16 %v6721, %v6712
  %v8279 = vpack.c.b16 %v6722, %v6713
  %v8280 = vpack.c.b16 %v6723, %v6714
  %v8281 = vpack.c.b16 %v6724, %v6715
  %v8282 = vpack.c.b16 %v6725, %v6716
  %v8283 = vpack.c.b16 %v6726, %v6717
  %v8284 = vpack.c.b16 %v6736, %v6727
  %v8285 = vpack.c.b16 %v6737, %v6728
  %v8286 = vpack.c.b16 %v6738, %v6729
  %v8287 = vpack.c.b16 %v6739, %v6730
  %v8288 = vpack.c.b16 %v6740, %v6731
  %v8289 = vpack.c.b16 %v6741, %v6732
  %v8290 = vpack.c.b16 %v6742, %v6733
  %v8291 = vpack.c.b16 %v6743, %v6734
  %v8292 = vpack.c.b16 %v6744, %v6735
  %v8293 = vpack.c.b16 %v6754, %v6745
  %v8294 = vpack.c.b16 %v6755, %v6746
  %v8295 = vpack.c.b16 %v6756, %v6747
  %v8296 = vpack.c.b16 %v6757, %v6748
  %v8297 = vpack.c.b16 %v6758, %v6749
  %v8298 = vpack.c.b16 %v6759, %v6750
  %v8299 = vpack.c.b16 %v6760, %v6751
  %v8300 = vpack.c.b16 %v6761, %v6752
  %v8301 = vpack.c.b16 %v6762, %v6753
  %v8302 = vpack.c.b16 %v6772, %v6763
  %v8303 = vpack.c.b16 %v6773, %v6764
  %v8304 = vpack.c.b16 %v6774, %v6765
  %v8305 = vpack.c.b16 %v6775, %v6766
  %v8306 = vpack.c.b16 %v6776, %v6767
  %v8307 = vpack.c.b16 %v6777, %v6768
  %v8308 = vpack.c.b16 %v6778, %v6769
  %v8309 = vpack.c.b16 %v6779, %v6770
  %v8310 = vpack.c.b16 %v6780, %v6771
  %v8311 = vpack.c.b16 %v6790, %v6781
  %v8312 = vpack.c.b16 %v6791, %v6782
  %v8313 = vpack.c.b16 %v6792, %v6783
  %v8314 = vpack.c.b16 %v6793, %v6784
  %v8315 = vpack.c.b16 %v6794, %v6785
  %v8316 = vpack.c.b16 %v6795, %v6786
  %v8317 = vpack.c.b16 %v6796, %v6787
  %v8318 = vpack.c.b16 %v6797, %v6788
  %v8319 = vpack.c.b16 %v6798, %v6789
  %v8320 = vpack.c.b16 %v6808, %v6799
  %v8321 = vpack.c.b16 %v6809, %v6800
  %v8322 = vpack.c.b16 %v6810, %v6801
  %v8323 = vpack.c.b16 %v6811, %v6802
  %v8324 = vpack.c.b16 %v6812, %v6803
  %v8325 = vpack.c.b16 %v6813, %v6804
  %v8326 = vpack.c.b16 %v6814, %v6805
  %v8327 = vpack.c.b16 %v6815, %v6806
  %v8328 = vpack.c.b16 %v6816, %v6807
  %v8329 = vpack.c.b16 %v6826, %v6817
  %v8330 = vpack.c.b16 %v6827, %v6818
  %v8331 = vpack.c.b16 %v6828, %v6819
  %v8332 = vpack.c.b16 %v6829, %v6820
  %v8333 = vpack.c.b16 %v6830, %v6821
  %v8334 = vpack.c.b16 %v6831, %v6822
  %v8335 = vpack.c.b16 %v6832, %v6823
  %v8336 = vpack.c.b16 %v6833, %v6824
  %v8337 = vpack.c.b16 %v6834, %v6825
  %v8338 = vpack.c.b16 %v6844, %v6835
  %v8339 = vpack.c.b16 %v6845, %v6836
  %v8340 = vpack.c.b16 %v6846, %v6837
  %v8341 = vpack.c.b16 %v6847, %v6838
  %v8342 = vpack.c.b16 %v6848, %v6839
  %v8343 = vpack.c.b16 %v6849, %v6840
  %v8344 = vpack.c.b16 %v6850, %v6841
  %v8345 = vpack.c.b16 %v6851, %v6842
  %v8346 = vpack.c.b16 %v6852, %v6843
  %v8347 = vpack.c.b16 %v6862, %v6853
  %v8348 = vpack.c.b16 %v6863, %v6854
  %v8349 = vpack.c.b16 %v6864, %v6855
  %v8350 = vpack.c.b16 %v6865, %v6856
  %v8351 = vpack.c.b16 %v6866, %v6857
  %v8352 = vpack.c.b16 %v6867, %v6858
  %v8353 = vpack.c.b16 %v6868, %v6859
  %v8354 = vpack.c.b16 %v6869, %v6860
  %v8355 = vpack.c.b16 %v6870, %v6861
  %v8356 = vpack.c.b16 %v6880, %v6871
  %v8357 = vpack.c.b16 %v6881, %v6872
  %v8358 = vpack.c.b16 %v6882, %v6873
  %v8359 = vpack.c.b16 %v6883, %v6874
  %v8360 = vpack.c.b16 %v6884, %v6875
  %v8361 = vpack.c.b16 %v6885, %v6876
  %v8362 = vpack.c.b16 %v6886, %v6877
  %v8363 = vpack.c.b16 %v6887, %v6878
  %v8364 = vpack.c.b16 %v6888, %v6879
  %v8365 = vpack.c.b16 %v6898, %v6889
  %v8366 = vpack.c.b16 %v6899, %v6890
  %v8367 = vpack.c.b16 %v6900, %v6891
  %v8368 = vpack.c.b16 %v6901, %v6892
  %v8369 = vpack.c.b16 %v6902, %v6893
  %v8370 = vpack.c.b16 %v6903, %v6894
  %v8371 = vpack.c.b16 %v6904, %v6895
  %v8372 = vpack.c.b16 %v6905, %v6896
  %v8373 = vpack.c.b16 %v6906, %v6897
  %v8374 = vpack.c.b16 %v6916, %v6907
  %v8375 = vpack.c.b16 %v6917, %v6908
  %v8376 = vpack.c.b16 %v6918, %v6909
  %v8377 = vpack.c.b16 %v6919, %v6910
  %v8378 = vpack.c.b16 %v6920, %v6911
  %v8379 = vpack.c.b16 %v6921, %v6912
  %v8380 = vpack.c.b16 %v6922, %v6913
  %v8381 = vpack.c.b16 %v6923, %v6914
  %v8382 = vpack.c.b16 %v6924, %v6915
  %v8383 = vpack.c.b16 %v6934, %v6925
  %v8384 = vpack.c.b16 %v6935, %v6926
  %v8385 = vpack.c.b16 %v6936, %v6927
  %v8386 = vpack.c.b16 %v6937, %v6928
  %v8387 = vpack.c.b16 %v6938, %v6929
  %v8388 = vpack.c.b16 %v6939, %v6930
  %v8389 = vpack.c.b16 %v6940, %v6931
  %v8390 = vpack.c.b16 %v6941, %v6932
  %v8391 = vpack.c.b16 %v6942, %v6933
  %v8392 = vpack.c.b16 %v6952, %v6943
  %v8393 = vpack.c.b16 %v6953, %v6944
  %v8394 = vpack.c.b16 %v6954, %v6945
  %v8395 = vpack.c.b16 %v6955, %v6946
  %v8396 = vpack.c.b16 %v6956, %v6947
  %v8397 = vpack.c.b16 %v6957, %v6948
  %v8398 = vpack.c.b16 %v6958, %v6949
  %v8399 = vpack.c.b16 %v6959, %v6950
  %v8400 = vpack.c.b16 %v6960, %v6951
  %v8401 = vpack.c.b16 %v6970, %v6961
  %v8402 = vpack.c.b16 %v6971, %v6962
  %v8403 = vpack.c.b16 %v6972, %v6963
  %v8404 = vpack.c.b16 %v6973, %v6964
  %v8405 = vpack.c.b16 %v6974, %v6965
  %v8406 = vpack.c.b16 %v6975, %v6966
  %v8407 = vpack.c.b16 %v6976, %v6967
  %v8408 = vpack.c.b16 %v6977, %v6968
  %v8409 = vpack.c.b16 %v6978, %v6969
  %v8410 = vpack.c.b16 %v6988, %v6979
  %v8411 = vpack.c.b16 %v6989, %v6980
  %v8412 = vpack.c.b16 %v6990, %v6981
  %v8413 = vpack.c.b16 %v6991, %v6982
  %v8414 = vpack.c.b16 %v6992, %v6983
  %v8415 = vpack.c.b16 %v6993, %v6984
  %v8416 = vpack.c.b16 %v6994, %v6985
  %v8417 = vpack.c.b16 %v6995, %v6986
  %v8418 = vpack.c.b16 %v6996, %v6987
  %v8419 = vpack.c.b16 %v7006, %v6997
  %v8420 = vpack.c.b16 %v7007, %v6998
  %v8421 = vpack.c.b16 %v7008, %v6999
  %v8422 = vpack.c.b16 %v7009, %v7000
  %v8423 = vpack.c.b16 %v7010, %v7001
  %v8424 = vpack.c.b16 %v7011, %v7002
  %v8425 = vpack.c.b16 %v7012, %v7003
  %v8426 = vpack.c.b16 %v7013, %v7004
  %v8427 = vpack.c.b16 %v7014, %v7005
  %v8428 = vpack.c.b16 %v7024, %v7015
  %v8429 = vpack.c.b16 %v7025, %v7016
  %v8430 = vpack.c.b16 %v7026, %v7017
  %v8431 = vpack.c.b16 %v7027, %v7018
  %v8432 = vpack.c.b16 %v7028, %v7019
  %v8433 = vpack.c.b16 %v7029, %v7020
  %v8434 = vpack.c.b16 %v7030, %v7021
  %v8435 = vpack.c.b16 %v7031, %v7022
  %v8436 = vpack.c.b16 %v7032, %v7023
  %v8437 = vpack.c.b16 %v7042, %v7033
  %v8438 = vpack.c.b16 %v7043, %v7034
  %v8439 = vpack.c.b16 %v7044, %v7035
  %v8440 = vpack.c.b16 %v7045, %v7036
  %v8441 = vpack.c.b16 %v7046, %v7037
  %v8442 = vpack.c.b16 %v7047, %v7038
  %v8443 = vpack.c.b16 %v7048, %v7039
  %v8444 = vpack.c.b16 %v7049, %v7040
  %v8445 = vpack.c.b16 %v7050, %v7041
  %v8446 = vpack.c.b16 %v7060, %v7051
  %v8447 = vpack.c.b16 %v7061, %v7052
  %v8448 = vpack.c.b16 %v7062, %v7053
  %v8449 = vpack.c.b16 %v7063, %v7054
  %v8450 = vpack.c.b16 %v7064, %v7055
  %v8451 = vpack.c.b16 %v7065, %v7056
  %v8452 = vpack.c.b16 %v7066, %v7057
  %v8453 = vpack.c.b16 %v7067, %v7058
  %v8454 = vpack.c.b16 %v7068, %v7059
  %v8455 = vpack.c.b16 %v7078, %v7069
  %v8456 = vpack.c.b16 %v7079, %v7070
  %v8457 = vpack.c.b16 %v7080, %v7071
  %v8458 = vpack.c.b16 %v7081, %v7072
  %v8459 = vpack.c.b16 %v7082, %v7073
  %v8460 = vpack.c.b16 %v7083, %v7074
  %v8461 = vpack.c.b16 %v7084, %v7075
  %v8462 = vpack.c.b16 %v7085, %v7076
  %v8463 = vpack.c.b16 %v7086, %v7077
  %v8464 = vpack.c.b16 %v7096, %v7087
  %v8465 = vpack.c.b16 %v7097, %v7088
  %v8466 = vpack.c.b16 %v7098, %v7089
  %v8467 = vpack.c.b16 %v7099, %v7090
  %v8468 = vpack.c.b16 %v7100, %v7091
  %v8469 = vpack.c.b16 %v7101, %v7092
  %v8470 = vpack.c.b16 %v7102, %v7093
  %v8471 = vpack.c.b16 %v7103, %v7094
  %v8472 = vpack.c.b16 %v7104, %v7095
  %v8473 = vpack.c.b16 %v7114, %v7105
  %v8474 = vpack.c.b16 %v7115, %v7106
  %v8475 = vpack.c.b16 %v7116, %v7107
  %v8476 = vpack.c.b16 %v7117, %v7108
  %v8477 = vpack.c.b16 %v7118, %v7109
  %v8478 = vpack.c.b16 %v7119, %v7110
  %v8479 = vpack.c.b16 %v7120, %v7111
  %v8480 = vpack.c.b16 %v7121, %v7112
  %v8481 = vpack.c.b16 %v7122, %v7113
  %v8482 = vpack.c.b16 %v7132, %v7123
  %v8483 = vpack.c.b16 %v7133, %v7124
  %v8484 = vpack.c.b16 %v7134, %v7125
  %v8485 = vpack.c.b16 %v7135, %v7126
  %v8486 = vpack.c.b16 %v7136, %v7127
  %v8487 = vpack.c.b16 %v7137, %v7128
  %v8488 = vpack.c.b16 %v7138, %v7129
  %v8489 = vpack.c.b16 %v7139, %v7130
  %v8490 = vpack.c.b16 %v7140, %v7131
  %v8491 = vpack.c.b16 %v7150, %v7141
  %v8492 = vpack.c.b16 %v7151, %v7142
  %v8493 = vpack.c.b16 %v7152, %v7143
  %v8494 = vpack.c.b16 %v7153, %v7144
  %v8495 = vpack.c.b16 %v7154, %v7145
  %v8496 = vpack.c.b16 %v7155, %v7146
  %v8497 = vpack.c.b16 %v7156, %v7147
  %v8498 = vpack.c.b16 %v7157, %v7148
  %v8499 = vpack.c.b16 %v7158, %v7149
  %v8500 = vpack.c.b16 %v7168, %v7159
  %v8501 = vpack.c.b16 %v7169, %v7160
  %v8502 = vpack.c.b16 %v7170, %v7161
  %v8503 = vpack.c.b16 %v7171, %v7162
  %v8504 = vpack.c.b16 %v7172, %v7163
  %v8505 = vpack.c.b16 %v7173, %v7164
  %v8506 = vpack.c.b16 %v7174, %v7165
  %v8507 = vpack.c.b16 %v7175, %v7166
  %v8508 = vpack.c.b16 %v7176, %v7167
  %v8509 = vpack.c.b16 %v7186, %v7177
  %v8510 = vpack.c.b16 %v7187, %v7178
  %v8511 = vpack.c.b16 %v7188, %v7179
  %v8512 = vpack.c.b16 %v7189, %v7180
  %v8513 = vpack.c.b16 %v7190, %v7181
  %v8514 = vpack.c.b16 %v7191, %v7182
  %v8515 = vpack.c.b16 %v7192, %v7183
  %v8516 = vpack.c.b16 %v7193, %v7184
  %v8517 = vpack.c.b16 %v7194, %v7185
  %v8518 = vpack.c.b16 %v7204, %v7195
  %v8519 = vpack.c.b16 %v7205, %v7196
  %v8520 = vpack.c.b16 %v7206, %v7197
  %v8521 = vpack.c.b16 %v7207, %v7198
  %v8522 = vpack.c.b16 %v7208, %v7199
  %v8523 = vpack.c.b16 %v7209, %v7200
  %v8524 = vpack.c.b16 %v7210, %v7201
  %v8525 = vpack.c.b16 %v7211, %v7202
  %v8526 = vpack.c.b16 %v7212, %v7203
  %v8527 = vpack.c.b16 %v7222, %v7213
  %v8528 = vpack.c.b16 %v7223, %v7214
  %v8529 = vpack.c.b16 %v7224, %v7215
  %v8530 = vpack.c.b16 %v7225, %v7216
  %v8531 = vpack.c.b16 %v7226, %v7217
  %v8532 = vpack.c.b16 %v7227, %v7218
  %v8533 = vpack.c.b16 %v7228, %v7219
  %v8534 = vpack.c.b16 %v7229, %v7220
  %v8535 = vpack.c.b16 %v7230, %v7221
  %v8536 = vpack.c.b16 %v7240, %v7231
  %v8537 = vpack.c.b16 %v7241, %v7232
  %v8538 = vpack.c.b16 %v7242, %v7233
  %v8539 = vpack.c.b16 %v7243, %v7234
  %v8540 = vpack.c.b16 %v7244, %v7235
  %v8541 = vpack.c.b16 %v7245, %v7236
  %v8542 = vpack.c.b16 %v7246, %v7237
  %v8543 = vpack.c.b16 %v7247, %v7238
  %v8544 = vpack.c.b16 %v7248, %v7239
  %9841 = vmatprep.subr.bf16.mxu0 %v7313
  %9842 = vmatpush1.bf16.msra.mxu0 %v7312
  %9843 = vmatprep.subr.bf16.mxu0 %v7304
  %9844 = vmatpush1.bf16.msra.mxu0 %v7303
  %9845 = vmatprep.subr.bf16.mxu0 %v7295
  %9846 = vmatpush1.bf16.msra.mxu0 %v7294
  %9847 = vmatprep.subr.bf16.mxu0 %v7286
  %9848 = vmatpush1.bf16.msra.mxu0 %v7285
  %9849 = vmatprep.subr.bf16.mxu0 %v7277
  %9850 = vmatpush1.bf16.msra.mxu0 %v7276
  %9851 = vmatprep.subr.bf16.mxu0 %v7268
  %9852 = vmatpush1.bf16.msra.mxu0 %v7267
  %9853 = vmatprep.subr.bf16.mxu0 %v7259
  %9854 = vmatpush1.bf16.msra.mxu0 %v7258
  %9855 = vmatprep.subr.bf16.mxu0 %v7250
  %9856 = vmatpush1.bf16.msra.mxu0 %v7249
  %9857 = vmatprep.subr.bf16.mxu0 %v7385
  %9858 = vmatpush2.bf16.msra.mxu0 %v7384
  %9859 = vmatprep.subr.bf16.mxu0 %v7376
  %9860 = vmatpush2.bf16.msra.mxu0 %v7375
  %9861 = vmatprep.subr.bf16.mxu0 %v7367
  %9862 = vmatpush2.bf16.msra.mxu0 %v7366
  %9863 = vmatprep.subr.bf16.mxu0 %v7358
  %9864 = vmatpush2.bf16.msra.mxu0 %v7357
  %9865 = vmatprep.subr.bf16.mxu0 %v7349
  %9866 = vmatpush2.bf16.msra.mxu0 %v7348
  %9867 = vmatprep.subr.bf16.mxu0 %v7340
  %9868 = vmatpush2.bf16.msra.mxu0 %v7339
  %9869 = vmatprep.subr.bf16.mxu0 %v7331
  %9870 = vmatpush2.bf16.msra.mxu0 %v7330
  %9871 = vmatprep.subr.bf16.mxu0 %v7322
  %9872 = vmatpush2.bf16.msra.mxu0 %v7321
  %9873 = vmatprep.mubr.bf16.mxu0 %v1711
  %9874 = vmatmul.mubr.bf16.gmra.mxu0 %v1710
  %v9875 = vpop.f32.mrf.mxu0
  %v9876 = vadd.f32 %v3175, %v9875
  %v9877 = vpop.f32.mrf.mxu0
  %v9878 = vadd.f32 %v3179, %v9877
  %v9879 = vpop.f32.mrf.mxu0
  %v9880 = vpop.f32.mrf.mxu0
  %9881 = vdwg.mxu0
  %9882 = vmatprep.subr.bf16.mxu0 %v7457
  %9883 = vmatpush1.bf16.msra.mxu0 %v7456
  %9884 = vmatprep.subr.bf16.mxu0 %v7448
  %9885 = vmatpush1.bf16.msra.mxu0 %v7447
  %9886 = vmatprep.subr.bf16.mxu0 %v7439
  %9887 = vmatpush1.bf16.msra.mxu0 %v7438
  %9888 = vmatprep.subr.bf16.mxu0 %v7430
  %9889 = vmatpush1.bf16.msra.mxu0 %v7429
  %9890 = vmatprep.subr.bf16.mxu0 %v7421
  %9891 = vmatpush1.bf16.msra.mxu0 %v7420
  %9892 = vmatprep.subr.bf16.mxu0 %v7412
  %9893 = vmatpush1.bf16.msra.mxu0 %v7411
  %9894 = vmatprep.subr.bf16.mxu0 %v7403
  %9895 = vmatpush1.bf16.msra.mxu0 %v7402
  %9896 = vmatprep.subr.bf16.mxu0 %v7394
  %9897 = vmatpush1.bf16.msra.mxu0 %v7393
  %9898 = vmatprep.subr.bf16.mxu0 %v7529
  %9899 = vmatpush2.bf16.msra.mxu0 %v7528
  %9900 = vmatprep.subr.bf16.mxu0 %v7520
  %9901 = vmatpush2.bf16.msra.mxu0 %v7519
  %9902 = vmatprep.subr.bf16.mxu0 %v7511
  %9903 = vmatpush2.bf16.msra.mxu0 %v7510
  %9904 = vmatprep.subr.bf16.mxu0 %v7502
  %9905 = vmatpush2.bf16.msra.mxu0 %v7501
  %9906 = vmatprep.subr.bf16.mxu0 %v7493
  %9907 = vmatpush2.bf16.msra.mxu0 %v7492
  %9908 = vmatprep.subr.bf16.mxu0 %v7484
  %9909 = vmatpush2.bf16.msra.mxu0 %v7483
  %9910 = vmatprep.subr.bf16.mxu0 %v7475
  %9911 = vmatpush2.bf16.msra.mxu0 %v7474
  %9912 = vmatprep.subr.bf16.mxu0 %v7466
  %9913 = vmatpush2.bf16.msra.mxu0 %v7465
  %9914 = vmatprep.mubr.bf16.mxu0 %v1713
  %9915 = vmatmul.mubr.bf16.gmra.mxu0 %v1712
  %v9916 = vpop.f32.mrf.mxu0
  %v9917 = vadd.f32 %v9876, %v9916
  %v9918 = vpop.f32.mrf.mxu0
  %v9919 = vadd.f32 %v9878, %v9918
  %v9920 = vpop.f32.mrf.mxu0
  %v9921 = vpop.f32.mrf.mxu0
  %9922 = vdwg.mxu0
  %9923 = vmatprep.subr.bf16.mxu0 %v7601
  %9924 = vmatpush1.bf16.msra.mxu0 %v7600
  %9925 = vmatprep.subr.bf16.mxu0 %v7592
  %9926 = vmatpush1.bf16.msra.mxu0 %v7591
  %9927 = vmatprep.subr.bf16.mxu0 %v7583
  %9928 = vmatpush1.bf16.msra.mxu0 %v7582
  %9929 = vmatprep.subr.bf16.mxu0 %v7574
  %9930 = vmatpush1.bf16.msra.mxu0 %v7573
  %9931 = vmatprep.subr.bf16.mxu0 %v7565
  %9932 = vmatpush1.bf16.msra.mxu0 %v7564
  %9933 = vmatprep.subr.bf16.mxu0 %v7556
  %9934 = vmatpush1.bf16.msra.mxu0 %v7555
  %9935 = vmatprep.subr.bf16.mxu0 %v7547
  %9936 = vmatpush1.bf16.msra.mxu0 %v7546
  %9937 = vmatprep.subr.bf16.mxu0 %v7538
  %9938 = vmatpush1.bf16.msra.mxu0 %v7537
  %9939 = vmatprep.subr.bf16.mxu0 %v7673
  %9940 = vmatpush2.bf16.msra.mxu0 %v7672
  %9941 = vmatprep.subr.bf16.mxu0 %v7664
  %9942 = vmatpush2.bf16.msra.mxu0 %v7663
  %9943 = vmatprep.subr.bf16.mxu0 %v7655
  %9944 = vmatpush2.bf16.msra.mxu0 %v7654
  %9945 = vmatprep.subr.bf16.mxu0 %v7646
  %9946 = vmatpush2.bf16.msra.mxu0 %v7645
  %9947 = vmatprep.subr.bf16.mxu0 %v7637
  %9948 = vmatpush2.bf16.msra.mxu0 %v7636
  %9949 = vmatprep.subr.bf16.mxu0 %v7628
  %9950 = vmatpush2.bf16.msra.mxu0 %v7627
  %9951 = vmatprep.subr.bf16.mxu0 %v7619
  %9952 = vmatpush2.bf16.msra.mxu0 %v7618
  %9953 = vmatprep.subr.bf16.mxu0 %v7610
  %9954 = vmatpush2.bf16.msra.mxu0 %v7609
  %9955 = vmatprep.mubr.bf16.mxu0 %v1715
  %9956 = vmatmul.mubr.bf16.gmra.mxu0 %v1714
  %v9957 = vpop.f32.mrf.mxu0
  %v9958 = vadd.f32 %v9917, %v9957
  %v9959 = vpop.f32.mrf.mxu0
  %v9960 = vadd.f32 %v9919, %v9959
  %v9961 = vpop.f32.mrf.mxu0
  %v9962 = vpop.f32.mrf.mxu0
  %9963 = vdwg.mxu0
  %9964 = vmatprep.subr.bf16.mxu0 %v7745
  %9965 = vmatpush1.bf16.msra.mxu0 %v7744
  %9966 = vmatprep.subr.bf16.mxu0 %v7736
  %9967 = vmatpush1.bf16.msra.mxu0 %v7735
  %9968 = vmatprep.subr.bf16.mxu0 %v7727
  %9969 = vmatpush1.bf16.msra.mxu0 %v7726
  %9970 = vmatprep.subr.bf16.mxu0 %v7718
  %9971 = vmatpush1.bf16.msra.mxu0 %v7717
  %9972 = vmatprep.subr.bf16.mxu0 %v7709
  %9973 = vmatpush1.bf16.msra.mxu0 %v7708
  %9974 = vmatprep.subr.bf16.mxu0 %v7700
  %9975 = vmatpush1.bf16.msra.mxu0 %v7699
  %9976 = vmatprep.subr.bf16.mxu0 %v7691
  %9977 = vmatpush1.bf16.msra.mxu0 %v7690
  %9978 = vmatprep.subr.bf16.mxu0 %v7682
  %9979 = vmatpush1.bf16.msra.mxu0 %v7681
  %9980 = vmatprep.subr.bf16.mxu0 %v7817
  %9981 = vmatpush2.bf16.msra.mxu0 %v7816
  %9982 = vmatprep.subr.bf16.mxu0 %v7808
  %9983 = vmatpush2.bf16.msra.mxu0 %v7807
  %9984 = vmatprep.subr.bf16.mxu0 %v7799
  %9985 = vmatpush2.bf16.msra.mxu0 %v7798
  %9986 = vmatprep.subr.bf16.mxu0 %v7790
  %9987 = vmatpush2.bf16.msra.mxu0 %v7789
  %9988 = vmatprep.subr.bf16.mxu0 %v7781
  %9989 = vmatpush2.bf16.msra.mxu0 %v7780
  %9990 = vmatprep.subr.bf16.mxu0 %v7772
  %9991 = vmatpush2.bf16.msra.mxu0 %v7771
  %9992 = vmatprep.subr.bf16.mxu0 %v7763
  %9993 = vmatpush2.bf16.msra.mxu0 %v7762
  %9994 = vmatprep.subr.bf16.mxu0 %v7754
  %9995 = vmatpush2.bf16.msra.mxu0 %v7753
  %9996 = vmatprep.mubr.bf16.mxu0 %v1717
  %9997 = vmatmul.mubr.bf16.gmra.mxu0 %v1716
  %v9998 = vpop.f32.mrf.mxu0
  %v9999 = vadd.f32 %v9958, %v9998
  %v10000 = vpop.f32.mrf.mxu0
  %v10001 = vadd.f32 %v9960, %v10000
  %v10002 = vpop.f32.mrf.mxu0
  %v10003 = vpop.f32.mrf.mxu0
  %10004 = vdwg.mxu0
  %10005 = vmatprep.subr.bf16.mxu0 %v7889
  %10006 = vmatpush1.bf16.msra.mxu0 %v7888
  %10007 = vmatprep.subr.bf16.mxu0 %v7880
  %10008 = vmatpush1.bf16.msra.mxu0 %v7879
  %10009 = vmatprep.subr.bf16.mxu0 %v7871
  %10010 = vmatpush1.bf16.msra.mxu0 %v7870
  %10011 = vmatprep.subr.bf16.mxu0 %v7862
  %10012 = vmatpush1.bf16.msra.mxu0 %v7861
  %10013 = vmatprep.subr.bf16.mxu0 %v7853
  %10014 = vmatpush1.bf16.msra.mxu0 %v7852
  %10015 = vmatprep.subr.bf16.mxu0 %v7844
  %10016 = vmatpush1.bf16.msra.mxu0 %v7843
  %10017 = vmatprep.subr.bf16.mxu0 %v7835
  %10018 = vmatpush1.bf16.msra.mxu0 %v7834
  %10019 = vmatprep.subr.bf16.mxu0 %v7826
  %10020 = vmatpush1.bf16.msra.mxu0 %v7825
  %10021 = vmatprep.subr.bf16.mxu0 %v7961
  %10022 = vmatpush2.bf16.msra.mxu0 %v7960
  %10023 = vmatprep.subr.bf16.mxu0 %v7952
  %10024 = vmatpush2.bf16.msra.mxu0 %v7951
  %10025 = vmatprep.subr.bf16.mxu0 %v7943
  %10026 = vmatpush2.bf16.msra.mxu0 %v7942
  %10027 = vmatprep.subr.bf16.mxu0 %v7934
  %10028 = vmatpush2.bf16.msra.mxu0 %v7933
  %10029 = vmatprep.subr.bf16.mxu0 %v7925
  %10030 = vmatpush2.bf16.msra.mxu0 %v7924
  %10031 = vmatprep.subr.bf16.mxu0 %v7916
  %10032 = vmatpush2.bf16.msra.mxu0 %v7915
  %10033 = vmatprep.subr.bf16.mxu0 %v7907
  %10034 = vmatpush2.bf16.msra.mxu0 %v7906
  %10035 = vmatprep.subr.bf16.mxu0 %v7898
  %10036 = vmatpush2.bf16.msra.mxu0 %v7897
  %10037 = vmatprep.mubr.bf16.mxu0 %v1719
  %10038 = vmatmul.mubr.bf16.gmra.mxu0 %v1718
  %v10039 = vpop.f32.mrf.mxu0
  %v10040 = vadd.f32 %v9999, %v10039
  %v10041 = vpop.f32.mrf.mxu0
  %v10042 = vadd.f32 %v10001, %v10041
  %v10043 = vpop.f32.mrf.mxu0
  %v10044 = vpop.f32.mrf.mxu0
  %10045 = vdwg.mxu0
  %10046 = vmatprep.subr.bf16.mxu0 %v8033
  %10047 = vmatpush1.bf16.msra.mxu0 %v8032
  %10048 = vmatprep.subr.bf16.mxu0 %v8024
  %10049 = vmatpush1.bf16.msra.mxu0 %v8023
  %10050 = vmatprep.subr.bf16.mxu0 %v8015
  %10051 = vmatpush1.bf16.msra.mxu0 %v8014
  %10052 = vmatprep.subr.bf16.mxu0 %v8006
  %10053 = vmatpush1.bf16.msra.mxu0 %v8005
  %10054 = vmatprep.subr.bf16.mxu0 %v7997
  %10055 = vmatpush1.bf16.msra.mxu0 %v7996
  %10056 = vmatprep.subr.bf16.mxu0 %v7988
  %10057 = vmatpush1.bf16.msra.mxu0 %v7987
  %10058 = vmatprep.subr.bf16.mxu0 %v7979
  %10059 = vmatpush1.bf16.msra.mxu0 %v7978
  %10060 = vmatprep.subr.bf16.mxu0 %v7970
  %10061 = vmatpush1.bf16.msra.mxu0 %v7969
  %10062 = vmatprep.subr.bf16.mxu0 %v8105
  %10063 = vmatpush2.bf16.msra.mxu0 %v8104
  %10064 = vmatprep.subr.bf16.mxu0 %v8096
  %10065 = vmatpush2.bf16.msra.mxu0 %v8095
  %10066 = vmatprep.subr.bf16.mxu0 %v8087
  %10067 = vmatpush2.bf16.msra.mxu0 %v8086
  %10068 = vmatprep.subr.bf16.mxu0 %v8078
  %10069 = vmatpush2.bf16.msra.mxu0 %v8077
  %10070 = vmatprep.subr.bf16.mxu0 %v8069
  %10071 = vmatpush2.bf16.msra.mxu0 %v8068
  %10072 = vmatprep.subr.bf16.mxu0 %v8060
  %10073 = vmatpush2.bf16.msra.mxu0 %v8059
  %10074 = vmatprep.subr.bf16.mxu0 %v8051
  %10075 = vmatpush2.bf16.msra.mxu0 %v8050
  %10076 = vmatprep.subr.bf16.mxu0 %v8042
  %10077 = vmatpush2.bf16.msra.mxu0 %v8041
  %10078 = vmatprep.mubr.bf16.mxu0 %v1721
  %10079 = vmatmul.mubr.bf16.gmra.mxu0 %v1720
  %v10080 = vpop.f32.mrf.mxu0
  %v10081 = vadd.f32 %v10040, %v10080
  %v10082 = vpop.f32.mrf.mxu0
  %v10083 = vadd.f32 %v10042, %v10082
  %v10084 = vpop.f32.mrf.mxu0
  %v10085 = vpop.f32.mrf.mxu0
  %10086 = vdwg.mxu0
  %10087 = vmatprep.subr.bf16.mxu0 %v8177
  %10088 = vmatpush1.bf16.msra.mxu0 %v8176
  %10089 = vmatprep.subr.bf16.mxu0 %v8168
  %10090 = vmatpush1.bf16.msra.mxu0 %v8167
  %10091 = vmatprep.subr.bf16.mxu0 %v8159
  %10092 = vmatpush1.bf16.msra.mxu0 %v8158
  %10093 = vmatprep.subr.bf16.mxu0 %v8150
  %10094 = vmatpush1.bf16.msra.mxu0 %v8149
  %10095 = vmatprep.subr.bf16.mxu0 %v8141
  %10096 = vmatpush1.bf16.msra.mxu0 %v8140
  %10097 = vmatprep.subr.bf16.mxu0 %v8132
  %10098 = vmatpush1.bf16.msra.mxu0 %v8131
  %10099 = vmatprep.subr.bf16.mxu0 %v8123
  %10100 = vmatpush1.bf16.msra.mxu0 %v8122
  %10101 = vmatprep.subr.bf16.mxu0 %v8114
  %10102 = vmatpush1.bf16.msra.mxu0 %v8113
  %10103 = vmatprep.subr.bf16.mxu0 %v8249
  %10104 = vmatpush2.bf16.msra.mxu0 %v8248
  %10105 = vmatprep.subr.bf16.mxu0 %v8240
  %10106 = vmatpush2.bf16.msra.mxu0 %v8239
  %10107 = vmatprep.subr.bf16.mxu0 %v8231
  %10108 = vmatpush2.bf16.msra.mxu0 %v8230
  %10109 = vmatprep.subr.bf16.mxu0 %v8222
  %10110 = vmatpush2.bf16.msra.mxu0 %v8221
  %10111 = vmatprep.subr.bf16.mxu0 %v8213
  %10112 = vmatpush2.bf16.msra.mxu0 %v8212
  %10113 = vmatprep.subr.bf16.mxu0 %v8204
  %10114 = vmatpush2.bf16.msra.mxu0 %v8203
  %10115 = vmatprep.subr.bf16.mxu0 %v8195
  %10116 = vmatpush2.bf16.msra.mxu0 %v8194
  %10117 = vmatprep.subr.bf16.mxu0 %v8186
  %10118 = vmatpush2.bf16.msra.mxu0 %v8185
  %10119 = vmatprep.mubr.bf16.mxu0 %v1723
  %10120 = vmatmul.mubr.bf16.gmra.mxu0 %v1722
  %v10121 = vpop.f32.mrf.mxu0
  %v10122 = vadd.f32 %v10081, %v10121
  %v10123 = vpop.f32.mrf.mxu0
  %v10124 = vadd.f32 %v10083, %v10123
  %v10125 = vpop.f32.mrf.mxu0
  %v10126 = vpop.f32.mrf.mxu0
  %10127 = vdwg.mxu0
  %10128 = vmatprep.subr.bf16.mxu0 %v8321
  %10129 = vmatpush1.bf16.msra.mxu0 %v8320
  %10130 = vmatprep.subr.bf16.mxu0 %v8312
  %10131 = vmatpush1.bf16.msra.mxu0 %v8311
  %10132 = vmatprep.subr.bf16.mxu0 %v8303
  %10133 = vmatpush1.bf16.msra.mxu0 %v8302
  %10134 = vmatprep.subr.bf16.mxu0 %v8294
  %10135 = vmatpush1.bf16.msra.mxu0 %v8293
  %10136 = vmatprep.subr.bf16.mxu0 %v8285
  %10137 = vmatpush1.bf16.msra.mxu0 %v8284
  %10138 = vmatprep.subr.bf16.mxu0 %v8276
  %10139 = vmatpush1.bf16.msra.mxu0 %v8275
  %10140 = vmatprep.subr.bf16.mxu0 %v8267
  %10141 = vmatpush1.bf16.msra.mxu0 %v8266
  %10142 = vmatprep.subr.bf16.mxu0 %v8258
  %10143 = vmatpush1.bf16.msra.mxu0 %v8257
  %10144 = vmatprep.subr.bf16.mxu0 %v8393
  %10145 = vmatpush2.bf16.msra.mxu0 %v8392
  %10146 = vmatprep.subr.bf16.mxu0 %v8384
  %10147 = vmatpush2.bf16.msra.mxu0 %v8383
  %10148 = vmatprep.subr.bf16.mxu0 %v8375
  %10149 = vmatpush2.bf16.msra.mxu0 %v8374
  %10150 = vmatprep.subr.bf16.mxu0 %v8366
  %10151 = vmatpush2.bf16.msra.mxu0 %v8365
  %10152 = vmatprep.subr.bf16.mxu0 %v8357
  %10153 = vmatpush2.bf16.msra.mxu0 %v8356
  %10154 = vmatprep.subr.bf16.mxu0 %v8348
  %10155 = vmatpush2.bf16.msra.mxu0 %v8347
  %10156 = vmatprep.subr.bf16.mxu0 %v8339
  %10157 = vmatpush2.bf16.msra.mxu0 %v8338
  %10158 = vmatprep.subr.bf16.mxu0 %v8330
  %10159 = vmatpush2.bf16.msra.mxu0 %v8329
  %10160 = vmatprep.mubr.bf16.mxu0 %v1725
  %10161 = vmatmul.mubr.bf16.gmra.mxu0 %v1724
  %v10162 = vpop.f32.mrf.mxu0
  %v10163 = vadd.f32 %v10122, %v10162
  %v10164 = vpop.f32.mrf.mxu0
  %v10165 = vadd.f32 %v10124, %v10164
  %v10166 = vpop.f32.mrf.mxu0
  %v10167 = vpop.f32.mrf.mxu0
  %10168 = vdwg.mxu0
  %10169 = vmatprep.subr.bf16.mxu0 %v8465
  %10170 = vmatpush1.bf16.msra.mxu0 %v8464
  %10171 = vmatprep.subr.bf16.mxu0 %v8456
  %10172 = vmatpush1.bf16.msra.mxu0 %v8455
  %10173 = vmatprep.subr.bf16.mxu0 %v8447
  %10174 = vmatpush1.bf16.msra.mxu0 %v8446
  %10175 = vmatprep.subr.bf16.mxu0 %v8438
  %10176 = vmatpush1.bf16.msra.mxu0 %v8437
  %10177 = vmatprep.subr.bf16.mxu0 %v8429
  %10178 = vmatpush1.bf16.msra.mxu0 %v8428
  %10179 = vmatprep.subr.bf16.mxu0 %v8420
  %10180 = vmatpush1.bf16.msra.mxu0 %v8419
  %10181 = vmatprep.subr.bf16.mxu0 %v8411
  %10182 = vmatpush1.bf16.msra.mxu0 %v8410
  %10183 = vmatprep.subr.bf16.mxu0 %v8402
  %10184 = vmatpush1.bf16.msra.mxu0 %v8401
  %10185 = vmatprep.subr.bf16.mxu0 %v8537
  %10186 = vmatpush2.bf16.msra.mxu0 %v8536
  %10187 = vmatprep.subr.bf16.mxu0 %v8528
  %10188 = vmatpush2.bf16.msra.mxu0 %v8527
  %10189 = vmatprep.subr.bf16.mxu0 %v8519
  %10190 = vmatpush2.bf16.msra.mxu0 %v8518
  %10191 = vmatprep.subr.bf16.mxu0 %v8510
  %10192 = vmatpush2.bf16.msra.mxu0 %v8509
  %10193 = vmatprep.subr.bf16.mxu0 %v8501
  %10194 = vmatpush2.bf16.msra.mxu0 %v8500
  %10195 = vmatprep.subr.bf16.mxu0 %v8492
  %10196 = vmatpush2.bf16.msra.mxu0 %v8491
  %10197 = vmatprep.subr.bf16.mxu0 %v8483
  %10198 = vmatpush2.bf16.msra.mxu0 %v8482
  %10199 = vmatprep.subr.bf16.mxu0 %v8474
  %10200 = vmatpush2.bf16.msra.mxu0 %v8473
  %10201 = vmatprep.mubr.bf16.mxu0 %v1727
  %10202 = vmatmul.mubr.bf16.gmra.mxu0 %v1726
  %v10203 = vpop.f32.mrf.mxu0
  %v10204 = vadd.f32 %v10163, %v10203
  %v10205 = vpop.f32.mrf.mxu0
  %v10206 = vadd.f32 %v10165, %v10205
  %v10207 = vpop.f32.mrf.mxu0
  %v10208 = vpop.f32.mrf.mxu0
  %10209 = vdwg.mxu0
  %10210 = vmatprep.subr.bf16.mxu0 %v7315
  %10211 = vmatpush1.bf16.msra.mxu0 %v7314
  %10212 = vmatprep.subr.bf16.mxu0 %v7306
  %10213 = vmatpush1.bf16.msra.mxu0 %v7305
  %10214 = vmatprep.subr.bf16.mxu0 %v7297
  %10215 = vmatpush1.bf16.msra.mxu0 %v7296
  %10216 = vmatprep.subr.bf16.mxu0 %v7288
  %10217 = vmatpush1.bf16.msra.mxu0 %v7287
  %10218 = vmatprep.subr.bf16.mxu0 %v7279
  %10219 = vmatpush1.bf16.msra.mxu0 %v7278
  %10220 = vmatprep.subr.bf16.mxu0 %v7270
  %10221 = vmatpush1.bf16.msra.mxu0 %v7269
  %10222 = vmatprep.subr.bf16.mxu0 %v7261
  %10223 = vmatpush1.bf16.msra.mxu0 %v7260
  %10224 = vmatprep.subr.bf16.mxu0 %v7252
  %10225 = vmatpush1.bf16.msra.mxu0 %v7251
  %10226 = vmatprep.subr.bf16.mxu0 %v7387
  %10227 = vmatpush2.bf16.msra.mxu0 %v7386
  %10228 = vmatprep.subr.bf16.mxu0 %v7378
  %10229 = vmatpush2.bf16.msra.mxu0 %v7377
  %10230 = vmatprep.subr.bf16.mxu0 %v7369
  %10231 = vmatpush2.bf16.msra.mxu0 %v7368
  %10232 = vmatprep.subr.bf16.mxu0 %v7360
  %10233 = vmatpush2.bf16.msra.mxu0 %v7359
  %10234 = vmatprep.subr.bf16.mxu0 %v7351
  %10235 = vmatpush2.bf16.msra.mxu0 %v7350
  %10236 = vmatprep.subr.bf16.mxu0 %v7342
  %10237 = vmatpush2.bf16.msra.mxu0 %v7341
  %10238 = vmatprep.subr.bf16.mxu0 %v7333
  %10239 = vmatpush2.bf16.msra.mxu0 %v7332
  %10240 = vmatprep.subr.bf16.mxu0 %v7324
  %10241 = vmatpush2.bf16.msra.mxu0 %v7323
  %10242 = vmatprep.mubr.bf16.mxu0 %v1711
  %10243 = vmatmul.mubr.bf16.gmra.mxu0 %v1710
  %v10244 = vpop.f32.mrf.mxu0
  %v10245 = vadd.f32 %v3183, %v10244
  %v10246 = vpop.f32.mrf.mxu0
  %v10247 = vadd.f32 %v3187, %v10246
  %v10248 = vpop.f32.mrf.mxu0
  %v10249 = vpop.f32.mrf.mxu0
  %10250 = vdwg.mxu0
  %10251 = vmatprep.subr.bf16.mxu0 %v7459
  %10252 = vmatpush1.bf16.msra.mxu0 %v7458
  %10253 = vmatprep.subr.bf16.mxu0 %v7450
  %10254 = vmatpush1.bf16.msra.mxu0 %v7449
  %10255 = vmatprep.subr.bf16.mxu0 %v7441
  %10256 = vmatpush1.bf16.msra.mxu0 %v7440
  %10257 = vmatprep.subr.bf16.mxu0 %v7432
  %10258 = vmatpush1.bf16.msra.mxu0 %v7431
  %10259 = vmatprep.subr.bf16.mxu0 %v7423
  %10260 = vmatpush1.bf16.msra.mxu0 %v7422
  %10261 = vmatprep.subr.bf16.mxu0 %v7414
  %10262 = vmatpush1.bf16.msra.mxu0 %v7413
  %10263 = vmatprep.subr.bf16.mxu0 %v7405
  %10264 = vmatpush1.bf16.msra.mxu0 %v7404
  %10265 = vmatprep.subr.bf16.mxu0 %v7396
  %10266 = vmatpush1.bf16.msra.mxu0 %v7395
  %10267 = vmatprep.subr.bf16.mxu0 %v7531
  %10268 = vmatpush2.bf16.msra.mxu0 %v7530
  %10269 = vmatprep.subr.bf16.mxu0 %v7522
  %10270 = vmatpush2.bf16.msra.mxu0 %v7521
  %10271 = vmatprep.subr.bf16.mxu0 %v7513
  %10272 = vmatpush2.bf16.msra.mxu0 %v7512
  %10273 = vmatprep.subr.bf16.mxu0 %v7504
  %10274 = vmatpush2.bf16.msra.mxu0 %v7503
  %10275 = vmatprep.subr.bf16.mxu0 %v7495
  %10276 = vmatpush2.bf16.msra.mxu0 %v7494
  %10277 = vmatprep.subr.bf16.mxu0 %v7486
  %10278 = vmatpush2.bf16.msra.mxu0 %v7485
  %10279 = vmatprep.subr.bf16.mxu0 %v7477
  %10280 = vmatpush2.bf16.msra.mxu0 %v7476
  %10281 = vmatprep.subr.bf16.mxu0 %v7468
  %10282 = vmatpush2.bf16.msra.mxu0 %v7467
  %10283 = vmatprep.mubr.bf16.mxu0 %v1713
  %10284 = vmatmul.mubr.bf16.gmra.mxu0 %v1712
  %v10285 = vpop.f32.mrf.mxu0
  %v10286 = vadd.f32 %v10245, %v10285
  %v10287 = vpop.f32.mrf.mxu0
  %v10288 = vadd.f32 %v10247, %v10287
  %v10289 = vpop.f32.mrf.mxu0
  %v10290 = vpop.f32.mrf.mxu0
  %10291 = vdwg.mxu0
  %10292 = vmatprep.subr.bf16.mxu0 %v7603
  %10293 = vmatpush1.bf16.msra.mxu0 %v7602
  %10294 = vmatprep.subr.bf16.mxu0 %v7594
  %10295 = vmatpush1.bf16.msra.mxu0 %v7593
  %10296 = vmatprep.subr.bf16.mxu0 %v7585
  %10297 = vmatpush1.bf16.msra.mxu0 %v7584
  %10298 = vmatprep.subr.bf16.mxu0 %v7576
  %10299 = vmatpush1.bf16.msra.mxu0 %v7575
  %10300 = vmatprep.subr.bf16.mxu0 %v7567
  %10301 = vmatpush1.bf16.msra.mxu0 %v7566
  %10302 = vmatprep.subr.bf16.mxu0 %v7558
  %10303 = vmatpush1.bf16.msra.mxu0 %v7557
  %10304 = vmatprep.subr.bf16.mxu0 %v7549
  %10305 = vmatpush1.bf16.msra.mxu0 %v7548
  %10306 = vmatprep.subr.bf16.mxu0 %v7540
  %10307 = vmatpush1.bf16.msra.mxu0 %v7539
  %10308 = vmatprep.subr.bf16.mxu0 %v7675
  %10309 = vmatpush2.bf16.msra.mxu0 %v7674
  %10310 = vmatprep.subr.bf16.mxu0 %v7666
  %10311 = vmatpush2.bf16.msra.mxu0 %v7665
  %10312 = vmatprep.subr.bf16.mxu0 %v7657
  %10313 = vmatpush2.bf16.msra.mxu0 %v7656
  %10314 = vmatprep.subr.bf16.mxu0 %v7648
  %10315 = vmatpush2.bf16.msra.mxu0 %v7647
  %10316 = vmatprep.subr.bf16.mxu0 %v7639
  %10317 = vmatpush2.bf16.msra.mxu0 %v7638
  %10318 = vmatprep.subr.bf16.mxu0 %v7630
  %10319 = vmatpush2.bf16.msra.mxu0 %v7629
  %10320 = vmatprep.subr.bf16.mxu0 %v7621
  %10321 = vmatpush2.bf16.msra.mxu0 %v7620
  %10322 = vmatprep.subr.bf16.mxu0 %v7612
  %10323 = vmatpush2.bf16.msra.mxu0 %v7611
  %10324 = vmatprep.mubr.bf16.mxu0 %v1715
  %10325 = vmatmul.mubr.bf16.gmra.mxu0 %v1714
  %v10326 = vpop.f32.mrf.mxu0
  %v10327 = vadd.f32 %v10286, %v10326
  %v10328 = vpop.f32.mrf.mxu0
  %v10329 = vadd.f32 %v10288, %v10328
  %v10330 = vpop.f32.mrf.mxu0
  %v10331 = vpop.f32.mrf.mxu0
  %10332 = vdwg.mxu0
  %10333 = vmatprep.subr.bf16.mxu0 %v7747
  %10334 = vmatpush1.bf16.msra.mxu0 %v7746
  %10335 = vmatprep.subr.bf16.mxu0 %v7738
  %10336 = vmatpush1.bf16.msra.mxu0 %v7737
  %10337 = vmatprep.subr.bf16.mxu0 %v7729
  %10338 = vmatpush1.bf16.msra.mxu0 %v7728
  %10339 = vmatprep.subr.bf16.mxu0 %v7720
  %10340 = vmatpush1.bf16.msra.mxu0 %v7719
  %10341 = vmatprep.subr.bf16.mxu0 %v7711
  %10342 = vmatpush1.bf16.msra.mxu0 %v7710
  %10343 = vmatprep.subr.bf16.mxu0 %v7702
  %10344 = vmatpush1.bf16.msra.mxu0 %v7701
  %10345 = vmatprep.subr.bf16.mxu0 %v7693
  %10346 = vmatpush1.bf16.msra.mxu0 %v7692
  %10347 = vmatprep.subr.bf16.mxu0 %v7684
  %10348 = vmatpush1.bf16.msra.mxu0 %v7683
  %10349 = vmatprep.subr.bf16.mxu0 %v7819
  %10350 = vmatpush2.bf16.msra.mxu0 %v7818
  %10351 = vmatprep.subr.bf16.mxu0 %v7810
  %10352 = vmatpush2.bf16.msra.mxu0 %v7809
  %10353 = vmatprep.subr.bf16.mxu0 %v7801
  %10354 = vmatpush2.bf16.msra.mxu0 %v7800
  %10355 = vmatprep.subr.bf16.mxu0 %v7792
  %10356 = vmatpush2.bf16.msra.mxu0 %v7791
  %10357 = vmatprep.subr.bf16.mxu0 %v7783
  %10358 = vmatpush2.bf16.msra.mxu0 %v7782
  %10359 = vmatprep.subr.bf16.mxu0 %v7774
  %10360 = vmatpush2.bf16.msra.mxu0 %v7773
  %10361 = vmatprep.subr.bf16.mxu0 %v7765
  %10362 = vmatpush2.bf16.msra.mxu0 %v7764
  %10363 = vmatprep.subr.bf16.mxu0 %v7756
  %10364 = vmatpush2.bf16.msra.mxu0 %v7755
  %10365 = vmatprep.mubr.bf16.mxu0 %v1717
  %10366 = vmatmul.mubr.bf16.gmra.mxu0 %v1716
  %v10367 = vpop.f32.mrf.mxu0
  %v10368 = vadd.f32 %v10327, %v10367
  %v10369 = vpop.f32.mrf.mxu0
  %v10370 = vadd.f32 %v10329, %v10369
  %v10371 = vpop.f32.mrf.mxu0
  %v10372 = vpop.f32.mrf.mxu0
  %10373 = vdwg.mxu0
  %10374 = vmatprep.subr.bf16.mxu0 %v7891
  %10375 = vmatpush1.bf16.msra.mxu0 %v7890
  %10376 = vmatprep.subr.bf16.mxu0 %v7882
  %10377 = vmatpush1.bf16.msra.mxu0 %v7881
  %10378 = vmatprep.subr.bf16.mxu0 %v7873
  %10379 = vmatpush1.bf16.msra.mxu0 %v7872
  %10380 = vmatprep.subr.bf16.mxu0 %v7864
  %10381 = vmatpush1.bf16.msra.mxu0 %v7863
  %10382 = vmatprep.subr.bf16.mxu0 %v7855
  %10383 = vmatpush1.bf16.msra.mxu0 %v7854
  %10384 = vmatprep.subr.bf16.mxu0 %v7846
  %10385 = vmatpush1.bf16.msra.mxu0 %v7845
  %10386 = vmatprep.subr.bf16.mxu0 %v7837
  %10387 = vmatpush1.bf16.msra.mxu0 %v7836
  %10388 = vmatprep.subr.bf16.mxu0 %v7828
  %10389 = vmatpush1.bf16.msra.mxu0 %v7827
  %10390 = vmatprep.subr.bf16.mxu0 %v7963
  %10391 = vmatpush2.bf16.msra.mxu0 %v7962
  %10392 = vmatprep.subr.bf16.mxu0 %v7954
  %10393 = vmatpush2.bf16.msra.mxu0 %v7953
  %10394 = vmatprep.subr.bf16.mxu0 %v7945
  %10395 = vmatpush2.bf16.msra.mxu0 %v7944
  %10396 = vmatprep.subr.bf16.mxu0 %v7936
  %10397 = vmatpush2.bf16.msra.mxu0 %v7935
  %10398 = vmatprep.subr.bf16.mxu0 %v7927
  %10399 = vmatpush2.bf16.msra.mxu0 %v7926
  %10400 = vmatprep.subr.bf16.mxu0 %v7918
  %10401 = vmatpush2.bf16.msra.mxu0 %v7917
  %10402 = vmatprep.subr.bf16.mxu0 %v7909
  %10403 = vmatpush2.bf16.msra.mxu0 %v7908
  %10404 = vmatprep.subr.bf16.mxu0 %v7900
  %10405 = vmatpush2.bf16.msra.mxu0 %v7899
  %10406 = vmatprep.mubr.bf16.mxu0 %v1719
  %10407 = vmatmul.mubr.bf16.gmra.mxu0 %v1718
  %v10408 = vpop.f32.mrf.mxu0
  %v10409 = vadd.f32 %v10368, %v10408
  %v10410 = vpop.f32.mrf.mxu0
  %v10411 = vadd.f32 %v10370, %v10410
  %v10412 = vpop.f32.mrf.mxu0
  %v10413 = vpop.f32.mrf.mxu0
  %10414 = vdwg.mxu0
  %10415 = vmatprep.subr.bf16.mxu0 %v8035
  %10416 = vmatpush1.bf16.msra.mxu0 %v8034
  %10417 = vmatprep.subr.bf16.mxu0 %v8026
  %10418 = vmatpush1.bf16.msra.mxu0 %v8025
  %10419 = vmatprep.subr.bf16.mxu0 %v8017
  %10420 = vmatpush1.bf16.msra.mxu0 %v8016
  %10421 = vmatprep.subr.bf16.mxu0 %v8008
  %10422 = vmatpush1.bf16.msra.mxu0 %v8007
  %10423 = vmatprep.subr.bf16.mxu0 %v7999
  %10424 = vmatpush1.bf16.msra.mxu0 %v7998
  %10425 = vmatprep.subr.bf16.mxu0 %v7990
  %10426 = vmatpush1.bf16.msra.mxu0 %v7989
  %10427 = vmatprep.subr.bf16.mxu0 %v7981
  %10428 = vmatpush1.bf16.msra.mxu0 %v7980
  %10429 = vmatprep.subr.bf16.mxu0 %v7972
  %10430 = vmatpush1.bf16.msra.mxu0 %v7971
  %10431 = vmatprep.subr.bf16.mxu0 %v8107
  %10432 = vmatpush2.bf16.msra.mxu0 %v8106
  %10433 = vmatprep.subr.bf16.mxu0 %v8098
  %10434 = vmatpush2.bf16.msra.mxu0 %v8097
  %10435 = vmatprep.subr.bf16.mxu0 %v8089
  %10436 = vmatpush2.bf16.msra.mxu0 %v8088
  %10437 = vmatprep.subr.bf16.mxu0 %v8080
  %10438 = vmatpush2.bf16.msra.mxu0 %v8079
  %10439 = vmatprep.subr.bf16.mxu0 %v8071
  %10440 = vmatpush2.bf16.msra.mxu0 %v8070
  %10441 = vmatprep.subr.bf16.mxu0 %v8062
  %10442 = vmatpush2.bf16.msra.mxu0 %v8061
  %10443 = vmatprep.subr.bf16.mxu0 %v8053
  %10444 = vmatpush2.bf16.msra.mxu0 %v8052
  %10445 = vmatprep.subr.bf16.mxu0 %v8044
  %10446 = vmatpush2.bf16.msra.mxu0 %v8043
  %10447 = vmatprep.mubr.bf16.mxu0 %v1721
  %10448 = vmatmul.mubr.bf16.gmra.mxu0 %v1720
  %v10449 = vpop.f32.mrf.mxu0
  %v10450 = vadd.f32 %v10409, %v10449
  %v10451 = vpop.f32.mrf.mxu0
  %v10452 = vadd.f32 %v10411, %v10451
  %v10453 = vpop.f32.mrf.mxu0
  %v10454 = vpop.f32.mrf.mxu0
  %10455 = vdwg.mxu0
  %10456 = vmatprep.subr.bf16.mxu0 %v8179
  %10457 = vmatpush1.bf16.msra.mxu0 %v8178
  %10458 = vmatprep.subr.bf16.mxu0 %v8170
  %10459 = vmatpush1.bf16.msra.mxu0 %v8169
  %10460 = vmatprep.subr.bf16.mxu0 %v8161
  %10461 = vmatpush1.bf16.msra.mxu0 %v8160
  %10462 = vmatprep.subr.bf16.mxu0 %v8152
  %10463 = vmatpush1.bf16.msra.mxu0 %v8151
  %10464 = vmatprep.subr.bf16.mxu0 %v8143
  %10465 = vmatpush1.bf16.msra.mxu0 %v8142
  %10466 = vmatprep.subr.bf16.mxu0 %v8134
  %10467 = vmatpush1.bf16.msra.mxu0 %v8133
  %10468 = vmatprep.subr.bf16.mxu0 %v8125
  %10469 = vmatpush1.bf16.msra.mxu0 %v8124
  %10470 = vmatprep.subr.bf16.mxu0 %v8116
  %10471 = vmatpush1.bf16.msra.mxu0 %v8115
  %10472 = vmatprep.subr.bf16.mxu0 %v8251
  %10473 = vmatpush2.bf16.msra.mxu0 %v8250
  %10474 = vmatprep.subr.bf16.mxu0 %v8242
  %10475 = vmatpush2.bf16.msra.mxu0 %v8241
  %10476 = vmatprep.subr.bf16.mxu0 %v8233
  %10477 = vmatpush2.bf16.msra.mxu0 %v8232
  %10478 = vmatprep.subr.bf16.mxu0 %v8224
  %10479 = vmatpush2.bf16.msra.mxu0 %v8223
  %10480 = vmatprep.subr.bf16.mxu0 %v8215
  %10481 = vmatpush2.bf16.msra.mxu0 %v8214
  %10482 = vmatprep.subr.bf16.mxu0 %v8206
  %10483 = vmatpush2.bf16.msra.mxu0 %v8205
  %10484 = vmatprep.subr.bf16.mxu0 %v8197
  %10485 = vmatpush2.bf16.msra.mxu0 %v8196
  %10486 = vmatprep.subr.bf16.mxu0 %v8188
  %10487 = vmatpush2.bf16.msra.mxu0 %v8187
  %10488 = vmatprep.mubr.bf16.mxu0 %v1723
  %10489 = vmatmul.mubr.bf16.gmra.mxu0 %v1722
  %v10490 = vpop.f32.mrf.mxu0
  %v10491 = vadd.f32 %v10450, %v10490
  %v10492 = vpop.f32.mrf.mxu0
  %v10493 = vadd.f32 %v10452, %v10492
  %v10494 = vpop.f32.mrf.mxu0
  %v10495 = vpop.f32.mrf.mxu0
  %10496 = vdwg.mxu0
  %10497 = vmatprep.subr.bf16.mxu0 %v8323
  %10498 = vmatpush1.bf16.msra.mxu0 %v8322
  %10499 = vmatprep.subr.bf16.mxu0 %v8314
  %10500 = vmatpush1.bf16.msra.mxu0 %v8313
  %10501 = vmatprep.subr.bf16.mxu0 %v8305
  %10502 = vmatpush1.bf16.msra.mxu0 %v8304
  %10503 = vmatprep.subr.bf16.mxu0 %v8296
  %10504 = vmatpush1.bf16.msra.mxu0 %v8295
  %10505 = vmatprep.subr.bf16.mxu0 %v8287
  %10506 = vmatpush1.bf16.msra.mxu0 %v8286
  %10507 = vmatprep.subr.bf16.mxu0 %v8278
  %10508 = vmatpush1.bf16.msra.mxu0 %v8277
  %10509 = vmatprep.subr.bf16.mxu0 %v8269
  %10510 = vmatpush1.bf16.msra.mxu0 %v8268
  %10511 = vmatprep.subr.bf16.mxu0 %v8260
  %10512 = vmatpush1.bf16.msra.mxu0 %v8259
  %10513 = vmatprep.subr.bf16.mxu0 %v8395
  %10514 = vmatpush2.bf16.msra.mxu0 %v8394
  %10515 = vmatprep.subr.bf16.mxu0 %v8386
  %10516 = vmatpush2.bf16.msra.mxu0 %v8385
  %10517 = vmatprep.subr.bf16.mxu0 %v8377
  %10518 = vmatpush2.bf16.msra.mxu0 %v8376
  %10519 = vmatprep.subr.bf16.mxu0 %v8368
  %10520 = vmatpush2.bf16.msra.mxu0 %v8367
  %10521 = vmatprep.subr.bf16.mxu0 %v8359
  %10522 = vmatpush2.bf16.msra.mxu0 %v8358
  %10523 = vmatprep.subr.bf16.mxu0 %v8350
  %10524 = vmatpush2.bf16.msra.mxu0 %v8349
  %10525 = vmatprep.subr.bf16.mxu0 %v8341
  %10526 = vmatpush2.bf16.msra.mxu0 %v8340
  %10527 = vmatprep.subr.bf16.mxu0 %v8332
  %10528 = vmatpush2.bf16.msra.mxu0 %v8331
  %10529 = vmatprep.mubr.bf16.mxu0 %v1725
  %10530 = vmatmul.mubr.bf16.gmra.mxu0 %v1724
  %v10531 = vpop.f32.mrf.mxu0
  %v10532 = vadd.f32 %v10491, %v10531
  %v10533 = vpop.f32.mrf.mxu0
  %v10534 = vadd.f32 %v10493, %v10533
  %v10535 = vpop.f32.mrf.mxu0
  %v10536 = vpop.f32.mrf.mxu0
  %10537 = vdwg.mxu0
  %10538 = vmatprep.subr.bf16.mxu0 %v8467
  %10539 = vmatpush1.bf16.msra.mxu0 %v8466
  %10540 = vmatprep.subr.bf16.mxu0 %v8458
  %10541 = vmatpush1.bf16.msra.mxu0 %v8457
  %10542 = vmatprep.subr.bf16.mxu0 %v8449
  %10543 = vmatpush1.bf16.msra.mxu0 %v8448
  %10544 = vmatprep.subr.bf16.mxu0 %v8440
  %10545 = vmatpush1.bf16.msra.mxu0 %v8439
  %10546 = vmatprep.subr.bf16.mxu0 %v8431
  %10547 = vmatpush1.bf16.msra.mxu0 %v8430
  %10548 = vmatprep.subr.bf16.mxu0 %v8422
  %10549 = vmatpush1.bf16.msra.mxu0 %v8421
  %10550 = vmatprep.subr.bf16.mxu0 %v8413
  %10551 = vmatpush1.bf16.msra.mxu0 %v8412
  %10552 = vmatprep.subr.bf16.mxu0 %v8404
  %10553 = vmatpush1.bf16.msra.mxu0 %v8403
  %10554 = vmatprep.subr.bf16.mxu0 %v8539
  %10555 = vmatpush2.bf16.msra.mxu0 %v8538
  %10556 = vmatprep.subr.bf16.mxu0 %v8530
  %10557 = vmatpush2.bf16.msra.mxu0 %v8529
  %10558 = vmatprep.subr.bf16.mxu0 %v8521
  %10559 = vmatpush2.bf16.msra.mxu0 %v8520
  %10560 = vmatprep.subr.bf16.mxu0 %v8512
  %10561 = vmatpush2.bf16.msra.mxu0 %v8511
  %10562 = vmatprep.subr.bf16.mxu0 %v8503
  %10563 = vmatpush2.bf16.msra.mxu0 %v8502
  %10564 = vmatprep.subr.bf16.mxu0 %v8494
  %10565 = vmatpush2.bf16.msra.mxu0 %v8493
  %10566 = vmatprep.subr.bf16.mxu0 %v8485
  %10567 = vmatpush2.bf16.msra.mxu0 %v8484
  %10568 = vmatprep.subr.bf16.mxu0 %v8476
  %10569 = vmatpush2.bf16.msra.mxu0 %v8475
  %10570 = vmatprep.mubr.bf16.mxu0 %v1727
  %10571 = vmatmul.mubr.bf16.gmra.mxu0 %v1726
  %v10572 = vpop.f32.mrf.mxu0
  %v10573 = vadd.f32 %v10532, %v10572
  %v10574 = vpop.f32.mrf.mxu0
  %v10575 = vadd.f32 %v10534, %v10574
  %v10576 = vpop.f32.mrf.mxu0
  %v10577 = vpop.f32.mrf.mxu0
  %10578 = vdwg.mxu0
  %10579 = vmatprep.subr.bf16.mxu0 %v7317
  %10580 = vmatpush1.bf16.msra.mxu0 %v7316
  %10581 = vmatprep.subr.bf16.mxu0 %v7308
  %10582 = vmatpush1.bf16.msra.mxu0 %v7307
  %10583 = vmatprep.subr.bf16.mxu0 %v7299
  %10584 = vmatpush1.bf16.msra.mxu0 %v7298
  %10585 = vmatprep.subr.bf16.mxu0 %v7290
  %10586 = vmatpush1.bf16.msra.mxu0 %v7289
  %10587 = vmatprep.subr.bf16.mxu0 %v7281
  %10588 = vmatpush1.bf16.msra.mxu0 %v7280
  %10589 = vmatprep.subr.bf16.mxu0 %v7272
  %10590 = vmatpush1.bf16.msra.mxu0 %v7271
  %10591 = vmatprep.subr.bf16.mxu0 %v7263
  %10592 = vmatpush1.bf16.msra.mxu0 %v7262
  %10593 = vmatprep.subr.bf16.mxu0 %v7254
  %10594 = vmatpush1.bf16.msra.mxu0 %v7253
  %10595 = vmatprep.subr.bf16.mxu0 %v7389
  %10596 = vmatpush2.bf16.msra.mxu0 %v7388
  %10597 = vmatprep.subr.bf16.mxu0 %v7380
  %10598 = vmatpush2.bf16.msra.mxu0 %v7379
  %10599 = vmatprep.subr.bf16.mxu0 %v7371
  %10600 = vmatpush2.bf16.msra.mxu0 %v7370
  %10601 = vmatprep.subr.bf16.mxu0 %v7362
  %10602 = vmatpush2.bf16.msra.mxu0 %v7361
  %10603 = vmatprep.subr.bf16.mxu0 %v7353
  %10604 = vmatpush2.bf16.msra.mxu0 %v7352
  %10605 = vmatprep.subr.bf16.mxu0 %v7344
  %10606 = vmatpush2.bf16.msra.mxu0 %v7343
  %10607 = vmatprep.subr.bf16.mxu0 %v7335
  %10608 = vmatpush2.bf16.msra.mxu0 %v7334
  %10609 = vmatprep.subr.bf16.mxu0 %v7326
  %10610 = vmatpush2.bf16.msra.mxu0 %v7325
  %10611 = vmatprep.mubr.bf16.mxu0 %v1711
  %10612 = vmatmul.mubr.bf16.gmra.mxu0 %v1710
  %v10613 = vpop.f32.mrf.mxu0
  %v10614 = vadd.f32 %v3191, %v10613
  %v10615 = vpop.f32.mrf.mxu0
  %v10616 = vadd.f32 %v3195, %v10615
  %v10617 = vpop.f32.mrf.mxu0
  %v10618 = vpop.f32.mrf.mxu0
  %10619 = vdwg.mxu0
  %10620 = vmatprep.subr.bf16.mxu0 %v7461
  %10621 = vmatpush1.bf16.msra.mxu0 %v7460
  %10622 = vmatprep.subr.bf16.mxu0 %v7452
  %10623 = vmatpush1.bf16.msra.mxu0 %v7451
  %10624 = vmatprep.subr.bf16.mxu0 %v7443
  %10625 = vmatpush1.bf16.msra.mxu0 %v7442
  %10626 = vmatprep.subr.bf16.mxu0 %v7434
  %10627 = vmatpush1.bf16.msra.mxu0 %v7433
  %10628 = vmatprep.subr.bf16.mxu0 %v7425
  %10629 = vmatpush1.bf16.msra.mxu0 %v7424
  %10630 = vmatprep.subr.bf16.mxu0 %v7416
  %10631 = vmatpush1.bf16.msra.mxu0 %v7415
  %10632 = vmatprep.subr.bf16.mxu0 %v7407
  %10633 = vmatpush1.bf16.msra.mxu0 %v7406
  %10634 = vmatprep.subr.bf16.mxu0 %v7398
  %10635 = vmatpush1.bf16.msra.mxu0 %v7397
  %10636 = vmatprep.subr.bf16.mxu0 %v7533
  %10637 = vmatpush2.bf16.msra.mxu0 %v7532
  %10638 = vmatprep.subr.bf16.mxu0 %v7524
  %10639 = vmatpush2.bf16.msra.mxu0 %v7523
  %10640 = vmatprep.subr.bf16.mxu0 %v7515
  %10641 = vmatpush2.bf16.msra.mxu0 %v7514
  %10642 = vmatprep.subr.bf16.mxu0 %v7506
  %10643 = vmatpush2.bf16.msra.mxu0 %v7505
  %10644 = vmatprep.subr.bf16.mxu0 %v7497
  %10645 = vmatpush2.bf16.msra.mxu0 %v7496
  %10646 = vmatprep.subr.bf16.mxu0 %v7488
  %10647 = vmatpush2.bf16.msra.mxu0 %v7487
  %10648 = vmatprep.subr.bf16.mxu0 %v7479
  %10649 = vmatpush2.bf16.msra.mxu0 %v7478
  %10650 = vmatprep.subr.bf16.mxu0 %v7470
  %10651 = vmatpush2.bf16.msra.mxu0 %v7469
  %10652 = vmatprep.mubr.bf16.mxu0 %v1713
  %10653 = vmatmul.mubr.bf16.gmra.mxu0 %v1712
  %v10654 = vpop.f32.mrf.mxu0
  %v10655 = vadd.f32 %v10614, %v10654
  %v10656 = vpop.f32.mrf.mxu0
  %v10657 = vadd.f32 %v10616, %v10656
  %v10658 = vpop.f32.mrf.mxu0
  %v10659 = vpop.f32.mrf.mxu0
  %10660 = vdwg.mxu0
  %10661 = vmatprep.subr.bf16.mxu0 %v7605
  %10662 = vmatpush1.bf16.msra.mxu0 %v7604
  %10663 = vmatprep.subr.bf16.mxu0 %v7596
  %10664 = vmatpush1.bf16.msra.mxu0 %v7595
  %10665 = vmatprep.subr.bf16.mxu0 %v7587
  %10666 = vmatpush1.bf16.msra.mxu0 %v7586
  %10667 = vmatprep.subr.bf16.mxu0 %v7578
  %10668 = vmatpush1.bf16.msra.mxu0 %v7577
  %10669 = vmatprep.subr.bf16.mxu0 %v7569
  %10670 = vmatpush1.bf16.msra.mxu0 %v7568
  %10671 = vmatprep.subr.bf16.mxu0 %v7560
  %10672 = vmatpush1.bf16.msra.mxu0 %v7559
  %10673 = vmatprep.subr.bf16.mxu0 %v7551
  %10674 = vmatpush1.bf16.msra.mxu0 %v7550
  %10675 = vmatprep.subr.bf16.mxu0 %v7542
  %10676 = vmatpush1.bf16.msra.mxu0 %v7541
  %10677 = vmatprep.subr.bf16.mxu0 %v7677
  %10678 = vmatpush2.bf16.msra.mxu0 %v7676
  %10679 = vmatprep.subr.bf16.mxu0 %v7668
  %10680 = vmatpush2.bf16.msra.mxu0 %v7667
  %10681 = vmatprep.subr.bf16.mxu0 %v7659
  %10682 = vmatpush2.bf16.msra.mxu0 %v7658
  %10683 = vmatprep.subr.bf16.mxu0 %v7650
  %10684 = vmatpush2.bf16.msra.mxu0 %v7649
  %10685 = vmatprep.subr.bf16.mxu0 %v7641
  %10686 = vmatpush2.bf16.msra.mxu0 %v7640
  %10687 = vmatprep.subr.bf16.mxu0 %v7632
  %10688 = vmatpush2.bf16.msra.mxu0 %v7631
  %10689 = vmatprep.subr.bf16.mxu0 %v7623
  %10690 = vmatpush2.bf16.msra.mxu0 %v7622
  %10691 = vmatprep.subr.bf16.mxu0 %v7614
  %10692 = vmatpush2.bf16.msra.mxu0 %v7613
  %10693 = vmatprep.mubr.bf16.mxu0 %v1715
  %10694 = vmatmul.mubr.bf16.gmra.mxu0 %v1714
  %v10695 = vpop.f32.mrf.mxu0
  %v10696 = vadd.f32 %v10655, %v10695
  %v10697 = vpop.f32.mrf.mxu0
  %v10698 = vadd.f32 %v10657, %v10697
  %v10699 = vpop.f32.mrf.mxu0
  %v10700 = vpop.f32.mrf.mxu0
  %10701 = vdwg.mxu0
  %10702 = vmatprep.subr.bf16.mxu0 %v7749
  %10703 = vmatpush1.bf16.msra.mxu0 %v7748
  %10704 = vmatprep.subr.bf16.mxu0 %v7740
  %10705 = vmatpush1.bf16.msra.mxu0 %v7739
  %10706 = vmatprep.subr.bf16.mxu0 %v7731
  %10707 = vmatpush1.bf16.msra.mxu0 %v7730
  %10708 = vmatprep.subr.bf16.mxu0 %v7722
  %10709 = vmatpush1.bf16.msra.mxu0 %v7721
  %10710 = vmatprep.subr.bf16.mxu0 %v7713
  %10711 = vmatpush1.bf16.msra.mxu0 %v7712
  %10712 = vmatprep.subr.bf16.mxu0 %v7704
  %10713 = vmatpush1.bf16.msra.mxu0 %v7703
  %10714 = vmatprep.subr.bf16.mxu0 %v7695
  %10715 = vmatpush1.bf16.msra.mxu0 %v7694
  %10716 = vmatprep.subr.bf16.mxu0 %v7686
  %10717 = vmatpush1.bf16.msra.mxu0 %v7685
  %10718 = vmatprep.subr.bf16.mxu0 %v7821
  %10719 = vmatpush2.bf16.msra.mxu0 %v7820
  %10720 = vmatprep.subr.bf16.mxu0 %v7812
  %10721 = vmatpush2.bf16.msra.mxu0 %v7811
  %10722 = vmatprep.subr.bf16.mxu0 %v7803
  %10723 = vmatpush2.bf16.msra.mxu0 %v7802
  %10724 = vmatprep.subr.bf16.mxu0 %v7794
  %10725 = vmatpush2.bf16.msra.mxu0 %v7793
  %10726 = vmatprep.subr.bf16.mxu0 %v7785
  %10727 = vmatpush2.bf16.msra.mxu0 %v7784
  %10728 = vmatprep.subr.bf16.mxu0 %v7776
  %10729 = vmatpush2.bf16.msra.mxu0 %v7775
  %10730 = vmatprep.subr.bf16.mxu0 %v7767
  %10731 = vmatpush2.bf16.msra.mxu0 %v7766
  %10732 = vmatprep.subr.bf16.mxu0 %v7758
  %10733 = vmatpush2.bf16.msra.mxu0 %v7757
  %10734 = vmatprep.mubr.bf16.mxu0 %v1717
  %10735 = vmatmul.mubr.bf16.gmra.mxu0 %v1716
  %v10736 = vpop.f32.mrf.mxu0
  %v10737 = vadd.f32 %v10696, %v10736
  %v10738 = vpop.f32.mrf.mxu0
  %v10739 = vadd.f32 %v10698, %v10738
  %v10740 = vpop.f32.mrf.mxu0
  %v10741 = vpop.f32.mrf.mxu0
  %10742 = vdwg.mxu0
  %10743 = vmatprep.subr.bf16.mxu0 %v7893
  %10744 = vmatpush1.bf16.msra.mxu0 %v7892
  %10745 = vmatprep.subr.bf16.mxu0 %v7884
  %10746 = vmatpush1.bf16.msra.mxu0 %v7883
  %10747 = vmatprep.subr.bf16.mxu0 %v7875
  %10748 = vmatpush1.bf16.msra.mxu0 %v7874
  %10749 = vmatprep.subr.bf16.mxu0 %v7866
  %10750 = vmatpush1.bf16.msra.mxu0 %v7865
  %10751 = vmatprep.subr.bf16.mxu0 %v7857
  %10752 = vmatpush1.bf16.msra.mxu0 %v7856
  %10753 = vmatprep.subr.bf16.mxu0 %v7848
  %10754 = vmatpush1.bf16.msra.mxu0 %v7847
  %10755 = vmatprep.subr.bf16.mxu0 %v7839
  %10756 = vmatpush1.bf16.msra.mxu0 %v7838
  %10757 = vmatprep.subr.bf16.mxu0 %v7830
  %10758 = vmatpush1.bf16.msra.mxu0 %v7829
  %10759 = vmatprep.subr.bf16.mxu0 %v7965
  %10760 = vmatpush2.bf16.msra.mxu0 %v7964
  %10761 = vmatprep.subr.bf16.mxu0 %v7956
  %10762 = vmatpush2.bf16.msra.mxu0 %v7955
  %10763 = vmatprep.subr.bf16.mxu0 %v7947
  %10764 = vmatpush2.bf16.msra.mxu0 %v7946
  %10765 = vmatprep.subr.bf16.mxu0 %v7938
  %10766 = vmatpush2.bf16.msra.mxu0 %v7937
  %10767 = vmatprep.subr.bf16.mxu0 %v7929
  %10768 = vmatpush2.bf16.msra.mxu0 %v7928
  %10769 = vmatprep.subr.bf16.mxu0 %v7920
  %10770 = vmatpush2.bf16.msra.mxu0 %v7919
  %10771 = vmatprep.subr.bf16.mxu0 %v7911
  %10772 = vmatpush2.bf16.msra.mxu0 %v7910
  %10773 = vmatprep.subr.bf16.mxu0 %v7902
  %10774 = vmatpush2.bf16.msra.mxu0 %v7901
  %10775 = vmatprep.mubr.bf16.mxu0 %v1719
  %10776 = vmatmul.mubr.bf16.gmra.mxu0 %v1718
  %v10777 = vpop.f32.mrf.mxu0
  %v10778 = vadd.f32 %v10737, %v10777
  %v10779 = vpop.f32.mrf.mxu0
  %v10780 = vadd.f32 %v10739, %v10779
  %v10781 = vpop.f32.mrf.mxu0
  %v10782 = vpop.f32.mrf.mxu0
  %10783 = vdwg.mxu0
  %10784 = vmatprep.subr.bf16.mxu0 %v8037
  %10785 = vmatpush1.bf16.msra.mxu0 %v8036
  %10786 = vmatprep.subr.bf16.mxu0 %v8028
  %10787 = vmatpush1.bf16.msra.mxu0 %v8027
  %10788 = vmatprep.subr.bf16.mxu0 %v8019
  %10789 = vmatpush1.bf16.msra.mxu0 %v8018
  %10790 = vmatprep.subr.bf16.mxu0 %v8010
  %10791 = vmatpush1.bf16.msra.mxu0 %v8009
  %10792 = vmatprep.subr.bf16.mxu0 %v8001
  %10793 = vmatpush1.bf16.msra.mxu0 %v8000
  %10794 = vmatprep.subr.bf16.mxu0 %v7992
  %10795 = vmatpush1.bf16.msra.mxu0 %v7991
  %10796 = vmatprep.subr.bf16.mxu0 %v7983
  %10797 = vmatpush1.bf16.msra.mxu0 %v7982
  %10798 = vmatprep.subr.bf16.mxu0 %v7974
  %10799 = vmatpush1.bf16.msra.mxu0 %v7973
  %10800 = vmatprep.subr.bf16.mxu0 %v8109
  %10801 = vmatpush2.bf16.msra.mxu0 %v8108
  %10802 = vmatprep.subr.bf16.mxu0 %v8100
  %10803 = vmatpush2.bf16.msra.mxu0 %v8099
  %10804 = vmatprep.subr.bf16.mxu0 %v8091
  %10805 = vmatpush2.bf16.msra.mxu0 %v8090
  %10806 = vmatprep.subr.bf16.mxu0 %v8082
  %10807 = vmatpush2.bf16.msra.mxu0 %v8081
  %10808 = vmatprep.subr.bf16.mxu0 %v8073
  %10809 = vmatpush2.bf16.msra.mxu0 %v8072
  %10810 = vmatprep.subr.bf16.mxu0 %v8064
  %10811 = vmatpush2.bf16.msra.mxu0 %v8063
  %10812 = vmatprep.subr.bf16.mxu0 %v8055
  %10813 = vmatpush2.bf16.msra.mxu0 %v8054
  %10814 = vmatprep.subr.bf16.mxu0 %v8046
  %10815 = vmatpush2.bf16.msra.mxu0 %v8045
  %10816 = vmatprep.mubr.bf16.mxu0 %v1721
  %10817 = vmatmul.mubr.bf16.gmra.mxu0 %v1720
  %v10818 = vpop.f32.mrf.mxu0
  %v10819 = vadd.f32 %v10778, %v10818
  %v10820 = vpop.f32.mrf.mxu0
  %v10821 = vadd.f32 %v10780, %v10820
  %v10822 = vpop.f32.mrf.mxu0
  %v10823 = vpop.f32.mrf.mxu0
  %10824 = vdwg.mxu0
  %10825 = vmatprep.subr.bf16.mxu0 %v8181
  %10826 = vmatpush1.bf16.msra.mxu0 %v8180
  %10827 = vmatprep.subr.bf16.mxu0 %v8172
  %10828 = vmatpush1.bf16.msra.mxu0 %v8171
  %10829 = vmatprep.subr.bf16.mxu0 %v8163
  %10830 = vmatpush1.bf16.msra.mxu0 %v8162
  %10831 = vmatprep.subr.bf16.mxu0 %v8154
  %10832 = vmatpush1.bf16.msra.mxu0 %v8153
  %10833 = vmatprep.subr.bf16.mxu0 %v8145
  %10834 = vmatpush1.bf16.msra.mxu0 %v8144
  %10835 = vmatprep.subr.bf16.mxu0 %v8136
  %10836 = vmatpush1.bf16.msra.mxu0 %v8135
  %10837 = vmatprep.subr.bf16.mxu0 %v8127
  %10838 = vmatpush1.bf16.msra.mxu0 %v8126
  %10839 = vmatprep.subr.bf16.mxu0 %v8118
  %10840 = vmatpush1.bf16.msra.mxu0 %v8117
  %10841 = vmatprep.subr.bf16.mxu0 %v8253
  %10842 = vmatpush2.bf16.msra.mxu0 %v8252
  %10843 = vmatprep.subr.bf16.mxu0 %v8244
  %10844 = vmatpush2.bf16.msra.mxu0 %v8243
  %10845 = vmatprep.subr.bf16.mxu0 %v8235
  %10846 = vmatpush2.bf16.msra.mxu0 %v8234
  %10847 = vmatprep.subr.bf16.mxu0 %v8226
  %10848 = vmatpush2.bf16.msra.mxu0 %v8225
  %10849 = vmatprep.subr.bf16.mxu0 %v8217
  %10850 = vmatpush2.bf16.msra.mxu0 %v8216
  %10851 = vmatprep.subr.bf16.mxu0 %v8208
  %10852 = vmatpush2.bf16.msra.mxu0 %v8207
  %10853 = vmatprep.subr.bf16.mxu0 %v8199
  %10854 = vmatpush2.bf16.msra.mxu0 %v8198
  %10855 = vmatprep.subr.bf16.mxu0 %v8190
  %10856 = vmatpush2.bf16.msra.mxu0 %v8189
  %10857 = vmatprep.mubr.bf16.mxu0 %v1723
  %10858 = vmatmul.mubr.bf16.gmra.mxu0 %v1722
  %v10859 = vpop.f32.mrf.mxu0
  %v10860 = vadd.f32 %v10819, %v10859
  %v10861 = vpop.f32.mrf.mxu0
  %v10862 = vadd.f32 %v10821, %v10861
  %v10863 = vpop.f32.mrf.mxu0
  %v10864 = vpop.f32.mrf.mxu0
  %10865 = vdwg.mxu0
  %10866 = vmatprep.subr.bf16.mxu0 %v8325
  %10867 = vmatpush1.bf16.msra.mxu0 %v8324
  %10868 = vmatprep.subr.bf16.mxu0 %v8316
  %10869 = vmatpush1.bf16.msra.mxu0 %v8315
  %10870 = vmatprep.subr.bf16.mxu0 %v8307
  %10871 = vmatpush1.bf16.msra.mxu0 %v8306
  %10872 = vmatprep.subr.bf16.mxu0 %v8298
  %10873 = vmatpush1.bf16.msra.mxu0 %v8297
  %10874 = vmatprep.subr.bf16.mxu0 %v8289
  %10875 = vmatpush1.bf16.msra.mxu0 %v8288
  %10876 = vmatprep.subr.bf16.mxu0 %v8280
  %10877 = vmatpush1.bf16.msra.mxu0 %v8279
  %10878 = vmatprep.subr.bf16.mxu0 %v8271
  %10879 = vmatpush1.bf16.msra.mxu0 %v8270
  %10880 = vmatprep.subr.bf16.mxu0 %v8262
  %10881 = vmatpush1.bf16.msra.mxu0 %v8261
  %10882 = vmatprep.subr.bf16.mxu0 %v8397
  %10883 = vmatpush2.bf16.msra.mxu0 %v8396
  %10884 = vmatprep.subr.bf16.mxu0 %v8388
  %10885 = vmatpush2.bf16.msra.mxu0 %v8387
  %10886 = vmatprep.subr.bf16.mxu0 %v8379
  %10887 = vmatpush2.bf16.msra.mxu0 %v8378
  %10888 = vmatprep.subr.bf16.mxu0 %v8370
  %10889 = vmatpush2.bf16.msra.mxu0 %v8369
  %10890 = vmatprep.subr.bf16.mxu0 %v8361
  %10891 = vmatpush2.bf16.msra.mxu0 %v8360
  %10892 = vmatprep.subr.bf16.mxu0 %v8352
  %10893 = vmatpush2.bf16.msra.mxu0 %v8351
  %10894 = vmatprep.subr.bf16.mxu0 %v8343
  %10895 = vmatpush2.bf16.msra.mxu0 %v8342
  %10896 = vmatprep.subr.bf16.mxu0 %v8334
  %10897 = vmatpush2.bf16.msra.mxu0 %v8333
  %10898 = vmatprep.mubr.bf16.mxu0 %v1725
  %10899 = vmatmul.mubr.bf16.gmra.mxu0 %v1724
  %v10900 = vpop.f32.mrf.mxu0
  %v10901 = vadd.f32 %v10860, %v10900
  %v10902 = vpop.f32.mrf.mxu0
  %v10903 = vadd.f32 %v10862, %v10902
  %v10904 = vpop.f32.mrf.mxu0
  %v10905 = vpop.f32.mrf.mxu0
  %10906 = vdwg.mxu0
  %10907 = vmatprep.subr.bf16.mxu0 %v8469
  %10908 = vmatpush1.bf16.msra.mxu0 %v8468
  %10909 = vmatprep.subr.bf16.mxu0 %v8460
  %10910 = vmatpush1.bf16.msra.mxu0 %v8459
  %10911 = vmatprep.subr.bf16.mxu0 %v8451
  %10912 = vmatpush1.bf16.msra.mxu0 %v8450
  %10913 = vmatprep.subr.bf16.mxu0 %v8442
  %10914 = vmatpush1.bf16.msra.mxu0 %v8441
  %10915 = vmatprep.subr.bf16.mxu0 %v8433
  %10916 = vmatpush1.bf16.msra.mxu0 %v8432
  %10917 = vmatprep.subr.bf16.mxu0 %v8424
  %10918 = vmatpush1.bf16.msra.mxu0 %v8423
  %10919 = vmatprep.subr.bf16.mxu0 %v8415
  %10920 = vmatpush1.bf16.msra.mxu0 %v8414
  %10921 = vmatprep.subr.bf16.mxu0 %v8406
  %10922 = vmatpush1.bf16.msra.mxu0 %v8405
  %10923 = vmatprep.subr.bf16.mxu0 %v8541
  %10924 = vmatpush2.bf16.msra.mxu0 %v8540
  %10925 = vmatprep.subr.bf16.mxu0 %v8532
  %10926 = vmatpush2.bf16.msra.mxu0 %v8531
  %10927 = vmatprep.subr.bf16.mxu0 %v8523
  %10928 = vmatpush2.bf16.msra.mxu0 %v8522
  %10929 = vmatprep.subr.bf16.mxu0 %v8514
  %10930 = vmatpush2.bf16.msra.mxu0 %v8513
  %10931 = vmatprep.subr.bf16.mxu0 %v8505
  %10932 = vmatpush2.bf16.msra.mxu0 %v8504
  %10933 = vmatprep.subr.bf16.mxu0 %v8496
  %10934 = vmatpush2.bf16.msra.mxu0 %v8495
  %10935 = vmatprep.subr.bf16.mxu0 %v8487
  %10936 = vmatpush2.bf16.msra.mxu0 %v8486
  %10937 = vmatprep.subr.bf16.mxu0 %v8478
  %10938 = vmatpush2.bf16.msra.mxu0 %v8477
  %10939 = vmatprep.mubr.bf16.mxu0 %v1727
  %10940 = vmatmul.mubr.bf16.gmra.mxu0 %v1726
  %v10941 = vpop.f32.mrf.mxu0
  %v10942 = vadd.f32 %v10901, %v10941
  %v10943 = vpop.f32.mrf.mxu0
  %v10944 = vadd.f32 %v10903, %v10943
  %v10945 = vpop.f32.mrf.mxu0
  %v10946 = vpop.f32.mrf.mxu0
  %10947 = vdwg.mxu0
  %10948 = vmatprep.subr.bf16.mxu0 %v7319
  %10949 = vmatpush1.bf16.msra.mxu0 %v7318
  %10950 = vmatprep.subr.bf16.mxu0 %v7310
  %10951 = vmatpush1.bf16.msra.mxu0 %v7309
  %10952 = vmatprep.subr.bf16.mxu0 %v7301
  %10953 = vmatpush1.bf16.msra.mxu0 %v7300
  %10954 = vmatprep.subr.bf16.mxu0 %v7292
  %10955 = vmatpush1.bf16.msra.mxu0 %v7291
  %10956 = vmatprep.subr.bf16.mxu0 %v7283
  %10957 = vmatpush1.bf16.msra.mxu0 %v7282
  %10958 = vmatprep.subr.bf16.mxu0 %v7274
  %10959 = vmatpush1.bf16.msra.mxu0 %v7273
  %10960 = vmatprep.subr.bf16.mxu0 %v7265
  %10961 = vmatpush1.bf16.msra.mxu0 %v7264
  %10962 = vmatprep.subr.bf16.mxu0 %v7256
  %10963 = vmatpush1.bf16.msra.mxu0 %v7255
  %10964 = vmatprep.subr.bf16.mxu0 %v7391
  %10965 = vmatpush2.bf16.msra.mxu0 %v7390
  %10966 = vmatprep.subr.bf16.mxu0 %v7382
  %10967 = vmatpush2.bf16.msra.mxu0 %v7381
  %10968 = vmatprep.subr.bf16.mxu0 %v7373
  %10969 = vmatpush2.bf16.msra.mxu0 %v7372
  %10970 = vmatprep.subr.bf16.mxu0 %v7364
  %10971 = vmatpush2.bf16.msra.mxu0 %v7363
  %10972 = vmatprep.subr.bf16.mxu0 %v7355
  %10973 = vmatpush2.bf16.msra.mxu0 %v7354
  %10974 = vmatprep.subr.bf16.mxu0 %v7346
  %10975 = vmatpush2.bf16.msra.mxu0 %v7345
  %10976 = vmatprep.subr.bf16.mxu0 %v7337
  %10977 = vmatpush2.bf16.msra.mxu0 %v7336
  %10978 = vmatprep.subr.bf16.mxu0 %v7328
  %10979 = vmatpush2.bf16.msra.mxu0 %v7327
  %10980 = vmatprep.mubr.bf16.mxu0 %v1711
  %10981 = vmatmul.mubr.bf16.gmra.mxu0 %v1710
  %v10982 = vpop.f32.mrf.mxu0
  %v10983 = vadd.f32 %v3199, %v10982
  %v10984 = vpop.f32.mrf.mxu0
  %v10985 = vadd.f32 %v3203, %v10984
  %v10986 = vpop.f32.mrf.mxu0
  %v10987 = vpop.f32.mrf.mxu0
  %10988 = vdwg.mxu0
  %10989 = vmatprep.subr.bf16.mxu0 %v7463
  %10990 = vmatpush1.bf16.msra.mxu0 %v7462
  %10991 = vmatprep.subr.bf16.mxu0 %v7454
  %10992 = vmatpush1.bf16.msra.mxu0 %v7453
  %10993 = vmatprep.subr.bf16.mxu0 %v7445
  %10994 = vmatpush1.bf16.msra.mxu0 %v7444
  %10995 = vmatprep.subr.bf16.mxu0 %v7436
  %10996 = vmatpush1.bf16.msra.mxu0 %v7435
  %10997 = vmatprep.subr.bf16.mxu0 %v7427
  %10998 = vmatpush1.bf16.msra.mxu0 %v7426
  %10999 = vmatprep.subr.bf16.mxu0 %v7418
  %11000 = vmatpush1.bf16.msra.mxu0 %v7417
  %11001 = vmatprep.subr.bf16.mxu0 %v7409
  %11002 = vmatpush1.bf16.msra.mxu0 %v7408
  %11003 = vmatprep.subr.bf16.mxu0 %v7400
  %11004 = vmatpush1.bf16.msra.mxu0 %v7399
  %11005 = vmatprep.subr.bf16.mxu0 %v7535
  %11006 = vmatpush2.bf16.msra.mxu0 %v7534
  %11007 = vmatprep.subr.bf16.mxu0 %v7526
  %11008 = vmatpush2.bf16.msra.mxu0 %v7525
  %11009 = vmatprep.subr.bf16.mxu0 %v7517
  %11010 = vmatpush2.bf16.msra.mxu0 %v7516
  %11011 = vmatprep.subr.bf16.mxu0 %v7508
  %11012 = vmatpush2.bf16.msra.mxu0 %v7507
  %11013 = vmatprep.subr.bf16.mxu0 %v7499
  %11014 = vmatpush2.bf16.msra.mxu0 %v7498
  %11015 = vmatprep.subr.bf16.mxu0 %v7490
  %11016 = vmatpush2.bf16.msra.mxu0 %v7489
  %11017 = vmatprep.subr.bf16.mxu0 %v7481
  %11018 = vmatpush2.bf16.msra.mxu0 %v7480
  %11019 = vmatprep.subr.bf16.mxu0 %v7472
  %11020 = vmatpush2.bf16.msra.mxu0 %v7471
  %11021 = vmatprep.mubr.bf16.mxu0 %v1713
  %11022 = vmatmul.mubr.bf16.gmra.mxu0 %v1712
  %v11023 = vpop.f32.mrf.mxu0
  %v11024 = vadd.f32 %v10983, %v11023
  %v11025 = vpop.f32.mrf.mxu0
  %v11026 = vadd.f32 %v10985, %v11025
  %v11027 = vpop.f32.mrf.mxu0
  %v11028 = vpop.f32.mrf.mxu0
  %11029 = vdwg.mxu0
  %11030 = vmatprep.subr.bf16.mxu0 %v7607
  %11031 = vmatpush1.bf16.msra.mxu0 %v7606
  %11032 = vmatprep.subr.bf16.mxu0 %v7598
  %11033 = vmatpush1.bf16.msra.mxu0 %v7597
  %11034 = vmatprep.subr.bf16.mxu0 %v7589
  %11035 = vmatpush1.bf16.msra.mxu0 %v7588
  %11036 = vmatprep.subr.bf16.mxu0 %v7580
  %11037 = vmatpush1.bf16.msra.mxu0 %v7579
  %11038 = vmatprep.subr.bf16.mxu0 %v7571
  %11039 = vmatpush1.bf16.msra.mxu0 %v7570
  %11040 = vmatprep.subr.bf16.mxu0 %v7562
  %11041 = vmatpush1.bf16.msra.mxu0 %v7561
  %11042 = vmatprep.subr.bf16.mxu0 %v7553
  %11043 = vmatpush1.bf16.msra.mxu0 %v7552
  %11044 = vmatprep.subr.bf16.mxu0 %v7544
  %11045 = vmatpush1.bf16.msra.mxu0 %v7543
  %11046 = vmatprep.subr.bf16.mxu0 %v7679
  %11047 = vmatpush2.bf16.msra.mxu0 %v7678
  %11048 = vmatprep.subr.bf16.mxu0 %v7670
  %11049 = vmatpush2.bf16.msra.mxu0 %v7669
  %11050 = vmatprep.subr.bf16.mxu0 %v7661
  %11051 = vmatpush2.bf16.msra.mxu0 %v7660
  %11052 = vmatprep.subr.bf16.mxu0 %v7652
  %11053 = vmatpush2.bf16.msra.mxu0 %v7651
  %11054 = vmatprep.subr.bf16.mxu0 %v7643
  %11055 = vmatpush2.bf16.msra.mxu0 %v7642
  %11056 = vmatprep.subr.bf16.mxu0 %v7634
  %11057 = vmatpush2.bf16.msra.mxu0 %v7633
  %11058 = vmatprep.subr.bf16.mxu0 %v7625
  %11059 = vmatpush2.bf16.msra.mxu0 %v7624
  %11060 = vmatprep.subr.bf16.mxu0 %v7616
  %11061 = vmatpush2.bf16.msra.mxu0 %v7615
  %11062 = vmatprep.mubr.bf16.mxu0 %v1715
  %11063 = vmatmul.mubr.bf16.gmra.mxu0 %v1714
  %v11064 = vpop.f32.mrf.mxu0
  %v11065 = vadd.f32 %v11024, %v11064
  %v11066 = vpop.f32.mrf.mxu0
  %v11067 = vadd.f32 %v11026, %v11066
  %v11068 = vpop.f32.mrf.mxu0
  %v11069 = vpop.f32.mrf.mxu0
  %11070 = vdwg.mxu0
  %11071 = vmatprep.subr.bf16.mxu0 %v7751
  %11072 = vmatpush1.bf16.msra.mxu0 %v7750
  %11073 = vmatprep.subr.bf16.mxu0 %v7742
  %11074 = vmatpush1.bf16.msra.mxu0 %v7741
  %11075 = vmatprep.subr.bf16.mxu0 %v7733
  %11076 = vmatpush1.bf16.msra.mxu0 %v7732
  %11077 = vmatprep.subr.bf16.mxu0 %v7724
  %11078 = vmatpush1.bf16.msra.mxu0 %v7723
  %11079 = vmatprep.subr.bf16.mxu0 %v7715
  %11080 = vmatpush1.bf16.msra.mxu0 %v7714
  %11081 = vmatprep.subr.bf16.mxu0 %v7706
  %11082 = vmatpush1.bf16.msra.mxu0 %v7705
  %11083 = vmatprep.subr.bf16.mxu0 %v7697
  %11084 = vmatpush1.bf16.msra.mxu0 %v7696
  %11085 = vmatprep.subr.bf16.mxu0 %v7688
  %11086 = vmatpush1.bf16.msra.mxu0 %v7687
  %11087 = vmatprep.subr.bf16.mxu0 %v7823
  %11088 = vmatpush2.bf16.msra.mxu0 %v7822
  %11089 = vmatprep.subr.bf16.mxu0 %v7814
  %11090 = vmatpush2.bf16.msra.mxu0 %v7813
  %11091 = vmatprep.subr.bf16.mxu0 %v7805
  %11092 = vmatpush2.bf16.msra.mxu0 %v7804
  %11093 = vmatprep.subr.bf16.mxu0 %v7796
  %11094 = vmatpush2.bf16.msra.mxu0 %v7795
  %11095 = vmatprep.subr.bf16.mxu0 %v7787
  %11096 = vmatpush2.bf16.msra.mxu0 %v7786
  %11097 = vmatprep.subr.bf16.mxu0 %v7778
  %11098 = vmatpush2.bf16.msra.mxu0 %v7777
  %11099 = vmatprep.subr.bf16.mxu0 %v7769
  %11100 = vmatpush2.bf16.msra.mxu0 %v7768
  %11101 = vmatprep.subr.bf16.mxu0 %v7760
  %11102 = vmatpush2.bf16.msra.mxu0 %v7759
  %11103 = vmatprep.mubr.bf16.mxu0 %v1717
  %11104 = vmatmul.mubr.bf16.gmra.mxu0 %v1716
  %v11105 = vpop.f32.mrf.mxu0
  %v11106 = vadd.f32 %v11065, %v11105
  %v11107 = vpop.f32.mrf.mxu0
  %v11108 = vadd.f32 %v11067, %v11107
  %v11109 = vpop.f32.mrf.mxu0
  %v11110 = vpop.f32.mrf.mxu0
  %11111 = vdwg.mxu0
  %11112 = vmatprep.subr.bf16.mxu0 %v7895
  %11113 = vmatpush1.bf16.msra.mxu0 %v7894
  %11114 = vmatprep.subr.bf16.mxu0 %v7886
  %11115 = vmatpush1.bf16.msra.mxu0 %v7885
  %11116 = vmatprep.subr.bf16.mxu0 %v7877
  %11117 = vmatpush1.bf16.msra.mxu0 %v7876
  %11118 = vmatprep.subr.bf16.mxu0 %v7868
  %11119 = vmatpush1.bf16.msra.mxu0 %v7867
  %11120 = vmatprep.subr.bf16.mxu0 %v7859
  %11121 = vmatpush1.bf16.msra.mxu0 %v7858
  %11122 = vmatprep.subr.bf16.mxu0 %v7850
  %11123 = vmatpush1.bf16.msra.mxu0 %v7849
  %11124 = vmatprep.subr.bf16.mxu0 %v7841
  %11125 = vmatpush1.bf16.msra.mxu0 %v7840
  %11126 = vmatprep.subr.bf16.mxu0 %v7832
  %11127 = vmatpush1.bf16.msra.mxu0 %v7831
  %11128 = vmatprep.subr.bf16.mxu0 %v7967
  %11129 = vmatpush2.bf16.msra.mxu0 %v7966
  %11130 = vmatprep.subr.bf16.mxu0 %v7958
  %11131 = vmatpush2.bf16.msra.mxu0 %v7957
  %11132 = vmatprep.subr.bf16.mxu0 %v7949
  %11133 = vmatpush2.bf16.msra.mxu0 %v7948
  %11134 = vmatprep.subr.bf16.mxu0 %v7940
  %11135 = vmatpush2.bf16.msra.mxu0 %v7939
  %11136 = vmatprep.subr.bf16.mxu0 %v7931
  %11137 = vmatpush2.bf16.msra.mxu0 %v7930
  %11138 = vmatprep.subr.bf16.mxu0 %v7922
  %11139 = vmatpush2.bf16.msra.mxu0 %v7921
  %11140 = vmatprep.subr.bf16.mxu0 %v7913
  %11141 = vmatpush2.bf16.msra.mxu0 %v7912
  %11142 = vmatprep.subr.bf16.mxu0 %v7904
  %11143 = vmatpush2.bf16.msra.mxu0 %v7903
  %11144 = vmatprep.mubr.bf16.mxu0 %v1719
  %11145 = vmatmul.mubr.bf16.gmra.mxu0 %v1718
  %v11146 = vpop.f32.mrf.mxu0
  %v11147 = vadd.f32 %v11106, %v11146
  %v11148 = vpop.f32.mrf.mxu0
  %v11149 = vadd.f32 %v11108, %v11148
  %v11150 = vpop.f32.mrf.mxu0
  %v11151 = vpop.f32.mrf.mxu0
  %11152 = vdwg.mxu0
  %11153 = vmatprep.subr.bf16.mxu0 %v8039
  %11154 = vmatpush1.bf16.msra.mxu0 %v8038
  %11155 = vmatprep.subr.bf16.mxu0 %v8030
  %11156 = vmatpush1.bf16.msra.mxu0 %v8029
  %11157 = vmatprep.subr.bf16.mxu0 %v8021
  %11158 = vmatpush1.bf16.msra.mxu0 %v8020
  %11159 = vmatprep.subr.bf16.mxu0 %v8012
  %11160 = vmatpush1.bf16.msra.mxu0 %v8011
  %11161 = vmatprep.subr.bf16.mxu0 %v8003
  %11162 = vmatpush1.bf16.msra.mxu0 %v8002
  %11163 = vmatprep.subr.bf16.mxu0 %v7994
  %11164 = vmatpush1.bf16.msra.mxu0 %v7993
  %11165 = vmatprep.subr.bf16.mxu0 %v7985
  %11166 = vmatpush1.bf16.msra.mxu0 %v7984
  %11167 = vmatprep.subr.bf16.mxu0 %v7976
  %11168 = vmatpush1.bf16.msra.mxu0 %v7975
  %11169 = vmatprep.subr.bf16.mxu0 %v8111
  %11170 = vmatpush2.bf16.msra.mxu0 %v8110
  %11171 = vmatprep.subr.bf16.mxu0 %v8102
  %11172 = vmatpush2.bf16.msra.mxu0 %v8101
  %11173 = vmatprep.subr.bf16.mxu0 %v8093
  %11174 = vmatpush2.bf16.msra.mxu0 %v8092
  %11175 = vmatprep.subr.bf16.mxu0 %v8084
  %11176 = vmatpush2.bf16.msra.mxu0 %v8083
  %11177 = vmatprep.subr.bf16.mxu0 %v8075
  %11178 = vmatpush2.bf16.msra.mxu0 %v8074
  %11179 = vmatprep.subr.bf16.mxu0 %v8066
  %11180 = vmatpush2.bf16.msra.mxu0 %v8065
  %11181 = vmatprep.subr.bf16.mxu0 %v8057
  %11182 = vmatpush2.bf16.msra.mxu0 %v8056
  %11183 = vmatprep.subr.bf16.mxu0 %v8048
  %11184 = vmatpush2.bf16.msra.mxu0 %v8047
  %11185 = vmatprep.mubr.bf16.mxu0 %v1721
  %11186 = vmatmul.mubr.bf16.gmra.mxu0 %v1720
  %v11187 = vpop.f32.mrf.mxu0
  %v11188 = vadd.f32 %v11147, %v11187
  %v11189 = vpop.f32.mrf.mxu0
  %v11190 = vadd.f32 %v11149, %v11189
  %v11191 = vpop.f32.mrf.mxu0
  %v11192 = vpop.f32.mrf.mxu0
  %11193 = vdwg.mxu0
  %11194 = vmatprep.subr.bf16.mxu0 %v8183
  %11195 = vmatpush1.bf16.msra.mxu0 %v8182
  %11196 = vmatprep.subr.bf16.mxu0 %v8174
  %11197 = vmatpush1.bf16.msra.mxu0 %v8173
  %11198 = vmatprep.subr.bf16.mxu0 %v8165
  %11199 = vmatpush1.bf16.msra.mxu0 %v8164
  %11200 = vmatprep.subr.bf16.mxu0 %v8156
  %11201 = vmatpush1.bf16.msra.mxu0 %v8155
  %11202 = vmatprep.subr.bf16.mxu0 %v8147
  %11203 = vmatpush1.bf16.msra.mxu0 %v8146
  %11204 = vmatprep.subr.bf16.mxu0 %v8138
  %11205 = vmatpush1.bf16.msra.mxu0 %v8137
  %11206 = vmatprep.subr.bf16.mxu0 %v8129
  %11207 = vmatpush1.bf16.msra.mxu0 %v8128
  %11208 = vmatprep.subr.bf16.mxu0 %v8120
  %11209 = vmatpush1.bf16.msra.mxu0 %v8119
  %11210 = vmatprep.subr.bf16.mxu0 %v8255
  %11211 = vmatpush2.bf16.msra.mxu0 %v8254
  %11212 = vmatprep.subr.bf16.mxu0 %v8246
  %11213 = vmatpush2.bf16.msra.mxu0 %v8245
  %11214 = vmatprep.subr.bf16.mxu0 %v8237
  %11215 = vmatpush2.bf16.msra.mxu0 %v8236
  %11216 = vmatprep.subr.bf16.mxu0 %v8228
  %11217 = vmatpush2.bf16.msra.mxu0 %v8227
  %11218 = vmatprep.subr.bf16.mxu0 %v8219
  %11219 = vmatpush2.bf16.msra.mxu0 %v8218
  %11220 = vmatprep.subr.bf16.mxu0 %v8210
  %11221 = vmatpush2.bf16.msra.mxu0 %v8209
  %11222 = vmatprep.subr.bf16.mxu0 %v8201
  %11223 = vmatpush2.bf16.msra.mxu0 %v8200
  %11224 = vmatprep.subr.bf16.mxu0 %v8192
  %11225 = vmatpush2.bf16.msra.mxu0 %v8191
  %11226 = vmatprep.mubr.bf16.mxu0 %v1723
  %11227 = vmatmul.mubr.bf16.gmra.mxu0 %v1722
  %v11228 = vpop.f32.mrf.mxu0
  %v11229 = vadd.f32 %v11188, %v11228
  %v11230 = vpop.f32.mrf.mxu0
  %v11231 = vadd.f32 %v11190, %v11230
  %v11232 = vpop.f32.mrf.mxu0
  %v11233 = vpop.f32.mrf.mxu0
  %11234 = vdwg.mxu0
  %11235 = vmatprep.subr.bf16.mxu0 %v8327
  %11236 = vmatpush1.bf16.msra.mxu0 %v8326
  %11237 = vmatprep.subr.bf16.mxu0 %v8318
  %11238 = vmatpush1.bf16.msra.mxu0 %v8317
  %11239 = vmatprep.subr.bf16.mxu0 %v8309
  %11240 = vmatpush1.bf16.msra.mxu0 %v8308
  %11241 = vmatprep.subr.bf16.mxu0 %v8300
  %11242 = vmatpush1.bf16.msra.mxu0 %v8299
  %11243 = vmatprep.subr.bf16.mxu0 %v8291
  %11244 = vmatpush1.bf16.msra.mxu0 %v8290
  %11245 = vmatprep.subr.bf16.mxu0 %v8282
  %11246 = vmatpush1.bf16.msra.mxu0 %v8281
  %11247 = vmatprep.subr.bf16.mxu0 %v8273
  %11248 = vmatpush1.bf16.msra.mxu0 %v8272
  %11249 = vmatprep.subr.bf16.mxu0 %v8264
  %11250 = vmatpush1.bf16.msra.mxu0 %v8263
  %11251 = vmatprep.subr.bf16.mxu0 %v8399
  %11252 = vmatpush2.bf16.msra.mxu0 %v8398
  %11253 = vmatprep.subr.bf16.mxu0 %v8390
  %11254 = vmatpush2.bf16.msra.mxu0 %v8389
  %11255 = vmatprep.subr.bf16.mxu0 %v8381
  %11256 = vmatpush2.bf16.msra.mxu0 %v8380
  %11257 = vmatprep.subr.bf16.mxu0 %v8372
  %11258 = vmatpush2.bf16.msra.mxu0 %v8371
  %11259 = vmatprep.subr.bf16.mxu0 %v8363
  %11260 = vmatpush2.bf16.msra.mxu0 %v8362
  %11261 = vmatprep.subr.bf16.mxu0 %v8354
  %11262 = vmatpush2.bf16.msra.mxu0 %v8353
  %11263 = vmatprep.subr.bf16.mxu0 %v8345
  %11264 = vmatpush2.bf16.msra.mxu0 %v8344
  %11265 = vmatprep.subr.bf16.mxu0 %v8336
  %11266 = vmatpush2.bf16.msra.mxu0 %v8335
  %11267 = vmatprep.mubr.bf16.mxu0 %v1725
  %11268 = vmatmul.mubr.bf16.gmra.mxu0 %v1724
  %v11269 = vpop.f32.mrf.mxu0
  %v11270 = vadd.f32 %v11229, %v11269
  %v11271 = vpop.f32.mrf.mxu0
  %v11272 = vadd.f32 %v11231, %v11271
  %v11273 = vpop.f32.mrf.mxu0
  %v11274 = vpop.f32.mrf.mxu0
  %11275 = vdwg.mxu0
  %11276 = vmatprep.subr.bf16.mxu0 %v8471
  %11277 = vmatpush1.bf16.msra.mxu0 %v8470
  %11278 = vmatprep.subr.bf16.mxu0 %v8462
  %11279 = vmatpush1.bf16.msra.mxu0 %v8461
  %11280 = vmatprep.subr.bf16.mxu0 %v8453
  %11281 = vmatpush1.bf16.msra.mxu0 %v8452
  %11282 = vmatprep.subr.bf16.mxu0 %v8444
  %11283 = vmatpush1.bf16.msra.mxu0 %v8443
  %11284 = vmatprep.subr.bf16.mxu0 %v8435
  %11285 = vmatpush1.bf16.msra.mxu0 %v8434
  %11286 = vmatprep.subr.bf16.mxu0 %v8426
  %11287 = vmatpush1.bf16.msra.mxu0 %v8425
  %11288 = vmatprep.subr.bf16.mxu0 %v8417
  %11289 = vmatpush1.bf16.msra.mxu0 %v8416
  %11290 = vmatprep.subr.bf16.mxu0 %v8408
  %11291 = vmatpush1.bf16.msra.mxu0 %v8407
  %11292 = vmatprep.subr.bf16.mxu0 %v8543
  %11293 = vmatpush2.bf16.msra.mxu0 %v8542
  %11294 = vmatprep.subr.bf16.mxu0 %v8534
  %11295 = vmatpush2.bf16.msra.mxu0 %v8533
  %11296 = vmatprep.subr.bf16.mxu0 %v8525
  %11297 = vmatpush2.bf16.msra.mxu0 %v8524
  %11298 = vmatprep.subr.bf16.mxu0 %v8516
  %11299 = vmatpush2.bf16.msra.mxu0 %v8515
  %11300 = vmatprep.subr.bf16.mxu0 %v8507
  %11301 = vmatpush2.bf16.msra.mxu0 %v8506
  %11302 = vmatprep.subr.bf16.mxu0 %v8498
  %11303 = vmatpush2.bf16.msra.mxu0 %v8497
  %11304 = vmatprep.subr.bf16.mxu0 %v8489
  %11305 = vmatpush2.bf16.msra.mxu0 %v8488
  %11306 = vmatprep.subr.bf16.mxu0 %v8480
  %11307 = vmatpush2.bf16.msra.mxu0 %v8479
  %11308 = vmatprep.mubr.bf16.mxu0 %v1727
  %11309 = vmatmul.mubr.bf16.gmra.mxu0 %v1726
  %v11310 = vpop.f32.mrf.mxu0
  %v11311 = vadd.f32 %v11270, %v11310
  %v11312 = vpop.f32.mrf.mxu0
  %v11313 = vadd.f32 %v11272, %v11312
  %v11314 = vpop.f32.mrf.mxu0
  %v11315 = vpop.f32.mrf.mxu0
  %11316 = vdwg.mxu0
  %11317 = vmatprep.subr.bf16.mxu0 0
  %11318 = vmatpush1.bf16.msra.mxu0 %v7320
  %11319 = vmatprep.subr.bf16.mxu0 0
  %11320 = vmatpush1.bf16.msra.mxu0 %v7311
  %11321 = vmatprep.subr.bf16.mxu0 0
  %11322 = vmatpush1.bf16.msra.mxu0 %v7302
  %11323 = vmatprep.subr.bf16.mxu0 0
  %11324 = vmatpush1.bf16.msra.mxu0 %v7293
  %11325 = vmatprep.subr.bf16.mxu0 0
  %11326 = vmatpush1.bf16.msra.mxu0 %v7284
  %11327 = vmatprep.subr.bf16.mxu0 0
  %11328 = vmatpush1.bf16.msra.mxu0 %v7275
  %11329 = vmatprep.subr.bf16.mxu0 0
  %11330 = vmatpush1.bf16.msra.mxu0 %v7266
  %11331 = vmatprep.subr.bf16.mxu0 0
  %11332 = vmatpush1.bf16.msra.mxu0 %v7257
  %11333 = vmatprep.subr.bf16.mxu0 0
  %11334 = vmatpush2.bf16.msra.mxu0 %v7392
  %11335 = vmatprep.subr.bf16.mxu0 0
  %11336 = vmatpush2.bf16.msra.mxu0 %v7383
  %11337 = vmatprep.subr.bf16.mxu0 0
  %11338 = vmatpush2.bf16.msra.mxu0 %v7374
  %11339 = vmatprep.subr.bf16.mxu0 0
  %11340 = vmatpush2.bf16.msra.mxu0 %v7365
  %11341 = vmatprep.subr.bf16.mxu0 0
  %11342 = vmatpush2.bf16.msra.mxu0 %v7356
  %11343 = vmatprep.subr.bf16.mxu0 0
  %11344 = vmatpush2.bf16.msra.mxu0 %v7347
  %11345 = vmatprep.subr.bf16.mxu0 0
  %11346 = vmatpush2.bf16.msra.mxu0 %v7338
  %11347 = vmatprep.subr.bf16.mxu0 0
  %11348 = vmatpush2.bf16.msra.mxu0 %v7329
  %11349 = vmatprep.mubr.bf16.mxu0 %v1711
  %11350 = vmatmul.mubr.bf16.gmra.mxu0 %v1710
  %v11351 = vpop.f32.mrf.mxu0
  %v11352 = vadd.f32 %v3207, %v11351
  %v11353 = vpop.f32.mrf.mxu0
  %v11354 = vpop.f32.mrf.mxu0
  %v11355 = vpop.f32.mrf.mxu0
  %11356 = vdwg.mxu0
  %11357 = vmatprep.subr.bf16.mxu0 0
  %11358 = vmatpush1.bf16.msra.mxu0 %v7464
  %11359 = vmatprep.subr.bf16.mxu0 0
  %11360 = vmatpush1.bf16.msra.mxu0 %v7455
  %11361 = vmatprep.subr.bf16.mxu0 0
  %11362 = vmatpush1.bf16.msra.mxu0 %v7446
  %11363 = vmatprep.subr.bf16.mxu0 0
  %11364 = vmatpush1.bf16.msra.mxu0 %v7437
  %11365 = vmatprep.subr.bf16.mxu0 0
  %11366 = vmatpush1.bf16.msra.mxu0 %v7428
  %11367 = vmatprep.subr.bf16.mxu0 0
  %11368 = vmatpush1.bf16.msra.mxu0 %v7419
  %11369 = vmatprep.subr.bf16.mxu0 0
  %11370 = vmatpush1.bf16.msra.mxu0 %v7410
  %11371 = vmatprep.subr.bf16.mxu0 0
  %11372 = vmatpush1.bf16.msra.mxu0 %v7401
  %11373 = vmatprep.subr.bf16.mxu0 0
  %11374 = vmatpush2.bf16.msra.mxu0 %v7536
  %11375 = vmatprep.subr.bf16.mxu0 0
  %11376 = vmatpush2.bf16.msra.mxu0 %v7527
  %11377 = vmatprep.subr.bf16.mxu0 0
  %11378 = vmatpush2.bf16.msra.mxu0 %v7518
  %11379 = vmatprep.subr.bf16.mxu0 0
  %11380 = vmatpush2.bf16.msra.mxu0 %v7509
  %11381 = vmatprep.subr.bf16.mxu0 0
  %11382 = vmatpush2.bf16.msra.mxu0 %v7500
  %11383 = vmatprep.subr.bf16.mxu0 0
  %11384 = vmatpush2.bf16.msra.mxu0 %v7491
  %11385 = vmatprep.subr.bf16.mxu0 0
  %11386 = vmatpush2.bf16.msra.mxu0 %v7482
  %11387 = vmatprep.subr.bf16.mxu0 0
  %11388 = vmatpush2.bf16.msra.mxu0 %v7473
  %11389 = vmatprep.mubr.bf16.mxu0 %v1713
  %11390 = vmatmul.mubr.bf16.gmra.mxu0 %v1712
  %v11391 = vpop.f32.mrf.mxu0
  %v11392 = vadd.f32 %v11352, %v11391
  %v11393 = vpop.f32.mrf.mxu0
  %v11394 = vpop.f32.mrf.mxu0
  %v11395 = vpop.f32.mrf.mxu0
  %11396 = vdwg.mxu0
  %11397 = vmatprep.subr.bf16.mxu0 0
  %11398 = vmatpush1.bf16.msra.mxu0 %v7608
  %11399 = vmatprep.subr.bf16.mxu0 0
  %11400 = vmatpush1.bf16.msra.mxu0 %v7599
  %11401 = vmatprep.subr.bf16.mxu0 0
  %11402 = vmatpush1.bf16.msra.mxu0 %v7590
  %11403 = vmatprep.subr.bf16.mxu0 0
  %11404 = vmatpush1.bf16.msra.mxu0 %v7581
  %11405 = vmatprep.subr.bf16.mxu0 0
  %11406 = vmatpush1.bf16.msra.mxu0 %v7572
  %11407 = vmatprep.subr.bf16.mxu0 0
  %11408 = vmatpush1.bf16.msra.mxu0 %v7563
  %11409 = vmatprep.subr.bf16.mxu0 0
  %11410 = vmatpush1.bf16.msra.mxu0 %v7554
  %11411 = vmatprep.subr.bf16.mxu0 0
  %11412 = vmatpush1.bf16.msra.mxu0 %v7545
  %11413 = vmatprep.subr.bf16.mxu0 0
  %11414 = vmatpush2.bf16.msra.mxu0 %v7680
  %11415 = vmatprep.subr.bf16.mxu0 0
  %11416 = vmatpush2.bf16.msra.mxu0 %v7671
  %11417 = vmatprep.subr.bf16.mxu0 0
  %11418 = vmatpush2.bf16.msra.mxu0 %v7662
  %11419 = vmatprep.subr.bf16.mxu0 0
  %11420 = vmatpush2.bf16.msra.mxu0 %v7653
  %11421 = vmatprep.subr.bf16.mxu0 0
  %11422 = vmatpush2.bf16.msra.mxu0 %v7644
  %11423 = vmatprep.subr.bf16.mxu0 0
  %11424 = vmatpush2.bf16.msra.mxu0 %v7635
  %11425 = vmatprep.subr.bf16.mxu0 0
  %11426 = vmatpush2.bf16.msra.mxu0 %v7626
  %11427 = vmatprep.subr.bf16.mxu0 0
  %11428 = vmatpush2.bf16.msra.mxu0 %v7617
  %11429 = vmatprep.mubr.bf16.mxu0 %v1715
  %11430 = vmatmul.mubr.bf16.gmra.mxu0 %v1714
  %v11431 = vpop.f32.mrf.mxu0
  %v11432 = vadd.f32 %v11392, %v11431
  %v11433 = vpop.f32.mrf.mxu0
  %v11434 = vpop.f32.mrf.mxu0
  %v11435 = vpop.f32.mrf.mxu0
  %11436 = vdwg.mxu0
  %11437 = vmatprep.subr.bf16.mxu0 0
  %11438 = vmatpush1.bf16.msra.mxu0 %v7752
  %11439 = vmatprep.subr.bf16.mxu0 0
  %11440 = vmatpush1.bf16.msra.mxu0 %v7743
  %11441 = vmatprep.subr.bf16.mxu0 0
  %11442 = vmatpush1.bf16.msra.mxu0 %v7734
  %11443 = vmatprep.subr.bf16.mxu0 0
  %11444 = vmatpush1.bf16.msra.mxu0 %v7725
  %11445 = vmatprep.subr.bf16.mxu0 0
  %11446 = vmatpush1.bf16.msra.mxu0 %v7716
  %11447 = vmatprep.subr.bf16.mxu0 0
  %11448 = vmatpush1.bf16.msra.mxu0 %v7707
  %11449 = vmatprep.subr.bf16.mxu0 0
  %11450 = vmatpush1.bf16.msra.mxu0 %v7698
  %11451 = vmatprep.subr.bf16.mxu0 0
  %11452 = vmatpush1.bf16.msra.mxu0 %v7689
  %11453 = vmatprep.subr.bf16.mxu0 0
  %11454 = vmatpush2.bf16.msra.mxu0 %v7824
  %11455 = vmatprep.subr.bf16.mxu0 0
  %11456 = vmatpush2.bf16.msra.mxu0 %v7815
  %11457 = vmatprep.subr.bf16.mxu0 0
  %11458 = vmatpush2.bf16.msra.mxu0 %v7806
  %11459 = vmatprep.subr.bf16.mxu0 0
  %11460 = vmatpush2.bf16.msra.mxu0 %v7797
  %11461 = vmatprep.subr.bf16.mxu0 0
  %11462 = vmatpush2.bf16.msra.mxu0 %v7788
  %11463 = vmatprep.subr.bf16.mxu0 0
  %11464 = vmatpush2.bf16.msra.mxu0 %v7779
  %11465 = vmatprep.subr.bf16.mxu0 0
  %11466 = vmatpush2.bf16.msra.mxu0 %v7770
  %11467 = vmatprep.subr.bf16.mxu0 0
  %11468 = vmatpush2.bf16.msra.mxu0 %v7761
  %11469 = vmatprep.mubr.bf16.mxu0 %v1717
  %11470 = vmatmul.mubr.bf16.gmra.mxu0 %v1716
  %v11471 = vpop.f32.mrf.mxu0
  %v11472 = vadd.f32 %v11432, %v11471
  %v11473 = vpop.f32.mrf.mxu0
  %v11474 = vpop.f32.mrf.mxu0
  %v11475 = vpop.f32.mrf.mxu0
  %11476 = vdwg.mxu0
  %11477 = vmatprep.subr.bf16.mxu0 0
  %11478 = vmatpush1.bf16.msra.mxu0 %v7896
  %11479 = vmatprep.subr.bf16.mxu0 0
  %11480 = vmatpush1.bf16.msra.mxu0 %v7887
  %11481 = vmatprep.subr.bf16.mxu0 0
  %11482 = vmatpush1.bf16.msra.mxu0 %v7878
  %11483 = vmatprep.subr.bf16.mxu0 0
  %11484 = vmatpush1.bf16.msra.mxu0 %v7869
  %11485 = vmatprep.subr.bf16.mxu0 0
  %11486 = vmatpush1.bf16.msra.mxu0 %v7860
  %11487 = vmatprep.subr.bf16.mxu0 0
  %11488 = vmatpush1.bf16.msra.mxu0 %v7851
  %11489 = vmatprep.subr.bf16.mxu0 0
  %11490 = vmatpush1.bf16.msra.mxu0 %v7842
  %11491 = vmatprep.subr.bf16.mxu0 0
  %11492 = vmatpush1.bf16.msra.mxu0 %v7833
  %11493 = vmatprep.subr.bf16.mxu0 0
  %11494 = vmatpush2.bf16.msra.mxu0 %v7968
  %11495 = vmatprep.subr.bf16.mxu0 0
  %11496 = vmatpush2.bf16.msra.mxu0 %v7959
  %11497 = vmatprep.subr.bf16.mxu0 0
  %11498 = vmatpush2.bf16.msra.mxu0 %v7950
  %11499 = vmatprep.subr.bf16.mxu0 0
  %11500 = vmatpush2.bf16.msra.mxu0 %v7941
  %11501 = vmatprep.subr.bf16.mxu0 0
  %11502 = vmatpush2.bf16.msra.mxu0 %v7932
  %11503 = vmatprep.subr.bf16.mxu0 0
  %11504 = vmatpush2.bf16.msra.mxu0 %v7923
  %11505 = vmatprep.subr.bf16.mxu0 0
  %11506 = vmatpush2.bf16.msra.mxu0 %v7914
  %11507 = vmatprep.subr.bf16.mxu0 0
  %11508 = vmatpush2.bf16.msra.mxu0 %v7905
  %11509 = vmatprep.mubr.bf16.mxu0 %v1719
  %11510 = vmatmul.mubr.bf16.gmra.mxu0 %v1718
  %v11511 = vpop.f32.mrf.mxu0
  %v11512 = vadd.f32 %v11472, %v11511
  %v11513 = vpop.f32.mrf.mxu0
  %v11514 = vpop.f32.mrf.mxu0
  %v11515 = vpop.f32.mrf.mxu0
  %11516 = vdwg.mxu0
  %11517 = vmatprep.subr.bf16.mxu0 0
  %11518 = vmatpush1.bf16.msra.mxu0 %v8040
  %11519 = vmatprep.subr.bf16.mxu0 0
  %11520 = vmatpush1.bf16.msra.mxu0 %v8031
  %11521 = vmatprep.subr.bf16.mxu0 0
  %11522 = vmatpush1.bf16.msra.mxu0 %v8022
  %11523 = vmatprep.subr.bf16.mxu0 0
  %11524 = vmatpush1.bf16.msra.mxu0 %v8013
  %11525 = vmatprep.subr.bf16.mxu0 0
  %11526 = vmatpush1.bf16.msra.mxu0 %v8004
  %11527 = vmatprep.subr.bf16.mxu0 0
  %11528 = vmatpush1.bf16.msra.mxu0 %v7995
  %11529 = vmatprep.subr.bf16.mxu0 0
  %11530 = vmatpush1.bf16.msra.mxu0 %v7986
  %11531 = vmatprep.subr.bf16.mxu0 0
  %11532 = vmatpush1.bf16.msra.mxu0 %v7977
  %11533 = vmatprep.subr.bf16.mxu0 0
  %11534 = vmatpush2.bf16.msra.mxu0 %v8112
  %11535 = vmatprep.subr.bf16.mxu0 0
  %11536 = vmatpush2.bf16.msra.mxu0 %v8103
  %11537 = vmatprep.subr.bf16.mxu0 0
  %11538 = vmatpush2.bf16.msra.mxu0 %v8094
  %11539 = vmatprep.subr.bf16.mxu0 0
  %11540 = vmatpush2.bf16.msra.mxu0 %v8085
  %11541 = vmatprep.subr.bf16.mxu0 0
  %11542 = vmatpush2.bf16.msra.mxu0 %v8076
  %11543 = vmatprep.subr.bf16.mxu0 0
  %11544 = vmatpush2.bf16.msra.mxu0 %v8067
  %11545 = vmatprep.subr.bf16.mxu0 0
  %11546 = vmatpush2.bf16.msra.mxu0 %v8058
  %11547 = vmatprep.subr.bf16.mxu0 0
  %11548 = vmatpush2.bf16.msra.mxu0 %v8049
  %11549 = vmatprep.mubr.bf16.mxu0 %v1721
  %11550 = vmatmul.mubr.bf16.gmra.mxu0 %v1720
  %v11551 = vpop.f32.mrf.mxu0
  %v11552 = vadd.f32 %v11512, %v11551
  %v11553 = vpop.f32.mrf.mxu0
  %v11554 = vpop.f32.mrf.mxu0
  %v11555 = vpop.f32.mrf.mxu0
  %11556 = vdwg.mxu0
  %11557 = vmatprep.subr.bf16.mxu0 0
  %11558 = vmatpush1.bf16.msra.mxu0 %v8184
  %11559 = vmatprep.subr.bf16.mxu0 0
  %11560 = vmatpush1.bf16.msra.mxu0 %v8175
  %11561 = vmatprep.subr.bf16.mxu0 0
  %11562 = vmatpush1.bf16.msra.mxu0 %v8166
  %11563 = vmatprep.subr.bf16.mxu0 0
  %11564 = vmatpush1.bf16.msra.mxu0 %v8157
  %11565 = vmatprep.subr.bf16.mxu0 0
  %11566 = vmatpush1.bf16.msra.mxu0 %v8148
  %11567 = vmatprep.subr.bf16.mxu0 0
  %11568 = vmatpush1.bf16.msra.mxu0 %v8139
  %11569 = vmatprep.subr.bf16.mxu0 0
  %11570 = vmatpush1.bf16.msra.mxu0 %v8130
  %11571 = vmatprep.subr.bf16.mxu0 0
  %11572 = vmatpush1.bf16.msra.mxu0 %v8121
  %11573 = vmatprep.subr.bf16.mxu0 0
  %11574 = vmatpush2.bf16.msra.mxu0 %v8256
  %11575 = vmatprep.subr.bf16.mxu0 0
  %11576 = vmatpush2.bf16.msra.mxu0 %v8247
  %11577 = vmatprep.subr.bf16.mxu0 0
  %11578 = vmatpush2.bf16.msra.mxu0 %v8238
  %11579 = vmatprep.subr.bf16.mxu0 0
  %11580 = vmatpush2.bf16.msra.mxu0 %v8229
  %11581 = vmatprep.subr.bf16.mxu0 0
  %11582 = vmatpush2.bf16.msra.mxu0 %v8220
  %11583 = vmatprep.subr.bf16.mxu0 0
  %11584 = vmatpush2.bf16.msra.mxu0 %v8211
  %11585 = vmatprep.subr.bf16.mxu0 0
  %11586 = vmatpush2.bf16.msra.mxu0 %v8202
  %11587 = vmatprep.subr.bf16.mxu0 0
  %11588 = vmatpush2.bf16.msra.mxu0 %v8193
  %11589 = vmatprep.mubr.bf16.mxu0 %v1723
  %11590 = vmatmul.mubr.bf16.gmra.mxu0 %v1722
  %v11591 = vpop.f32.mrf.mxu0
  %v11592 = vadd.f32 %v11552, %v11591
  %v11593 = vpop.f32.mrf.mxu0
  %v11594 = vpop.f32.mrf.mxu0
  %v11595 = vpop.f32.mrf.mxu0
  %11596 = vdwg.mxu0
  %11597 = vmatprep.subr.bf16.mxu0 0
  %11598 = vmatpush1.bf16.msra.mxu0 %v8328
  %11599 = vmatprep.subr.bf16.mxu0 0
  %11600 = vmatpush1.bf16.msra.mxu0 %v8319
  %11601 = vmatprep.subr.bf16.mxu0 0
  %11602 = vmatpush1.bf16.msra.mxu0 %v8310
  %11603 = vmatprep.subr.bf16.mxu0 0
  %11604 = vmatpush1.bf16.msra.mxu0 %v8301
  %11605 = vmatprep.subr.bf16.mxu0 0
  %11606 = vmatpush1.bf16.msra.mxu0 %v8292
  %11607 = vmatprep.subr.bf16.mxu0 0
  %11608 = vmatpush1.bf16.msra.mxu0 %v8283
  %11609 = vmatprep.subr.bf16.mxu0 0
  %11610 = vmatpush1.bf16.msra.mxu0 %v8274
  %11611 = vmatprep.subr.bf16.mxu0 0
  %11612 = vmatpush1.bf16.msra.mxu0 %v8265
  %11613 = vmatprep.subr.bf16.mxu0 0
  %11614 = vmatpush2.bf16.msra.mxu0 %v8400
  %11615 = vmatprep.subr.bf16.mxu0 0
  %11616 = vmatpush2.bf16.msra.mxu0 %v8391
  %11617 = vmatprep.subr.bf16.mxu0 0
  %11618 = vmatpush2.bf16.msra.mxu0 %v8382
  %11619 = vmatprep.subr.bf16.mxu0 0
  %11620 = vmatpush2.bf16.msra.mxu0 %v8373
  %11621 = vmatprep.subr.bf16.mxu0 0
  %11622 = vmatpush2.bf16.msra.mxu0 %v8364
  %11623 = vmatprep.subr.bf16.mxu0 0
  %11624 = vmatpush2.bf16.msra.mxu0 %v8355
  %11625 = vmatprep.subr.bf16.mxu0 0
  %11626 = vmatpush2.bf16.msra.mxu0 %v8346
  %11627 = vmatprep.subr.bf16.mxu0 0
  %11628 = vmatpush2.bf16.msra.mxu0 %v8337
  %11629 = vmatprep.mubr.bf16.mxu0 %v1725
  %11630 = vmatmul.mubr.bf16.gmra.mxu0 %v1724
  %v11631 = vpop.f32.mrf.mxu0
  %v11632 = vadd.f32 %v11592, %v11631
  %v11633 = vpop.f32.mrf.mxu0
  %v11634 = vpop.f32.mrf.mxu0
  %v11635 = vpop.f32.mrf.mxu0
  %11636 = vdwg.mxu0
  %11637 = vmatprep.subr.bf16.mxu0 0
  %11638 = vmatpush1.bf16.msra.mxu0 %v8472
  %11639 = vmatprep.subr.bf16.mxu0 0
  %11640 = vmatpush1.bf16.msra.mxu0 %v8463
  %11641 = vmatprep.subr.bf16.mxu0 0
  %11642 = vmatpush1.bf16.msra.mxu0 %v8454
  %11643 = vmatprep.subr.bf16.mxu0 0
  %11644 = vmatpush1.bf16.msra.mxu0 %v8445
  %11645 = vmatprep.subr.bf16.mxu0 0
  %11646 = vmatpush1.bf16.msra.mxu0 %v8436
  %11647 = vmatprep.subr.bf16.mxu0 0
  %11648 = vmatpush1.bf16.msra.mxu0 %v8427
  %11649 = vmatprep.subr.bf16.mxu0 0
  %11650 = vmatpush1.bf16.msra.mxu0 %v8418
  %11651 = vmatprep.subr.bf16.mxu0 0
  %11652 = vmatpush1.bf16.msra.mxu0 %v8409
  %11653 = vmatprep.subr.bf16.mxu0 0
  %11654 = vmatpush2.bf16.msra.mxu0 %v8544
  %11655 = vmatprep.subr.bf16.mxu0 0
  %11656 = vmatpush2.bf16.msra.mxu0 %v8535
  %11657 = vmatprep.subr.bf16.mxu0 0
  %11658 = vmatpush2.bf16.msra.mxu0 %v8526
  %11659 = vmatprep.subr.bf16.mxu0 0
  %11660 = vmatpush2.bf16.msra.mxu0 %v8517
  %11661 = vmatprep.subr.bf16.mxu0 0
  %11662 = vmatpush2.bf16.msra.mxu0 %v8508
  %11663 = vmatprep.subr.bf16.mxu0 0
  %11664 = vmatpush2.bf16.msra.mxu0 %v8499
  %11665 = vmatprep.subr.bf16.mxu0 0
  %11666 = vmatpush2.bf16.msra.mxu0 %v8490
  %11667 = vmatprep.subr.bf16.mxu0 0
  %11668 = vmatpush2.bf16.msra.mxu0 %v8481
  %11669 = vmatprep.mubr.bf16.mxu0 %v1727
  %11670 = vmatmul.mubr.bf16.gmra.mxu0 %v1726
  %v11671 = vpop.f32.mrf.mxu0
  %v11672 = vadd.f32 %v11632, %v11671
  %v11673 = vpop.f32.mrf.mxu0
  %v11674 = vpop.f32.mrf.mxu0
  %v11675 = vpop.f32.mrf.mxu0
  %11676 = vdwg.mxu0
  %v11677 = vmax.f32 %v10204, 0.0
  %v11678 = vmax.f32 %v10206, 0.0
  %v11679 = vmax.f32 %v10573, 0.0
  %v11680 = vmax.f32 %v10575, 0.0
  %v11681 = vmax.f32 %v10942, 0.0
  %v11682 = vmax.f32 %v10944, 0.0
  %v11683 = vmax.f32 %v11311, 0.0
  %v11684 = vmax.f32 %v11313, 0.0
  %v11685 = vmax.f32 %v11672, 0.0
  %11695 = vrot.lane.b32.xlu0 %v11677, 96
  %v11696 = vpop.permute.xlu0 %11695
  %11697 = vrot.lane.b32.xlu0 %v11678, 96
  %v11698 = vpop.permute.xlu0 %11697
  %11699 = vrot.lane.b32.xlu0 %v11679, 96
  %v11700 = vpop.permute.xlu0 %11699
  %11701 = vrot.lane.b32.xlu0 %v11680, 96
  %v11702 = vpop.permute.xlu0 %11701
  %11703 = vrot.lane.b32.xlu0 %v11681, 96
  %v11704 = vpop.permute.xlu0 %11703
  %11705 = vrot.lane.b32.xlu0 %v11682, 96
  %v11706 = vpop.permute.xlu0 %11705
  %11707 = vrot.lane.b32.xlu0 %v11683, 96
  %v11708 = vpop.permute.xlu0 %11707
  %11709 = vrot.lane.b32.xlu0 %v11684, 96
  %v11710 = vpop.permute.xlu0 %11709
  %11711 = vrot.lane.b32.xlu0 %v11685, 96
  %v11712 = vpop.permute.xlu0 %11711
  %vm11713 = vcmask 785408
  %v11714 = vsel %vm11713, %v11696, %v11698
  %v11715 = vsel %vm11713, %v11698, %v11700
  %v11716 = vsel %vm11713, %v11700, %v11702
  %v11717 = vsel %vm11713, %v11702, %v11704
  %v11718 = vsel %vm11713, %v11704, %v11706
  %v11719 = vsel %vm11713, %v11706, %v11708
  %v11720 = vsel %vm11713, %v11708, %v11710
  %v11721 = vsel %vm11713, %v11710, %v11712
  %v11732 = vsel %vm11713, %v11712, %v11696
  %v11733 = vmax.f32 %v11677, %v11714
  %v11734 = vmax.f32 %v11678, %v11715
  %v11735 = vmax.f32 %v11679, %v11716
  %v11736 = vmax.f32 %v11680, %v11717
  %v11737 = vmax.f32 %v11681, %v11718
  %v11738 = vmax.f32 %v11682, %v11719
  %v11739 = vmax.f32 %v11683, %v11720
  %v11740 = vmax.f32 %v11684, %v11721
  %v11741 = vmax.f32 %v11685, %v11732
  %11750 = vrot.lane.b32.xlu0 %v11734, 64
  %v11751 = vpop.permute.xlu0 %11750
  %11752 = vrot.lane.b32.xlu0 %v11735, 64
  %v11753 = vpop.permute.xlu0 %11752
  %11754 = vrot.lane.b32.xlu0 %v11736, 64
  %v11755 = vpop.permute.xlu0 %11754
  %11756 = vrot.lane.b32.xlu0 %v11737, 64
  %v11757 = vpop.permute.xlu0 %11756
  %11758 = vrot.lane.b32.xlu0 %v11738, 64
  %v11759 = vpop.permute.xlu0 %11758
  %11760 = vrot.lane.b32.xlu0 %v11739, 64
  %v11761 = vpop.permute.xlu0 %11760
  %11762 = vrot.lane.b32.xlu0 %v11740, 64
  %v11763 = vpop.permute.xlu0 %11762
  %11764 = vrot.lane.b32.xlu0 %v11741, 64
  %v11765 = vpop.permute.xlu0 %11764
  %v11766 = vsel %vm1651, %v11751, %v11753
  %v11767 = vsel %vm1651, %v11753, %v11755
  %v11768 = vsel %vm1651, %v11755, %v11757
  %v11769 = vsel %vm1651, %v11757, %v11759
  %v11770 = vsel %vm1651, %v11759, %v11761
  %v11771 = vsel %vm1651, %v11761, %v11763
  %v11772 = vsel %vm1651, %v11763, %v11765
  %11782 = vrot.lane.b32.xlu0 %v11733, 64
  %v11783 = vpop.permute.xlu0 %11782
  %v11784 = vsel %vm1651, %v11783, %v11751
  %v11787 = vsel %vm1651, %v11765, %v11783
  %v11788 = vmax.f32 %v11733, %v11766
  %v11789 = vmax.f32 %v11734, %v11767
  %v11790 = vmax.f32 %v11735, %v11768
  %v11791 = vmax.f32 %v11736, %v11769
  %v11792 = vmax.f32 %v11737, %v11770
  %v11793 = vmax.f32 %v11738, %v11771
  %v11794 = vmax.f32 %v11739, %v11772
  %v11795 = vmax.f32 %v11740, %v11787
  %v11796 = vmax.f32 %v11741, %v11784
  %v11797 = vpack.c.bf16 %v11788, %v11788
  %v11798 = vpack.c.bf16 %v11789, %v11789
  %v11799 = vpack.c.bf16 %v11790, %v11790
  %v11800 = vpack.c.bf16 %v11791, %v11791
  %v11801 = vpack.c.bf16 %v11792, %v11792
  %v11802 = vpack.c.bf16 %v11793, %v11793
  %v11803 = vpack.c.bf16 %v11794, %v11794
  %v11804 = vpack.c.bf16 %v11795, %v11795
  %v11805 = vpack.c.bf16 %v11796, %v11796
  %v11806 = vld [vmem:[%s5] sm:$0xf]
  %v11807 = vld [vmem:[%s5 + $0x4] sm:$0xf]
  %v11808 = vld [vmem:[%s5 + $0x8] sm:$0xf]
  %v11809 = vld [vmem:[%s5 + $0xc] sm:$0xf]
  %v11810 = vld [vmem:[%s5 + $0x10] sm:$0xf]
  %v11811 = vld [vmem:[%s5 + $0x14] sm:$0xf]
  %v11812 = vld [vmem:[%s5 + $0x18] sm:$0xf]
  %v11813 = vld [vmem:[%s5 + $0x1c] sm:$0xf]
  %v11814 = vld [vmem:[%s5 + $0x20] sm:$0xf]
  %v11815 = vld [vmem:[%s5 + $0x24] sm:$0xf]
  %v11816 = vld [vmem:[%s5 + $0x28] sm:$0xf]
  %v11817 = vld [vmem:[%s5 + $0x2c] sm:$0xf]
  %v11818 = vld [vmem:[%s5 + $0x30] sm:$0xf]
  %v11819 = vld [vmem:[%s5 + $0x34] sm:$0xf]
  %v11820 = vld [vmem:[%s5 + $0x38] sm:$0xf]
  %v11821 = vld [vmem:[%s5 + $0x3c] sm:$0xf]
  %v11822 = vld [vmem:[%s5 + $0x40] sm:$0xf]
  %v11823 = vld [vmem:[%s5 + $0x44] sm:$0xf]
  %v11824 = vld [vmem:[%s5 + $0x48] sm:$0xf]
  %v11825 = vld [vmem:[%s5 + $0x4c] sm:$0xf]
  %v11826 = vld [vmem:[%s5 + $0x50] sm:$0xf]
  %v11827 = vld [vmem:[%s5 + $0x54] sm:$0xf]
  %v11828 = vld [vmem:[%s5 + $0x58] sm:$0xf]
  %v11829 = vld [vmem:[%s5 + $0x5c] sm:$0xf]
  %v11830 = vld [vmem:[%s5 + $0x60] sm:$0xf]
  %v11831 = vld [vmem:[%s5 + $0x64] sm:$0xf]
  %v11832 = vld [vmem:[%s5 + $0x68] sm:$0xf]
  %v11833 = vld [vmem:[%s5 + $0x6c] sm:$0xf]
  %v11834 = vld [vmem:[%s5 + $0x70] sm:$0xf]
  %v11835 = vld [vmem:[%s5 + $0x74] sm:$0xf]
  %v11836 = vld [vmem:[%s5 + $0x78] sm:$0xf]
  %v11837 = vld [vmem:[%s5 + $0x7c] sm:$0xf]
  %v11838 = vld [vmem:[%s5 + $0x80] sm:$0xf]
  %v11839 = vld [vmem:[%s5 + $0x84] sm:$0xf]
  %v11840 = vld [vmem:[%s5 + $0x88] sm:$0xf]
  %v11841 = vld [vmem:[%s5 + $0x8c] sm:$0xf]
  %v11842 = vld [vmem:[%s5 + $0x90] sm:$0xf]
  %v11843 = vld [vmem:[%s5 + $0x94] sm:$0xf]
  %v11844 = vld [vmem:[%s5 + $0x98] sm:$0xf]
  %v11845 = vld [vmem:[%s5 + $0x9c] sm:$0xf]
  %v11846 = vld [vmem:[%s5 + $0xa0] sm:$0xf]
  %v11847 = vld [vmem:[%s5 + $0xa4] sm:$0xf]
  %v11848 = vld [vmem:[%s5 + $0xa8] sm:$0xf]
  %v11849 = vld [vmem:[%s5 + $0xac] sm:$0xf]
  %v11850 = vld [vmem:[%s5 + $0xb0] sm:$0xf]
  %v11851 = vld [vmem:[%s5 + $0xb4] sm:$0xf]
  %v11852 = vld [vmem:[%s5 + $0xb8] sm:$0xf]
  %v11853 = vld [vmem:[%s5 + $0xbc] sm:$0xf]
  %v11854 = vld [vmem:[%s5 + $0xc0] sm:$0xf]
  %v11855 = vld [vmem:[%s5 + $0xc4] sm:$0xf]
  %v11856 = vld [vmem:[%s5 + $0xc8] sm:$0xf]
  %v11857 = vld [vmem:[%s5 + $0xcc] sm:$0xf]
  %v11858 = vld [vmem:[%s5 + $0xd0] sm:$0xf]
  %v11859 = vld [vmem:[%s5 + $0xd4] sm:$0xf]
  %v11860 = vld [vmem:[%s5 + $0xd8] sm:$0xf]
  %v11861 = vld [vmem:[%s5 + $0xdc] sm:$0xf]
  %v11862 = vld [vmem:[%s5 + $0xe0] sm:$0xf]
  %v11863 = vld [vmem:[%s5 + $0xe4] sm:$0xf]
  %v11864 = vld [vmem:[%s5 + $0xe8] sm:$0xf]
  %v11865 = vld [vmem:[%s5 + $0xec] sm:$0xf]
  %v11866 = vld [vmem:[%s5 + $0xf0] sm:$0xf]
  %v11867 = vld [vmem:[%s5 + $0xf4] sm:$0xf]
  %v11868 = vld [vmem:[%s5 + $0xf8] sm:$0xf]
  %v11869 = vld [vmem:[%s5 + $0xfc] sm:$0xf]
  %v11870 = vld [vmem:[%s5 + $0x100] sm:$0xf]
  %v11871 = vld [vmem:[%s5 + $0x104] sm:$0xf]
  %v11872 = vld [vmem:[%s5 + $0x108] sm:$0xf]
  %v11873 = vld [vmem:[%s5 + $0x10c] sm:$0xf]
  %v11874 = vld [vmem:[%s5 + $0x110] sm:$0xf]
  %v11875 = vld [vmem:[%s5 + $0x114] sm:$0xf]
  %v11876 = vld [vmem:[%s5 + $0x118] sm:$0xf]
  %v11877 = vld [vmem:[%s5 + $0x11c] sm:$0xf]
  %v11878 = vld [vmem:[%s5 + $0x120] sm:$0xf]
  %v11879 = vld [vmem:[%s5 + $0x124] sm:$0xf]
  %v11880 = vld [vmem:[%s5 + $0x128] sm:$0xf]
  %v11881 = vld [vmem:[%s5 + $0x12c] sm:$0xf]
  %v11882 = vld [vmem:[%s5 + $0x130] sm:$0xf]
  %v11883 = vld [vmem:[%s5 + $0x134] sm:$0xf]
  %v11884 = vld [vmem:[%s5 + $0x138] sm:$0xf]
  %v11885 = vld [vmem:[%s5 + $0x13c] sm:$0xf]
  %v11886 = vld [vmem:[%s5 + $0x140] sm:$0xf]
  %v11887 = vld [vmem:[%s5 + $0x144] sm:$0xf]
  %v11888 = vld [vmem:[%s5 + $0x148] sm:$0xf]
  %v11889 = vld [vmem:[%s5 + $0x14c] sm:$0xf]
  %v11890 = vld [vmem:[%s5 + $0x150] sm:$0xf]
  %v11891 = vld [vmem:[%s5 + $0x154] sm:$0xf]
  %v11892 = vld [vmem:[%s5 + $0x158] sm:$0xf]
  %v11893 = vld [vmem:[%s5 + $0x15c] sm:$0xf]
  %v11894 = vld [vmem:[%s5 + $0x160] sm:$0xf]
  %v11895 = vld [vmem:[%s5 + $0x164] sm:$0xf]
  %v11896 = vld [vmem:[%s5 + $0x168] sm:$0xf]
  %v11897 = vld [vmem:[%s5 + $0x16c] sm:$0xf]
  %v11898 = vld [vmem:[%s5 + $0x170] sm:$0xf]
  %v11899 = vld [vmem:[%s5 + $0x174] sm:$0xf]
  %v11900 = vld [vmem:[%s5 + $0x178] sm:$0xf]
  %v11901 = vld [vmem:[%s5 + $0x17c] sm:$0xf]
  %v11902 = vld [vmem:[%s5 + $0x180] sm:$0xf]
  %v11903 = vld [vmem:[%s5 + $0x184] sm:$0xf]
  %v11904 = vld [vmem:[%s5 + $0x188] sm:$0xf]
  %v11905 = vld [vmem:[%s5 + $0x18c] sm:$0xf]
  %v11906 = vld [vmem:[%s5 + $0x190] sm:$0xf]
  %v11907 = vld [vmem:[%s5 + $0x194] sm:$0xf]
  %v11908 = vld [vmem:[%s5 + $0x198] sm:$0xf]
  %v11909 = vld [vmem:[%s5 + $0x19c] sm:$0xf]
  %v11910 = vld [vmem:[%s5 + $0x1a0] sm:$0xf]
  %v11911 = vld [vmem:[%s5 + $0x1a4] sm:$0xf]
  %v11912 = vld [vmem:[%s5 + $0x1a8] sm:$0xf]
  %v11913 = vld [vmem:[%s5 + $0x1ac] sm:$0xf]
  %v11914 = vld [vmem:[%s5 + $0x1b0] sm:$0xf]
  %v11915 = vld [vmem:[%s5 + $0x1b4] sm:$0xf]
  %v11916 = vld [vmem:[%s5 + $0x1b8] sm:$0xf]
  %v11917 = vld [vmem:[%s5 + $0x1bc] sm:$0xf]
  %v11918 = vld [vmem:[%s5 + $0x1c0] sm:$0xf]
  %v11919 = vld [vmem:[%s5 + $0x1c4] sm:$0xf]
  %v11920 = vld [vmem:[%s5 + $0x1c8] sm:$0xf]
  %v11921 = vld [vmem:[%s5 + $0x1cc] sm:$0xf]
  %v11922 = vld [vmem:[%s5 + $0x1d0] sm:$0xf]
  %v11923 = vld [vmem:[%s5 + $0x1d4] sm:$0xf]
  %v11924 = vld [vmem:[%s5 + $0x1d8] sm:$0xf]
  %v11925 = vld [vmem:[%s5 + $0x1dc] sm:$0xf]
  %v11926 = vld [vmem:[%s5 + $0x1e0] sm:$0xf]
  %v11927 = vld [vmem:[%s5 + $0x1e4] sm:$0xf]
  %v11928 = vld [vmem:[%s5 + $0x1e8] sm:$0xf]
  %v11929 = vld [vmem:[%s5 + $0x1ec] sm:$0xf]
  %v11930 = vld [vmem:[%s5 + $0x1f0] sm:$0xf]
  %v11931 = vld [vmem:[%s5 + $0x1f4] sm:$0xf]
  %v11932 = vld [vmem:[%s5 + $0x1f8] sm:$0xf]
  %v11933 = vld [vmem:[%s5 + $0x1fc] sm:$0xf]
  %v11934 = vld [vmem:[%s5 + $0x200] sm:$0xf]
  %v11935 = vld [vmem:[%s5 + $0x204] sm:$0xf]
  %v11936 = vld [vmem:[%s5 + $0x208] sm:$0xf]
  %v11937 = vld [vmem:[%s5 + $0x20c] sm:$0xf]
  %v11938 = vld [vmem:[%s5 + $0x210] sm:$0xf]
  %v11939 = vld [vmem:[%s5 + $0x214] sm:$0xf]
  %v11940 = vld [vmem:[%s5 + $0x218] sm:$0xf]
  %v11941 = vld [vmem:[%s5 + $0x21c] sm:$0xf]
  %v11942 = vld [vmem:[%s5 + $0x220] sm:$0xf]
  %v11943 = vld [vmem:[%s5 + $0x224] sm:$0xf]
  %v11944 = vld [vmem:[%s5 + $0x228] sm:$0xf]
  %v11945 = vld [vmem:[%s5 + $0x22c] sm:$0xf]
  %v11946 = vld [vmem:[%s5 + $0x230] sm:$0xf]
  %v11947 = vld [vmem:[%s5 + $0x234] sm:$0xf]
  %v11948 = vld [vmem:[%s5 + $0x238] sm:$0xf]
  %v11949 = vld [vmem:[%s5 + $0x23c] sm:$0xf]
  %v11950 = vld [vmem:[%s6] sm:$0x1]
  %v11952 = vlaneseq
  %v11953 = vshrl.u32 %v11952, 7
  %v11954 = vsub.s32 0, %v11953
  %v11955 = vrot.slane %v11950, %v11954
  %v12101 = vunpack.c.l.b16 %v11806
  %v12102 = vunpack.c.l.b16 %v11807
  %v12103 = vunpack.c.l.b16 %v11808
  %v12104 = vunpack.c.l.b16 %v11809
  %v12105 = vunpack.c.l.b16 %v11810
  %v12106 = vunpack.c.l.b16 %v11811
  %v12107 = vunpack.c.l.b16 %v11812
  %v12108 = vunpack.c.l.b16 %v11813
  %v12109 = vunpack.c.l.b16 %v11814
  %v12110 = vunpack.c.l.b16 %v11815
  %v12111 = vunpack.c.l.b16 %v11816
  %v12112 = vunpack.c.l.b16 %v11817
  %v12113 = vunpack.c.l.b16 %v11818
  %v12114 = vunpack.c.l.b16 %v11819
  %v12115 = vunpack.c.l.b16 %v11820
  %v12116 = vunpack.c.l.b16 %v11821
  %v12117 = vunpack.c.l.b16 %v11822
  %v12118 = vunpack.c.l.b16 %v11823
  %v12119 = vunpack.c.l.b16 %v11824
  %v12120 = vunpack.c.l.b16 %v11825
  %v12121 = vunpack.c.l.b16 %v11826
  %v12122 = vunpack.c.l.b16 %v11827
  %v12123 = vunpack.c.l.b16 %v11828
  %v12124 = vunpack.c.l.b16 %v11829
  %v12125 = vunpack.c.l.b16 %v11830
  %v12126 = vunpack.c.l.b16 %v11831
  %v12127 = vunpack.c.l.b16 %v11832
  %v12128 = vunpack.c.l.b16 %v11833
  %v12129 = vunpack.c.l.b16 %v11834
  %v12130 = vunpack.c.l.b16 %v11835
  %v12131 = vunpack.c.l.b16 %v11836
  %v12132 = vunpack.c.l.b16 %v11837
  %v12133 = vunpack.c.l.b16 %v11838
  %v12134 = vunpack.c.l.b16 %v11839
  %v12135 = vunpack.c.l.b16 %v11840
  %v12136 = vunpack.c.l.b16 %v11841
  %v12137 = vunpack.c.l.b16 %v11842
  %v12138 = vunpack.c.l.b16 %v11843
  %v12139 = vunpack.c.l.b16 %v11844
  %v12140 = vunpack.c.l.b16 %v11845
  %v12141 = vunpack.c.l.b16 %v11846
  %v12142 = vunpack.c.l.b16 %v11847
  %v12143 = vunpack.c.l.b16 %v11848
  %v12144 = vunpack.c.l.b16 %v11849
  %v12145 = vunpack.c.l.b16 %v11850
  %v12146 = vunpack.c.l.b16 %v11851
  %v12147 = vunpack.c.l.b16 %v11852
  %v12148 = vunpack.c.l.b16 %v11853
  %v12149 = vunpack.c.l.b16 %v11854
  %v12150 = vunpack.c.l.b16 %v11855
  %v12151 = vunpack.c.l.b16 %v11856
  %v12152 = vunpack.c.l.b16 %v11857
  %v12153 = vunpack.c.l.b16 %v11858
  %v12154 = vunpack.c.l.b16 %v11859
  %v12155 = vunpack.c.l.b16 %v11860
  %v12156 = vunpack.c.l.b16 %v11861
  %v12157 = vunpack.c.l.b16 %v11862
  %v12158 = vunpack.c.l.b16 %v11863
  %v12159 = vunpack.c.l.b16 %v11864
  %v12160 = vunpack.c.l.b16 %v11865
  %v12161 = vunpack.c.l.b16 %v11866
  %v12162 = vunpack.c.l.b16 %v11867
  %v12163 = vunpack.c.l.b16 %v11868
  %v12164 = vunpack.c.l.b16 %v11869
  %v12165 = vunpack.c.l.b16 %v11870
  %v12166 = vunpack.c.l.b16 %v11871
  %v12167 = vunpack.c.l.b16 %v11872
  %v12168 = vunpack.c.l.b16 %v11873
  %v12169 = vunpack.c.l.b16 %v11874
  %v12170 = vunpack.c.l.b16 %v11875
  %v12171 = vunpack.c.l.b16 %v11876
  %v12172 = vunpack.c.l.b16 %v11877
  %v12173 = vunpack.c.l.b16 %v11878
  %v12174 = vunpack.c.l.b16 %v11879
  %v12175 = vunpack.c.l.b16 %v11880
  %v12176 = vunpack.c.l.b16 %v11881
  %v12177 = vunpack.c.l.b16 %v11882
  %v12178 = vunpack.c.l.b16 %v11883
  %v12179 = vunpack.c.l.b16 %v11884
  %v12180 = vunpack.c.l.b16 %v11885
  %v12181 = vunpack.c.l.b16 %v11886
  %v12182 = vunpack.c.l.b16 %v11887
  %v12183 = vunpack.c.l.b16 %v11888
  %v12184 = vunpack.c.l.b16 %v11889
  %v12185 = vunpack.c.l.b16 %v11890
  %v12186 = vunpack.c.l.b16 %v11891
  %v12187 = vunpack.c.l.b16 %v11892
  %v12188 = vunpack.c.l.b16 %v11893
  %v12189 = vunpack.c.l.b16 %v11894
  %v12190 = vunpack.c.l.b16 %v11895
  %v12191 = vunpack.c.l.b16 %v11896
  %v12192 = vunpack.c.l.b16 %v11897
  %v12193 = vunpack.c.l.b16 %v11898
  %v12194 = vunpack.c.l.b16 %v11899
  %v12195 = vunpack.c.l.b16 %v11900
  %v12196 = vunpack.c.l.b16 %v11901
  %v12197 = vunpack.c.l.b16 %v11902
  %v12198 = vunpack.c.l.b16 %v11903
  %v12199 = vunpack.c.l.b16 %v11904
  %v12200 = vunpack.c.l.b16 %v11905
  %v12201 = vunpack.c.l.b16 %v11906
  %v12202 = vunpack.c.l.b16 %v11907
  %v12203 = vunpack.c.l.b16 %v11908
  %v12204 = vunpack.c.l.b16 %v11909
  %v12205 = vunpack.c.l.b16 %v11910
  %v12206 = vunpack.c.l.b16 %v11911
  %v12207 = vunpack.c.l.b16 %v11912
  %v12208 = vunpack.c.l.b16 %v11913
  %v12209 = vunpack.c.l.b16 %v11914
  %v12210 = vunpack.c.l.b16 %v11915
  %v12211 = vunpack.c.l.b16 %v11916
  %v12212 = vunpack.c.l.b16 %v11917
  %v12213 = vunpack.c.l.b16 %v11918
  %v12214 = vunpack.c.l.b16 %v11919
  %v12215 = vunpack.c.l.b16 %v11920
  %v12216 = vunpack.c.l.b16 %v11921
  %v12217 = vunpack.c.l.b16 %v11922
  %v12218 = vunpack.c.l.b16 %v11923
  %v12219 = vunpack.c.l.b16 %v11924
  %v12220 = vunpack.c.l.b16 %v11925
  %v12221 = vunpack.c.l.b16 %v11926
  %v12222 = vunpack.c.l.b16 %v11927
  %v12223 = vunpack.c.l.b16 %v11928
  %v12224 = vunpack.c.l.b16 %v11929
  %v12225 = vunpack.c.l.b16 %v11930
  %v12226 = vunpack.c.l.b16 %v11931
  %v12227 = vunpack.c.l.b16 %v11932
  %v12228 = vunpack.c.l.b16 %v11933
  %v12229 = vunpack.c.l.b16 %v11934
  %v12230 = vunpack.c.l.b16 %v11935
  %v12231 = vunpack.c.l.b16 %v11936
  %v12232 = vunpack.c.l.b16 %v11937
  %v12233 = vunpack.c.l.b16 %v11938
  %v12234 = vunpack.c.l.b16 %v11939
  %v12235 = vunpack.c.l.b16 %v11940
  %v12236 = vunpack.c.l.b16 %v11941
  %v12237 = vunpack.c.l.b16 %v11942
  %v12238 = vunpack.c.l.b16 %v11943
  %v12239 = vunpack.c.l.b16 %v11944
  %v12240 = vunpack.c.l.b16 %v11945
  %v12241 = vunpack.c.l.b16 %v11946
  %v12242 = vunpack.c.l.b16 %v11947
  %v12243 = vunpack.c.l.b16 %v11948
  %v12244 = vunpack.c.l.b16 %v11949
  %v12245 = vpack.c.b16 %v12102, %v12101
  %v12246 = vpack.c.b16 %v12104, %v12103
  %v12247 = vpack.c.b16 %v12106, %v12105
  %v12248 = vpack.c.b16 %v12108, %v12107
  %v12249 = vpack.c.b16 %v12110, %v12109
  %v12250 = vpack.c.b16 %v12112, %v12111
  %v12251 = vpack.c.b16 %v12114, %v12113
  %v12252 = vpack.c.b16 %v12116, %v12115
  %v12253 = vpack.c.b16 %v12118, %v12117
  %v12254 = vpack.c.b16 %v12120, %v12119
  %v12255 = vpack.c.b16 %v12122, %v12121
  %v12256 = vpack.c.b16 %v12124, %v12123
  %v12257 = vpack.c.b16 %v12126, %v12125
  %v12258 = vpack.c.b16 %v12128, %v12127
  %v12259 = vpack.c.b16 %v12130, %v12129
  %v12260 = vpack.c.b16 %v12132, %v12131
  %v12261 = vpack.c.b16 %v12134, %v12133
  %v12262 = vpack.c.b16 %v12136, %v12135
  %v12263 = vpack.c.b16 %v12138, %v12137
  %v12264 = vpack.c.b16 %v12140, %v12139
  %v12265 = vpack.c.b16 %v12142, %v12141
  %v12266 = vpack.c.b16 %v12144, %v12143
  %v12267 = vpack.c.b16 %v12146, %v12145
  %v12268 = vpack.c.b16 %v12148, %v12147
  %v12269 = vpack.c.b16 %v12150, %v12149
  %v12270 = vpack.c.b16 %v12152, %v12151
  %v12271 = vpack.c.b16 %v12154, %v12153
  %v12272 = vpack.c.b16 %v12156, %v12155
  %v12273 = vpack.c.b16 %v12158, %v12157
  %v12274 = vpack.c.b16 %v12160, %v12159
  %v12275 = vpack.c.b16 %v12162, %v12161
  %v12276 = vpack.c.b16 %v12164, %v12163
  %v12277 = vpack.c.b16 %v12166, %v12165
  %v12278 = vpack.c.b16 %v12168, %v12167
  %v12279 = vpack.c.b16 %v12170, %v12169
  %v12280 = vpack.c.b16 %v12172, %v12171
  %v12281 = vpack.c.b16 %v12174, %v12173
  %v12282 = vpack.c.b16 %v12176, %v12175
  %v12283 = vpack.c.b16 %v12178, %v12177
  %v12284 = vpack.c.b16 %v12180, %v12179
  %v12285 = vpack.c.b16 %v12182, %v12181
  %v12286 = vpack.c.b16 %v12184, %v12183
  %v12287 = vpack.c.b16 %v12186, %v12185
  %v12288 = vpack.c.b16 %v12188, %v12187
  %v12289 = vpack.c.b16 %v12190, %v12189
  %v12290 = vpack.c.b16 %v12192, %v12191
  %v12291 = vpack.c.b16 %v12194, %v12193
  %v12292 = vpack.c.b16 %v12196, %v12195
  %v12293 = vpack.c.b16 %v12198, %v12197
  %v12294 = vpack.c.b16 %v12200, %v12199
  %v12295 = vpack.c.b16 %v12202, %v12201
  %v12296 = vpack.c.b16 %v12204, %v12203
  %v12297 = vpack.c.b16 %v12206, %v12205
  %v12298 = vpack.c.b16 %v12208, %v12207
  %v12299 = vpack.c.b16 %v12210, %v12209
  %v12300 = vpack.c.b16 %v12212, %v12211
  %v12301 = vpack.c.b16 %v12214, %v12213
  %v12302 = vpack.c.b16 %v12216, %v12215
  %v12303 = vpack.c.b16 %v12218, %v12217
  %v12304 = vpack.c.b16 %v12220, %v12219
  %v12305 = vpack.c.b16 %v12222, %v12221
  %v12306 = vpack.c.b16 %v12224, %v12223
  %v12307 = vpack.c.b16 %v12226, %v12225
  %v12308 = vpack.c.b16 %v12228, %v12227
  %v12309 = vpack.c.b16 %v12230, %v12229
  %v12310 = vpack.c.b16 %v12232, %v12231
  %v12311 = vpack.c.b16 %v12234, %v12233
  %v12312 = vpack.c.b16 %v12236, %v12235
  %v12313 = vpack.c.b16 %v12238, %v12237
  %v12314 = vpack.c.b16 %v12240, %v12239
  %v12315 = vpack.c.b16 %v12242, %v12241
  %v12316 = vpack.c.b16 %v12244, %v12243
  %12389 = vmatprep.subr.bf16.mxu0 0
  %12390 = vmatpush1.bf16.msra.mxu0 %v12252
  %12391 = vmatprep.subr.bf16.mxu0 0
  %12392 = vmatpush1.bf16.msra.mxu0 %v12251
  %12393 = vmatprep.subr.bf16.mxu0 0
  %12394 = vmatpush1.bf16.msra.mxu0 %v12250
  %12395 = vmatprep.subr.bf16.mxu0 0
  %12396 = vmatpush1.bf16.msra.mxu0 %v12249
  %12397 = vmatprep.subr.bf16.mxu0 0
  %12398 = vmatpush1.bf16.msra.mxu0 %v12248
  %12399 = vmatprep.subr.bf16.mxu0 0
  %12400 = vmatpush1.bf16.msra.mxu0 %v12247
  %12401 = vmatprep.subr.bf16.mxu0 0
  %12402 = vmatpush1.bf16.msra.mxu0 %v12246
  %12403 = vmatprep.subr.bf16.mxu0 0
  %12404 = vmatpush1.bf16.msra.mxu0 %v12245
  %12405 = vmatprep.subr.bf16.mxu0 0
  %12406 = vmatpush2.bf16.msra.mxu0 %v12260
  %12407 = vmatprep.subr.bf16.mxu0 0
  %12408 = vmatpush2.bf16.msra.mxu0 %v12259
  %12409 = vmatprep.subr.bf16.mxu0 0
  %12410 = vmatpush2.bf16.msra.mxu0 %v12258
  %12411 = vmatprep.subr.bf16.mxu0 0
  %12412 = vmatpush2.bf16.msra.mxu0 %v12257
  %12413 = vmatprep.subr.bf16.mxu0 0
  %12414 = vmatpush2.bf16.msra.mxu0 %v12256
  %12415 = vmatprep.subr.bf16.mxu0 0
  %12416 = vmatpush2.bf16.msra.mxu0 %v12255
  %12417 = vmatprep.subr.bf16.mxu0 0
  %12418 = vmatpush2.bf16.msra.mxu0 %v12254
  %12419 = vmatprep.subr.bf16.mxu0 0
  %12420 = vmatpush2.bf16.msra.mxu0 %v12253
  %12421 = vmatprep.mubr.bf16.mxu0 %v11798
  %12422 = vmatmul.mubr.bf16.gmra.mxu0 %v11797
  %v12423 = vpop.f32.mrf.mxu0
  %v12424 = vadd.f32 %v11955, %v12423
  %v12425 = vpop.f32.mrf.mxu0
  %v12426 = vpop.f32.mrf.mxu0
  %v12427 = vpop.f32.mrf.mxu0
  %12428 = vdwg.mxu0
  %12429 = vmatprep.subr.bf16.mxu0 0
  %12430 = vmatpush1.bf16.msra.mxu0 %v12268
  %12431 = vmatprep.subr.bf16.mxu0 0
  %12432 = vmatpush1.bf16.msra.mxu0 %v12267
  %12433 = vmatprep.subr.bf16.mxu0 0
  %12434 = vmatpush1.bf16.msra.mxu0 %v12266
  %12435 = vmatprep.subr.bf16.mxu0 0
  %12436 = vmatpush1.bf16.msra.mxu0 %v12265
  %12437 = vmatprep.subr.bf16.mxu0 0
  %12438 = vmatpush1.bf16.msra.mxu0 %v12264
  %12439 = vmatprep.subr.bf16.mxu0 0
  %12440 = vmatpush1.bf16.msra.mxu0 %v12263
  %12441 = vmatprep.subr.bf16.mxu0 0
  %12442 = vmatpush1.bf16.msra.mxu0 %v12262
  %12443 = vmatprep.subr.bf16.mxu0 0
  %12444 = vmatpush1.bf16.msra.mxu0 %v12261
  %12445 = vmatprep.subr.bf16.mxu0 0
  %12446 = vmatpush2.bf16.msra.mxu0 %v12276
  %12447 = vmatprep.subr.bf16.mxu0 0
  %12448 = vmatpush2.bf16.msra.mxu0 %v12275
  %12449 = vmatprep.subr.bf16.mxu0 0
  %12450 = vmatpush2.bf16.msra.mxu0 %v12274
  %12451 = vmatprep.subr.bf16.mxu0 0
  %12452 = vmatpush2.bf16.msra.mxu0 %v12273
  %12453 = vmatprep.subr.bf16.mxu0 0
  %12454 = vmatpush2.bf16.msra.mxu0 %v12272
  %12455 = vmatprep.subr.bf16.mxu0 0
  %12456 = vmatpush2.bf16.msra.mxu0 %v12271
  %12457 = vmatprep.subr.bf16.mxu0 0
  %12458 = vmatpush2.bf16.msra.mxu0 %v12270
  %12459 = vmatprep.subr.bf16.mxu0 0
  %12460 = vmatpush2.bf16.msra.mxu0 %v12269
  %12461 = vmatprep.mubr.bf16.mxu0 %v11800
  %12462 = vmatmul.mubr.bf16.gmra.mxu0 %v11799
  %v12463 = vpop.f32.mrf.mxu0
  %v12464 = vadd.f32 %v12424, %v12463
  %v12465 = vpop.f32.mrf.mxu0
  %v12466 = vpop.f32.mrf.mxu0
  %v12467 = vpop.f32.mrf.mxu0
  %12468 = vdwg.mxu0
  %12469 = vmatprep.subr.bf16.mxu0 0
  %12470 = vmatpush1.bf16.msra.mxu0 %v12284
  %12471 = vmatprep.subr.bf16.mxu0 0
  %12472 = vmatpush1.bf16.msra.mxu0 %v12283
  %12473 = vmatprep.subr.bf16.mxu0 0
  %12474 = vmatpush1.bf16.msra.mxu0 %v12282
  %12475 = vmatprep.subr.bf16.mxu0 0
  %12476 = vmatpush1.bf16.msra.mxu0 %v12281
  %12477 = vmatprep.subr.bf16.mxu0 0
  %12478 = vmatpush1.bf16.msra.mxu0 %v12280
  %12479 = vmatprep.subr.bf16.mxu0 0
  %12480 = vmatpush1.bf16.msra.mxu0 %v12279
  %12481 = vmatprep.subr.bf16.mxu0 0
  %12482 = vmatpush1.bf16.msra.mxu0 %v12278
  %12483 = vmatprep.subr.bf16.mxu0 0
  %12484 = vmatpush1.bf16.msra.mxu0 %v12277
  %12485 = vmatprep.subr.bf16.mxu0 0
  %12486 = vmatpush2.bf16.msra.mxu0 %v12292
  %12487 = vmatprep.subr.bf16.mxu0 0
  %12488 = vmatpush2.bf16.msra.mxu0 %v12291
  %12489 = vmatprep.subr.bf16.mxu0 0
  %12490 = vmatpush2.bf16.msra.mxu0 %v12290
  %12491 = vmatprep.subr.bf16.mxu0 0
  %12492 = vmatpush2.bf16.msra.mxu0 %v12289
  %12493 = vmatprep.subr.bf16.mxu0 0
  %12494 = vmatpush2.bf16.msra.mxu0 %v12288
  %12495 = vmatprep.subr.bf16.mxu0 0
  %12496 = vmatpush2.bf16.msra.mxu0 %v12287
  %12497 = vmatprep.subr.bf16.mxu0 0
  %12498 = vmatpush2.bf16.msra.mxu0 %v12286
  %12499 = vmatprep.subr.bf16.mxu0 0
  %12500 = vmatpush2.bf16.msra.mxu0 %v12285
  %12501 = vmatprep.mubr.bf16.mxu0 %v11802
  %12502 = vmatmul.mubr.bf16.gmra.mxu0 %v11801
  %v12503 = vpop.f32.mrf.mxu0
  %v12504 = vadd.f32 %v12464, %v12503
  %v12505 = vpop.f32.mrf.mxu0
  %v12506 = vpop.f32.mrf.mxu0
  %v12507 = vpop.f32.mrf.mxu0
  %12508 = vdwg.mxu0
  %12509 = vmatprep.subr.bf16.mxu0 0
  %12510 = vmatpush1.bf16.msra.mxu0 %v12300
  %12511 = vmatprep.subr.bf16.mxu0 0
  %12512 = vmatpush1.bf16.msra.mxu0 %v12299
  %12513 = vmatprep.subr.bf16.mxu0 0
  %12514 = vmatpush1.bf16.msra.mxu0 %v12298
  %12515 = vmatprep.subr.bf16.mxu0 0
  %12516 = vmatpush1.bf16.msra.mxu0 %v12297
  %12517 = vmatprep.subr.bf16.mxu0 0
  %12518 = vmatpush1.bf16.msra.mxu0 %v12296
  %12519 = vmatprep.subr.bf16.mxu0 0
  %12520 = vmatpush1.bf16.msra.mxu0 %v12295
  %12521 = vmatprep.subr.bf16.mxu0 0
  %12522 = vmatpush1.bf16.msra.mxu0 %v12294
  %12523 = vmatprep.subr.bf16.mxu0 0
  %12524 = vmatpush1.bf16.msra.mxu0 %v12293
  %12525 = vmatprep.subr.bf16.mxu0 0
  %12526 = vmatpush2.bf16.msra.mxu0 %v12308
  %12527 = vmatprep.subr.bf16.mxu0 0
  %12528 = vmatpush2.bf16.msra.mxu0 %v12307
  %12529 = vmatprep.subr.bf16.mxu0 0
  %12530 = vmatpush2.bf16.msra.mxu0 %v12306
  %12531 = vmatprep.subr.bf16.mxu0 0
  %12532 = vmatpush2.bf16.msra.mxu0 %v12305
  %12533 = vmatprep.subr.bf16.mxu0 0
  %12534 = vmatpush2.bf16.msra.mxu0 %v12304
  %12535 = vmatprep.subr.bf16.mxu0 0
  %12536 = vmatpush2.bf16.msra.mxu0 %v12303
  %12537 = vmatprep.subr.bf16.mxu0 0
  %12538 = vmatpush2.bf16.msra.mxu0 %v12302
  %12539 = vmatprep.subr.bf16.mxu0 0
  %12540 = vmatpush2.bf16.msra.mxu0 %v12301
  %12541 = vmatprep.mubr.bf16.mxu0 %v11804
  %12542 = vmatmul.mubr.bf16.gmra.mxu0 %v11803
  %v12543 = vpop.f32.mrf.mxu0
  %v12544 = vadd.f32 %v12504, %v12543
  %v12545 = vpop.f32.mrf.mxu0
  %v12546 = vpop.f32.mrf.mxu0
  %v12547 = vpop.f32.mrf.mxu0
  %12548 = vdwg.mxu0
  %12549 = vmatprep.subr.bf16.mxu0 0
  %12550 = vmatpush1.bf16.msra.mxu0 %v12316
  %12551 = vmatprep.subr.bf16.mxu0 0
  %12552 = vmatpush1.bf16.msra.mxu0 %v12315
  %12553 = vmatprep.subr.bf16.mxu0 0
  %12554 = vmatpush1.bf16.msra.mxu0 %v12314
  %12555 = vmatprep.subr.bf16.mxu0 0
  %12556 = vmatpush1.bf16.msra.mxu0 %v12313
  %12557 = vmatprep.subr.bf16.mxu0 0
  %12558 = vmatpush1.bf16.msra.mxu0 %v12312
  %12559 = vmatprep.subr.bf16.mxu0 0
  %12560 = vmatpush1.bf16.msra.mxu0 %v12311
  %12561 = vmatprep.subr.bf16.mxu0 0
  %12562 = vmatpush1.bf16.msra.mxu0 %v12310
  %12563 = vmatprep.subr.bf16.mxu0 0
  %12564 = vmatpush1.bf16.msra.mxu0 %v12309
  %12565 = vmatprep.subr.bf16.mxu0 0
  %12566 = vmatpush2.bf16.msra.mxu0 0
  %12567 = vmatprep.subr.bf16.mxu0 0
  %12568 = vmatpush2.bf16.msra.mxu0 0
  %12569 = vmatprep.subr.bf16.mxu0 0
  %12570 = vmatpush2.bf16.msra.mxu0 0
  %12571 = vmatprep.subr.bf16.mxu0 0
  %12572 = vmatpush2.bf16.msra.mxu0 0
  %12573 = vmatprep.subr.bf16.mxu0 0
  %12574 = vmatpush2.bf16.msra.mxu0 0
  %12575 = vmatprep.subr.bf16.mxu0 0
  %12576 = vmatpush2.bf16.msra.mxu0 0
  %12577 = vmatprep.subr.bf16.mxu0 0
  %12578 = vmatpush2.bf16.msra.mxu0 0
  %12579 = vmatprep.subr.bf16.mxu0 0
  %12580 = vmatpush2.bf16.msra.mxu0 0
  %12581 = vmatprep.mubr.bf16.mxu0 0
  %12582 = vmatmul.mubr.bf16.gmra.mxu0 %v11805
  %v12583 = vpop.f32.mrf.mxu0
  %v12584 = vadd.f32 %v12544, %v12583
  %v12585 = vpop.f32.mrf.mxu0
  %v12586 = vpop.f32.mrf.mxu0
  %v12587 = vpop.f32.mrf.mxu0
  %12588 = vdwg.mxu0
  %12589 = vst [vmem:[%s7] sm:$0xff] %v12584
  // Predicated region
  $region30: #{cnn_forward.1} parent=0 // pred_check
    _
  $region31: #{cnn_forward.1} parent=0 // pred_check_branch
    %12591 = sbr.rel (0) target = $region33
  $region32: #{cnn_forward.1} parent=0 // pred_region
    _
  $region33: #{cnn_forward.1} parent=0 // pred_fallthru
    _
  // Predicated region
  $region34: #{cnn_forward.1} parent=0 // pred_check
    _
  $region35: #{cnn_forward.1} parent=0 // pred_check_branch
    %12593 = sbr.rel (0) target = $region37
  $region36: #{cnn_forward.1} parent=0 // pred_region
    _
  $region37: #{cnn_forward.1} parent=0 // pred_fallthru
    _

</llo_original>
